<compile_context>
chip_gen: v6e
topology: v6e:2x2x1
jax: 0.10.0
libtpu: 0.0.40
codegen_flags: <defaults>
</compile_context>

<pallas_src>
import jax
import jax.numpy as jnp
from jax.experimental import pallas as pl
from jax.experimental.pallas import tpu as pltpu


# ---------------------------------------------------------------------------
# Flat-layout geometry (Python ints, baked into the kernel at trace time)
# ---------------------------------------------------------------------------
_K = 5                 # conv kernel size
_PW = 32               # conv1 padded row stride (2 + 28 + 2)
_PH = 33               # padded rows: 2 top + 28 + 3 bottom (extra row keeps
                       #   wrap-around reads of invalid columns in bounds)
_L0 = _PH * _PW        # 1056 flat padded input length
_Q1 = 28 * _PW         # 896  conv1 output codes: (y, x) -> 32*y + x  (28x28 valid)
_V1 = _Q1 - _PW        # 864
_P1 = _V1 - 1          # 863  pool1 codes: (y, x) -> 64*y + 2*x       (14x14 valid)
_Q2 = 596              # conv2 output codes: (y, x) -> 64*y + 2*x     (10x10 valid)
_V2 = _Q2 - 64         # 532
_P2 = _V2 - 2          # 530  pool2 codes: (y, x) -> 128*y + 4*x      (5x5  valid)


# ---------------------------------------------------------------------------
# The fused kernel (one grid step == one image)
# ---------------------------------------------------------------------------
def _lenet5_kernel(x_ref, w1_ref, b1_ref, w2_ref, b2_ref,
                   wf1_ref, bf1_ref, wf2_ref, bf2_ref, wf3_ref, bf3_ref,
                   o_ref, s1_ref, s2_ref, fcin_ref):
    # ---- conv1 (1 -> 6, k=5, pad=2) + ReLU --------------------------------
    row = x_ref[0, 0, :]                                    # (1056,) padded 33x32 image
    for i in range(_K):
        for j in range(_K):
            off = _PW * i + j
            s1_ref[_K * i + j, :] = row[off:off + _Q1]      # patch row (i, j)
    a1 = jnp.dot(w1_ref[...], s1_ref[...],
                 preferred_element_type=jnp.float32)        # (6, 896)
    a1 = jnp.maximum(a1 + b1_ref[...], 0.0)

    # ---- maxpool 2x2 stride 2 (row stride 32, col stride 1) ---------------
    v1 = jnp.maximum(a1[:, :_V1], a1[:, _PW:_PW + _V1])
    p1 = jnp.maximum(v1[:, :_P1], v1[:, 1:1 + _P1])         # (6, 863)

    # ---- conv2 (6 -> 16, k=5, pad=0) + ReLU -------------------------------
    # pool1 flat geometry: row stride 64, col stride 2, valid 14x14.
    # S2 rows are ordered (c, i, j) to match conv2_w.reshape(16, 150).
    for c in range(6):
        for i in range(_K):
            for j in range(_K):
                off = 64 * i + 2 * j
                s2_ref[c * 25 + _K * i + j, :] = p1[c, off:off + _Q2]
    a2 = jnp.dot(w2_ref[...], s2_ref[...],
                 preferred_element_type=jnp.float32)        # (16, 596)
    a2 = jnp.maximum(a2 + b2_ref[...], 0.0)

    # ---- maxpool 2x2 stride 2 (row stride 64, col stride 2) ---------------
    v2 = jnp.maximum(a2[:, :_V2], a2[:, 64:64 + _V2])
    p2 = jnp.maximum(v2[:, :_P2], v2[:, 2:2 + _P2])         # (16, 530)

    # ---- gather the valid 5x5x16 lattice into the fc input column ---------
    # pool2 flat geometry: row stride 128, col stride 4, valid 5x5.
    # fc input order is (y, x, c); fc1 weight columns were permuted to match.
    for y in range(5):
        for x in range(5):
            pos = 128 * y + 4 * x
            r0 = (5 * y + x) * 16
            fcin_ref[r0:r0 + 16, :] = p2[:, pos:pos + 1]

    # ---- fc1 -> relu -> fc2 -> relu -> fc3 --------------------------------
    h = jnp.dot(wf1_ref[...], fcin_ref[...],
                preferred_element_type=jnp.float32)         # (120, 1)
    h = jnp.maximum(h + bf1_ref[...], 0.0)
    h = jnp.dot(wf2_ref[...], h, preferred_element_type=jnp.float32)
    h = jnp.maximum(h + bf2_ref[...], 0.0)
    h = jnp.dot(wf3_ref[...], h, preferred_element_type=jnp.float32)
    o_ref[0, :, :] = h + bf3_ref[...]                       # (10, 1)


# ---------------------------------------------------------------------------
# Wrapper
# ---------------------------------------------------------------------------
def lenet5_forward(prepared, x):
    """x: (B, 1, 28, 28) NCHW float32 -> logits (B, 10)."""
    B = x.shape[0]
    assert x.shape[1:] == (1, 28, 28), x.shape
    # Only XLA glue in the whole forward: pad to 33x32 and flatten the rows.
    xflat = jnp.pad(x, ((0, 0), (0, 0), (2, 3), (2, 2))).reshape(B, 1, _L0)

    out = pl.pallas_call(
        _lenet5_kernel,
        out_shape=jax.ShapeDtypeStruct((B, 10, 1), jnp.float32),
        grid=(B,),
        in_specs=[
            pl.BlockSpec((1, 1, _L0), lambda b: (b, 0, 0)),   # image b
            pl.BlockSpec((6, 25), lambda b: (0, 0)),          # conv1 w
            pl.BlockSpec((6, 1), lambda b: (0, 0)),           # conv1 b
            pl.BlockSpec((16, 150), lambda b: (0, 0)),        # conv2 w
            pl.BlockSpec((16, 1), lambda b: (0, 0)),          # conv2 b
            pl.BlockSpec((120, 400), lambda b: (0, 0)),       # fc1 w
            pl.BlockSpec((120, 1), lambda b: (0, 0)),         # fc1 b
            pl.BlockSpec((84, 120), lambda b: (0, 0)),        # fc2 w
            pl.BlockSpec((84, 1), lambda b: (0, 0)),          # fc2 b
            pl.BlockSpec((10, 84), lambda b: (0, 0)),         # fc3 w
            pl.BlockSpec((10, 1), lambda b: (0, 0)),          # fc3 b
        ],
        out_specs=pl.BlockSpec((1, 10, 1), lambda b: (b, 0, 0)),
        scratch_shapes=[
            pltpu.VMEM((25, _Q1), jnp.float32),     # conv1 patch matrix
            pltpu.VMEM((150, _Q2), jnp.float32),    # conv2 patch matrix
            pltpu.VMEM((400, 1), jnp.float32),      # flattened fc input
        ],
        compiler_params=pltpu.CompilerParams(
            dimension_semantics=("parallel",)),
    )(xflat,
      prepared["w1"], prepared["b1"], prepared["w2"], prepared["b2"],
      prepared["wf1"], prepared["bf1"], prepared["wf2"], prepared["bf2"],
      prepared["wf3"], prepared["bf3"])
    return out.reshape(B, 10)


# ---------------------------------------------------------------------------
# Parameters (PyTorch-layout init + one-time rearrangement for the kernel)
# ---------------------------------------------------------------------------
def init_params(key):
    keys = jax.random.split(key, 10)

    def u(k, shape, fan_in):
        bound = 1.0 / float(fan_in) ** 0.5
        return jax.random.uniform(k, shape, jnp.float32, -bound, bound)

    return {
        "conv1_w": u(keys[0], (6, 1, 5, 5), 1 * 5 * 5),
        "conv1_b": u(keys[1], (6,), 1 * 5 * 5),
        "conv2_w": u(keys[2], (16, 6, 5, 5), 6 * 5 * 5),
        "conv2_b": u(keys[3], (16,), 6 * 5 * 5),
        "fc1_w": u(keys[4], (120, 16 * 5 * 5), 16 * 5 * 5),
        "fc1_b": u(keys[5], (120,), 16 * 5 * 5),
        "fc2_w": u(keys[6], (84, 120), 120),
        "fc2_b": u(keys[7], (84,), 120),
        "fc3_w": u(keys[8], (10, 84), 84),
        "fc3_b": u(keys[9], (10,), 84),
    }


def prepare_params(p):
    """One-time weight rearrangement so the forward pass does no transposes."""
    return {
        "w1": p["conv1_w"].reshape(6, 25),                       # rows (i, j)
        "b1": p["conv1_b"].reshape(6, 1),
        "w2": p["conv2_w"].reshape(16, 150),                     # rows (c, i, j)
        "b2": p["conv2_b"].reshape(16, 1),
        # fc1 columns permuted from PyTorch's (c, y, x) order to the kernel's
        # (y, x, c) gather order.
        "wf1": p["fc1_w"].reshape(120, 16, 5, 5)
                          .transpose(0, 2, 3, 1).reshape(120, 400),
        "bf1": p["fc1_b"].reshape(120, 1),
        "wf2": p["fc2_w"],
        "bf2": p["fc2_b"].reshape(84, 1),
        "wf3": p["fc3_w"],
        "bf3": p["fc3_b"].reshape(10, 1),
    }


# ---------------------------------------------------------------------------
# Pure-XLA reference (for a correctness check only; not on the Pallas path)
# ---------------------------------------------------------------------------
def lenet5_reference(p, x):
    dn = ("NCHW", "OIHW", "NCHW")
    a = jax.lax.conv_general_dilated(x, p["conv1_w"], (1, 1),
                                     ((2, 2), (2, 2)), dimension_numbers=dn)
    a = jax.nn.relu(a + p["conv1_b"][None, :, None, None])
    a = jax.lax.reduce_window(a, -jnp.inf, jax.lax.max,
                              (1, 1, 2, 2), (1, 1, 2, 2), "VALID")
    a = jax.lax.conv_general_dilated(a, p["conv2_w"], (1, 1),
                                     ((0, 0), (0, 0)), dimension_numbers=dn)
    a = jax.nn.relu(a + p["conv2_b"][None, :, None, None])
    a = jax.lax.reduce_window(a, -jnp.inf, jax.lax.max,
                              (1, 1, 2, 2), (1, 1, 2, 2), "VALID")
    a = a.reshape(a.shape[0], -1)
    a = jax.nn.relu(a @ p["fc1_w"].T + p["fc1_b"])
    a = jax.nn.relu(a @ p["fc2_w"].T + p["fc2_b"])
    return a @ p["fc3_w"].T + p["fc3_b"]


if __name__ == "__main__":
    key = jax.random.PRNGKey(0)
    pkey, xkey = jax.random.split(key)
    params = init_params(pkey)
    prepared = prepare_params(params)

    # LeNet5's fc1 dimensions imply a 1x28x28 input; use batch=2.
    x = jax.random.normal(xkey, (2, 1, 28, 28), dtype=jnp.float32)

    out = jax.block_until_ready(jax.jit(lenet5_forward)(prepared, x))
    assert out.shape == (2, 10), out.shape
    assert bool(jnp.all(jnp.isfinite(out)))

    ref = lenet5_reference(params, x)
    max_err = float(jnp.max(jnp.abs(out - ref)))
    assert bool(jnp.allclose(out, ref, atol=5e-2, rtol=5e-2)), max_err

    print("KERNEL_OK")
</pallas_src>

<mosaic_0001>
module attributes {stable_mosaic.version = 11 : i64} {
  func.func @_lenet5_kernel(%arg0: i32, %arg1: memref<1x1x1056xf32, #tpu.memory_space<vmem>>, %arg2: memref<6x25xf32, #tpu.memory_space<vmem>>, %arg3: memref<6x1xf32, #tpu.memory_space<vmem>>, %arg4: memref<16x150xf32, #tpu.memory_space<vmem>>, %arg5: memref<16x1xf32, #tpu.memory_space<vmem>>, %arg6: memref<120x400xf32, #tpu.memory_space<vmem>>, %arg7: memref<120x1xf32, #tpu.memory_space<vmem>>, %arg8: memref<84x120xf32, #tpu.memory_space<vmem>>, %arg9: memref<84x1xf32, #tpu.memory_space<vmem>>, %arg10: memref<10x84xf32, #tpu.memory_space<vmem>>, %arg11: memref<10x1xf32, #tpu.memory_space<vmem>>, %arg12: memref<1x10x1xf32, #tpu.memory_space<vmem>>, %arg13: memref<25x896xf32, #tpu.memory_space<vmem>>, %arg14: memref<150x596xf32, #tpu.memory_space<vmem>>, %arg15: memref<400x1xf32, #tpu.memory_space<vmem>>) attributes {dimension_semantics = [#tpu.dimension_semantics<parallel>], iteration_bounds = array<i64: 2>, scalar_prefetch = 0 : i64, scratch_operands = 3 : i64, tpu.core_type = #tpu.core_type<tc>, window_params = [{transform_indices = @transform_0, window_bounds = array<i64: 1, 1, 1056>}, {pipeline_mode = #tpu.pipeline_mode<synchronous>, transform_indices = @transform_1, window_bounds = array<i64: 6, 25>}, {pipeline_mode = #tpu.pipeline_mode<synchronous>, transform_indices = @transform_2, window_bounds = array<i64: 6, 1>}, {pipeline_mode = #tpu.pipeline_mode<synchronous>, transform_indices = @transform_3, window_bounds = array<i64: 16, 150>}, {pipeline_mode = #tpu.pipeline_mode<synchronous>, transform_indices = @transform_4, window_bounds = array<i64: 16, 1>}, {pipeline_mode = #tpu.pipeline_mode<synchronous>, transform_indices = @transform_5, window_bounds = array<i64: 120, 400>}, {pipeline_mode = #tpu.pipeline_mode<synchronous>, transform_indices = @transform_6, window_bounds = array<i64: 120, 1>}, {pipeline_mode = #tpu.pipeline_mode<synchronous>, transform_indices = @transform_7, window_bounds = array<i64: 84, 120>}, {pipeline_mode = #tpu.pipeline_mode<synchronous>, transform_indices = @transform_8, window_bounds = array<i64: 84, 1>}, {pipeline_mode = #tpu.pipeline_mode<synchronous>, transform_indices = @transform_9, window_bounds = array<i64: 10, 84>}, {pipeline_mode = #tpu.pipeline_mode<synchronous>, transform_indices = @transform_10, window_bounds = array<i64: 10, 1>}, {transform_indices = @transform_11, window_bounds = array<i64: 1, 10, 1>}]} {
    %c0 = arith.constant 0 : index
    %c0_0 = arith.constant 0 : index
    %c0_1 = arith.constant 0 : index
    %0 = vector.load %arg1[%c0, %c0_0, %c0_1] : memref<1x1x1056xf32, #tpu.memory_space<vmem>>, vector<1x1x1056xf32>
    %1 = vector.shape_cast %0 : vector<1x1x1056xf32> to vector<1056xf32>
    %2 = vector.extract_strided_slice %1 {offsets = [0], sizes = [896], strides = [1]} : vector<1056xf32> to vector<896xf32>
    %c0_2 = arith.constant 0 : index
    %c0_3 = arith.constant 0 : index
    %3 = vector.load %arg13[%c0_2, %c0_3] : memref<25x896xf32, #tpu.memory_space<vmem>>, vector<1x896xf32>
    %4 = vector.shape_cast %3 : vector<1x896xf32> to vector<896xf32>
    %5 = vector.shape_cast %2 : vector<896xf32> to vector<1x896xf32>
    tpu.vector_store %arg13[%c0_2, %c0_3], %5 {strides = array<i32>} : memref<25x896xf32, #tpu.memory_space<vmem>>, vector<1x896xf32>,
    %6 = vector.extract_strided_slice %1 {offsets = [1], sizes = [896], strides = [1]} : vector<1056xf32> to vector<896xf32>
    %c1 = arith.constant 1 : index
    %c0_4 = arith.constant 0 : index
    %7 = vector.load %arg13[%c1, %c0_4] : memref<25x896xf32, #tpu.memory_space<vmem>>, vector<1x896xf32>
    %8 = vector.shape_cast %7 : vector<1x896xf32> to vector<896xf32>
    %9 = vector.shape_cast %6 : vector<896xf32> to vector<1x896xf32>
    tpu.vector_store %arg13[%c1, %c0_4], %9 {strides = array<i32>} : memref<25x896xf32, #tpu.memory_space<vmem>>, vector<1x896xf32>,
    %10 = vector.extract_strided_slice %1 {offsets = [2], sizes = [896], strides = [1]} : vector<1056xf32> to vector<896xf32>
    %c2 = arith.constant 2 : index
    %c0_5 = arith.constant 0 : index
    %11 = vector.load %arg13[%c2, %c0_5] : memref<25x896xf32, #tpu.memory_space<vmem>>, vector<1x896xf32>
    %12 = vector.shape_cast %11 : vector<1x896xf32> to vector<896xf32>
    %13 = vector.shape_cast %10 : vector<896xf32> to vector<1x896xf32>
    tpu.vector_store %arg13[%c2, %c0_5], %13 {strides = array<i32>} : memref<25x896xf32, #tpu.memory_space<vmem>>, vector<1x896xf32>,
    %14 = vector.extract_strided_slice %1 {offsets = [3], sizes = [896], strides = [1]} : vector<1056xf32> to vector<896xf32>
    %c3 = arith.constant 3 : index
    %c0_6 = arith.constant 0 : index
    %15 = vector.load %arg13[%c3, %c0_6] : memref<25x896xf32, #tpu.memory_space<vmem>>, vector<1x896xf32>
    %16 = vector.shape_cast %15 : vector<1x896xf32> to vector<896xf32>
    %17 = vector.shape_cast %14 : vector<896xf32> to vector<1x896xf32>
    tpu.vector_store %arg13[%c3, %c0_6], %17 {strides = array<i32>} : memref<25x896xf32, #tpu.memory_space<vmem>>, vector<1x896xf32>,
    %18 = vector.extract_strided_slice %1 {offsets = [4], sizes = [896], strides = [1]} : vector<1056xf32> to vector<896xf32>
    %c4 = arith.constant 4 : index
    %c0_7 = arith.constant 0 : index
    %19 = vector.load %arg13[%c4, %c0_7] : memref<25x896xf32, #tpu.memory_space<vmem>>, vector<1x896xf32>
    %20 = vector.shape_cast %19 : vector<1x896xf32> to vector<896xf32>
    %21 = vector.shape_cast %18 : vector<896xf32> to vector<1x896xf32>
    tpu.vector_store %arg13[%c4, %c0_7], %21 {strides = array<i32>} : memref<25x896xf32, #tpu.memory_space<vmem>>, vector<1x896xf32>,
    %22 = vector.extract_strided_slice %1 {offsets = [32], sizes = [896], strides = [1]} : vector<1056xf32> to vector<896xf32>
    %c5 = arith.constant 5 : index
    %c0_8 = arith.constant 0 : index
    %23 = vector.load %arg13[%c5, %c0_8] : memref<25x896xf32, #tpu.memory_space<vmem>>, vector<1x896xf32>
    %24 = vector.shape_cast %23 : vector<1x896xf32> to vector<896xf32>
    %25 = vector.shape_cast %22 : vector<896xf32> to vector<1x896xf32>
    tpu.vector_store %arg13[%c5, %c0_8], %25 {strides = array<i32>} : memref<25x896xf32, #tpu.memory_space<vmem>>, vector<1x896xf32>,
    %26 = vector.extract_strided_slice %1 {offsets = [33], sizes = [896], strides = [1]} : vector<1056xf32> to vector<896xf32>
    %c6 = arith.constant 6 : index
    %c0_9 = arith.constant 0 : index
    %27 = vector.load %arg13[%c6, %c0_9] : memref<25x896xf32, #tpu.memory_space<vmem>>, vector<1x896xf32>
    %28 = vector.shape_cast %27 : vector<1x896xf32> to vector<896xf32>
    %29 = vector.shape_cast %26 : vector<896xf32> to vector<1x896xf32>
    tpu.vector_store %arg13[%c6, %c0_9], %29 {strides = array<i32>} : memref<25x896xf32, #tpu.memory_space<vmem>>, vector<1x896xf32>,
    %30 = vector.extract_strided_slice %1 {offsets = [34], sizes = [896], strides = [1]} : vector<1056xf32> to vector<896xf32>
    %c7 = arith.constant 7 : index
    %c0_10 = arith.constant 0 : index
    %31 = vector.load %arg13[%c7, %c0_10] : memref<25x896xf32, #tpu.memory_space<vmem>>, vector<1x896xf32>
    %32 = vector.shape_cast %31 : vector<1x896xf32> to vector<896xf32>
    %33 = vector.shape_cast %30 : vector<896xf32> to vector<1x896xf32>
    tpu.vector_store %arg13[%c7, %c0_10], %33 {strides = array<i32>} : memref<25x896xf32, #tpu.memory_space<vmem>>, vector<1x896xf32>,
    %34 = vector.extract_strided_slice %1 {offsets = [35], sizes = [896], strides = [1]} : vector<1056xf32> to vector<896xf32>
    %c8 = arith.constant 8 : index
    %c0_11 = arith.constant 0 : index
    %35 = vector.load %arg13[%c8, %c0_11] : memref<25x896xf32, #tpu.memory_space<vmem>>, vector<1x896xf32>
    %36 = vector.shape_cast %35 : vector<1x896xf32> to vector<896xf32>
    %37 = vector.shape_cast %34 : vector<896xf32> to vector<1x896xf32>
    tpu.vector_store %arg13[%c8, %c0_11], %37 {strides = array<i32>} : memref<25x896xf32, #tpu.memory_space<vmem>>, vector<1x896xf32>,
    %38 = vector.extract_strided_slice %1 {offsets = [36], sizes = [896], strides = [1]} : vector<1056xf32> to vector<896xf32>
    %c9 = arith.constant 9 : index
    %c0_12 = arith.constant 0 : index
    %39 = vector.load %arg13[%c9, %c0_12] : memref<25x896xf32, #tpu.memory_space<vmem>>, vector<1x896xf32>
    %40 = vector.shape_cast %39 : vector<1x896xf32> to vector<896xf32>
    %41 = vector.shape_cast %38 : vector<896xf32> to vector<1x896xf32>
    tpu.vector_store %arg13[%c9, %c0_12], %41 {strides = array<i32>} : memref<25x896xf32, #tpu.memory_space<vmem>>, vector<1x896xf32>,
    %42 = vector.extract_strided_slice %1 {offsets = [64], sizes = [896], strides = [1]} : vector<1056xf32> to vector<896xf32>
    %c10 = arith.constant 10 : index
    %c0_13 = arith.constant 0 : index
    %43 = vector.load %arg13[%c10, %c0_13] : memref<25x896xf32, #tpu.memory_space<vmem>>, vector<1x896xf32>
    %44 = vector.shape_cast %43 : vector<1x896xf32> to vector<896xf32>
    %45 = vector.shape_cast %42 : vector<896xf32> to vector<1x896xf32>
    tpu.vector_store %arg13[%c10, %c0_13], %45 {strides = array<i32>} : memref<25x896xf32, #tpu.memory_space<vmem>>, vector<1x896xf32>,
    %46 = vector.extract_strided_slice %1 {offsets = [65], sizes = [896], strides = [1]} : vector<1056xf32> to vector<896xf32>
    %c11 = arith.constant 11 : index
    %c0_14 = arith.constant 0 : index
    %47 = vector.load %arg13[%c11, %c0_14] : memref<25x896xf32, #tpu.memory_space<vmem>>, vector<1x896xf32>
    %48 = vector.shape_cast %47 : vector<1x896xf32> to vector<896xf32>
    %49 = vector.shape_cast %46 : vector<896xf32> to vector<1x896xf32>
    tpu.vector_store %arg13[%c11, %c0_14], %49 {strides = array<i32>} : memref<25x896xf32, #tpu.memory_space<vmem>>, vector<1x896xf32>,
    %50 = vector.extract_strided_slice %1 {offsets = [66], sizes = [896], strides = [1]} : vector<1056xf32> to vector<896xf32>
    %c12 = arith.constant 12 : index
    %c0_15 = arith.constant 0 : index
    %51 = vector.load %arg13[%c12, %c0_15] : memref<25x896xf32, #tpu.memory_space<vmem>>, vector<1x896xf32>
    %52 = vector.shape_cast %51 : vector<1x896xf32> to vector<896xf32>
    %53 = vector.shape_cast %50 : vector<896xf32> to vector<1x896xf32>
    tpu.vector_store %arg13[%c12, %c0_15], %53 {strides = array<i32>} : memref<25x896xf32, #tpu.memory_space<vmem>>, vector<1x896xf32>,
    %54 = vector.extract_strided_slice %1 {offsets = [67], sizes = [896], strides = [1]} : vector<1056xf32> to vector<896xf32>
    %c13 = arith.constant 13 : index
    %c0_16 = arith.constant 0 : index
    %55 = vector.load %arg13[%c13, %c0_16] : memref<25x896xf32, #tpu.memory_space<vmem>>, vector<1x896xf32>
    %56 = vector.shape_cast %55 : vector<1x896xf32> to vector<896xf32>
    %57 = vector.shape_cast %54 : vector<896xf32> to vector<1x896xf32>
    tpu.vector_store %arg13[%c13, %c0_16], %57 {strides = array<i32>} : memref<25x896xf32, #tpu.memory_space<vmem>>, vector<1x896xf32>,
    %58 = vector.extract_strided_slice %1 {offsets = [68], sizes = [896], strides = [1]} : vector<1056xf32> to vector<896xf32>
    %c14 = arith.constant 14 : index
    %c0_17 = arith.constant 0 : index
    %59 = vector.load %arg13[%c14, %c0_17] : memref<25x896xf32, #tpu.memory_space<vmem>>, vector<1x896xf32>
    %60 = vector.shape_cast %59 : vector<1x896xf32> to vector<896xf32>
    %61 = vector.shape_cast %58 : vector<896xf32> to vector<1x896xf32>
    tpu.vector_store %arg13[%c14, %c0_17], %61 {strides = array<i32>} : memref<25x896xf32, #tpu.memory_space<vmem>>, vector<1x896xf32>,
    %62 = vector.extract_strided_slice %1 {offsets = [96], sizes = [896], strides = [1]} : vector<1056xf32> to vector<896xf32>
    %c15 = arith.constant 15 : index
    %c0_18 = arith.constant 0 : index
    %63 = vector.load %arg13[%c15, %c0_18] : memref<25x896xf32, #tpu.memory_space<vmem>>, vector<1x896xf32>
    %64 = vector.shape_cast %63 : vector<1x896xf32> to vector<896xf32>
    %65 = vector.shape_cast %62 : vector<896xf32> to vector<1x896xf32>
    tpu.vector_store %arg13[%c15, %c0_18], %65 {strides = array<i32>} : memref<25x896xf32, #tpu.memory_space<vmem>>, vector<1x896xf32>,
    %66 = vector.extract_strided_slice %1 {offsets = [97], sizes = [896], strides = [1]} : vector<1056xf32> to vector<896xf32>
    %c16 = arith.constant 16 : index
    %c0_19 = arith.constant 0 : index
    %67 = vector.load %arg13[%c16, %c0_19] : memref<25x896xf32, #tpu.memory_space<vmem>>, vector<1x896xf32>
    %68 = vector.shape_cast %67 : vector<1x896xf32> to vector<896xf32>
    %69 = vector.shape_cast %66 : vector<896xf32> to vector<1x896xf32>
    tpu.vector_store %arg13[%c16, %c0_19], %69 {strides = array<i32>} : memref<25x896xf32, #tpu.memory_space<vmem>>, vector<1x896xf32>,
    %70 = vector.extract_strided_slice %1 {offsets = [98], sizes = [896], strides = [1]} : vector<1056xf32> to vector<896xf32>
    %c17 = arith.constant 17 : index
    %c0_20 = arith.constant 0 : index
    %71 = vector.load %arg13[%c17, %c0_20] : memref<25x896xf32, #tpu.memory_space<vmem>>, vector<1x896xf32>
    %72 = vector.shape_cast %71 : vector<1x896xf32> to vector<896xf32>
    %73 = vector.shape_cast %70 : vector<896xf32> to vector<1x896xf32>
    tpu.vector_store %arg13[%c17, %c0_20], %73 {strides = array<i32>} : memref<25x896xf32, #tpu.memory_space<vmem>>, vector<1x896xf32>,
    %74 = vector.extract_strided_slice %1 {offsets = [99], sizes = [896], strides = [1]} : vector<1056xf32> to vector<896xf32>
    %c18 = arith.constant 18 : index
    %c0_21 = arith.constant 0 : index
    %75 = vector.load %arg13[%c18, %c0_21] : memref<25x896xf32, #tpu.memory_space<vmem>>, vector<1x896xf32>
    %76 = vector.shape_cast %75 : vector<1x896xf32> to vector<896xf32>
    %77 = vector.shape_cast %74 : vector<896xf32> to vector<1x896xf32>
    tpu.vector_store %arg13[%c18, %c0_21], %77 {strides = array<i32>} : memref<25x896xf32, #tpu.memory_space<vmem>>, vector<1x896xf32>,
    %78 = vector.extract_strided_slice %1 {offsets = [100], sizes = [896], strides = [1]} : vector<1056xf32> to vector<896xf32>
    %c19 = arith.constant 19 : index
    %c0_22 = arith.constant 0 : index
    %79 = vector.load %arg13[%c19, %c0_22] : memref<25x896xf32, #tpu.memory_space<vmem>>, vector<1x896xf32>
    %80 = vector.shape_cast %79 : vector<1x896xf32> to vector<896xf32>
    %81 = vector.shape_cast %78 : vector<896xf32> to vector<1x896xf32>
    tpu.vector_store %arg13[%c19, %c0_22], %81 {strides = array<i32>} : memref<25x896xf32, #tpu.memory_space<vmem>>, vector<1x896xf32>,
    %82 = vector.extract_strided_slice %1 {offsets = [128], sizes = [896], strides = [1]} : vector<1056xf32> to vector<896xf32>
    %c20 = arith.constant 20 : index
    %c0_23 = arith.constant 0 : index
    %83 = vector.load %arg13[%c20, %c0_23] : memref<25x896xf32, #tpu.memory_space<vmem>>, vector<1x896xf32>
    %84 = vector.shape_cast %83 : vector<1x896xf32> to vector<896xf32>
    %85 = vector.shape_cast %82 : vector<896xf32> to vector<1x896xf32>
    tpu.vector_store %arg13[%c20, %c0_23], %85 {strides = array<i32>} : memref<25x896xf32, #tpu.memory_space<vmem>>, vector<1x896xf32>,
    %86 = vector.extract_strided_slice %1 {offsets = [129], sizes = [896], strides = [1]} : vector<1056xf32> to vector<896xf32>
    %c21 = arith.constant 21 : index
    %c0_24 = arith.constant 0 : index
    %87 = vector.load %arg13[%c21, %c0_24] : memref<25x896xf32, #tpu.memory_space<vmem>>, vector<1x896xf32>
    %88 = vector.shape_cast %87 : vector<1x896xf32> to vector<896xf32>
    %89 = vector.shape_cast %86 : vector<896xf32> to vector<1x896xf32>
    tpu.vector_store %arg13[%c21, %c0_24], %89 {strides = array<i32>} : memref<25x896xf32, #tpu.memory_space<vmem>>, vector<1x896xf32>,
    %90 = vector.extract_strided_slice %1 {offsets = [130], sizes = [896], strides = [1]} : vector<1056xf32> to vector<896xf32>
    %c22 = arith.constant 22 : index
    %c0_25 = arith.constant 0 : index
    %91 = vector.load %arg13[%c22, %c0_25] : memref<25x896xf32, #tpu.memory_space<vmem>>, vector<1x896xf32>
    %92 = vector.shape_cast %91 : vector<1x896xf32> to vector<896xf32>
    %93 = vector.shape_cast %90 : vector<896xf32> to vector<1x896xf32>
    tpu.vector_store %arg13[%c22, %c0_25], %93 {strides = array<i32>} : memref<25x896xf32, #tpu.memory_space<vmem>>, vector<1x896xf32>,
    %94 = vector.extract_strided_slice %1 {offsets = [131], sizes = [896], strides = [1]} : vector<1056xf32> to vector<896xf32>
    %c23 = arith.constant 23 : index
    %c0_26 = arith.constant 0 : index
    %95 = vector.load %arg13[%c23, %c0_26] : memref<25x896xf32, #tpu.memory_space<vmem>>, vector<1x896xf32>
    %96 = vector.shape_cast %95 : vector<1x896xf32> to vector<896xf32>
    %97 = vector.shape_cast %94 : vector<896xf32> to vector<1x896xf32>
    tpu.vector_store %arg13[%c23, %c0_26], %97 {strides = array<i32>} : memref<25x896xf32, #tpu.memory_space<vmem>>, vector<1x896xf32>,
    %98 = vector.extract_strided_slice %1 {offsets = [132], sizes = [896], strides = [1]} : vector<1056xf32> to vector<896xf32>
    %c24 = arith.constant 24 : index
    %c0_27 = arith.constant 0 : index
    %99 = vector.load %arg13[%c24, %c0_27] : memref<25x896xf32, #tpu.memory_space<vmem>>, vector<1x896xf32>
    %100 = vector.shape_cast %99 : vector<1x896xf32> to vector<896xf32>
    %101 = vector.shape_cast %98 : vector<896xf32> to vector<1x896xf32>
    tpu.vector_store %arg13[%c24, %c0_27], %101 {strides = array<i32>} : memref<25x896xf32, #tpu.memory_space<vmem>>, vector<1x896xf32>,
    %c0_28 = arith.constant 0 : index
    %c0_29 = arith.constant 0 : index
    %102 = vector.load %arg2[%c0_28, %c0_29] : memref<6x25xf32, #tpu.memory_space<vmem>>, vector<6x25xf32>
    %c0_30 = arith.constant 0 : index
    %c0_31 = arith.constant 0 : index
    %103 = vector.load %arg13[%c0_30, %c0_31] : memref<25x896xf32, #tpu.memory_space<vmem>>, vector<25x896xf32>
    %cst = arith.constant dense<0.000000e+00> : vector<6x896xf32>
    %104 = tpu.matmul %102, %103, %cst {dimension_numbers = #tpu.dot_dimension_numbers<[1], [0], [0], [1], [0, 0, 1, 1], [], []>} : vector<6x25xf32>, vector<25x896xf32>, vector<6x896xf32> -> vector<6x896xf32>
    %c0_32 = arith.constant 0 : index
    %c0_33 = arith.constant 0 : index
    %105 = vector.load %arg3[%c0_32, %c0_33] : memref<6x1xf32, #tpu.memory_space<vmem>>, vector<6x1xf32>
    %106 = vector.broadcast %105 : vector<6x1xf32> to vector<6x896xf32>
    %107 = arith.addf %104, %106 : vector<6x896xf32>
    %cst_34 = arith.constant 0.000000e+00 : f32
    %108 = vector.broadcast %cst_34 : f32 to vector<6x896xf32>
    %109 = arith.maximumf %107, %108 : vector<6x896xf32>
    %110 = vector.extract_strided_slice %109 {offsets = [0, 0], sizes = [6, 864], strides = [1, 1]} : vector<6x896xf32> to vector<6x864xf32>
    %111 = vector.extract_strided_slice %109 {offsets = [0, 32], sizes = [6, 864], strides = [1, 1]} : vector<6x896xf32> to vector<6x864xf32>
    %112 = arith.maximumf %110, %111 : vector<6x864xf32>
    %113 = vector.extract_strided_slice %112 {offsets = [0, 0], sizes = [6, 863], strides = [1, 1]} : vector<6x864xf32> to vector<6x863xf32>
    %114 = vector.extract_strided_slice %112 {offsets = [0, 1], sizes = [6, 863], strides = [1, 1]} : vector<6x864xf32> to vector<6x863xf32>
    %115 = arith.maximumf %113, %114 : vector<6x863xf32>
    %116 = vector.extract_strided_slice %115 {offsets = [0, 0], sizes = [1, 596], strides = [1, 1]} : vector<6x863xf32> to vector<1x596xf32>
    %117 = vector.shape_cast %116 : vector<1x596xf32> to vector<596xf32>
    %c0_35 = arith.constant 0 : index
    %c0_36 = arith.constant 0 : index
    %118 = vector.load %arg14[%c0_35, %c0_36] : memref<150x596xf32, #tpu.memory_space<vmem>>, vector<1x596xf32>
    %119 = vector.shape_cast %118 : vector<1x596xf32> to vector<596xf32>
    %120 = vector.shape_cast %117 : vector<596xf32> to vector<1x596xf32>
    tpu.vector_store %arg14[%c0_35, %c0_36], %120 {strides = array<i32>} : memref<150x596xf32, #tpu.memory_space<vmem>>, vector<1x596xf32>,
    %121 = vector.extract_strided_slice %115 {offsets = [0, 2], sizes = [1, 596], strides = [1, 1]} : vector<6x863xf32> to vector<1x596xf32>
    %122 = vector.shape_cast %121 : vector<1x596xf32> to vector<596xf32>
    %c1_37 = arith.constant 1 : index
    %c0_38 = arith.constant 0 : index
    %123 = vector.load %arg14[%c1_37, %c0_38] : memref<150x596xf32, #tpu.memory_space<vmem>>, vector<1x596xf32>
    %124 = vector.shape_cast %123 : vector<1x596xf32> to vector<596xf32>
    %125 = vector.shape_cast %122 : vector<596xf32> to vector<1x596xf32>
    tpu.vector_store %arg14[%c1_37, %c0_38], %125 {strides = array<i32>} : memref<150x596xf32, #tpu.memory_space<vmem>>, vector<1x596xf32>,
    %126 = vector.extract_strided_slice %115 {offsets = [0, 4], sizes = [1, 596], strides = [1, 1]} : vector<6x863xf32> to vector<1x596xf32>
    %127 = vector.shape_cast %126 : vector<1x596xf32> to vector<596xf32>
    %c2_39 = arith.constant 2 : index
    %c0_40 = arith.constant 0 : index
    %128 = vector.load %arg14[%c2_39, %c0_40] : memref<150x596xf32, #tpu.memory_space<vmem>>, vector<1x596xf32>
    %129 = vector.shape_cast %128 : vector<1x596xf32> to vector<596xf32>
    %130 = vector.shape_cast %127 : vector<596xf32> to vector<1x596xf32>
    tpu.vector_store %arg14[%c2_39, %c0_40], %130 {strides = array<i32>} : memref<150x596xf32, #tpu.memory_space<vmem>>, vector<1x596xf32>,
    %131 = vector.extract_strided_slice %115 {offsets = [0, 6], sizes = [1, 596], strides = [1, 1]} : vector<6x863xf32> to vector<1x596xf32>
    %132 = vector.shape_cast %131 : vector<1x596xf32> to vector<596xf32>
    %c3_41 = arith.constant 3 : index
    %c0_42 = arith.constant 0 : index
    %133 = vector.load %arg14[%c3_41, %c0_42] : memref<150x596xf32, #tpu.memory_space<vmem>>, vector<1x596xf32>
    %134 = vector.shape_cast %133 : vector<1x596xf32> to vector<596xf32>
    %135 = vector.shape_cast %132 : vector<596xf32> to vector<1x596xf32>
    tpu.vector_store %arg14[%c3_41, %c0_42], %135 {strides = array<i32>} : memref<150x596xf32, #tpu.memory_space<vmem>>, vector<1x596xf32>,
    %136 = vector.extract_strided_slice %115 {offsets = [0, 8], sizes = [1, 596], strides = [1, 1]} : vector<6x863xf32> to vector<1x596xf32>
    %137 = vector.shape_cast %136 : vector<1x596xf32> to vector<596xf32>
    %c4_43 = arith.constant 4 : index
    %c0_44 = arith.constant 0 : index
    %138 = vector.load %arg14[%c4_43, %c0_44] : memref<150x596xf32, #tpu.memory_space<vmem>>, vector<1x596xf32>
    %139 = vector.shape_cast %138 : vector<1x596xf32> to vector<596xf32>
    %140 = vector.shape_cast %137 : vector<596xf32> to vector<1x596xf32>
    tpu.vector_store %arg14[%c4_43, %c0_44], %140 {strides = array<i32>} : memref<150x596xf32, #tpu.memory_space<vmem>>, vector<1x596xf32>,
    %141 = vector.extract_strided_slice %115 {offsets = [0, 64], sizes = [1, 596], strides = [1, 1]} : vector<6x863xf32> to vector<1x596xf32>
    %142 = vector.shape_cast %141 : vector<1x596xf32> to vector<596xf32>
    %c5_45 = arith.constant 5 : index
    %c0_46 = arith.constant 0 : index
    %143 = vector.load %arg14[%c5_45, %c0_46] : memref<150x596xf32, #tpu.memory_space<vmem>>, vector<1x596xf32>
    %144 = vector.shape_cast %143 : vector<1x596xf32> to vector<596xf32>
    %145 = vector.shape_cast %142 : vector<596xf32> to vector<1x596xf32>
    tpu.vector_store %arg14[%c5_45, %c0_46], %145 {strides = array<i32>} : memref<150x596xf32, #tpu.memory_space<vmem>>, vector<1x596xf32>,
    %146 = vector.extract_strided_slice %115 {offsets = [0, 66], sizes = [1, 596], strides = [1, 1]} : vector<6x863xf32> to vector<1x596xf32>
    %147 = vector.shape_cast %146 : vector<1x596xf32> to vector<596xf32>
    %c6_47 = arith.constant 6 : index
    %c0_48 = arith.constant 0 : index
    %148 = vector.load %arg14[%c6_47, %c0_48] : memref<150x596xf32, #tpu.memory_space<vmem>>, vector<1x596xf32>
    %149 = vector.shape_cast %148 : vector<1x596xf32> to vector<596xf32>
    %150 = vector.shape_cast %147 : vector<596xf32> to vector<1x596xf32>
    tpu.vector_store %arg14[%c6_47, %c0_48], %150 {strides = array<i32>} : memref<150x596xf32, #tpu.memory_space<vmem>>, vector<1x596xf32>,
    %151 = vector.extract_strided_slice %115 {offsets = [0, 68], sizes = [1, 596], strides = [1, 1]} : vector<6x863xf32> to vector<1x596xf32>
    %152 = vector.shape_cast %151 : vector<1x596xf32> to vector<596xf32>
    %c7_49 = arith.constant 7 : index
    %c0_50 = arith.constant 0 : index
    %153 = vector.load %arg14[%c7_49, %c0_50] : memref<150x596xf32, #tpu.memory_space<vmem>>, vector<1x596xf32>
    %154 = vector.shape_cast %153 : vector<1x596xf32> to vector<596xf32>
    %155 = vector.shape_cast %152 : vector<596xf32> to vector<1x596xf32>
    tpu.vector_store %arg14[%c7_49, %c0_50], %155 {strides = array<i32>} : memref<150x596xf32, #tpu.memory_space<vmem>>, vector<1x596xf32>,
    %156 = vector.extract_strided_slice %115 {offsets = [0, 70], sizes = [1, 596], strides = [1, 1]} : vector<6x863xf32> to vector<1x596xf32>
    %157 = vector.shape_cast %156 : vector<1x596xf32> to vector<596xf32>
    %c8_51 = arith.constant 8 : index
    %c0_52 = arith.constant 0 : index
    %158 = vector.load %arg14[%c8_51, %c0_52] : memref<150x596xf32, #tpu.memory_space<vmem>>, vector<1x596xf32>
    %159 = vector.shape_cast %158 : vector<1x596xf32> to vector<596xf32>
    %160 = vector.shape_cast %157 : vector<596xf32> to vector<1x596xf32>
    tpu.vector_store %arg14[%c8_51, %c0_52], %160 {strides = array<i32>} : memref<150x596xf32, #tpu.memory_space<vmem>>, vector<1x596xf32>,
    %161 = vector.extract_strided_slice %115 {offsets = [0, 72], sizes = [1, 596], strides = [1, 1]} : vector<6x863xf32> to vector<1x596xf32>
    %162 = vector.shape_cast %161 : vector<1x596xf32> to vector<596xf32>
    %c9_53 = arith.constant 9 : index
    %c0_54 = arith.constant 0 : index
    %163 = vector.load %arg14[%c9_53, %c0_54] : memref<150x596xf32, #tpu.memory_space<vmem>>, vector<1x596xf32>
    %164 = vector.shape_cast %163 : vector<1x596xf32> to vector<596xf32>
    %165 = vector.shape_cast %162 : vector<596xf32> to vector<1x596xf32>
    tpu.vector_store %arg14[%c9_53, %c0_54], %165 {strides = array<i32>} : memref<150x596xf32, #tpu.memory_space<vmem>>, vector<1x596xf32>,
    %166 = vector.extract_strided_slice %115 {offsets = [0, 128], sizes = [1, 596], strides = [1, 1]} : vector<6x863xf32> to vector<1x596xf32>
    %167 = vector.shape_cast %166 : vector<1x596xf32> to vector<596xf32>
    %c10_55 = arith.constant 10 : index
    %c0_56 = arith.constant 0 : index
    %168 = vector.load %arg14[%c10_55, %c0_56] : memref<150x596xf32, #tpu.memory_space<vmem>>, vector<1x596xf32>
    %169 = vector.shape_cast %168 : vector<1x596xf32> to vector<596xf32>
    %170 = vector.shape_cast %167 : vector<596xf32> to vector<1x596xf32>
    tpu.vector_store %arg14[%c10_55, %c0_56], %170 {strides = array<i32>} : memref<150x596xf32, #tpu.memory_space<vmem>>, vector<1x596xf32>,
    %171 = vector.extract_strided_slice %115 {offsets = [0, 130], sizes = [1, 596], strides = [1, 1]} : vector<6x863xf32> to vector<1x596xf32>
    %172 = vector.shape_cast %171 : vector<1x596xf32> to vector<596xf32>
    %c11_57 = arith.constant 11 : index
    %c0_58 = arith.constant 0 : index
    %173 = vector.load %arg14[%c11_57, %c0_58] : memref<150x596xf32, #tpu.memory_space<vmem>>, vector<1x596xf32>
    %174 = vector.shape_cast %173 : vector<1x596xf32> to vector<596xf32>
    %175 = vector.shape_cast %172 : vector<596xf32> to vector<1x596xf32>
    tpu.vector_store %arg14[%c11_57, %c0_58], %175 {strides = array<i32>} : memref<150x596xf32, #tpu.memory_space<vmem>>, vector<1x596xf32>,
    %176 = vector.extract_strided_slice %115 {offsets = [0, 132], sizes = [1, 596], strides = [1, 1]} : vector<6x863xf32> to vector<1x596xf32>
    %177 = vector.shape_cast %176 : vector<1x596xf32> to vector<596xf32>
    %c12_59 = arith.constant 12 : index
    %c0_60 = arith.constant 0 : index
    %178 = vector.load %arg14[%c12_59, %c0_60] : memref<150x596xf32, #tpu.memory_space<vmem>>, vector<1x596xf32>
    %179 = vector.shape_cast %178 : vector<1x596xf32> to vector<596xf32>
    %180 = vector.shape_cast %177 : vector<596xf32> to vector<1x596xf32>
    tpu.vector_store %arg14[%c12_59, %c0_60], %180 {strides = array<i32>} : memref<150x596xf32, #tpu.memory_space<vmem>>, vector<1x596xf32>,
    %181 = vector.extract_strided_slice %115 {offsets = [0, 134], sizes = [1, 596], strides = [1, 1]} : vector<6x863xf32> to vector<1x596xf32>
    %182 = vector.shape_cast %181 : vector<1x596xf32> to vector<596xf32>
    %c13_61 = arith.constant 13 : index
    %c0_62 = arith.constant 0 : index
    %183 = vector.load %arg14[%c13_61, %c0_62] : memref<150x596xf32, #tpu.memory_space<vmem>>, vector<1x596xf32>
    %184 = vector.shape_cast %183 : vector<1x596xf32> to vector<596xf32>
    %185 = vector.shape_cast %182 : vector<596xf32> to vector<1x596xf32>
    tpu.vector_store %arg14[%c13_61, %c0_62], %185 {strides = array<i32>} : memref<150x596xf32, #tpu.memory_space<vmem>>, vector<1x596xf32>,
    %186 = vector.extract_strided_slice %115 {offsets = [0, 136], sizes = [1, 596], strides = [1, 1]} : vector<6x863xf32> to vector<1x596xf32>
    %187 = vector.shape_cast %186 : vector<1x596xf32> to vector<596xf32>
    %c14_63 = arith.constant 14 : index
    %c0_64 = arith.constant 0 : index
    %188 = vector.load %arg14[%c14_63, %c0_64] : memref<150x596xf32, #tpu.memory_space<vmem>>, vector<1x596xf32>
    %189 = vector.shape_cast %188 : vector<1x596xf32> to vector<596xf32>
    %190 = vector.shape_cast %187 : vector<596xf32> to vector<1x596xf32>
    tpu.vector_store %arg14[%c14_63, %c0_64], %190 {strides = array<i32>} : memref<150x596xf32, #tpu.memory_space<vmem>>, vector<1x596xf32>,
    %191 = vector.extract_strided_slice %115 {offsets = [0, 192], sizes = [1, 596], strides = [1, 1]} : vector<6x863xf32> to vector<1x596xf32>
    %192 = vector.shape_cast %191 : vector<1x596xf32> to vector<596xf32>
    %c15_65 = arith.constant 15 : index
    %c0_66 = arith.constant 0 : index
    %193 = vector.load %arg14[%c15_65, %c0_66] : memref<150x596xf32, #tpu.memory_space<vmem>>, vector<1x596xf32>
    %194 = vector.shape_cast %193 : vector<1x596xf32> to vector<596xf32>
    %195 = vector.shape_cast %192 : vector<596xf32> to vector<1x596xf32>
    tpu.vector_store %arg14[%c15_65, %c0_66], %195 {strides = array<i32>} : memref<150x596xf32, #tpu.memory_space<vmem>>, vector<1x596xf32>,
    %196 = vector.extract_strided_slice %115 {offsets = [0, 194], sizes = [1, 596], strides = [1, 1]} : vector<6x863xf32> to vector<1x596xf32>
    %197 = vector.shape_cast %196 : vector<1x596xf32> to vector<596xf32>
    %c16_67 = arith.constant 16 : index
    %c0_68 = arith.constant 0 : index
    %198 = vector.load %arg14[%c16_67, %c0_68] : memref<150x596xf32, #tpu.memory_space<vmem>>, vector<1x596xf32>
    %199 = vector.shape_cast %198 : vector<1x596xf32> to vector<596xf32>
    %200 = vector.shape_cast %197 : vector<596xf32> to vector<1x596xf32>
    tpu.vector_store %arg14[%c16_67, %c0_68], %200 {strides = array<i32>} : memref<150x596xf32, #tpu.memory_space<vmem>>, vector<1x596xf32>,
    %201 = vector.extract_strided_slice %115 {offsets = [0, 196], sizes = [1, 596], strides = [1, 1]} : vector<6x863xf32> to vector<1x596xf32>
    %202 = vector.shape_cast %201 : vector<1x596xf32> to vector<596xf32>
    %c17_69 = arith.constant 17 : index
    %c0_70 = arith.constant 0 : index
    %203 = vector.load %arg14[%c17_69, %c0_70] : memref<150x596xf32, #tpu.memory_space<vmem>>, vector<1x596xf32>
    %204 = vector.shape_cast %203 : vector<1x596xf32> to vector<596xf32>
    %205 = vector.shape_cast %202 : vector<596xf32> to vector<1x596xf32>
    tpu.vector_store %arg14[%c17_69, %c0_70], %205 {strides = array<i32>} : memref<150x596xf32, #tpu.memory_space<vmem>>, vector<1x596xf32>,
    %206 = vector.extract_strided_slice %115 {offsets = [0, 198], sizes = [1, 596], strides = [1, 1]} : vector<6x863xf32> to vector<1x596xf32>
    %207 = vector.shape_cast %206 : vector<1x596xf32> to vector<596xf32>
    %c18_71 = arith.constant 18 : index
    %c0_72 = arith.constant 0 : index
    %208 = vector.load %arg14[%c18_71, %c0_72] : memref<150x596xf32, #tpu.memory_space<vmem>>, vector<1x596xf32>
    %209 = vector.shape_cast %208 : vector<1x596xf32> to vector<596xf32>
    %210 = vector.shape_cast %207 : vector<596xf32> to vector<1x596xf32>
    tpu.vector_store %arg14[%c18_71, %c0_72], %210 {strides = array<i32>} : memref<150x596xf32, #tpu.memory_space<vmem>>, vector<1x596xf32>,
    %211 = vector.extract_strided_slice %115 {offsets = [0, 200], sizes = [1, 596], strides = [1, 1]} : vector<6x863xf32> to vector<1x596xf32>
    %212 = vector.shape_cast %211 : vector<1x596xf32> to vector<596xf32>
    %c19_73 = arith.constant 19 : index
    %c0_74 = arith.constant 0 : index
    %213 = vector.load %arg14[%c19_73, %c0_74] : memref<150x596xf32, #tpu.memory_space<vmem>>, vector<1x596xf32>
    %214 = vector.shape_cast %213 : vector<1x596xf32> to vector<596xf32>
    %215 = vector.shape_cast %212 : vector<596xf32> to vector<1x596xf32>
    tpu.vector_store %arg14[%c19_73, %c0_74], %215 {strides = array<i32>} : memref<150x596xf32, #tpu.memory_space<vmem>>, vector<1x596xf32>,
    %216 = vector.extract_strided_slice %115 {offsets = [0, 256], sizes = [1, 596], strides = [1, 1]} : vector<6x863xf32> to vector<1x596xf32>
    %217 = vector.shape_cast %216 : vector<1x596xf32> to vector<596xf32>
    %c20_75 = arith.constant 20 : index
    %c0_76 = arith.constant 0 : index
    %218 = vector.load %arg14[%c20_75, %c0_76] : memref<150x596xf32, #tpu.memory_space<vmem>>, vector<1x596xf32>
    %219 = vector.shape_cast %218 : vector<1x596xf32> to vector<596xf32>
    %220 = vector.shape_cast %217 : vector<596xf32> to vector<1x596xf32>
    tpu.vector_store %arg14[%c20_75, %c0_76], %220 {strides = array<i32>} : memref<150x596xf32, #tpu.memory_space<vmem>>, vector<1x596xf32>,
    %221 = vector.extract_strided_slice %115 {offsets = [0, 258], sizes = [1, 596], strides = [1, 1]} : vector<6x863xf32> to vector<1x596xf32>
    %222 = vector.shape_cast %221 : vector<1x596xf32> to vector<596xf32>
    %c21_77 = arith.constant 21 : index
    %c0_78 = arith.constant 0 : index
    %223 = vector.load %arg14[%c21_77, %c0_78] : memref<150x596xf32, #tpu.memory_space<vmem>>, vector<1x596xf32>
    %224 = vector.shape_cast %223 : vector<1x596xf32> to vector<596xf32>
    %225 = vector.shape_cast %222 : vector<596xf32> to vector<1x596xf32>
    tpu.vector_store %arg14[%c21_77, %c0_78], %225 {strides = array<i32>} : memref<150x596xf32, #tpu.memory_space<vmem>>, vector<1x596xf32>,
    %226 = vector.extract_strided_slice %115 {offsets = [0, 260], sizes = [1, 596], strides = [1, 1]} : vector<6x863xf32> to vector<1x596xf32>
    %227 = vector.shape_cast %226 : vector<1x596xf32> to vector<596xf32>
    %c22_79 = arith.constant 22 : index
    %c0_80 = arith.constant 0 : index
    %228 = vector.load %arg14[%c22_79, %c0_80] : memref<150x596xf32, #tpu.memory_space<vmem>>, vector<1x596xf32>
    %229 = vector.shape_cast %228 : vector<1x596xf32> to vector<596xf32>
    %230 = vector.shape_cast %227 : vector<596xf32> to vector<1x596xf32>
    tpu.vector_store %arg14[%c22_79, %c0_80], %230 {strides = array<i32>} : memref<150x596xf32, #tpu.memory_space<vmem>>, vector<1x596xf32>,
    %231 = vector.extract_strided_slice %115 {offsets = [0, 262], sizes = [1, 596], strides = [1, 1]} : vector<6x863xf32> to vector<1x596xf32>
    %232 = vector.shape_cast %231 : vector<1x596xf32> to vector<596xf32>
    %c23_81 = arith.constant 23 : index
    %c0_82 = arith.constant 0 : index
    %233 = vector.load %arg14[%c23_81, %c0_82] : memref<150x596xf32, #tpu.memory_space<vmem>>, vector<1x596xf32>
    %234 = vector.shape_cast %233 : vector<1x596xf32> to vector<596xf32>
    %235 = vector.shape_cast %232 : vector<596xf32> to vector<1x596xf32>
    tpu.vector_store %arg14[%c23_81, %c0_82], %235 {strides = array<i32>} : memref<150x596xf32, #tpu.memory_space<vmem>>, vector<1x596xf32>,
    %236 = vector.extract_strided_slice %115 {offsets = [0, 264], sizes = [1, 596], strides = [1, 1]} : vector<6x863xf32> to vector<1x596xf32>
    %237 = vector.shape_cast %236 : vector<1x596xf32> to vector<596xf32>
    %c24_83 = arith.constant 24 : index
    %c0_84 = arith.constant 0 : index
    %238 = vector.load %arg14[%c24_83, %c0_84] : memref<150x596xf32, #tpu.memory_space<vmem>>, vector<1x596xf32>
    %239 = vector.shape_cast %238 : vector<1x596xf32> to vector<596xf32>
    %240 = vector.shape_cast %237 : vector<596xf32> to vector<1x596xf32>
    tpu.vector_store %arg14[%c24_83, %c0_84], %240 {strides = array<i32>} : memref<150x596xf32, #tpu.memory_space<vmem>>, vector<1x596xf32>,
    %241 = vector.extract_strided_slice %115 {offsets = [1, 0], sizes = [1, 596], strides = [1, 1]} : vector<6x863xf32> to vector<1x596xf32>
    %242 = vector.shape_cast %241 : vector<1x596xf32> to vector<596xf32>
    %c25 = arith.constant 25 : index
    %c0_85 = arith.constant 0 : index
    %243 = vector.load %arg14[%c25, %c0_85] : memref<150x596xf32, #tpu.memory_space<vmem>>, vector<1x596xf32>
    %244 = vector.shape_cast %243 : vector<1x596xf32> to vector<596xf32>
    %245 = vector.shape_cast %242 : vector<596xf32> to vector<1x596xf32>
    tpu.vector_store %arg14[%c25, %c0_85], %245 {strides = array<i32>} : memref<150x596xf32, #tpu.memory_space<vmem>>, vector<1x596xf32>,
    %246 = vector.extract_strided_slice %115 {offsets = [1, 2], sizes = [1, 596], strides = [1, 1]} : vector<6x863xf32> to vector<1x596xf32>
    %247 = vector.shape_cast %246 : vector<1x596xf32> to vector<596xf32>
    %c26 = arith.constant 26 : index
    %c0_86 = arith.constant 0 : index
    %248 = vector.load %arg14[%c26, %c0_86] : memref<150x596xf32, #tpu.memory_space<vmem>>, vector<1x596xf32>
    %249 = vector.shape_cast %248 : vector<1x596xf32> to vector<596xf32>
    %250 = vector.shape_cast %247 : vector<596xf32> to vector<1x596xf32>
    tpu.vector_store %arg14[%c26, %c0_86], %250 {strides = array<i32>} : memref<150x596xf32, #tpu.memory_space<vmem>>, vector<1x596xf32>,
    %251 = vector.extract_strided_slice %115 {offsets = [1, 4], sizes = [1, 596], strides = [1, 1]} : vector<6x863xf32> to vector<1x596xf32>
    %252 = vector.shape_cast %251 : vector<1x596xf32> to vector<596xf32>
    %c27 = arith.constant 27 : index
    %c0_87 = arith.constant 0 : index
    %253 = vector.load %arg14[%c27, %c0_87] : memref<150x596xf32, #tpu.memory_space<vmem>>, vector<1x596xf32>
    %254 = vector.shape_cast %253 : vector<1x596xf32> to vector<596xf32>
    %255 = vector.shape_cast %252 : vector<596xf32> to vector<1x596xf32>
    tpu.vector_store %arg14[%c27, %c0_87], %255 {strides = array<i32>} : memref<150x596xf32, #tpu.memory_space<vmem>>, vector<1x596xf32>,
    %256 = vector.extract_strided_slice %115 {offsets = [1, 6], sizes = [1, 596], strides = [1, 1]} : vector<6x863xf32> to vector<1x596xf32>
    %257 = vector.shape_cast %256 : vector<1x596xf32> to vector<596xf32>
    %c28 = arith.constant 28 : index
    %c0_88 = arith.constant 0 : index
    %258 = vector.load %arg14[%c28, %c0_88] : memref<150x596xf32, #tpu.memory_space<vmem>>, vector<1x596xf32>
    %259 = vector.shape_cast %258 : vector<1x596xf32> to vector<596xf32>
    %260 = vector.shape_cast %257 : vector<596xf32> to vector<1x596xf32>
    tpu.vector_store %arg14[%c28, %c0_88], %260 {strides = array<i32>} : memref<150x596xf32, #tpu.memory_space<vmem>>, vector<1x596xf32>,
    %261 = vector.extract_strided_slice %115 {offsets = [1, 8], sizes = [1, 596], strides = [1, 1]} : vector<6x863xf32> to vector<1x596xf32>
    %262 = vector.shape_cast %261 : vector<1x596xf32> to vector<596xf32>
    %c29 = arith.constant 29 : index
    %c0_89 = arith.constant 0 : index
    %263 = vector.load %arg14[%c29, %c0_89] : memref<150x596xf32, #tpu.memory_space<vmem>>, vector<1x596xf32>
    %264 = vector.shape_cast %263 : vector<1x596xf32> to vector<596xf32>
    %265 = vector.shape_cast %262 : vector<596xf32> to vector<1x596xf32>
    tpu.vector_store %arg14[%c29, %c0_89], %265 {strides = array<i32>} : memref<150x596xf32, #tpu.memory_space<vmem>>, vector<1x596xf32>,
    %266 = vector.extract_strided_slice %115 {offsets = [1, 64], sizes = [1, 596], strides = [1, 1]} : vector<6x863xf32> to vector<1x596xf32>
    %267 = vector.shape_cast %266 : vector<1x596xf32> to vector<596xf32>
    %c30 = arith.constant 30 : index
    %c0_90 = arith.constant 0 : index
    %268 = vector.load %arg14[%c30, %c0_90] : memref<150x596xf32, #tpu.memory_space<vmem>>, vector<1x596xf32>
    %269 = vector.shape_cast %268 : vector<1x596xf32> to vector<596xf32>
    %270 = vector.shape_cast %267 : vector<596xf32> to vector<1x596xf32>
    tpu.vector_store %arg14[%c30, %c0_90], %270 {strides = array<i32>} : memref<150x596xf32, #tpu.memory_space<vmem>>, vector<1x596xf32>,
    %271 = vector.extract_strided_slice %115 {offsets = [1, 66], sizes = [1, 596], strides = [1, 1]} : vector<6x863xf32> to vector<1x596xf32>
    %272 = vector.shape_cast %271 : vector<1x596xf32> to vector<596xf32>
    %c31 = arith.constant 31 : index
    %c0_91 = arith.constant 0 : index
    %273 = vector.load %arg14[%c31, %c0_91] : memref<150x596xf32, #tpu.memory_space<vmem>>, vector<1x596xf32>
    %274 = vector.shape_cast %273 : vector<1x596xf32> to vector<596xf32>
    %275 = vector.shape_cast %272 : vector<596xf32> to vector<1x596xf32>
    tpu.vector_store %arg14[%c31, %c0_91], %275 {strides = array<i32>} : memref<150x596xf32, #tpu.memory_space<vmem>>, vector<1x596xf32>,
    %276 = vector.extract_strided_slice %115 {offsets = [1, 68], sizes = [1, 596], strides = [1, 1]} : vector<6x863xf32> to vector<1x596xf32>
    %277 = vector.shape_cast %276 : vector<1x596xf32> to vector<596xf32>
    %c32 = arith.constant 32 : index
    %c0_92 = arith.constant 0 : index
    %278 = vector.load %arg14[%c32, %c0_92] : memref<150x596xf32, #tpu.memory_space<vmem>>, vector<1x596xf32>
    %279 = vector.shape_cast %278 : vector<1x596xf32> to vector<596xf32>
    %280 = vector.shape_cast %277 : vector<596xf32> to vector<1x596xf32>
    tpu.vector_store %arg14[%c32, %c0_92], %280 {strides = array<i32>} : memref<150x596xf32, #tpu.memory_space<vmem>>, vector<1x596xf32>,
    %281 = vector.extract_strided_slice %115 {offsets = [1, 70], sizes = [1, 596], strides = [1, 1]} : vector<6x863xf32> to vector<1x596xf32>
    %282 = vector.shape_cast %281 : vector<1x596xf32> to vector<596xf32>
    %c33 = arith.constant 33 : index
    %c0_93 = arith.constant 0 : index
    %283 = vector.load %arg14[%c33, %c0_93] : memref<150x596xf32, #tpu.memory_space<vmem>>, vector<1x596xf32>
    %284 = vector.shape_cast %283 : vector<1x596xf32> to vector<596xf32>
    %285 = vector.shape_cast %282 : vector<596xf32> to vector<1x596xf32>
    tpu.vector_store %arg14[%c33, %c0_93], %285 {strides = array<i32>} : memref<150x596xf32, #tpu.memory_space<vmem>>, vector<1x596xf32>,
    %286 = vector.extract_strided_slice %115 {offsets = [1, 72], sizes = [1, 596], strides = [1, 1]} : vector<6x863xf32> to vector<1x596xf32>
    %287 = vector.shape_cast %286 : vector<1x596xf32> to vector<596xf32>
    %c34 = arith.constant 34 : index
    %c0_94 = arith.constant 0 : index
    %288 = vector.load %arg14[%c34, %c0_94] : memref<150x596xf32, #tpu.memory_space<vmem>>, vector<1x596xf32>
    %289 = vector.shape_cast %288 : vector<1x596xf32> to vector<596xf32>
    %290 = vector.shape_cast %287 : vector<596xf32> to vector<1x596xf32>
    tpu.vector_store %arg14[%c34, %c0_94], %290 {strides = array<i32>} : memref<150x596xf32, #tpu.memory_space<vmem>>, vector<1x596xf32>,
    %291 = vector.extract_strided_slice %115 {offsets = [1, 128], sizes = [1, 596], strides = [1, 1]} : vector<6x863xf32> to vector<1x596xf32>
    %292 = vector.shape_cast %291 : vector<1x596xf32> to vector<596xf32>
    %c35 = arith.constant 35 : index
    %c0_95 = arith.constant 0 : index
    %293 = vector.load %arg14[%c35, %c0_95] : memref<150x596xf32, #tpu.memory_space<vmem>>, vector<1x596xf32>
    %294 = vector.shape_cast %293 : vector<1x596xf32> to vector<596xf32>
    %295 = vector.shape_cast %292 : vector<596xf32> to vector<1x596xf32>
    tpu.vector_store %arg14[%c35, %c0_95], %295 {strides = array<i32>} : memref<150x596xf32, #tpu.memory_space<vmem>>, vector<1x596xf32>,
    %296 = vector.extract_strided_slice %115 {offsets = [1, 130], sizes = [1, 596], strides = [1, 1]} : vector<6x863xf32> to vector<1x596xf32>
    %297 = vector.shape_cast %296 : vector<1x596xf32> to vector<596xf32>
    %c36 = arith.constant 36 : index
    %c0_96 = arith.constant 0 : index
    %298 = vector.load %arg14[%c36, %c0_96] : memref<150x596xf32, #tpu.memory_space<vmem>>, vector<1x596xf32>
    %299 = vector.shape_cast %298 : vector<1x596xf32> to vector<596xf32>
    %300 = vector.shape_cast %297 : vector<596xf32> to vector<1x596xf32>
    tpu.vector_store %arg14[%c36, %c0_96], %300 {strides = array<i32>} : memref<150x596xf32, #tpu.memory_space<vmem>>, vector<1x596xf32>,
    %301 = vector.extract_strided_slice %115 {offsets = [1, 132], sizes = [1, 596], strides = [1, 1]} : vector<6x863xf32> to vector<1x596xf32>
    %302 = vector.shape_cast %301 : vector<1x596xf32> to vector<596xf32>
    %c37 = arith.constant 37 : index
    %c0_97 = arith.constant 0 : index
    %303 = vector.load %arg14[%c37, %c0_97] : memref<150x596xf32, #tpu.memory_space<vmem>>, vector<1x596xf32>
    %304 = vector.shape_cast %303 : vector<1x596xf32> to vector<596xf32>
    %305 = vector.shape_cast %302 : vector<596xf32> to vector<1x596xf32>
    tpu.vector_store %arg14[%c37, %c0_97], %305 {strides = array<i32>} : memref<150x596xf32, #tpu.memory_space<vmem>>, vector<1x596xf32>,
    %306 = vector.extract_strided_slice %115 {offsets = [1, 134], sizes = [1, 596], strides = [1, 1]} : vector<6x863xf32> to vector<1x596xf32>
    %307 = vector.shape_cast %306 : vector<1x596xf32> to vector<596xf32>
    %c38 = arith.constant 38 : index
    %c0_98 = arith.constant 0 : index
    %308 = vector.load %arg14[%c38, %c0_98] : memref<150x596xf32, #tpu.memory_space<vmem>>, vector<1x596xf32>
    %309 = vector.shape_cast %308 : vector<1x596xf32> to vector<596xf32>
    %310 = vector.shape_cast %307 : vector<596xf32> to vector<1x596xf32>
    tpu.vector_store %arg14[%c38, %c0_98], %310 {strides = array<i32>} : memref<150x596xf32, #tpu.memory_space<vmem>>, vector<1x596xf32>,
    %311 = vector.extract_strided_slice %115 {offsets = [1, 136], sizes = [1, 596], strides = [1, 1]} : vector<6x863xf32> to vector<1x596xf32>
    %312 = vector.shape_cast %311 : vector<1x596xf32> to vector<596xf32>
    %c39 = arith.constant 39 : index
    %c0_99 = arith.constant 0 : index
    %313 = vector.load %arg14[%c39, %c0_99] : memref<150x596xf32, #tpu.memory_space<vmem>>, vector<1x596xf32>
    %314 = vector.shape_cast %313 : vector<1x596xf32> to vector<596xf32>
    %315 = vector.shape_cast %312 : vector<596xf32> to vector<1x596xf32>
    tpu.vector_store %arg14[%c39, %c0_99], %315 {strides = array<i32>} : memref<150x596xf32, #tpu.memory_space<vmem>>, vector<1x596xf32>,
    %316 = vector.extract_strided_slice %115 {offsets = [1, 192], sizes = [1, 596], strides = [1, 1]} : vector<6x863xf32> to vector<1x596xf32>
    %317 = vector.shape_cast %316 : vector<1x596xf32> to vector<596xf32>
    %c40 = arith.constant 40 : index
    %c0_100 = arith.constant 0 : index
    %318 = vector.load %arg14[%c40, %c0_100] : memref<150x596xf32, #tpu.memory_space<vmem>>, vector<1x596xf32>
    %319 = vector.shape_cast %318 : vector<1x596xf32> to vector<596xf32>
    %320 = vector.shape_cast %317 : vector<596xf32> to vector<1x596xf32>
    tpu.vector_store %arg14[%c40, %c0_100], %320 {strides = array<i32>} : memref<150x596xf32, #tpu.memory_space<vmem>>, vector<1x596xf32>,
    %321 = vector.extract_strided_slice %115 {offsets = [1, 194], sizes = [1, 596], strides = [1, 1]} : vector<6x863xf32> to vector<1x596xf32>
    %322 = vector.shape_cast %321 : vector<1x596xf32> to vector<596xf32>
    %c41 = arith.constant 41 : index
    %c0_101 = arith.constant 0 : index
    %323 = vector.load %arg14[%c41, %c0_101] : memref<150x596xf32, #tpu.memory_space<vmem>>, vector<1x596xf32>
    %324 = vector.shape_cast %323 : vector<1x596xf32> to vector<596xf32>
    %325 = vector.shape_cast %322 : vector<596xf32> to vector<1x596xf32>
    tpu.vector_store %arg14[%c41, %c0_101], %325 {strides = array<i32>} : memref<150x596xf32, #tpu.memory_space<vmem>>, vector<1x596xf32>,
    %326 = vector.extract_strided_slice %115 {offsets = [1, 196], sizes = [1, 596], strides = [1, 1]} : vector<6x863xf32> to vector<1x596xf32>
    %327 = vector.shape_cast %326 : vector<1x596xf32> to vector<596xf32>
    %c42 = arith.constant 42 : index
    %c0_102 = arith.constant 0 : index
    %328 = vector.load %arg14[%c42, %c0_102] : memref<150x596xf32, #tpu.memory_space<vmem>>, vector<1x596xf32>
    %329 = vector.shape_cast %328 : vector<1x596xf32> to vector<596xf32>
    %330 = vector.shape_cast %327 : vector<596xf32> to vector<1x596xf32>
    tpu.vector_store %arg14[%c42, %c0_102], %330 {strides = array<i32>} : memref<150x596xf32, #tpu.memory_space<vmem>>, vector<1x596xf32>,
    %331 = vector.extract_strided_slice %115 {offsets = [1, 198], sizes = [1, 596], strides = [1, 1]} : vector<6x863xf32> to vector<1x596xf32>
    %332 = vector.shape_cast %331 : vector<1x596xf32> to vector<596xf32>
    %c43 = arith.constant 43 : index
    %c0_103 = arith.constant 0 : index
    %333 = vector.load %arg14[%c43, %c0_103] : memref<150x596xf32, #tpu.memory_space<vmem>>, vector<1x596xf32>
    %334 = vector.shape_cast %333 : vector<1x596xf32> to vector<596xf32>
    %335 = vector.shape_cast %332 : vector<596xf32> to vector<1x596xf32>
    tpu.vector_store %arg14[%c43, %c0_103], %335 {strides = array<i32>} : memref<150x596xf32, #tpu.memory_space<vmem>>, vector<1x596xf32>,
    %336 = vector.extract_strided_slice %115 {offsets = [1, 200], sizes = [1, 596], strides = [1, 1]} : vector<6x863xf32> to vector<1x596xf32>
    %337 = vector.shape_cast %336 : vector<1x596xf32> to vector<596xf32>
    %c44 = arith.constant 44 : index
    %c0_104 = arith.constant 0 : index
    %338 = vector.load %arg14[%c44, %c0_104] : memref<150x596xf32, #tpu.memory_space<vmem>>, vector<1x596xf32>
    %339 = vector.shape_cast %338 : vector<1x596xf32> to vector<596xf32>
    %340 = vector.shape_cast %337 : vector<596xf32> to vector<1x596xf32>
    tpu.vector_store %arg14[%c44, %c0_104], %340 {strides = array<i32>} : memref<150x596xf32, #tpu.memory_space<vmem>>, vector<1x596xf32>,
    %341 = vector.extract_strided_slice %115 {offsets = [1, 256], sizes = [1, 596], strides = [1, 1]} : vector<6x863xf32> to vector<1x596xf32>
    %342 = vector.shape_cast %341 : vector<1x596xf32> to vector<596xf32>
    %c45 = arith.constant 45 : index
    %c0_105 = arith.constant 0 : index
    %343 = vector.load %arg14[%c45, %c0_105] : memref<150x596xf32, #tpu.memory_space<vmem>>, vector<1x596xf32>
    %344 = vector.shape_cast %343 : vector<1x596xf32> to vector<596xf32>
    %345 = vector.shape_cast %342 : vector<596xf32> to vector<1x596xf32>
    tpu.vector_store %arg14[%c45, %c0_105], %345 {strides = array<i32>} : memref<150x596xf32, #tpu.memory_space<vmem>>, vector<1x596xf32>,
    %346 = vector.extract_strided_slice %115 {offsets = [1, 258], sizes = [1, 596], strides = [1, 1]} : vector<6x863xf32> to vector<1x596xf32>
    %347 = vector.shape_cast %346 : vector<1x596xf32> to vector<596xf32>
    %c46 = arith.constant 46 : index
    %c0_106 = arith.constant 0 : index
    %348 = vector.load %arg14[%c46, %c0_106] : memref<150x596xf32, #tpu.memory_space<vmem>>, vector<1x596xf32>
    %349 = vector.shape_cast %348 : vector<1x596xf32> to vector<596xf32>
    %350 = vector.shape_cast %347 : vector<596xf32> to vector<1x596xf32>
    tpu.vector_store %arg14[%c46, %c0_106], %350 {strides = array<i32>} : memref<150x596xf32, #tpu.memory_space<vmem>>, vector<1x596xf32>,
    %351 = vector.extract_strided_slice %115 {offsets = [1, 260], sizes = [1, 596], strides = [1, 1]} : vector<6x863xf32> to vector<1x596xf32>
    %352 = vector.shape_cast %351 : vector<1x596xf32> to vector<596xf32>
    %c47 = arith.constant 47 : index
    %c0_107 = arith.constant 0 : index
    %353 = vector.load %arg14[%c47, %c0_107] : memref<150x596xf32, #tpu.memory_space<vmem>>, vector<1x596xf32>
    %354 = vector.shape_cast %353 : vector<1x596xf32> to vector<596xf32>
    %355 = vector.shape_cast %352 : vector<596xf32> to vector<1x596xf32>
    tpu.vector_store %arg14[%c47, %c0_107], %355 {strides = array<i32>} : memref<150x596xf32, #tpu.memory_space<vmem>>, vector<1x596xf32>,
    %356 = vector.extract_strided_slice %115 {offsets = [1, 262], sizes = [1, 596], strides = [1, 1]} : vector<6x863xf32> to vector<1x596xf32>
    %357 = vector.shape_cast %356 : vector<1x596xf32> to vector<596xf32>
    %c48 = arith.constant 48 : index
    %c0_108 = arith.constant 0 : index
    %358 = vector.load %arg14[%c48, %c0_108] : memref<150x596xf32, #tpu.memory_space<vmem>>, vector<1x596xf32>
    %359 = vector.shape_cast %358 : vector<1x596xf32> to vector<596xf32>
    %360 = vector.shape_cast %357 : vector<596xf32> to vector<1x596xf32>
    tpu.vector_store %arg14[%c48, %c0_108], %360 {strides = array<i32>} : memref<150x596xf32, #tpu.memory_space<vmem>>, vector<1x596xf32>,
    %361 = vector.extract_strided_slice %115 {offsets = [1, 264], sizes = [1, 596], strides = [1, 1]} : vector<6x863xf32> to vector<1x596xf32>
    %362 = vector.shape_cast %361 : vector<1x596xf32> to vector<596xf32>
    %c49 = arith.constant 49 : index
    %c0_109 = arith.constant 0 : index
    %363 = vector.load %arg14[%c49, %c0_109] : memref<150x596xf32, #tpu.memory_space<vmem>>, vector<1x596xf32>
    %364 = vector.shape_cast %363 : vector<1x596xf32> to vector<596xf32>
    %365 = vector.shape_cast %362 : vector<596xf32> to vector<1x596xf32>
    tpu.vector_store %arg14[%c49, %c0_109], %365 {strides = array<i32>} : memref<150x596xf32, #tpu.memory_space<vmem>>, vector<1x596xf32>,
    %366 = vector.extract_strided_slice %115 {offsets = [2, 0], sizes = [1, 596], strides = [1, 1]} : vector<6x863xf32> to vector<1x596xf32>
    %367 = vector.shape_cast %366 : vector<1x596xf32> to vector<596xf32>
    %c50 = arith.constant 50 : index
    %c0_110 = arith.constant 0 : index
    %368 = vector.load %arg14[%c50, %c0_110] : memref<150x596xf32, #tpu.memory_space<vmem>>, vector<1x596xf32>
    %369 = vector.shape_cast %368 : vector<1x596xf32> to vector<596xf32>
    %370 = vector.shape_cast %367 : vector<596xf32> to vector<1x596xf32>
    tpu.vector_store %arg14[%c50, %c0_110], %370 {strides = array<i32>} : memref<150x596xf32, #tpu.memory_space<vmem>>, vector<1x596xf32>,
    %371 = vector.extract_strided_slice %115 {offsets = [2, 2], sizes = [1, 596], strides = [1, 1]} : vector<6x863xf32> to vector<1x596xf32>
    %372 = vector.shape_cast %371 : vector<1x596xf32> to vector<596xf32>
    %c51 = arith.constant 51 : index
    %c0_111 = arith.constant 0 : index
    %373 = vector.load %arg14[%c51, %c0_111] : memref<150x596xf32, #tpu.memory_space<vmem>>, vector<1x596xf32>
    %374 = vector.shape_cast %373 : vector<1x596xf32> to vector<596xf32>
    %375 = vector.shape_cast %372 : vector<596xf32> to vector<1x596xf32>
    tpu.vector_store %arg14[%c51, %c0_111], %375 {strides = array<i32>} : memref<150x596xf32, #tpu.memory_space<vmem>>, vector<1x596xf32>,
    %376 = vector.extract_strided_slice %115 {offsets = [2, 4], sizes = [1, 596], strides = [1, 1]} : vector<6x863xf32> to vector<1x596xf32>
    %377 = vector.shape_cast %376 : vector<1x596xf32> to vector<596xf32>
    %c52 = arith.constant 52 : index
    %c0_112 = arith.constant 0 : index
    %378 = vector.load %arg14[%c52, %c0_112] : memref<150x596xf32, #tpu.memory_space<vmem>>, vector<1x596xf32>
    %379 = vector.shape_cast %378 : vector<1x596xf32> to vector<596xf32>
    %380 = vector.shape_cast %377 : vector<596xf32> to vector<1x596xf32>
    tpu.vector_store %arg14[%c52, %c0_112], %380 {strides = array<i32>} : memref<150x596xf32, #tpu.memory_space<vmem>>, vector<1x596xf32>,
    %381 = vector.extract_strided_slice %115 {offsets = [2, 6], sizes = [1, 596], strides = [1, 1]} : vector<6x863xf32> to vector<1x596xf32>
    %382 = vector.shape_cast %381 : vector<1x596xf32> to vector<596xf32>
    %c53 = arith.constant 53 : index
    %c0_113 = arith.constant 0 : index
    %383 = vector.load %arg14[%c53, %c0_113] : memref<150x596xf32, #tpu.memory_space<vmem>>, vector<1x596xf32>
    %384 = vector.shape_cast %383 : vector<1x596xf32> to vector<596xf32>
    %385 = vector.shape_cast %382 : vector<596xf32> to vector<1x596xf32>
    tpu.vector_store %arg14[%c53, %c0_113], %385 {strides = array<i32>} : memref<150x596xf32, #tpu.memory_space<vmem>>, vector<1x596xf32>,
    %386 = vector.extract_strided_slice %115 {offsets = [2, 8], sizes = [1, 596], strides = [1, 1]} : vector<6x863xf32> to vector<1x596xf32>
    %387 = vector.shape_cast %386 : vector<1x596xf32> to vector<596xf32>
    %c54 = arith.constant 54 : index
    %c0_114 = arith.constant 0 : index
    %388 = vector.load %arg14[%c54, %c0_114] : memref<150x596xf32, #tpu.memory_space<vmem>>, vector<1x596xf32>
    %389 = vector.shape_cast %388 : vector<1x596xf32> to vector<596xf32>
    %390 = vector.shape_cast %387 : vector<596xf32> to vector<1x596xf32>
    tpu.vector_store %arg14[%c54, %c0_114], %390 {strides = array<i32>} : memref<150x596xf32, #tpu.memory_space<vmem>>, vector<1x596xf32>,
    %391 = vector.extract_strided_slice %115 {offsets = [2, 64], sizes = [1, 596], strides = [1, 1]} : vector<6x863xf32> to vector<1x596xf32>
    %392 = vector.shape_cast %391 : vector<1x596xf32> to vector<596xf32>
    %c55 = arith.constant 55 : index
    %c0_115 = arith.constant 0 : index
    %393 = vector.load %arg14[%c55, %c0_115] : memref<150x596xf32, #tpu.memory_space<vmem>>, vector<1x596xf32>
    %394 = vector.shape_cast %393 : vector<1x596xf32> to vector<596xf32>
    %395 = vector.shape_cast %392 : vector<596xf32> to vector<1x596xf32>
    tpu.vector_store %arg14[%c55, %c0_115], %395 {strides = array<i32>} : memref<150x596xf32, #tpu.memory_space<vmem>>, vector<1x596xf32>,
    %396 = vector.extract_strided_slice %115 {offsets = [2, 66], sizes = [1, 596], strides = [1, 1]} : vector<6x863xf32> to vector<1x596xf32>
    %397 = vector.shape_cast %396 : vector<1x596xf32> to vector<596xf32>
    %c56 = arith.constant 56 : index
    %c0_116 = arith.constant 0 : index
    %398 = vector.load %arg14[%c56, %c0_116] : memref<150x596xf32, #tpu.memory_space<vmem>>, vector<1x596xf32>
    %399 = vector.shape_cast %398 : vector<1x596xf32> to vector<596xf32>
    %400 = vector.shape_cast %397 : vector<596xf32> to vector<1x596xf32>
    tpu.vector_store %arg14[%c56, %c0_116], %400 {strides = array<i32>} : memref<150x596xf32, #tpu.memory_space<vmem>>, vector<1x596xf32>,
    %401 = vector.extract_strided_slice %115 {offsets = [2, 68], sizes = [1, 596], strides = [1, 1]} : vector<6x863xf32> to vector<1x596xf32>
    %402 = vector.shape_cast %401 : vector<1x596xf32> to vector<596xf32>
    %c57 = arith.constant 57 : index
    %c0_117 = arith.constant 0 : index
    %403 = vector.load %arg14[%c57, %c0_117] : memref<150x596xf32, #tpu.memory_space<vmem>>, vector<1x596xf32>
    %404 = vector.shape_cast %403 : vector<1x596xf32> to vector<596xf32>
    %405 = vector.shape_cast %402 : vector<596xf32> to vector<1x596xf32>
    tpu.vector_store %arg14[%c57, %c0_117], %405 {strides = array<i32>} : memref<150x596xf32, #tpu.memory_space<vmem>>, vector<1x596xf32>,
    %406 = vector.extract_strided_slice %115 {offsets = [2, 70], sizes = [1, 596], strides = [1, 1]} : vector<6x863xf32> to vector<1x596xf32>
    %407 = vector.shape_cast %406 : vector<1x596xf32> to vector<596xf32>
    %c58 = arith.constant 58 : index
    %c0_118 = arith.constant 0 : index
    %408 = vector.load %arg14[%c58, %c0_118] : memref<150x596xf32, #tpu.memory_space<vmem>>, vector<1x596xf32>
    %409 = vector.shape_cast %408 : vector<1x596xf32> to vector<596xf32>
    %410 = vector.shape_cast %407 : vector<596xf32> to vector<1x596xf32>
    tpu.vector_store %arg14[%c58, %c0_118], %410 {strides = array<i32>} : memref<150x596xf32, #tpu.memory_space<vmem>>, vector<1x596xf32>,
    %411 = vector.extract_strided_slice %115 {offsets = [2, 72], sizes = [1, 596], strides = [1, 1]} : vector<6x863xf32> to vector<1x596xf32>
    %412 = vector.shape_cast %411 : vector<1x596xf32> to vector<596xf32>
    %c59 = arith.constant 59 : index
    %c0_119 = arith.constant 0 : index
    %413 = vector.load %arg14[%c59, %c0_119] : memref<150x596xf32, #tpu.memory_space<vmem>>, vector<1x596xf32>
    %414 = vector.shape_cast %413 : vector<1x596xf32> to vector<596xf32>
    %415 = vector.shape_cast %412 : vector<596xf32> to vector<1x596xf32>
    tpu.vector_store %arg14[%c59, %c0_119], %415 {strides = array<i32>} : memref<150x596xf32, #tpu.memory_space<vmem>>, vector<1x596xf32>,
    %416 = vector.extract_strided_slice %115 {offsets = [2, 128], sizes = [1, 596], strides = [1, 1]} : vector<6x863xf32> to vector<1x596xf32>
    %417 = vector.shape_cast %416 : vector<1x596xf32> to vector<596xf32>
    %c60 = arith.constant 60 : index
    %c0_120 = arith.constant 0 : index
    %418 = vector.load %arg14[%c60, %c0_120] : memref<150x596xf32, #tpu.memory_space<vmem>>, vector<1x596xf32>
    %419 = vector.shape_cast %418 : vector<1x596xf32> to vector<596xf32>
    %420 = vector.shape_cast %417 : vector<596xf32> to vector<1x596xf32>
    tpu.vector_store %arg14[%c60, %c0_120], %420 {strides = array<i32>} : memref<150x596xf32, #tpu.memory_space<vmem>>, vector<1x596xf32>,
    %421 = vector.extract_strided_slice %115 {offsets = [2, 130], sizes = [1, 596], strides = [1, 1]} : vector<6x863xf32> to vector<1x596xf32>
    %422 = vector.shape_cast %421 : vector<1x596xf32> to vector<596xf32>
    %c61 = arith.constant 61 : index
    %c0_121 = arith.constant 0 : index
    %423 = vector.load %arg14[%c61, %c0_121] : memref<150x596xf32, #tpu.memory_space<vmem>>, vector<1x596xf32>
    %424 = vector.shape_cast %423 : vector<1x596xf32> to vector<596xf32>
    %425 = vector.shape_cast %422 : vector<596xf32> to vector<1x596xf32>
    tpu.vector_store %arg14[%c61, %c0_121], %425 {strides = array<i32>} : memref<150x596xf32, #tpu.memory_space<vmem>>, vector<1x596xf32>,
    %426 = vector.extract_strided_slice %115 {offsets = [2, 132], sizes = [1, 596], strides = [1, 1]} : vector<6x863xf32> to vector<1x596xf32>
    %427 = vector.shape_cast %426 : vector<1x596xf32> to vector<596xf32>
    %c62 = arith.constant 62 : index
    %c0_122 = arith.constant 0 : index
    %428 = vector.load %arg14[%c62, %c0_122] : memref<150x596xf32, #tpu.memory_space<vmem>>, vector<1x596xf32>
    %429 = vector.shape_cast %428 : vector<1x596xf32> to vector<596xf32>
    %430 = vector.shape_cast %427 : vector<596xf32> to vector<1x596xf32>
    tpu.vector_store %arg14[%c62, %c0_122], %430 {strides = array<i32>} : memref<150x596xf32, #tpu.memory_space<vmem>>, vector<1x596xf32>,
    %431 = vector.extract_strided_slice %115 {offsets = [2, 134], sizes = [1, 596], strides = [1, 1]} : vector<6x863xf32> to vector<1x596xf32>
    %432 = vector.shape_cast %431 : vector<1x596xf32> to vector<596xf32>
    %c63 = arith.constant 63 : index
    %c0_123 = arith.constant 0 : index
    %433 = vector.load %arg14[%c63, %c0_123] : memref<150x596xf32, #tpu.memory_space<vmem>>, vector<1x596xf32>
    %434 = vector.shape_cast %433 : vector<1x596xf32> to vector<596xf32>
    %435 = vector.shape_cast %432 : vector<596xf32> to vector<1x596xf32>
    tpu.vector_store %arg14[%c63, %c0_123], %435 {strides = array<i32>} : memref<150x596xf32, #tpu.memory_space<vmem>>, vector<1x596xf32>,
    %436 = vector.extract_strided_slice %115 {offsets = [2, 136], sizes = [1, 596], strides = [1, 1]} : vector<6x863xf32> to vector<1x596xf32>
    %437 = vector.shape_cast %436 : vector<1x596xf32> to vector<596xf32>
    %c64 = arith.constant 64 : index
    %c0_124 = arith.constant 0 : index
    %438 = vector.load %arg14[%c64, %c0_124] : memref<150x596xf32, #tpu.memory_space<vmem>>, vector<1x596xf32>
    %439 = vector.shape_cast %438 : vector<1x596xf32> to vector<596xf32>
    %440 = vector.shape_cast %437 : vector<596xf32> to vector<1x596xf32>
    tpu.vector_store %arg14[%c64, %c0_124], %440 {strides = array<i32>} : memref<150x596xf32, #tpu.memory_space<vmem>>, vector<1x596xf32>,
    %441 = vector.extract_strided_slice %115 {offsets = [2, 192], sizes = [1, 596], strides = [1, 1]} : vector<6x863xf32> to vector<1x596xf32>
    %442 = vector.shape_cast %441 : vector<1x596xf32> to vector<596xf32>
    %c65 = arith.constant 65 : index
    %c0_125 = arith.constant 0 : index
    %443 = vector.load %arg14[%c65, %c0_125] : memref<150x596xf32, #tpu.memory_space<vmem>>, vector<1x596xf32>
    %444 = vector.shape_cast %443 : vector<1x596xf32> to vector<596xf32>
    %445 = vector.shape_cast %442 : vector<596xf32> to vector<1x596xf32>
    tpu.vector_store %arg14[%c65, %c0_125], %445 {strides = array<i32>} : memref<150x596xf32, #tpu.memory_space<vmem>>, vector<1x596xf32>,
    %446 = vector.extract_strided_slice %115 {offsets = [2, 194], sizes = [1, 596], strides = [1, 1]} : vector<6x863xf32> to vector<1x596xf32>
    %447 = vector.shape_cast %446 : vector<1x596xf32> to vector<596xf32>
    %c66 = arith.constant 66 : index
    %c0_126 = arith.constant 0 : index
    %448 = vector.load %arg14[%c66, %c0_126] : memref<150x596xf32, #tpu.memory_space<vmem>>, vector<1x596xf32>
    %449 = vector.shape_cast %448 : vector<1x596xf32> to vector<596xf32>
    %450 = vector.shape_cast %447 : vector<596xf32> to vector<1x596xf32>
    tpu.vector_store %arg14[%c66, %c0_126], %450 {strides = array<i32>} : memref<150x596xf32, #tpu.memory_space<vmem>>, vector<1x596xf32>,
    %451 = vector.extract_strided_slice %115 {offsets = [2, 196], sizes = [1, 596], strides = [1, 1]} : vector<6x863xf32> to vector<1x596xf32>
    %452 = vector.shape_cast %451 : vector<1x596xf32> to vector<596xf32>
    %c67 = arith.constant 67 : index
    %c0_127 = arith.constant 0 : index
    %453 = vector.load %arg14[%c67, %c0_127] : memref<150x596xf32, #tpu.memory_space<vmem>>, vector<1x596xf32>
    %454 = vector.shape_cast %453 : vector<1x596xf32> to vector<596xf32>
    %455 = vector.shape_cast %452 : vector<596xf32> to vector<1x596xf32>
    tpu.vector_store %arg14[%c67, %c0_127], %455 {strides = array<i32>} : memref<150x596xf32, #tpu.memory_space<vmem>>, vector<1x596xf32>,
    %456 = vector.extract_strided_slice %115 {offsets = [2, 198], sizes = [1, 596], strides = [1, 1]} : vector<6x863xf32> to vector<1x596xf32>
    %457 = vector.shape_cast %456 : vector<1x596xf32> to vector<596xf32>
    %c68 = arith.constant 68 : index
    %c0_128 = arith.constant 0 : index
    %458 = vector.load %arg14[%c68, %c0_128] : memref<150x596xf32, #tpu.memory_space<vmem>>, vector<1x596xf32>
    %459 = vector.shape_cast %458 : vector<1x596xf32> to vector<596xf32>
    %460 = vector.shape_cast %457 : vector<596xf32> to vector<1x596xf32>
    tpu.vector_store %arg14[%c68, %c0_128], %460 {strides = array<i32>} : memref<150x596xf32, #tpu.memory_space<vmem>>, vector<1x596xf32>,
    %461 = vector.extract_strided_slice %115 {offsets = [2, 200], sizes = [1, 596], strides = [1, 1]} : vector<6x863xf32> to vector<1x596xf32>
    %462 = vector.shape_cast %461 : vector<1x596xf32> to vector<596xf32>
    %c69 = arith.constant 69 : index
    %c0_129 = arith.constant 0 : index
    %463 = vector.load %arg14[%c69, %c0_129] : memref<150x596xf32, #tpu.memory_space<vmem>>, vector<1x596xf32>
    %464 = vector.shape_cast %463 : vector<1x596xf32> to vector<596xf32>
    %465 = vector.shape_cast %462 : vector<596xf32> to vector<1x596xf32>
    tpu.vector_store %arg14[%c69, %c0_129], %465 {strides = array<i32>} : memref<150x596xf32, #tpu.memory_space<vmem>>, vector<1x596xf32>,
    %466 = vector.extract_strided_slice %115 {offsets = [2, 256], sizes = [1, 596], strides = [1, 1]} : vector<6x863xf32> to vector<1x596xf32>
    %467 = vector.shape_cast %466 : vector<1x596xf32> to vector<596xf32>
    %c70 = arith.constant 70 : index
    %c0_130 = arith.constant 0 : index
    %468 = vector.load %arg14[%c70, %c0_130] : memref<150x596xf32, #tpu.memory_space<vmem>>, vector<1x596xf32>
    %469 = vector.shape_cast %468 : vector<1x596xf32> to vector<596xf32>
    %470 = vector.shape_cast %467 : vector<596xf32> to vector<1x596xf32>
    tpu.vector_store %arg14[%c70, %c0_130], %470 {strides = array<i32>} : memref<150x596xf32, #tpu.memory_space<vmem>>, vector<1x596xf32>,
    %471 = vector.extract_strided_slice %115 {offsets = [2, 258], sizes = [1, 596], strides = [1, 1]} : vector<6x863xf32> to vector<1x596xf32>
    %472 = vector.shape_cast %471 : vector<1x596xf32> to vector<596xf32>
    %c71 = arith.constant 71 : index
    %c0_131 = arith.constant 0 : index
    %473 = vector.load %arg14[%c71, %c0_131] : memref<150x596xf32, #tpu.memory_space<vmem>>, vector<1x596xf32>
    %474 = vector.shape_cast %473 : vector<1x596xf32> to vector<596xf32>
    %475 = vector.shape_cast %472 : vector<596xf32> to vector<1x596xf32>
    tpu.vector_store %arg14[%c71, %c0_131], %475 {strides = array<i32>} : memref<150x596xf32, #tpu.memory_space<vmem>>, vector<1x596xf32>,
    %476 = vector.extract_strided_slice %115 {offsets = [2, 260], sizes = [1, 596], strides = [1, 1]} : vector<6x863xf32> to vector<1x596xf32>
    %477 = vector.shape_cast %476 : vector<1x596xf32> to vector<596xf32>
    %c72 = arith.constant 72 : index
    %c0_132 = arith.constant 0 : index
    %478 = vector.load %arg14[%c72, %c0_132] : memref<150x596xf32, #tpu.memory_space<vmem>>, vector<1x596xf32>
    %479 = vector.shape_cast %478 : vector<1x596xf32> to vector<596xf32>
    %480 = vector.shape_cast %477 : vector<596xf32> to vector<1x596xf32>
    tpu.vector_store %arg14[%c72, %c0_132], %480 {strides = array<i32>} : memref<150x596xf32, #tpu.memory_space<vmem>>, vector<1x596xf32>,
    %481 = vector.extract_strided_slice %115 {offsets = [2, 262], sizes = [1, 596], strides = [1, 1]} : vector<6x863xf32> to vector<1x596xf32>
    %482 = vector.shape_cast %481 : vector<1x596xf32> to vector<596xf32>
    %c73 = arith.constant 73 : index
    %c0_133 = arith.constant 0 : index
    %483 = vector.load %arg14[%c73, %c0_133] : memref<150x596xf32, #tpu.memory_space<vmem>>, vector<1x596xf32>
    %484 = vector.shape_cast %483 : vector<1x596xf32> to vector<596xf32>
    %485 = vector.shape_cast %482 : vector<596xf32> to vector<1x596xf32>
    tpu.vector_store %arg14[%c73, %c0_133], %485 {strides = array<i32>} : memref<150x596xf32, #tpu.memory_space<vmem>>, vector<1x596xf32>,
    %486 = vector.extract_strided_slice %115 {offsets = [2, 264], sizes = [1, 596], strides = [1, 1]} : vector<6x863xf32> to vector<1x596xf32>
    %487 = vector.shape_cast %486 : vector<1x596xf32> to vector<596xf32>
    %c74 = arith.constant 74 : index
    %c0_134 = arith.constant 0 : index
    %488 = vector.load %arg14[%c74, %c0_134] : memref<150x596xf32, #tpu.memory_space<vmem>>, vector<1x596xf32>
    %489 = vector.shape_cast %488 : vector<1x596xf32> to vector<596xf32>
    %490 = vector.shape_cast %487 : vector<596xf32> to vector<1x596xf32>
    tpu.vector_store %arg14[%c74, %c0_134], %490 {strides = array<i32>} : memref<150x596xf32, #tpu.memory_space<vmem>>, vector<1x596xf32>,
    %491 = vector.extract_strided_slice %115 {offsets = [3, 0], sizes = [1, 596], strides = [1, 1]} : vector<6x863xf32> to vector<1x596xf32>
    %492 = vector.shape_cast %491 : vector<1x596xf32> to vector<596xf32>
    %c75 = arith.constant 75 : index
    %c0_135 = arith.constant 0 : index
    %493 = vector.load %arg14[%c75, %c0_135] : memref<150x596xf32, #tpu.memory_space<vmem>>, vector<1x596xf32>
    %494 = vector.shape_cast %493 : vector<1x596xf32> to vector<596xf32>
    %495 = vector.shape_cast %492 : vector<596xf32> to vector<1x596xf32>
    tpu.vector_store %arg14[%c75, %c0_135], %495 {strides = array<i32>} : memref<150x596xf32, #tpu.memory_space<vmem>>, vector<1x596xf32>,
    %496 = vector.extract_strided_slice %115 {offsets = [3, 2], sizes = [1, 596], strides = [1, 1]} : vector<6x863xf32> to vector<1x596xf32>
    %497 = vector.shape_cast %496 : vector<1x596xf32> to vector<596xf32>
    %c76 = arith.constant 76 : index
    %c0_136 = arith.constant 0 : index
    %498 = vector.load %arg14[%c76, %c0_136] : memref<150x596xf32, #tpu.memory_space<vmem>>, vector<1x596xf32>
    %499 = vector.shape_cast %498 : vector<1x596xf32> to vector<596xf32>
    %500 = vector.shape_cast %497 : vector<596xf32> to vector<1x596xf32>
    tpu.vector_store %arg14[%c76, %c0_136], %500 {strides = array<i32>} : memref<150x596xf32, #tpu.memory_space<vmem>>, vector<1x596xf32>,
    %501 = vector.extract_strided_slice %115 {offsets = [3, 4], sizes = [1, 596], strides = [1, 1]} : vector<6x863xf32> to vector<1x596xf32>
    %502 = vector.shape_cast %501 : vector<1x596xf32> to vector<596xf32>
    %c77 = arith.constant 77 : index
    %c0_137 = arith.constant 0 : index
    %503 = vector.load %arg14[%c77, %c0_137] : memref<150x596xf32, #tpu.memory_space<vmem>>, vector<1x596xf32>
    %504 = vector.shape_cast %503 : vector<1x596xf32> to vector<596xf32>
    %505 = vector.shape_cast %502 : vector<596xf32> to vector<1x596xf32>
    tpu.vector_store %arg14[%c77, %c0_137], %505 {strides = array<i32>} : memref<150x596xf32, #tpu.memory_space<vmem>>, vector<1x596xf32>,
    %506 = vector.extract_strided_slice %115 {offsets = [3, 6], sizes = [1, 596], strides = [1, 1]} : vector<6x863xf32> to vector<1x596xf32>
    %507 = vector.shape_cast %506 : vector<1x596xf32> to vector<596xf32>
    %c78 = arith.constant 78 : index
    %c0_138 = arith.constant 0 : index
    %508 = vector.load %arg14[%c78, %c0_138] : memref<150x596xf32, #tpu.memory_space<vmem>>, vector<1x596xf32>
    %509 = vector.shape_cast %508 : vector<1x596xf32> to vector<596xf32>
    %510 = vector.shape_cast %507 : vector<596xf32> to vector<1x596xf32>
    tpu.vector_store %arg14[%c78, %c0_138], %510 {strides = array<i32>} : memref<150x596xf32, #tpu.memory_space<vmem>>, vector<1x596xf32>,
    %511 = vector.extract_strided_slice %115 {offsets = [3, 8], sizes = [1, 596], strides = [1, 1]} : vector<6x863xf32> to vector<1x596xf32>
    %512 = vector.shape_cast %511 : vector<1x596xf32> to vector<596xf32>
    %c79 = arith.constant 79 : index
    %c0_139 = arith.constant 0 : index
    %513 = vector.load %arg14[%c79, %c0_139] : memref<150x596xf32, #tpu.memory_space<vmem>>, vector<1x596xf32>
    %514 = vector.shape_cast %513 : vector<1x596xf32> to vector<596xf32>
    %515 = vector.shape_cast %512 : vector<596xf32> to vector<1x596xf32>
    tpu.vector_store %arg14[%c79, %c0_139], %515 {strides = array<i32>} : memref<150x596xf32, #tpu.memory_space<vmem>>, vector<1x596xf32>,
    %516 = vector.extract_strided_slice %115 {offsets = [3, 64], sizes = [1, 596], strides = [1, 1]} : vector<6x863xf32> to vector<1x596xf32>
    %517 = vector.shape_cast %516 : vector<1x596xf32> to vector<596xf32>
    %c80 = arith.constant 80 : index
    %c0_140 = arith.constant 0 : index
    %518 = vector.load %arg14[%c80, %c0_140] : memref<150x596xf32, #tpu.memory_space<vmem>>, vector<1x596xf32>
    %519 = vector.shape_cast %518 : vector<1x596xf32> to vector<596xf32>
    %520 = vector.shape_cast %517 : vector<596xf32> to vector<1x596xf32>
    tpu.vector_store %arg14[%c80, %c0_140], %520 {strides = array<i32>} : memref<150x596xf32, #tpu.memory_space<vmem>>, vector<1x596xf32>,
    %521 = vector.extract_strided_slice %115 {offsets = [3, 66], sizes = [1, 596], strides = [1, 1]} : vector<6x863xf32> to vector<1x596xf32>
    %522 = vector.shape_cast %521 : vector<1x596xf32> to vector<596xf32>
    %c81 = arith.constant 81 : index
    %c0_141 = arith.constant 0 : index
    %523 = vector.load %arg14[%c81, %c0_141] : memref<150x596xf32, #tpu.memory_space<vmem>>, vector<1x596xf32>
    %524 = vector.shape_cast %523 : vector<1x596xf32> to vector<596xf32>
    %525 = vector.shape_cast %522 : vector<596xf32> to vector<1x596xf32>
    tpu.vector_store %arg14[%c81, %c0_141], %525 {strides = array<i32>} : memref<150x596xf32, #tpu.memory_space<vmem>>, vector<1x596xf32>,
    %526 = vector.extract_strided_slice %115 {offsets = [3, 68], sizes = [1, 596], strides = [1, 1]} : vector<6x863xf32> to vector<1x596xf32>
    %527 = vector.shape_cast %526 : vector<1x596xf32> to vector<596xf32>
    %c82 = arith.constant 82 : index
    %c0_142 = arith.constant 0 : index
    %528 = vector.load %arg14[%c82, %c0_142] : memref<150x596xf32, #tpu.memory_space<vmem>>, vector<1x596xf32>
    %529 = vector.shape_cast %528 : vector<1x596xf32> to vector<596xf32>
    %530 = vector.shape_cast %527 : vector<596xf32> to vector<1x596xf32>
    tpu.vector_store %arg14[%c82, %c0_142], %530 {strides = array<i32>} : memref<150x596xf32, #tpu.memory_space<vmem>>, vector<1x596xf32>,
    %531 = vector.extract_strided_slice %115 {offsets = [3, 70], sizes = [1, 596], strides = [1, 1]} : vector<6x863xf32> to vector<1x596xf32>
    %532 = vector.shape_cast %531 : vector<1x596xf32> to vector<596xf32>
    %c83 = arith.constant 83 : index
    %c0_143 = arith.constant 0 : index
    %533 = vector.load %arg14[%c83, %c0_143] : memref<150x596xf32, #tpu.memory_space<vmem>>, vector<1x596xf32>
    %534 = vector.shape_cast %533 : vector<1x596xf32> to vector<596xf32>
    %535 = vector.shape_cast %532 : vector<596xf32> to vector<1x596xf32>
    tpu.vector_store %arg14[%c83, %c0_143], %535 {strides = array<i32>} : memref<150x596xf32, #tpu.memory_space<vmem>>, vector<1x596xf32>,
    %536 = vector.extract_strided_slice %115 {offsets = [3, 72], sizes = [1, 596], strides = [1, 1]} : vector<6x863xf32> to vector<1x596xf32>
    %537 = vector.shape_cast %536 : vector<1x596xf32> to vector<596xf32>
    %c84 = arith.constant 84 : index
    %c0_144 = arith.constant 0 : index
    %538 = vector.load %arg14[%c84, %c0_144] : memref<150x596xf32, #tpu.memory_space<vmem>>, vector<1x596xf32>
    %539 = vector.shape_cast %538 : vector<1x596xf32> to vector<596xf32>
    %540 = vector.shape_cast %537 : vector<596xf32> to vector<1x596xf32>
    tpu.vector_store %arg14[%c84, %c0_144], %540 {strides = array<i32>} : memref<150x596xf32, #tpu.memory_space<vmem>>, vector<1x596xf32>,
    %541 = vector.extract_strided_slice %115 {offsets = [3, 128], sizes = [1, 596], strides = [1, 1]} : vector<6x863xf32> to vector<1x596xf32>
    %542 = vector.shape_cast %541 : vector<1x596xf32> to vector<596xf32>
    %c85 = arith.constant 85 : index
    %c0_145 = arith.constant 0 : index
    %543 = vector.load %arg14[%c85, %c0_145] : memref<150x596xf32, #tpu.memory_space<vmem>>, vector<1x596xf32>
    %544 = vector.shape_cast %543 : vector<1x596xf32> to vector<596xf32>
    %545 = vector.shape_cast %542 : vector<596xf32> to vector<1x596xf32>
    tpu.vector_store %arg14[%c85, %c0_145], %545 {strides = array<i32>} : memref<150x596xf32, #tpu.memory_space<vmem>>, vector<1x596xf32>,
    %546 = vector.extract_strided_slice %115 {offsets = [3, 130], sizes = [1, 596], strides = [1, 1]} : vector<6x863xf32> to vector<1x596xf32>
    %547 = vector.shape_cast %546 : vector<1x596xf32> to vector<596xf32>
    %c86 = arith.constant 86 : index
    %c0_146 = arith.constant 0 : index
    %548 = vector.load %arg14[%c86, %c0_146] : memref<150x596xf32, #tpu.memory_space<vmem>>, vector<1x596xf32>
    %549 = vector.shape_cast %548 : vector<1x596xf32> to vector<596xf32>
    %550 = vector.shape_cast %547 : vector<596xf32> to vector<1x596xf32>
    tpu.vector_store %arg14[%c86, %c0_146], %550 {strides = array<i32>} : memref<150x596xf32, #tpu.memory_space<vmem>>, vector<1x596xf32>,
    %551 = vector.extract_strided_slice %115 {offsets = [3, 132], sizes = [1, 596], strides = [1, 1]} : vector<6x863xf32> to vector<1x596xf32>
    %552 = vector.shape_cast %551 : vector<1x596xf32> to vector<596xf32>
    %c87 = arith.constant 87 : index
    %c0_147 = arith.constant 0 : index
    %553 = vector.load %arg14[%c87, %c0_147] : memref<150x596xf32, #tpu.memory_space<vmem>>, vector<1x596xf32>
    %554 = vector.shape_cast %553 : vector<1x596xf32> to vector<596xf32>
    %555 = vector.shape_cast %552 : vector<596xf32> to vector<1x596xf32>
    tpu.vector_store %arg14[%c87, %c0_147], %555 {strides = array<i32>} : memref<150x596xf32, #tpu.memory_space<vmem>>, vector<1x596xf32>,
    %556 = vector.extract_strided_slice %115 {offsets = [3, 134], sizes = [1, 596], strides = [1, 1]} : vector<6x863xf32> to vector<1x596xf32>
    %557 = vector.shape_cast %556 : vector<1x596xf32> to vector<596xf32>
    %c88 = arith.constant 88 : index
    %c0_148 = arith.constant 0 : index
    %558 = vector.load %arg14[%c88, %c0_148] : memref<150x596xf32, #tpu.memory_space<vmem>>, vector<1x596xf32>
    %559 = vector.shape_cast %558 : vector<1x596xf32> to vector<596xf32>
    %560 = vector.shape_cast %557 : vector<596xf32> to vector<1x596xf32>
    tpu.vector_store %arg14[%c88, %c0_148], %560 {strides = array<i32>} : memref<150x596xf32, #tpu.memory_space<vmem>>, vector<1x596xf32>,
    %561 = vector.extract_strided_slice %115 {offsets = [3, 136], sizes = [1, 596], strides = [1, 1]} : vector<6x863xf32> to vector<1x596xf32>
    %562 = vector.shape_cast %561 : vector<1x596xf32> to vector<596xf32>
    %c89 = arith.constant 89 : index
    %c0_149 = arith.constant 0 : index
    %563 = vector.load %arg14[%c89, %c0_149] : memref<150x596xf32, #tpu.memory_space<vmem>>, vector<1x596xf32>
    %564 = vector.shape_cast %563 : vector<1x596xf32> to vector<596xf32>
    %565 = vector.shape_cast %562 : vector<596xf32> to vector<1x596xf32>
    tpu.vector_store %arg14[%c89, %c0_149], %565 {strides = array<i32>} : memref<150x596xf32, #tpu.memory_space<vmem>>, vector<1x596xf32>,
    %566 = vector.extract_strided_slice %115 {offsets = [3, 192], sizes = [1, 596], strides = [1, 1]} : vector<6x863xf32> to vector<1x596xf32>
    %567 = vector.shape_cast %566 : vector<1x596xf32> to vector<596xf32>
    %c90 = arith.constant 90 : index
    %c0_150 = arith.constant 0 : index
    %568 = vector.load %arg14[%c90, %c0_150] : memref<150x596xf32, #tpu.memory_space<vmem>>, vector<1x596xf32>
    %569 = vector.shape_cast %568 : vector<1x596xf32> to vector<596xf32>
    %570 = vector.shape_cast %567 : vector<596xf32> to vector<1x596xf32>
    tpu.vector_store %arg14[%c90, %c0_150], %570 {strides = array<i32>} : memref<150x596xf32, #tpu.memory_space<vmem>>, vector<1x596xf32>,
    %571 = vector.extract_strided_slice %115 {offsets = [3, 194], sizes = [1, 596], strides = [1, 1]} : vector<6x863xf32> to vector<1x596xf32>
    %572 = vector.shape_cast %571 : vector<1x596xf32> to vector<596xf32>
    %c91 = arith.constant 91 : index
    %c0_151 = arith.constant 0 : index
    %573 = vector.load %arg14[%c91, %c0_151] : memref<150x596xf32, #tpu.memory_space<vmem>>, vector<1x596xf32>
    %574 = vector.shape_cast %573 : vector<1x596xf32> to vector<596xf32>
    %575 = vector.shape_cast %572 : vector<596xf32> to vector<1x596xf32>
    tpu.vector_store %arg14[%c91, %c0_151], %575 {strides = array<i32>} : memref<150x596xf32, #tpu.memory_space<vmem>>, vector<1x596xf32>,
    %576 = vector.extract_strided_slice %115 {offsets = [3, 196], sizes = [1, 596], strides = [1, 1]} : vector<6x863xf32> to vector<1x596xf32>
    %577 = vector.shape_cast %576 : vector<1x596xf32> to vector<596xf32>
    %c92 = arith.constant 92 : index
    %c0_152 = arith.constant 0 : index
    %578 = vector.load %arg14[%c92, %c0_152] : memref<150x596xf32, #tpu.memory_space<vmem>>, vector<1x596xf32>
    %579 = vector.shape_cast %578 : vector<1x596xf32> to vector<596xf32>
    %580 = vector.shape_cast %577 : vector<596xf32> to vector<1x596xf32>
    tpu.vector_store %arg14[%c92, %c0_152], %580 {strides = array<i32>} : memref<150x596xf32, #tpu.memory_space<vmem>>, vector<1x596xf32>,
    %581 = vector.extract_strided_slice %115 {offsets = [3, 198], sizes = [1, 596], strides = [1, 1]} : vector<6x863xf32> to vector<1x596xf32>
    %582 = vector.shape_cast %581 : vector<1x596xf32> to vector<596xf32>
    %c93 = arith.constant 93 : index
    %c0_153 = arith.constant 0 : index
    %583 = vector.load %arg14[%c93, %c0_153] : memref<150x596xf32, #tpu.memory_space<vmem>>, vector<1x596xf32>
    %584 = vector.shape_cast %583 : vector<1x596xf32> to vector<596xf32>
    %585 = vector.shape_cast %582 : vector<596xf32> to vector<1x596xf32>
    tpu.vector_store %arg14[%c93, %c0_153], %585 {strides = array<i32>} : memref<150x596xf32, #tpu.memory_space<vmem>>, vector<1x596xf32>,
    %586 = vector.extract_strided_slice %115 {offsets = [3, 200], sizes = [1, 596], strides = [1, 1]} : vector<6x863xf32> to vector<1x596xf32>
    %587 = vector.shape_cast %586 : vector<1x596xf32> to vector<596xf32>
    %c94 = arith.constant 94 : index
    %c0_154 = arith.constant 0 : index
    %588 = vector.load %arg14[%c94, %c0_154] : memref<150x596xf32, #tpu.memory_space<vmem>>, vector<1x596xf32>
    %589 = vector.shape_cast %588 : vector<1x596xf32> to vector<596xf32>
    %590 = vector.shape_cast %587 : vector<596xf32> to vector<1x596xf32>
    tpu.vector_store %arg14[%c94, %c0_154], %590 {strides = array<i32>} : memref<150x596xf32, #tpu.memory_space<vmem>>, vector<1x596xf32>,
    %591 = vector.extract_strided_slice %115 {offsets = [3, 256], sizes = [1, 596], strides = [1, 1]} : vector<6x863xf32> to vector<1x596xf32>
    %592 = vector.shape_cast %591 : vector<1x596xf32> to vector<596xf32>
    %c95 = arith.constant 95 : index
    %c0_155 = arith.constant 0 : index
    %593 = vector.load %arg14[%c95, %c0_155] : memref<150x596xf32, #tpu.memory_space<vmem>>, vector<1x596xf32>
    %594 = vector.shape_cast %593 : vector<1x596xf32> to vector<596xf32>
    %595 = vector.shape_cast %592 : vector<596xf32> to vector<1x596xf32>
    tpu.vector_store %arg14[%c95, %c0_155], %595 {strides = array<i32>} : memref<150x596xf32, #tpu.memory_space<vmem>>, vector<1x596xf32>,
    %596 = vector.extract_strided_slice %115 {offsets = [3, 258], sizes = [1, 596], strides = [1, 1]} : vector<6x863xf32> to vector<1x596xf32>
    %597 = vector.shape_cast %596 : vector<1x596xf32> to vector<596xf32>
    %c96 = arith.constant 96 : index
    %c0_156 = arith.constant 0 : index
    %598 = vector.load %arg14[%c96, %c0_156] : memref<150x596xf32, #tpu.memory_space<vmem>>, vector<1x596xf32>
    %599 = vector.shape_cast %598 : vector<1x596xf32> to vector<596xf32>
    %600 = vector.shape_cast %597 : vector<596xf32> to vector<1x596xf32>
    tpu.vector_store %arg14[%c96, %c0_156], %600 {strides = array<i32>} : memref<150x596xf32, #tpu.memory_space<vmem>>, vector<1x596xf32>,
    %601 = vector.extract_strided_slice %115 {offsets = [3, 260], sizes = [1, 596], strides = [1, 1]} : vector<6x863xf32> to vector<1x596xf32>
    %602 = vector.shape_cast %601 : vector<1x596xf32> to vector<596xf32>
    %c97 = arith.constant 97 : index
    %c0_157 = arith.constant 0 : index
    %603 = vector.load %arg14[%c97, %c0_157] : memref<150x596xf32, #tpu.memory_space<vmem>>, vector<1x596xf32>
    %604 = vector.shape_cast %603 : vector<1x596xf32> to vector<596xf32>
    %605 = vector.shape_cast %602 : vector<596xf32> to vector<1x596xf32>
    tpu.vector_store %arg14[%c97, %c0_157], %605 {strides = array<i32>} : memref<150x596xf32, #tpu.memory_space<vmem>>, vector<1x596xf32>,
    %606 = vector.extract_strided_slice %115 {offsets = [3, 262], sizes = [1, 596], strides = [1, 1]} : vector<6x863xf32> to vector<1x596xf32>
    %607 = vector.shape_cast %606 : vector<1x596xf32> to vector<596xf32>
    %c98 = arith.constant 98 : index
    %c0_158 = arith.constant 0 : index
    %608 = vector.load %arg14[%c98, %c0_158] : memref<150x596xf32, #tpu.memory_space<vmem>>, vector<1x596xf32>
    %609 = vector.shape_cast %608 : vector<1x596xf32> to vector<596xf32>
    %610 = vector.shape_cast %607 : vector<596xf32> to vector<1x596xf32>
    tpu.vector_store %arg14[%c98, %c0_158], %610 {strides = array<i32>} : memref<150x596xf32, #tpu.memory_space<vmem>>, vector<1x596xf32>,
    %611 = vector.extract_strided_slice %115 {offsets = [3, 264], sizes = [1, 596], strides = [1, 1]} : vector<6x863xf32> to vector<1x596xf32>
    %612 = vector.shape_cast %611 : vector<1x596xf32> to vector<596xf32>
    %c99 = arith.constant 99 : index
    %c0_159 = arith.constant 0 : index
    %613 = vector.load %arg14[%c99, %c0_159] : memref<150x596xf32, #tpu.memory_space<vmem>>, vector<1x596xf32>
    %614 = vector.shape_cast %613 : vector<1x596xf32> to vector<596xf32>
    %615 = vector.shape_cast %612 : vector<596xf32> to vector<1x596xf32>
    tpu.vector_store %arg14[%c99, %c0_159], %615 {strides = array<i32>} : memref<150x596xf32, #tpu.memory_space<vmem>>, vector<1x596xf32>,
    %616 = vector.extract_strided_slice %115 {offsets = [4, 0], sizes = [1, 596], strides = [1, 1]} : vector<6x863xf32> to vector<1x596xf32>
    %617 = vector.shape_cast %616 : vector<1x596xf32> to vector<596xf32>
    %c100 = arith.constant 100 : index
    %c0_160 = arith.constant 0 : index
    %618 = vector.load %arg14[%c100, %c0_160] : memref<150x596xf32, #tpu.memory_space<vmem>>, vector<1x596xf32>
    %619 = vector.shape_cast %618 : vector<1x596xf32> to vector<596xf32>
    %620 = vector.shape_cast %617 : vector<596xf32> to vector<1x596xf32>
    tpu.vector_store %arg14[%c100, %c0_160], %620 {strides = array<i32>} : memref<150x596xf32, #tpu.memory_space<vmem>>, vector<1x596xf32>,
    %621 = vector.extract_strided_slice %115 {offsets = [4, 2], sizes = [1, 596], strides = [1, 1]} : vector<6x863xf32> to vector<1x596xf32>
    %622 = vector.shape_cast %621 : vector<1x596xf32> to vector<596xf32>
    %c101 = arith.constant 101 : index
    %c0_161 = arith.constant 0 : index
    %623 = vector.load %arg14[%c101, %c0_161] : memref<150x596xf32, #tpu.memory_space<vmem>>, vector<1x596xf32>
    %624 = vector.shape_cast %623 : vector<1x596xf32> to vector<596xf32>
    %625 = vector.shape_cast %622 : vector<596xf32> to vector<1x596xf32>
    tpu.vector_store %arg14[%c101, %c0_161], %625 {strides = array<i32>} : memref<150x596xf32, #tpu.memory_space<vmem>>, vector<1x596xf32>,
    %626 = vector.extract_strided_slice %115 {offsets = [4, 4], sizes = [1, 596], strides = [1, 1]} : vector<6x863xf32> to vector<1x596xf32>
    %627 = vector.shape_cast %626 : vector<1x596xf32> to vector<596xf32>
    %c102 = arith.constant 102 : index
    %c0_162 = arith.constant 0 : index
    %628 = vector.load %arg14[%c102, %c0_162] : memref<150x596xf32, #tpu.memory_space<vmem>>, vector<1x596xf32>
    %629 = vector.shape_cast %628 : vector<1x596xf32> to vector<596xf32>
    %630 = vector.shape_cast %627 : vector<596xf32> to vector<1x596xf32>
    tpu.vector_store %arg14[%c102, %c0_162], %630 {strides = array<i32>} : memref<150x596xf32, #tpu.memory_space<vmem>>, vector<1x596xf32>,
    %631 = vector.extract_strided_slice %115 {offsets = [4, 6], sizes = [1, 596], strides = [1, 1]} : vector<6x863xf32> to vector<1x596xf32>
    %632 = vector.shape_cast %631 : vector<1x596xf32> to vector<596xf32>
    %c103 = arith.constant 103 : index
    %c0_163 = arith.constant 0 : index
    %633 = vector.load %arg14[%c103, %c0_163] : memref<150x596xf32, #tpu.memory_space<vmem>>, vector<1x596xf32>
    %634 = vector.shape_cast %633 : vector<1x596xf32> to vector<596xf32>
    %635 = vector.shape_cast %632 : vector<596xf32> to vector<1x596xf32>
    tpu.vector_store %arg14[%c103, %c0_163], %635 {strides = array<i32>} : memref<150x596xf32, #tpu.memory_space<vmem>>, vector<1x596xf32>,
    %636 = vector.extract_strided_slice %115 {offsets = [4, 8], sizes = [1, 596], strides = [1, 1]} : vector<6x863xf32> to vector<1x596xf32>
    %637 = vector.shape_cast %636 : vector<1x596xf32> to vector<596xf32>
    %c104 = arith.constant 104 : index
    %c0_164 = arith.constant 0 : index
    %638 = vector.load %arg14[%c104, %c0_164] : memref<150x596xf32, #tpu.memory_space<vmem>>, vector<1x596xf32>
    %639 = vector.shape_cast %638 : vector<1x596xf32> to vector<596xf32>
    %640 = vector.shape_cast %637 : vector<596xf32> to vector<1x596xf32>
    tpu.vector_store %arg14[%c104, %c0_164], %640 {strides = array<i32>} : memref<150x596xf32, #tpu.memory_space<vmem>>, vector<1x596xf32>,
    %641 = vector.extract_strided_slice %115 {offsets = [4, 64], sizes = [1, 596], strides = [1, 1]} : vector<6x863xf32> to vector<1x596xf32>
    %642 = vector.shape_cast %641 : vector<1x596xf32> to vector<596xf32>
    %c105 = arith.constant 105 : index
    %c0_165 = arith.constant 0 : index
    %643 = vector.load %arg14[%c105, %c0_165] : memref<150x596xf32, #tpu.memory_space<vmem>>, vector<1x596xf32>
    %644 = vector.shape_cast %643 : vector<1x596xf32> to vector<596xf32>
    %645 = vector.shape_cast %642 : vector<596xf32> to vector<1x596xf32>
    tpu.vector_store %arg14[%c105, %c0_165], %645 {strides = array<i32>} : memref<150x596xf32, #tpu.memory_space<vmem>>, vector<1x596xf32>,
    %646 = vector.extract_strided_slice %115 {offsets = [4, 66], sizes = [1, 596], strides = [1, 1]} : vector<6x863xf32> to vector<1x596xf32>
    %647 = vector.shape_cast %646 : vector<1x596xf32> to vector<596xf32>
    %c106 = arith.constant 106 : index
    %c0_166 = arith.constant 0 : index
    %648 = vector.load %arg14[%c106, %c0_166] : memref<150x596xf32, #tpu.memory_space<vmem>>, vector<1x596xf32>
    %649 = vector.shape_cast %648 : vector<1x596xf32> to vector<596xf32>
    %650 = vector.shape_cast %647 : vector<596xf32> to vector<1x596xf32>
    tpu.vector_store %arg14[%c106, %c0_166], %650 {strides = array<i32>} : memref<150x596xf32, #tpu.memory_space<vmem>>, vector<1x596xf32>,
    %651 = vector.extract_strided_slice %115 {offsets = [4, 68], sizes = [1, 596], strides = [1, 1]} : vector<6x863xf32> to vector<1x596xf32>
    %652 = vector.shape_cast %651 : vector<1x596xf32> to vector<596xf32>
    %c107 = arith.constant 107 : index
    %c0_167 = arith.constant 0 : index
    %653 = vector.load %arg14[%c107, %c0_167] : memref<150x596xf32, #tpu.memory_space<vmem>>, vector<1x596xf32>
    %654 = vector.shape_cast %653 : vector<1x596xf32> to vector<596xf32>
    %655 = vector.shape_cast %652 : vector<596xf32> to vector<1x596xf32>
    tpu.vector_store %arg14[%c107, %c0_167], %655 {strides = array<i32>} : memref<150x596xf32, #tpu.memory_space<vmem>>, vector<1x596xf32>,
    %656 = vector.extract_strided_slice %115 {offsets = [4, 70], sizes = [1, 596], strides = [1, 1]} : vector<6x863xf32> to vector<1x596xf32>
    %657 = vector.shape_cast %656 : vector<1x596xf32> to vector<596xf32>
    %c108 = arith.constant 108 : index
    %c0_168 = arith.constant 0 : index
    %658 = vector.load %arg14[%c108, %c0_168] : memref<150x596xf32, #tpu.memory_space<vmem>>, vector<1x596xf32>
    %659 = vector.shape_cast %658 : vector<1x596xf32> to vector<596xf32>
    %660 = vector.shape_cast %657 : vector<596xf32> to vector<1x596xf32>
    tpu.vector_store %arg14[%c108, %c0_168], %660 {strides = array<i32>} : memref<150x596xf32, #tpu.memory_space<vmem>>, vector<1x596xf32>,
    %661 = vector.extract_strided_slice %115 {offsets = [4, 72], sizes = [1, 596], strides = [1, 1]} : vector<6x863xf32> to vector<1x596xf32>
    %662 = vector.shape_cast %661 : vector<1x596xf32> to vector<596xf32>
    %c109 = arith.constant 109 : index
    %c0_169 = arith.constant 0 : index
    %663 = vector.load %arg14[%c109, %c0_169] : memref<150x596xf32, #tpu.memory_space<vmem>>, vector<1x596xf32>
    %664 = vector.shape_cast %663 : vector<1x596xf32> to vector<596xf32>
    %665 = vector.shape_cast %662 : vector<596xf32> to vector<1x596xf32>
    tpu.vector_store %arg14[%c109, %c0_169], %665 {strides = array<i32>} : memref<150x596xf32, #tpu.memory_space<vmem>>, vector<1x596xf32>,
    %666 = vector.extract_strided_slice %115 {offsets = [4, 128], sizes = [1, 596], strides = [1, 1]} : vector<6x863xf32> to vector<1x596xf32>
    %667 = vector.shape_cast %666 : vector<1x596xf32> to vector<596xf32>
    %c110 = arith.constant 110 : index
    %c0_170 = arith.constant 0 : index
    %668 = vector.load %arg14[%c110, %c0_170] : memref<150x596xf32, #tpu.memory_space<vmem>>, vector<1x596xf32>
    %669 = vector.shape_cast %668 : vector<1x596xf32> to vector<596xf32>
    %670 = vector.shape_cast %667 : vector<596xf32> to vector<1x596xf32>
    tpu.vector_store %arg14[%c110, %c0_170], %670 {strides = array<i32>} : memref<150x596xf32, #tpu.memory_space<vmem>>, vector<1x596xf32>,
    %671 = vector.extract_strided_slice %115 {offsets = [4, 130], sizes = [1, 596], strides = [1, 1]} : vector<6x863xf32> to vector<1x596xf32>
    %672 = vector.shape_cast %671 : vector<1x596xf32> to vector<596xf32>
    %c111 = arith.constant 111 : index
    %c0_171 = arith.constant 0 : index
    %673 = vector.load %arg14[%c111, %c0_171] : memref<150x596xf32, #tpu.memory_space<vmem>>, vector<1x596xf32>
    %674 = vector.shape_cast %673 : vector<1x596xf32> to vector<596xf32>
    %675 = vector.shape_cast %672 : vector<596xf32> to vector<1x596xf32>
    tpu.vector_store %arg14[%c111, %c0_171], %675 {strides = array<i32>} : memref<150x596xf32, #tpu.memory_space<vmem>>, vector<1x596xf32>,
    %676 = vector.extract_strided_slice %115 {offsets = [4, 132], sizes = [1, 596], strides = [1, 1]} : vector<6x863xf32> to vector<1x596xf32>
    %677 = vector.shape_cast %676 : vector<1x596xf32> to vector<596xf32>
    %c112 = arith.constant 112 : index
    %c0_172 = arith.constant 0 : index
    %678 = vector.load %arg14[%c112, %c0_172] : memref<150x596xf32, #tpu.memory_space<vmem>>, vector<1x596xf32>
    %679 = vector.shape_cast %678 : vector<1x596xf32> to vector<596xf32>
    %680 = vector.shape_cast %677 : vector<596xf32> to vector<1x596xf32>
    tpu.vector_store %arg14[%c112, %c0_172], %680 {strides = array<i32>} : memref<150x596xf32, #tpu.memory_space<vmem>>, vector<1x596xf32>,
    %681 = vector.extract_strided_slice %115 {offsets = [4, 134], sizes = [1, 596], strides = [1, 1]} : vector<6x863xf32> to vector<1x596xf32>
    %682 = vector.shape_cast %681 : vector<1x596xf32> to vector<596xf32>
    %c113 = arith.constant 113 : index
    %c0_173 = arith.constant 0 : index
    %683 = vector.load %arg14[%c113, %c0_173] : memref<150x596xf32, #tpu.memory_space<vmem>>, vector<1x596xf32>
    %684 = vector.shape_cast %683 : vector<1x596xf32> to vector<596xf32>
    %685 = vector.shape_cast %682 : vector<596xf32> to vector<1x596xf32>
    tpu.vector_store %arg14[%c113, %c0_173], %685 {strides = array<i32>} : memref<150x596xf32, #tpu.memory_space<vmem>>, vector<1x596xf32>,
    %686 = vector.extract_strided_slice %115 {offsets = [4, 136], sizes = [1, 596], strides = [1, 1]} : vector<6x863xf32> to vector<1x596xf32>
    %687 = vector.shape_cast %686 : vector<1x596xf32> to vector<596xf32>
    %c114 = arith.constant 114 : index
    %c0_174 = arith.constant 0 : index
    %688 = vector.load %arg14[%c114, %c0_174] : memref<150x596xf32, #tpu.memory_space<vmem>>, vector<1x596xf32>
    %689 = vector.shape_cast %688 : vector<1x596xf32> to vector<596xf32>
    %690 = vector.shape_cast %687 : vector<596xf32> to vector<1x596xf32>
    tpu.vector_store %arg14[%c114, %c0_174], %690 {strides = array<i32>} : memref<150x596xf32, #tpu.memory_space<vmem>>, vector<1x596xf32>,
    %691 = vector.extract_strided_slice %115 {offsets = [4, 192], sizes = [1, 596], strides = [1, 1]} : vector<6x863xf32> to vector<1x596xf32>
    %692 = vector.shape_cast %691 : vector<1x596xf32> to vector<596xf32>
    %c115 = arith.constant 115 : index
    %c0_175 = arith.constant 0 : index
    %693 = vector.load %arg14[%c115, %c0_175] : memref<150x596xf32, #tpu.memory_space<vmem>>, vector<1x596xf32>
    %694 = vector.shape_cast %693 : vector<1x596xf32> to vector<596xf32>
    %695 = vector.shape_cast %692 : vector<596xf32> to vector<1x596xf32>
    tpu.vector_store %arg14[%c115, %c0_175], %695 {strides = array<i32>} : memref<150x596xf32, #tpu.memory_space<vmem>>, vector<1x596xf32>,
    %696 = vector.extract_strided_slice %115 {offsets = [4, 194], sizes = [1, 596], strides = [1, 1]} : vector<6x863xf32> to vector<1x596xf32>
    %697 = vector.shape_cast %696 : vector<1x596xf32> to vector<596xf32>
    %c116 = arith.constant 116 : index
    %c0_176 = arith.constant 0 : index
    %698 = vector.load %arg14[%c116, %c0_176] : memref<150x596xf32, #tpu.memory_space<vmem>>, vector<1x596xf32>
    %699 = vector.shape_cast %698 : vector<1x596xf32> to vector<596xf32>
    %700 = vector.shape_cast %697 : vector<596xf32> to vector<1x596xf32>
    tpu.vector_store %arg14[%c116, %c0_176], %700 {strides = array<i32>} : memref<150x596xf32, #tpu.memory_space<vmem>>, vector<1x596xf32>,
    %701 = vector.extract_strided_slice %115 {offsets = [4, 196], sizes = [1, 596], strides = [1, 1]} : vector<6x863xf32> to vector<1x596xf32>
    %702 = vector.shape_cast %701 : vector<1x596xf32> to vector<596xf32>
    %c117 = arith.constant 117 : index
    %c0_177 = arith.constant 0 : index
    %703 = vector.load %arg14[%c117, %c0_177] : memref<150x596xf32, #tpu.memory_space<vmem>>, vector<1x596xf32>
    %704 = vector.shape_cast %703 : vector<1x596xf32> to vector<596xf32>
    %705 = vector.shape_cast %702 : vector<596xf32> to vector<1x596xf32>
    tpu.vector_store %arg14[%c117, %c0_177], %705 {strides = array<i32>} : memref<150x596xf32, #tpu.memory_space<vmem>>, vector<1x596xf32>,
    %706 = vector.extract_strided_slice %115 {offsets = [4, 198], sizes = [1, 596], strides = [1, 1]} : vector<6x863xf32> to vector<1x596xf32>
    %707 = vector.shape_cast %706 : vector<1x596xf32> to vector<596xf32>
    %c118 = arith.constant 118 : index
    %c0_178 = arith.constant 0 : index
    %708 = vector.load %arg14[%c118, %c0_178] : memref<150x596xf32, #tpu.memory_space<vmem>>, vector<1x596xf32>
    %709 = vector.shape_cast %708 : vector<1x596xf32> to vector<596xf32>
    %710 = vector.shape_cast %707 : vector<596xf32> to vector<1x596xf32>
    tpu.vector_store %arg14[%c118, %c0_178], %710 {strides = array<i32>} : memref<150x596xf32, #tpu.memory_space<vmem>>, vector<1x596xf32>,
    %711 = vector.extract_strided_slice %115 {offsets = [4, 200], sizes = [1, 596], strides = [1, 1]} : vector<6x863xf32> to vector<1x596xf32>
    %712 = vector.shape_cast %711 : vector<1x596xf32> to vector<596xf32>
    %c119 = arith.constant 119 : index
    %c0_179 = arith.constant 0 : index
    %713 = vector.load %arg14[%c119, %c0_179] : memref<150x596xf32, #tpu.memory_space<vmem>>, vector<1x596xf32>
    %714 = vector.shape_cast %713 : vector<1x596xf32> to vector<596xf32>
    %715 = vector.shape_cast %712 : vector<596xf32> to vector<1x596xf32>
    tpu.vector_store %arg14[%c119, %c0_179], %715 {strides = array<i32>} : memref<150x596xf32, #tpu.memory_space<vmem>>, vector<1x596xf32>,
    %716 = vector.extract_strided_slice %115 {offsets = [4, 256], sizes = [1, 596], strides = [1, 1]} : vector<6x863xf32> to vector<1x596xf32>
    %717 = vector.shape_cast %716 : vector<1x596xf32> to vector<596xf32>
    %c120 = arith.constant 120 : index
    %c0_180 = arith.constant 0 : index
    %718 = vector.load %arg14[%c120, %c0_180] : memref<150x596xf32, #tpu.memory_space<vmem>>, vector<1x596xf32>
    %719 = vector.shape_cast %718 : vector<1x596xf32> to vector<596xf32>
    %720 = vector.shape_cast %717 : vector<596xf32> to vector<1x596xf32>
    tpu.vector_store %arg14[%c120, %c0_180], %720 {strides = array<i32>} : memref<150x596xf32, #tpu.memory_space<vmem>>, vector<1x596xf32>,
    %721 = vector.extract_strided_slice %115 {offsets = [4, 258], sizes = [1, 596], strides = [1, 1]} : vector<6x863xf32> to vector<1x596xf32>
    %722 = vector.shape_cast %721 : vector<1x596xf32> to vector<596xf32>
    %c121 = arith.constant 121 : index
    %c0_181 = arith.constant 0 : index
    %723 = vector.load %arg14[%c121, %c0_181] : memref<150x596xf32, #tpu.memory_space<vmem>>, vector<1x596xf32>
    %724 = vector.shape_cast %723 : vector<1x596xf32> to vector<596xf32>
    %725 = vector.shape_cast %722 : vector<596xf32> to vector<1x596xf32>
    tpu.vector_store %arg14[%c121, %c0_181], %725 {strides = array<i32>} : memref<150x596xf32, #tpu.memory_space<vmem>>, vector<1x596xf32>,
    %726 = vector.extract_strided_slice %115 {offsets = [4, 260], sizes = [1, 596], strides = [1, 1]} : vector<6x863xf32> to vector<1x596xf32>
    %727 = vector.shape_cast %726 : vector<1x596xf32> to vector<596xf32>
    %c122 = arith.constant 122 : index
    %c0_182 = arith.constant 0 : index
    %728 = vector.load %arg14[%c122, %c0_182] : memref<150x596xf32, #tpu.memory_space<vmem>>, vector<1x596xf32>
    %729 = vector.shape_cast %728 : vector<1x596xf32> to vector<596xf32>
    %730 = vector.shape_cast %727 : vector<596xf32> to vector<1x596xf32>
    tpu.vector_store %arg14[%c122, %c0_182], %730 {strides = array<i32>} : memref<150x596xf32, #tpu.memory_space<vmem>>, vector<1x596xf32>,
    %731 = vector.extract_strided_slice %115 {offsets = [4, 262], sizes = [1, 596], strides = [1, 1]} : vector<6x863xf32> to vector<1x596xf32>
    %732 = vector.shape_cast %731 : vector<1x596xf32> to vector<596xf32>
    %c123 = arith.constant 123 : index
    %c0_183 = arith.constant 0 : index
    %733 = vector.load %arg14[%c123, %c0_183] : memref<150x596xf32, #tpu.memory_space<vmem>>, vector<1x596xf32>
    %734 = vector.shape_cast %733 : vector<1x596xf32> to vector<596xf32>
    %735 = vector.shape_cast %732 : vector<596xf32> to vector<1x596xf32>
    tpu.vector_store %arg14[%c123, %c0_183], %735 {strides = array<i32>} : memref<150x596xf32, #tpu.memory_space<vmem>>, vector<1x596xf32>,
    %736 = vector.extract_strided_slice %115 {offsets = [4, 264], sizes = [1, 596], strides = [1, 1]} : vector<6x863xf32> to vector<1x596xf32>
    %737 = vector.shape_cast %736 : vector<1x596xf32> to vector<596xf32>
    %c124 = arith.constant 124 : index
    %c0_184 = arith.constant 0 : index
    %738 = vector.load %arg14[%c124, %c0_184] : memref<150x596xf32, #tpu.memory_space<vmem>>, vector<1x596xf32>
    %739 = vector.shape_cast %738 : vector<1x596xf32> to vector<596xf32>
    %740 = vector.shape_cast %737 : vector<596xf32> to vector<1x596xf32>
    tpu.vector_store %arg14[%c124, %c0_184], %740 {strides = array<i32>} : memref<150x596xf32, #tpu.memory_space<vmem>>, vector<1x596xf32>,
    %741 = vector.extract_strided_slice %115 {offsets = [5, 0], sizes = [1, 596], strides = [1, 1]} : vector<6x863xf32> to vector<1x596xf32>
    %742 = vector.shape_cast %741 : vector<1x596xf32> to vector<596xf32>
    %c125 = arith.constant 125 : index
    %c0_185 = arith.constant 0 : index
    %743 = vector.load %arg14[%c125, %c0_185] : memref<150x596xf32, #tpu.memory_space<vmem>>, vector<1x596xf32>
    %744 = vector.shape_cast %743 : vector<1x596xf32> to vector<596xf32>
    %745 = vector.shape_cast %742 : vector<596xf32> to vector<1x596xf32>
    tpu.vector_store %arg14[%c125, %c0_185], %745 {strides = array<i32>} : memref<150x596xf32, #tpu.memory_space<vmem>>, vector<1x596xf32>,
    %746 = vector.extract_strided_slice %115 {offsets = [5, 2], sizes = [1, 596], strides = [1, 1]} : vector<6x863xf32> to vector<1x596xf32>
    %747 = vector.shape_cast %746 : vector<1x596xf32> to vector<596xf32>
    %c126 = arith.constant 126 : index
    %c0_186 = arith.constant 0 : index
    %748 = vector.load %arg14[%c126, %c0_186] : memref<150x596xf32, #tpu.memory_space<vmem>>, vector<1x596xf32>
    %749 = vector.shape_cast %748 : vector<1x596xf32> to vector<596xf32>
    %750 = vector.shape_cast %747 : vector<596xf32> to vector<1x596xf32>
    tpu.vector_store %arg14[%c126, %c0_186], %750 {strides = array<i32>} : memref<150x596xf32, #tpu.memory_space<vmem>>, vector<1x596xf32>,
    %751 = vector.extract_strided_slice %115 {offsets = [5, 4], sizes = [1, 596], strides = [1, 1]} : vector<6x863xf32> to vector<1x596xf32>
    %752 = vector.shape_cast %751 : vector<1x596xf32> to vector<596xf32>
    %c127 = arith.constant 127 : index
    %c0_187 = arith.constant 0 : index
    %753 = vector.load %arg14[%c127, %c0_187] : memref<150x596xf32, #tpu.memory_space<vmem>>, vector<1x596xf32>
    %754 = vector.shape_cast %753 : vector<1x596xf32> to vector<596xf32>
    %755 = vector.shape_cast %752 : vector<596xf32> to vector<1x596xf32>
    tpu.vector_store %arg14[%c127, %c0_187], %755 {strides = array<i32>} : memref<150x596xf32, #tpu.memory_space<vmem>>, vector<1x596xf32>,
    %756 = vector.extract_strided_slice %115 {offsets = [5, 6], sizes = [1, 596], strides = [1, 1]} : vector<6x863xf32> to vector<1x596xf32>
    %757 = vector.shape_cast %756 : vector<1x596xf32> to vector<596xf32>
    %c128 = arith.constant 128 : index
    %c0_188 = arith.constant 0 : index
    %758 = vector.load %arg14[%c128, %c0_188] : memref<150x596xf32, #tpu.memory_space<vmem>>, vector<1x596xf32>
    %759 = vector.shape_cast %758 : vector<1x596xf32> to vector<596xf32>
    %760 = vector.shape_cast %757 : vector<596xf32> to vector<1x596xf32>
    tpu.vector_store %arg14[%c128, %c0_188], %760 {strides = array<i32>} : memref<150x596xf32, #tpu.memory_space<vmem>>, vector<1x596xf32>,
    %761 = vector.extract_strided_slice %115 {offsets = [5, 8], sizes = [1, 596], strides = [1, 1]} : vector<6x863xf32> to vector<1x596xf32>
    %762 = vector.shape_cast %761 : vector<1x596xf32> to vector<596xf32>
    %c129 = arith.constant 129 : index
    %c0_189 = arith.constant 0 : index
    %763 = vector.load %arg14[%c129, %c0_189] : memref<150x596xf32, #tpu.memory_space<vmem>>, vector<1x596xf32>
    %764 = vector.shape_cast %763 : vector<1x596xf32> to vector<596xf32>
    %765 = vector.shape_cast %762 : vector<596xf32> to vector<1x596xf32>
    tpu.vector_store %arg14[%c129, %c0_189], %765 {strides = array<i32>} : memref<150x596xf32, #tpu.memory_space<vmem>>, vector<1x596xf32>,
    %766 = vector.extract_strided_slice %115 {offsets = [5, 64], sizes = [1, 596], strides = [1, 1]} : vector<6x863xf32> to vector<1x596xf32>
    %767 = vector.shape_cast %766 : vector<1x596xf32> to vector<596xf32>
    %c130 = arith.constant 130 : index
    %c0_190 = arith.constant 0 : index
    %768 = vector.load %arg14[%c130, %c0_190] : memref<150x596xf32, #tpu.memory_space<vmem>>, vector<1x596xf32>
    %769 = vector.shape_cast %768 : vector<1x596xf32> to vector<596xf32>
    %770 = vector.shape_cast %767 : vector<596xf32> to vector<1x596xf32>
    tpu.vector_store %arg14[%c130, %c0_190], %770 {strides = array<i32>} : memref<150x596xf32, #tpu.memory_space<vmem>>, vector<1x596xf32>,
    %771 = vector.extract_strided_slice %115 {offsets = [5, 66], sizes = [1, 596], strides = [1, 1]} : vector<6x863xf32> to vector<1x596xf32>
    %772 = vector.shape_cast %771 : vector<1x596xf32> to vector<596xf32>
    %c131 = arith.constant 131 : index
    %c0_191 = arith.constant 0 : index
    %773 = vector.load %arg14[%c131, %c0_191] : memref<150x596xf32, #tpu.memory_space<vmem>>, vector<1x596xf32>
    %774 = vector.shape_cast %773 : vector<1x596xf32> to vector<596xf32>
    %775 = vector.shape_cast %772 : vector<596xf32> to vector<1x596xf32>
    tpu.vector_store %arg14[%c131, %c0_191], %775 {strides = array<i32>} : memref<150x596xf32, #tpu.memory_space<vmem>>, vector<1x596xf32>,
    %776 = vector.extract_strided_slice %115 {offsets = [5, 68], sizes = [1, 596], strides = [1, 1]} : vector<6x863xf32> to vector<1x596xf32>
    %777 = vector.shape_cast %776 : vector<1x596xf32> to vector<596xf32>
    %c132 = arith.constant 132 : index
    %c0_192 = arith.constant 0 : index
    %778 = vector.load %arg14[%c132, %c0_192] : memref<150x596xf32, #tpu.memory_space<vmem>>, vector<1x596xf32>
    %779 = vector.shape_cast %778 : vector<1x596xf32> to vector<596xf32>
    %780 = vector.shape_cast %777 : vector<596xf32> to vector<1x596xf32>
    tpu.vector_store %arg14[%c132, %c0_192], %780 {strides = array<i32>} : memref<150x596xf32, #tpu.memory_space<vmem>>, vector<1x596xf32>,
    %781 = vector.extract_strided_slice %115 {offsets = [5, 70], sizes = [1, 596], strides = [1, 1]} : vector<6x863xf32> to vector<1x596xf32>
    %782 = vector.shape_cast %781 : vector<1x596xf32> to vector<596xf32>
    %c133 = arith.constant 133 : index
    %c0_193 = arith.constant 0 : index
    %783 = vector.load %arg14[%c133, %c0_193] : memref<150x596xf32, #tpu.memory_space<vmem>>, vector<1x596xf32>
    %784 = vector.shape_cast %783 : vector<1x596xf32> to vector<596xf32>
    %785 = vector.shape_cast %782 : vector<596xf32> to vector<1x596xf32>
    tpu.vector_store %arg14[%c133, %c0_193], %785 {strides = array<i32>} : memref<150x596xf32, #tpu.memory_space<vmem>>, vector<1x596xf32>,
    %786 = vector.extract_strided_slice %115 {offsets = [5, 72], sizes = [1, 596], strides = [1, 1]} : vector<6x863xf32> to vector<1x596xf32>
    %787 = vector.shape_cast %786 : vector<1x596xf32> to vector<596xf32>
    %c134 = arith.constant 134 : index
    %c0_194 = arith.constant 0 : index
    %788 = vector.load %arg14[%c134, %c0_194] : memref<150x596xf32, #tpu.memory_space<vmem>>, vector<1x596xf32>
    %789 = vector.shape_cast %788 : vector<1x596xf32> to vector<596xf32>
    %790 = vector.shape_cast %787 : vector<596xf32> to vector<1x596xf32>
    tpu.vector_store %arg14[%c134, %c0_194], %790 {strides = array<i32>} : memref<150x596xf32, #tpu.memory_space<vmem>>, vector<1x596xf32>,
    %791 = vector.extract_strided_slice %115 {offsets = [5, 128], sizes = [1, 596], strides = [1, 1]} : vector<6x863xf32> to vector<1x596xf32>
    %792 = vector.shape_cast %791 : vector<1x596xf32> to vector<596xf32>
    %c135 = arith.constant 135 : index
    %c0_195 = arith.constant 0 : index
    %793 = vector.load %arg14[%c135, %c0_195] : memref<150x596xf32, #tpu.memory_space<vmem>>, vector<1x596xf32>
    %794 = vector.shape_cast %793 : vector<1x596xf32> to vector<596xf32>
    %795 = vector.shape_cast %792 : vector<596xf32> to vector<1x596xf32>
    tpu.vector_store %arg14[%c135, %c0_195], %795 {strides = array<i32>} : memref<150x596xf32, #tpu.memory_space<vmem>>, vector<1x596xf32>,
    %796 = vector.extract_strided_slice %115 {offsets = [5, 130], sizes = [1, 596], strides = [1, 1]} : vector<6x863xf32> to vector<1x596xf32>
    %797 = vector.shape_cast %796 : vector<1x596xf32> to vector<596xf32>
    %c136 = arith.constant 136 : index
    %c0_196 = arith.constant 0 : index
    %798 = vector.load %arg14[%c136, %c0_196] : memref<150x596xf32, #tpu.memory_space<vmem>>, vector<1x596xf32>
    %799 = vector.shape_cast %798 : vector<1x596xf32> to vector<596xf32>
    %800 = vector.shape_cast %797 : vector<596xf32> to vector<1x596xf32>
    tpu.vector_store %arg14[%c136, %c0_196], %800 {strides = array<i32>} : memref<150x596xf32, #tpu.memory_space<vmem>>, vector<1x596xf32>,
    %801 = vector.extract_strided_slice %115 {offsets = [5, 132], sizes = [1, 596], strides = [1, 1]} : vector<6x863xf32> to vector<1x596xf32>
    %802 = vector.shape_cast %801 : vector<1x596xf32> to vector<596xf32>
    %c137 = arith.constant 137 : index
    %c0_197 = arith.constant 0 : index
    %803 = vector.load %arg14[%c137, %c0_197] : memref<150x596xf32, #tpu.memory_space<vmem>>, vector<1x596xf32>
    %804 = vector.shape_cast %803 : vector<1x596xf32> to vector<596xf32>
    %805 = vector.shape_cast %802 : vector<596xf32> to vector<1x596xf32>
    tpu.vector_store %arg14[%c137, %c0_197], %805 {strides = array<i32>} : memref<150x596xf32, #tpu.memory_space<vmem>>, vector<1x596xf32>,
    %806 = vector.extract_strided_slice %115 {offsets = [5, 134], sizes = [1, 596], strides = [1, 1]} : vector<6x863xf32> to vector<1x596xf32>
    %807 = vector.shape_cast %806 : vector<1x596xf32> to vector<596xf32>
    %c138 = arith.constant 138 : index
    %c0_198 = arith.constant 0 : index
    %808 = vector.load %arg14[%c138, %c0_198] : memref<150x596xf32, #tpu.memory_space<vmem>>, vector<1x596xf32>
    %809 = vector.shape_cast %808 : vector<1x596xf32> to vector<596xf32>
    %810 = vector.shape_cast %807 : vector<596xf32> to vector<1x596xf32>
    tpu.vector_store %arg14[%c138, %c0_198], %810 {strides = array<i32>} : memref<150x596xf32, #tpu.memory_space<vmem>>, vector<1x596xf32>,
    %811 = vector.extract_strided_slice %115 {offsets = [5, 136], sizes = [1, 596], strides = [1, 1]} : vector<6x863xf32> to vector<1x596xf32>
    %812 = vector.shape_cast %811 : vector<1x596xf32> to vector<596xf32>
    %c139 = arith.constant 139 : index
    %c0_199 = arith.constant 0 : index
    %813 = vector.load %arg14[%c139, %c0_199] : memref<150x596xf32, #tpu.memory_space<vmem>>, vector<1x596xf32>
    %814 = vector.shape_cast %813 : vector<1x596xf32> to vector<596xf32>
    %815 = vector.shape_cast %812 : vector<596xf32> to vector<1x596xf32>
    tpu.vector_store %arg14[%c139, %c0_199], %815 {strides = array<i32>} : memref<150x596xf32, #tpu.memory_space<vmem>>, vector<1x596xf32>,
    %816 = vector.extract_strided_slice %115 {offsets = [5, 192], sizes = [1, 596], strides = [1, 1]} : vector<6x863xf32> to vector<1x596xf32>
    %817 = vector.shape_cast %816 : vector<1x596xf32> to vector<596xf32>
    %c140 = arith.constant 140 : index
    %c0_200 = arith.constant 0 : index
    %818 = vector.load %arg14[%c140, %c0_200] : memref<150x596xf32, #tpu.memory_space<vmem>>, vector<1x596xf32>
    %819 = vector.shape_cast %818 : vector<1x596xf32> to vector<596xf32>
    %820 = vector.shape_cast %817 : vector<596xf32> to vector<1x596xf32>
    tpu.vector_store %arg14[%c140, %c0_200], %820 {strides = array<i32>} : memref<150x596xf32, #tpu.memory_space<vmem>>, vector<1x596xf32>,
    %821 = vector.extract_strided_slice %115 {offsets = [5, 194], sizes = [1, 596], strides = [1, 1]} : vector<6x863xf32> to vector<1x596xf32>
    %822 = vector.shape_cast %821 : vector<1x596xf32> to vector<596xf32>
    %c141 = arith.constant 141 : index
    %c0_201 = arith.constant 0 : index
    %823 = vector.load %arg14[%c141, %c0_201] : memref<150x596xf32, #tpu.memory_space<vmem>>, vector<1x596xf32>
    %824 = vector.shape_cast %823 : vector<1x596xf32> to vector<596xf32>
    %825 = vector.shape_cast %822 : vector<596xf32> to vector<1x596xf32>
    tpu.vector_store %arg14[%c141, %c0_201], %825 {strides = array<i32>} : memref<150x596xf32, #tpu.memory_space<vmem>>, vector<1x596xf32>,
    %826 = vector.extract_strided_slice %115 {offsets = [5, 196], sizes = [1, 596], strides = [1, 1]} : vector<6x863xf32> to vector<1x596xf32>
    %827 = vector.shape_cast %826 : vector<1x596xf32> to vector<596xf32>
    %c142 = arith.constant 142 : index
    %c0_202 = arith.constant 0 : index
    %828 = vector.load %arg14[%c142, %c0_202] : memref<150x596xf32, #tpu.memory_space<vmem>>, vector<1x596xf32>
    %829 = vector.shape_cast %828 : vector<1x596xf32> to vector<596xf32>
    %830 = vector.shape_cast %827 : vector<596xf32> to vector<1x596xf32>
    tpu.vector_store %arg14[%c142, %c0_202], %830 {strides = array<i32>} : memref<150x596xf32, #tpu.memory_space<vmem>>, vector<1x596xf32>,
    %831 = vector.extract_strided_slice %115 {offsets = [5, 198], sizes = [1, 596], strides = [1, 1]} : vector<6x863xf32> to vector<1x596xf32>
    %832 = vector.shape_cast %831 : vector<1x596xf32> to vector<596xf32>
    %c143 = arith.constant 143 : index
    %c0_203 = arith.constant 0 : index
    %833 = vector.load %arg14[%c143, %c0_203] : memref<150x596xf32, #tpu.memory_space<vmem>>, vector<1x596xf32>
    %834 = vector.shape_cast %833 : vector<1x596xf32> to vector<596xf32>
    %835 = vector.shape_cast %832 : vector<596xf32> to vector<1x596xf32>
    tpu.vector_store %arg14[%c143, %c0_203], %835 {strides = array<i32>} : memref<150x596xf32, #tpu.memory_space<vmem>>, vector<1x596xf32>,
    %836 = vector.extract_strided_slice %115 {offsets = [5, 200], sizes = [1, 596], strides = [1, 1]} : vector<6x863xf32> to vector<1x596xf32>
    %837 = vector.shape_cast %836 : vector<1x596xf32> to vector<596xf32>
    %c144 = arith.constant 144 : index
    %c0_204 = arith.constant 0 : index
    %838 = vector.load %arg14[%c144, %c0_204] : memref<150x596xf32, #tpu.memory_space<vmem>>, vector<1x596xf32>
    %839 = vector.shape_cast %838 : vector<1x596xf32> to vector<596xf32>
    %840 = vector.shape_cast %837 : vector<596xf32> to vector<1x596xf32>
    tpu.vector_store %arg14[%c144, %c0_204], %840 {strides = array<i32>} : memref<150x596xf32, #tpu.memory_space<vmem>>, vector<1x596xf32>,
    %841 = vector.extract_strided_slice %115 {offsets = [5, 256], sizes = [1, 596], strides = [1, 1]} : vector<6x863xf32> to vector<1x596xf32>
    %842 = vector.shape_cast %841 : vector<1x596xf32> to vector<596xf32>
    %c145 = arith.constant 145 : index
    %c0_205 = arith.constant 0 : index
    %843 = vector.load %arg14[%c145, %c0_205] : memref<150x596xf32, #tpu.memory_space<vmem>>, vector<1x596xf32>
    %844 = vector.shape_cast %843 : vector<1x596xf32> to vector<596xf32>
    %845 = vector.shape_cast %842 : vector<596xf32> to vector<1x596xf32>
    tpu.vector_store %arg14[%c145, %c0_205], %845 {strides = array<i32>} : memref<150x596xf32, #tpu.memory_space<vmem>>, vector<1x596xf32>,
    %846 = vector.extract_strided_slice %115 {offsets = [5, 258], sizes = [1, 596], strides = [1, 1]} : vector<6x863xf32> to vector<1x596xf32>
    %847 = vector.shape_cast %846 : vector<1x596xf32> to vector<596xf32>
    %c146 = arith.constant 146 : index
    %c0_206 = arith.constant 0 : index
    %848 = vector.load %arg14[%c146, %c0_206] : memref<150x596xf32, #tpu.memory_space<vmem>>, vector<1x596xf32>
    %849 = vector.shape_cast %848 : vector<1x596xf32> to vector<596xf32>
    %850 = vector.shape_cast %847 : vector<596xf32> to vector<1x596xf32>
    tpu.vector_store %arg14[%c146, %c0_206], %850 {strides = array<i32>} : memref<150x596xf32, #tpu.memory_space<vmem>>, vector<1x596xf32>,
    %851 = vector.extract_strided_slice %115 {offsets = [5, 260], sizes = [1, 596], strides = [1, 1]} : vector<6x863xf32> to vector<1x596xf32>
    %852 = vector.shape_cast %851 : vector<1x596xf32> to vector<596xf32>
    %c147 = arith.constant 147 : index
    %c0_207 = arith.constant 0 : index
    %853 = vector.load %arg14[%c147, %c0_207] : memref<150x596xf32, #tpu.memory_space<vmem>>, vector<1x596xf32>
    %854 = vector.shape_cast %853 : vector<1x596xf32> to vector<596xf32>
    %855 = vector.shape_cast %852 : vector<596xf32> to vector<1x596xf32>
    tpu.vector_store %arg14[%c147, %c0_207], %855 {strides = array<i32>} : memref<150x596xf32, #tpu.memory_space<vmem>>, vector<1x596xf32>,
    %856 = vector.extract_strided_slice %115 {offsets = [5, 262], sizes = [1, 596], strides = [1, 1]} : vector<6x863xf32> to vector<1x596xf32>
    %857 = vector.shape_cast %856 : vector<1x596xf32> to vector<596xf32>
    %c148 = arith.constant 148 : index
    %c0_208 = arith.constant 0 : index
    %858 = vector.load %arg14[%c148, %c0_208] : memref<150x596xf32, #tpu.memory_space<vmem>>, vector<1x596xf32>
    %859 = vector.shape_cast %858 : vector<1x596xf32> to vector<596xf32>
    %860 = vector.shape_cast %857 : vector<596xf32> to vector<1x596xf32>
    tpu.vector_store %arg14[%c148, %c0_208], %860 {strides = array<i32>} : memref<150x596xf32, #tpu.memory_space<vmem>>, vector<1x596xf32>,
    %861 = vector.extract_strided_slice %115 {offsets = [5, 264], sizes = [1, 596], strides = [1, 1]} : vector<6x863xf32> to vector<1x596xf32>
    %862 = vector.shape_cast %861 : vector<1x596xf32> to vector<596xf32>
    %c149 = arith.constant 149 : index
    %c0_209 = arith.constant 0 : index
    %863 = vector.load %arg14[%c149, %c0_209] : memref<150x596xf32, #tpu.memory_space<vmem>>, vector<1x596xf32>
    %864 = vector.shape_cast %863 : vector<1x596xf32> to vector<596xf32>
    %865 = vector.shape_cast %862 : vector<596xf32> to vector<1x596xf32>
    tpu.vector_store %arg14[%c149, %c0_209], %865 {strides = array<i32>} : memref<150x596xf32, #tpu.memory_space<vmem>>, vector<1x596xf32>,
    %c0_210 = arith.constant 0 : index
    %c0_211 = arith.constant 0 : index
    %866 = vector.load %arg4[%c0_210, %c0_211] : memref<16x150xf32, #tpu.memory_space<vmem>>, vector<16x150xf32>
    %c0_212 = arith.constant 0 : index
    %c0_213 = arith.constant 0 : index
    %867 = vector.load %arg14[%c0_212, %c0_213] : memref<150x596xf32, #tpu.memory_space<vmem>>, vector<150x596xf32>
    %cst_214 = arith.constant dense<0.000000e+00> : vector<16x596xf32>
    %868 = tpu.matmul %866, %867, %cst_214 {dimension_numbers = #tpu.dot_dimension_numbers<[1], [0], [0], [1], [0, 0, 1, 1], [], []>} : vector<16x150xf32>, vector<150x596xf32>, vector<16x596xf32> -> vector<16x596xf32>
    %c0_215 = arith.constant 0 : index
    %c0_216 = arith.constant 0 : index
    %869 = vector.load %arg5[%c0_215, %c0_216] : memref<16x1xf32, #tpu.memory_space<vmem>>, vector<16x1xf32>
    %870 = vector.broadcast %869 : vector<16x1xf32> to vector<16x596xf32>
    %871 = arith.addf %868, %870 : vector<16x596xf32>
    %cst_217 = arith.constant 0.000000e+00 : f32
    %872 = vector.broadcast %cst_217 : f32 to vector<16x596xf32>
    %873 = arith.maximumf %871, %872 : vector<16x596xf32>
    %874 = vector.extract_strided_slice %873 {offsets = [0, 0], sizes = [16, 532], strides = [1, 1]} : vector<16x596xf32> to vector<16x532xf32>
    %875 = vector.extract_strided_slice %873 {offsets = [0, 64], sizes = [16, 532], strides = [1, 1]} : vector<16x596xf32> to vector<16x532xf32>
    %876 = arith.maximumf %874, %875 : vector<16x532xf32>
    %877 = vector.extract_strided_slice %876 {offsets = [0, 0], sizes = [16, 530], strides = [1, 1]} : vector<16x532xf32> to vector<16x530xf32>
    %878 = vector.extract_strided_slice %876 {offsets = [0, 2], sizes = [16, 530], strides = [1, 1]} : vector<16x532xf32> to vector<16x530xf32>
    %879 = arith.maximumf %877, %878 : vector<16x530xf32>
    %880 = vector.extract_strided_slice %879 {offsets = [0, 0], sizes = [16, 1], strides = [1, 1]} : vector<16x530xf32> to vector<16x1xf32>
    %c0_218 = arith.constant 0 : index
    %c0_219 = arith.constant 0 : index
    %881 = vector.load %arg15[%c0_218, %c0_219] : memref<400x1xf32, #tpu.memory_space<vmem>>, vector<16x1xf32>
    tpu.vector_store %arg15[%c0_218, %c0_219], %880 {strides = array<i32>} : memref<400x1xf32, #tpu.memory_space<vmem>>, vector<16x1xf32>,
    %882 = vector.extract_strided_slice %879 {offsets = [0, 4], sizes = [16, 1], strides = [1, 1]} : vector<16x530xf32> to vector<16x1xf32>
    %c16_220 = arith.constant 16 : index
    %c0_221 = arith.constant 0 : index
    %883 = vector.load %arg15[%c16_220, %c0_221] : memref<400x1xf32, #tpu.memory_space<vmem>>, vector<16x1xf32>
    tpu.vector_store %arg15[%c16_220, %c0_221], %882 {strides = array<i32>} : memref<400x1xf32, #tpu.memory_space<vmem>>, vector<16x1xf32>,
    %884 = vector.extract_strided_slice %879 {offsets = [0, 8], sizes = [16, 1], strides = [1, 1]} : vector<16x530xf32> to vector<16x1xf32>
    %c32_222 = arith.constant 32 : index
    %c0_223 = arith.constant 0 : index
    %885 = vector.load %arg15[%c32_222, %c0_223] : memref<400x1xf32, #tpu.memory_space<vmem>>, vector<16x1xf32>
    tpu.vector_store %arg15[%c32_222, %c0_223], %884 {strides = array<i32>} : memref<400x1xf32, #tpu.memory_space<vmem>>, vector<16x1xf32>,
    %886 = vector.extract_strided_slice %879 {offsets = [0, 12], sizes = [16, 1], strides = [1, 1]} : vector<16x530xf32> to vector<16x1xf32>
    %c48_224 = arith.constant 48 : index
    %c0_225 = arith.constant 0 : index
    %887 = vector.load %arg15[%c48_224, %c0_225] : memref<400x1xf32, #tpu.memory_space<vmem>>, vector<16x1xf32>
    tpu.vector_store %arg15[%c48_224, %c0_225], %886 {strides = array<i32>} : memref<400x1xf32, #tpu.memory_space<vmem>>, vector<16x1xf32>,
    %888 = vector.extract_strided_slice %879 {offsets = [0, 16], sizes = [16, 1], strides = [1, 1]} : vector<16x530xf32> to vector<16x1xf32>
    %c64_226 = arith.constant 64 : index
    %c0_227 = arith.constant 0 : index
    %889 = vector.load %arg15[%c64_226, %c0_227] : memref<400x1xf32, #tpu.memory_space<vmem>>, vector<16x1xf32>
    tpu.vector_store %arg15[%c64_226, %c0_227], %888 {strides = array<i32>} : memref<400x1xf32, #tpu.memory_space<vmem>>, vector<16x1xf32>,
    %890 = vector.extract_strided_slice %879 {offsets = [0, 128], sizes = [16, 1], strides = [1, 1]} : vector<16x530xf32> to vector<16x1xf32>
    %c80_228 = arith.constant 80 : index
    %c0_229 = arith.constant 0 : index
    %891 = vector.load %arg15[%c80_228, %c0_229] : memref<400x1xf32, #tpu.memory_space<vmem>>, vector<16x1xf32>
    tpu.vector_store %arg15[%c80_228, %c0_229], %890 {strides = array<i32>} : memref<400x1xf32, #tpu.memory_space<vmem>>, vector<16x1xf32>,
    %892 = vector.extract_strided_slice %879 {offsets = [0, 132], sizes = [16, 1], strides = [1, 1]} : vector<16x530xf32> to vector<16x1xf32>
    %c96_230 = arith.constant 96 : index
    %c0_231 = arith.constant 0 : index
    %893 = vector.load %arg15[%c96_230, %c0_231] : memref<400x1xf32, #tpu.memory_space<vmem>>, vector<16x1xf32>
    tpu.vector_store %arg15[%c96_230, %c0_231], %892 {strides = array<i32>} : memref<400x1xf32, #tpu.memory_space<vmem>>, vector<16x1xf32>,
    %894 = vector.extract_strided_slice %879 {offsets = [0, 136], sizes = [16, 1], strides = [1, 1]} : vector<16x530xf32> to vector<16x1xf32>
    %c112_232 = arith.constant 112 : index
    %c0_233 = arith.constant 0 : index
    %895 = vector.load %arg15[%c112_232, %c0_233] : memref<400x1xf32, #tpu.memory_space<vmem>>, vector<16x1xf32>
    tpu.vector_store %arg15[%c112_232, %c0_233], %894 {strides = array<i32>} : memref<400x1xf32, #tpu.memory_space<vmem>>, vector<16x1xf32>,
    %896 = vector.extract_strided_slice %879 {offsets = [0, 140], sizes = [16, 1], strides = [1, 1]} : vector<16x530xf32> to vector<16x1xf32>
    %c128_234 = arith.constant 128 : index
    %c0_235 = arith.constant 0 : index
    %897 = vector.load %arg15[%c128_234, %c0_235] : memref<400x1xf32, #tpu.memory_space<vmem>>, vector<16x1xf32>
    tpu.vector_store %arg15[%c128_234, %c0_235], %896 {strides = array<i32>} : memref<400x1xf32, #tpu.memory_space<vmem>>, vector<16x1xf32>,
    %898 = vector.extract_strided_slice %879 {offsets = [0, 144], sizes = [16, 1], strides = [1, 1]} : vector<16x530xf32> to vector<16x1xf32>
    %c144_236 = arith.constant 144 : index
    %c0_237 = arith.constant 0 : index
    %899 = vector.load %arg15[%c144_236, %c0_237] : memref<400x1xf32, #tpu.memory_space<vmem>>, vector<16x1xf32>
    tpu.vector_store %arg15[%c144_236, %c0_237], %898 {strides = array<i32>} : memref<400x1xf32, #tpu.memory_space<vmem>>, vector<16x1xf32>,
    %900 = vector.extract_strided_slice %879 {offsets = [0, 256], sizes = [16, 1], strides = [1, 1]} : vector<16x530xf32> to vector<16x1xf32>
    %c160 = arith.constant 160 : index
    %c0_238 = arith.constant 0 : index
    %901 = vector.load %arg15[%c160, %c0_238] : memref<400x1xf32, #tpu.memory_space<vmem>>, vector<16x1xf32>
    tpu.vector_store %arg15[%c160, %c0_238], %900 {strides = array<i32>} : memref<400x1xf32, #tpu.memory_space<vmem>>, vector<16x1xf32>,
    %902 = vector.extract_strided_slice %879 {offsets = [0, 260], sizes = [16, 1], strides = [1, 1]} : vector<16x530xf32> to vector<16x1xf32>
    %c176 = arith.constant 176 : index
    %c0_239 = arith.constant 0 : index
    %903 = vector.load %arg15[%c176, %c0_239] : memref<400x1xf32, #tpu.memory_space<vmem>>, vector<16x1xf32>
    tpu.vector_store %arg15[%c176, %c0_239], %902 {strides = array<i32>} : memref<400x1xf32, #tpu.memory_space<vmem>>, vector<16x1xf32>,
    %904 = vector.extract_strided_slice %879 {offsets = [0, 264], sizes = [16, 1], strides = [1, 1]} : vector<16x530xf32> to vector<16x1xf32>
    %c192 = arith.constant 192 : index
    %c0_240 = arith.constant 0 : index
    %905 = vector.load %arg15[%c192, %c0_240] : memref<400x1xf32, #tpu.memory_space<vmem>>, vector<16x1xf32>
    tpu.vector_store %arg15[%c192, %c0_240], %904 {strides = array<i32>} : memref<400x1xf32, #tpu.memory_space<vmem>>, vector<16x1xf32>,
    %906 = vector.extract_strided_slice %879 {offsets = [0, 268], sizes = [16, 1], strides = [1, 1]} : vector<16x530xf32> to vector<16x1xf32>
    %c208 = arith.constant 208 : index
    %c0_241 = arith.constant 0 : index
    %907 = vector.load %arg15[%c208, %c0_241] : memref<400x1xf32, #tpu.memory_space<vmem>>, vector<16x1xf32>
    tpu.vector_store %arg15[%c208, %c0_241], %906 {strides = array<i32>} : memref<400x1xf32, #tpu.memory_space<vmem>>, vector<16x1xf32>,
    %908 = vector.extract_strided_slice %879 {offsets = [0, 272], sizes = [16, 1], strides = [1, 1]} : vector<16x530xf32> to vector<16x1xf32>
    %c224 = arith.constant 224 : index
    %c0_242 = arith.constant 0 : index
    %909 = vector.load %arg15[%c224, %c0_242] : memref<400x1xf32, #tpu.memory_space<vmem>>, vector<16x1xf32>
    tpu.vector_store %arg15[%c224, %c0_242], %908 {strides = array<i32>} : memref<400x1xf32, #tpu.memory_space<vmem>>, vector<16x1xf32>,
    %910 = vector.extract_strided_slice %879 {offsets = [0, 384], sizes = [16, 1], strides = [1, 1]} : vector<16x530xf32> to vector<16x1xf32>
    %c240 = arith.constant 240 : index
    %c0_243 = arith.constant 0 : index
    %911 = vector.load %arg15[%c240, %c0_243] : memref<400x1xf32, #tpu.memory_space<vmem>>, vector<16x1xf32>
    tpu.vector_store %arg15[%c240, %c0_243], %910 {strides = array<i32>} : memref<400x1xf32, #tpu.memory_space<vmem>>, vector<16x1xf32>,
    %912 = vector.extract_strided_slice %879 {offsets = [0, 388], sizes = [16, 1], strides = [1, 1]} : vector<16x530xf32> to vector<16x1xf32>
    %c256 = arith.constant 256 : index
    %c0_244 = arith.constant 0 : index
    %913 = vector.load %arg15[%c256, %c0_244] : memref<400x1xf32, #tpu.memory_space<vmem>>, vector<16x1xf32>
    tpu.vector_store %arg15[%c256, %c0_244], %912 {strides = array<i32>} : memref<400x1xf32, #tpu.memory_space<vmem>>, vector<16x1xf32>,
    %914 = vector.extract_strided_slice %879 {offsets = [0, 392], sizes = [16, 1], strides = [1, 1]} : vector<16x530xf32> to vector<16x1xf32>
    %c272 = arith.constant 272 : index
    %c0_245 = arith.constant 0 : index
    %915 = vector.load %arg15[%c272, %c0_245] : memref<400x1xf32, #tpu.memory_space<vmem>>, vector<16x1xf32>
    tpu.vector_store %arg15[%c272, %c0_245], %914 {strides = array<i32>} : memref<400x1xf32, #tpu.memory_space<vmem>>, vector<16x1xf32>,
    %916 = vector.extract_strided_slice %879 {offsets = [0, 396], sizes = [16, 1], strides = [1, 1]} : vector<16x530xf32> to vector<16x1xf32>
    %c288 = arith.constant 288 : index
    %c0_246 = arith.constant 0 : index
    %917 = vector.load %arg15[%c288, %c0_246] : memref<400x1xf32, #tpu.memory_space<vmem>>, vector<16x1xf32>
    tpu.vector_store %arg15[%c288, %c0_246], %916 {strides = array<i32>} : memref<400x1xf32, #tpu.memory_space<vmem>>, vector<16x1xf32>,
    %918 = vector.extract_strided_slice %879 {offsets = [0, 400], sizes = [16, 1], strides = [1, 1]} : vector<16x530xf32> to vector<16x1xf32>
    %c304 = arith.constant 304 : index
    %c0_247 = arith.constant 0 : index
    %919 = vector.load %arg15[%c304, %c0_247] : memref<400x1xf32, #tpu.memory_space<vmem>>, vector<16x1xf32>
    tpu.vector_store %arg15[%c304, %c0_247], %918 {strides = array<i32>} : memref<400x1xf32, #tpu.memory_space<vmem>>, vector<16x1xf32>,
    %920 = vector.extract_strided_slice %879 {offsets = [0, 512], sizes = [16, 1], strides = [1, 1]} : vector<16x530xf32> to vector<16x1xf32>
    %c320 = arith.constant 320 : index
    %c0_248 = arith.constant 0 : index
    %921 = vector.load %arg15[%c320, %c0_248] : memref<400x1xf32, #tpu.memory_space<vmem>>, vector<16x1xf32>
    tpu.vector_store %arg15[%c320, %c0_248], %920 {strides = array<i32>} : memref<400x1xf32, #tpu.memory_space<vmem>>, vector<16x1xf32>,
    %922 = vector.extract_strided_slice %879 {offsets = [0, 516], sizes = [16, 1], strides = [1, 1]} : vector<16x530xf32> to vector<16x1xf32>
    %c336 = arith.constant 336 : index
    %c0_249 = arith.constant 0 : index
    %923 = vector.load %arg15[%c336, %c0_249] : memref<400x1xf32, #tpu.memory_space<vmem>>, vector<16x1xf32>
    tpu.vector_store %arg15[%c336, %c0_249], %922 {strides = array<i32>} : memref<400x1xf32, #tpu.memory_space<vmem>>, vector<16x1xf32>,
    %924 = vector.extract_strided_slice %879 {offsets = [0, 520], sizes = [16, 1], strides = [1, 1]} : vector<16x530xf32> to vector<16x1xf32>
    %c352 = arith.constant 352 : index
    %c0_250 = arith.constant 0 : index
    %925 = vector.load %arg15[%c352, %c0_250] : memref<400x1xf32, #tpu.memory_space<vmem>>, vector<16x1xf32>
    tpu.vector_store %arg15[%c352, %c0_250], %924 {strides = array<i32>} : memref<400x1xf32, #tpu.memory_space<vmem>>, vector<16x1xf32>,
    %926 = vector.extract_strided_slice %879 {offsets = [0, 524], sizes = [16, 1], strides = [1, 1]} : vector<16x530xf32> to vector<16x1xf32>
    %c368 = arith.constant 368 : index
    %c0_251 = arith.constant 0 : index
    %927 = vector.load %arg15[%c368, %c0_251] : memref<400x1xf32, #tpu.memory_space<vmem>>, vector<16x1xf32>
    tpu.vector_store %arg15[%c368, %c0_251], %926 {strides = array<i32>} : memref<400x1xf32, #tpu.memory_space<vmem>>, vector<16x1xf32>,
    %928 = vector.extract_strided_slice %879 {offsets = [0, 528], sizes = [16, 1], strides = [1, 1]} : vector<16x530xf32> to vector<16x1xf32>
    %c384 = arith.constant 384 : index
    %c0_252 = arith.constant 0 : index
    %929 = vector.load %arg15[%c384, %c0_252] : memref<400x1xf32, #tpu.memory_space<vmem>>, vector<16x1xf32>
    tpu.vector_store %arg15[%c384, %c0_252], %928 {strides = array<i32>} : memref<400x1xf32, #tpu.memory_space<vmem>>, vector<16x1xf32>,
    %c0_253 = arith.constant 0 : index
    %c0_254 = arith.constant 0 : index
    %930 = vector.load %arg6[%c0_253, %c0_254] : memref<120x400xf32, #tpu.memory_space<vmem>>, vector<120x400xf32>
    %c0_255 = arith.constant 0 : index
    %c0_256 = arith.constant 0 : index
    %931 = vector.load %arg15[%c0_255, %c0_256] : memref<400x1xf32, #tpu.memory_space<vmem>>, vector<400x1xf32>
    %cst_257 = arith.constant dense<0.000000e+00> : vector<120x1xf32>
    %932 = tpu.matmul %930, %931, %cst_257 {dimension_numbers = #tpu.dot_dimension_numbers<[1], [0], [0], [1], [0, 0, 1, 1], [], []>} : vector<120x400xf32>, vector<400x1xf32>, vector<120x1xf32> -> vector<120x1xf32>
    %c0_258 = arith.constant 0 : index
    %c0_259 = arith.constant 0 : index
    %933 = vector.load %arg7[%c0_258, %c0_259] : memref<120x1xf32, #tpu.memory_space<vmem>>, vector<120x1xf32>
    %934 = arith.addf %932, %933 : vector<120x1xf32>
    %cst_260 = arith.constant 0.000000e+00 : f32
    %935 = vector.broadcast %cst_260 : f32 to vector<120x1xf32>
    %936 = arith.maximumf %934, %935 : vector<120x1xf32>
    %c0_261 = arith.constant 0 : index
    %c0_262 = arith.constant 0 : index
    %937 = vector.load %arg8[%c0_261, %c0_262] : memref<84x120xf32, #tpu.memory_space<vmem>>, vector<84x120xf32>
    %cst_263 = arith.constant dense<0.000000e+00> : vector<84x1xf32>
    %938 = tpu.matmul %937, %936, %cst_263 {dimension_numbers = #tpu.dot_dimension_numbers<[1], [0], [0], [1], [0, 0, 1, 1], [], []>} : vector<84x120xf32>, vector<120x1xf32>, vector<84x1xf32> -> vector<84x1xf32>
    %c0_264 = arith.constant 0 : index
    %c0_265 = arith.constant 0 : index
    %939 = vector.load %arg9[%c0_264, %c0_265] : memref<84x1xf32, #tpu.memory_space<vmem>>, vector<84x1xf32>
    %940 = arith.addf %938, %939 : vector<84x1xf32>
    %cst_266 = arith.constant 0.000000e+00 : f32
    %941 = vector.broadcast %cst_266 : f32 to vector<84x1xf32>
    %942 = arith.maximumf %940, %941 : vector<84x1xf32>
    %c0_267 = arith.constant 0 : index
    %c0_268 = arith.constant 0 : index
    %943 = vector.load %arg10[%c0_267, %c0_268] : memref<10x84xf32, #tpu.memory_space<vmem>>, vector<10x84xf32>
    %cst_269 = arith.constant dense<0.000000e+00> : vector<10x1xf32>
    %944 = tpu.matmul %943, %942, %cst_269 {dimension_numbers = #tpu.dot_dimension_numbers<[1], [0], [0], [1], [0, 0, 1, 1], [], []>} : vector<10x84xf32>, vector<84x1xf32>, vector<10x1xf32> -> vector<10x1xf32>
    %c0_270 = arith.constant 0 : index
    %c0_271 = arith.constant 0 : index
    %945 = vector.load %arg11[%c0_270, %c0_271] : memref<10x1xf32, #tpu.memory_space<vmem>>, vector<10x1xf32>
    %946 = arith.addf %944, %945 : vector<10x1xf32>
    %c0_272 = arith.constant 0 : index
    %c0_273 = arith.constant 0 : index
    %c0_274 = arith.constant 0 : index
    %947 = vector.load %arg12[%c0_272, %c0_273, %c0_274] : memref<1x10x1xf32, #tpu.memory_space<vmem>>, vector<1x10x1xf32>
    %948 = vector.shape_cast %947 : vector<1x10x1xf32> to vector<10x1xf32>
    %949 = vector.shape_cast %946 : vector<10x1xf32> to vector<1x10x1xf32>
    tpu.vector_store %arg12[%c0_272, %c0_273, %c0_274], %949 {strides = array<i32>} : memref<1x10x1xf32, #tpu.memory_space<vmem>>, vector<1x10x1xf32>,
    return
  }
  func.func @transform_0(%arg0: i32) -> (i32, i32, i32) {
    %c0_i32 = arith.constant 0 : i32
    %c0_i32_0 = arith.constant 0 : i32
    %c0_i32_1 = arith.constant 0 : i32
    return %arg0, %c0_i32, %c0_i32_0 : i32, i32, i32
  }
  func.func @transform_1(%arg0: i32) -> (i32, i32) {
    %c0_i32 = arith.constant 0 : i32
    %c0_i32_0 = arith.constant 0 : i32
    %c0_i32_1 = arith.constant 0 : i32
    return %c0_i32, %c0_i32_0 : i32, i32
  }
  func.func @transform_2(%arg0: i32) -> (i32, i32) {
    %c0_i32 = arith.constant 0 : i32
    %c0_i32_0 = arith.constant 0 : i32
    %c0_i32_1 = arith.constant 0 : i32
    return %c0_i32, %c0_i32_0 : i32, i32
  }
  func.func @transform_3(%arg0: i32) -> (i32, i32) {
    %c0_i32 = arith.constant 0 : i32
    %c0_i32_0 = arith.constant 0 : i32
    %c0_i32_1 = arith.constant 0 : i32
    return %c0_i32, %c0_i32_0 : i32, i32
  }
  func.func @transform_4(%arg0: i32) -> (i32, i32) {
    %c0_i32 = arith.constant 0 : i32
    %c0_i32_0 = arith.constant 0 : i32
    %c0_i32_1 = arith.constant 0 : i32
    return %c0_i32, %c0_i32_0 : i32, i32
  }
  func.func @transform_5(%arg0: i32) -> (i32, i32) {
    %c0_i32 = arith.constant 0 : i32
    %c0_i32_0 = arith.constant 0 : i32
    %c0_i32_1 = arith.constant 0 : i32
    return %c0_i32, %c0_i32_0 : i32, i32
  }
  func.func @transform_6(%arg0: i32) -> (i32, i32) {
    %c0_i32 = arith.constant 0 : i32
    %c0_i32_0 = arith.constant 0 : i32
    %c0_i32_1 = arith.constant 0 : i32
    return %c0_i32, %c0_i32_0 : i32, i32
  }
  func.func @transform_7(%arg0: i32) -> (i32, i32) {
    %c0_i32 = arith.constant 0 : i32
    %c0_i32_0 = arith.constant 0 : i32
    %c0_i32_1 = arith.constant 0 : i32
    return %c0_i32, %c0_i32_0 : i32, i32
  }
  func.func @transform_8(%arg0: i32) -> (i32, i32) {
    %c0_i32 = arith.constant 0 : i32
    %c0_i32_0 = arith.constant 0 : i32
    %c0_i32_1 = arith.constant 0 : i32
    return %c0_i32, %c0_i32_0 : i32, i32
  }
  func.func @transform_9(%arg0: i32) -> (i32, i32) {
    %c0_i32 = arith.constant 0 : i32
    %c0_i32_0 = arith.constant 0 : i32
    %c0_i32_1 = arith.constant 0 : i32
    return %c0_i32, %c0_i32_0 : i32, i32
  }
  func.func @transform_10(%arg0: i32) -> (i32, i32) {
    %c0_i32 = arith.constant 0 : i32
    %c0_i32_0 = arith.constant 0 : i32
    %c0_i32_1 = arith.constant 0 : i32
    return %c0_i32, %c0_i32_0 : i32, i32
  }
  func.func @transform_11(%arg0: i32) -> (i32, i32, i32) {
    %c0_i32 = arith.constant 0 : i32
    %c0_i32_0 = arith.constant 0 : i32
    %c0_i32_1 = arith.constant 0 : i32
    return %arg0, %c0_i32, %c0_i32_0 : i32, i32, i32
  }
}

</mosaic_0001>

<llo_original>
// kernel: lenet5_forward.1
$region0: #{lenet5_forward.1}
  #allocation0 [shape = 'u32[]', space=smem, size = 0x4, offset = 0x4, fixed_abs, tag = 'smem constant byte address 0x4 - core index']
  #allocation1 [shape = 'u32[144,128]{1,0:T(1,128)}', space=vmem, size = 0x12000, scoped, tag = 'internal scratch']
  #allocation2 [shape = 'f32[25,896]{1,0:T(8,128)}', space=vmem, size = 0x1c000, scoped, tag = 'scratch operand']
  #allocation3 [shape = 'f32[150,596]{1,0:T(8,128)}', space=vmem, size = 0x5f000, scoped, tag = 'scratch operand']
  #allocation4 [shape = 'f32[400,1]{1,0:T(8,128)}', space=vmem, size = 0x32000, scoped, tag = 'scratch operand']
  %s0 = inlined_call_operand.vmem [shape: f32[2,1,1056], index: 0, kind: input, shape index: {}]
  %s1 = inlined_call_operand.vmem [shape: f32[6,25], index: 1, kind: input, shape index: {}]
  %s2 = inlined_call_operand.vmem [shape: f32[6,1], index: 2, kind: input, shape index: {}]
  %s3 = inlined_call_operand.vmem [shape: f32[16,150], index: 3, kind: input, shape index: {}]
  %s4 = inlined_call_operand.vmem [shape: f32[16,1], index: 4, kind: input, shape index: {}]
  %s5 = inlined_call_operand.vmem [shape: f32[120,400], index: 5, kind: input, shape index: {}]
  %s6 = inlined_call_operand.vmem [shape: f32[120,1], index: 6, kind: input, shape index: {}]
  %s7 = inlined_call_operand.vmem [shape: f32[84,120], index: 7, kind: input, shape index: {}]
  %s8 = inlined_call_operand.vmem [shape: f32[84,1], index: 8, kind: input, shape index: {}]
  %s9 = inlined_call_operand.vmem [shape: f32[10,84], index: 9, kind: input, shape index: {}]
  %s10 = inlined_call_operand.vmem [shape: f32[10,1], index: 10, kind: input, shape index: {}]
  %s11 = inlined_call_operand.vmem [shape: f32[2,10,1], index: 11, kind: output, shape index: {}]
  %s12 = sld [smem:[#allocation0]]
  $region77: #{lenet5_forward.1} parent=0
    _
  %s14 = ssub.s32 1, %s12
  %s15 = scalar_select 0, %s14, %s12
  loop: start=0, step=1, limit=4
  $region2: #{lenet5_forward.1} parent=0 // loop_pre_header
    _
  $region3: #{lenet5_forward.1} parent=0 // loop_header
    %s17 = sphi 0, %s21
    %p18 = scmp.ge.s32.totalorder %s17, 4
    %s27 = sphi 0, %s29
    %s30 = sphi 0, %s27
    %s31 = sphi 0, %s30
    %s47 = sphi 0, %s31
    %s51 = sphi 0, %s51
    %s53 = sphi 0, %s51
    %s54 = sphi 0, %s53
    %s68 = sphi 0, %s54
    %s72 = sphi 0, %s72
    %s74 = sphi 0, %s72
    %s75 = sphi 0, %s74
    %s89 = sphi 0, %s75
    %s93 = sphi 0, %s93
    %s95 = sphi 0, %s93
    %s96 = sphi 0, %s95
    %s110 = sphi 0, %s96
    %s114 = sphi 0, %s114
    %s116 = sphi 0, %s114
    %s117 = sphi 0, %s116
    %s131 = sphi 0, %s117
    %s135 = sphi 0, %s135
    %s137 = sphi 0, %s135
    %s138 = sphi 0, %s137
    %s152 = sphi 0, %s138
    %s156 = sphi 0, %s156
    %s158 = sphi 0, %s156
    %s159 = sphi 0, %s158
    %s173 = sphi 0, %s159
    %s177 = sphi 0, %s177
    %s179 = sphi 0, %s177
    %s180 = sphi 0, %s179
    %s194 = sphi 0, %s180
    %s198 = sphi 0, %s198
    %s200 = sphi 0, %s198
    %s201 = sphi 0, %s200
    %s215 = sphi 0, %s201
    %s219 = sphi 0, %s219
    %s221 = sphi 0, %s219
    %s222 = sphi 0, %s221
    %s236 = sphi 0, %s222
    %s240 = sphi 0, %s240
    %s242 = sphi 0, %s240
    %s243 = sphi 0, %s242
    %s257 = sphi 0, %s243
    %s263 = sphi 0, %s265
    %s266 = sphi 0, %s263
    %s267 = sphi 0, %s266
    %s283 = sphi 0, %s267
  $region4: #{lenet5_forward.1} parent=0 // loop_header_branch
    %20 = sbr.rel (%p18) target = $region8
  $region5: #{lenet5_forward.1} parent=0 // loop_body
    %s22 = ssub.s32 %s17, 1
    %s23 = ssub.s32 %s17, 2
    %s24 = sadd.s32 %s17, 1
    %s25 = ssub.s32 %s17, %s24
    %p26 = scmp.eq.s32.totalorder %s25, 0
    %s28 = sadd.s32 %s27, 1
    %s29 = scalar_select %p26, %s27, %s28
    %p32 = pneg %p26
    %p33 = scmp.eq.s32.totalorder %s17, 1
    %p34 = por %p32, %p33
    %p35 = scmp.ne.s32.totalorder %s27, %s30
    %p36 = scmp.eq.s32.totalorder %s17, 0
    %p37 = por %p35, %p36
    %p38 = scmp.ne.s32.totalorder %s27, %s30
    %p39 = scmp.eq.s32.totalorder %s22, 1
    %p40 = por %p38, %p39
    %p41 = scmp.ne.s32.totalorder %s30, %s31
    %p42 = scmp.eq.s32.totalorder %s22, 0
    %p43 = por %p41, %p42
    %p44 = scmp.ne.s32.totalorder %s30, %s31
    %p45 = scmp.eq.s32.totalorder %s23, 1
    %p46 = por %p44, %p45
    %p48 = scmp.ne.s32.totalorder %s31, %s47
    %p49 = scmp.eq.s32.totalorder %s23, 0
    %p50 = por %p48, %p49
    %s52 = sadd.s32 %s51, 1
    %p55 = scmp.eq.s32.totalorder %s17, 1
    %p56 = scmp.ne.s32.totalorder %s51, %s53
    %p57 = scmp.eq.s32.totalorder %s17, 0
    %p58 = por %p56, %p57
    %p59 = scmp.ne.s32.totalorder %s51, %s53
    %p60 = scmp.eq.s32.totalorder %s22, 1
    %p61 = por %p59, %p60
    %p62 = scmp.ne.s32.totalorder %s53, %s54
    %p63 = scmp.eq.s32.totalorder %s22, 0
    %p64 = por %p62, %p63
    %p65 = scmp.ne.s32.totalorder %s53, %s54
    %p66 = scmp.eq.s32.totalorder %s23, 1
    %p67 = por %p65, %p66
    %p69 = scmp.ne.s32.totalorder %s54, %s68
    %p70 = scmp.eq.s32.totalorder %s23, 0
    %p71 = por %p69, %p70
    %s73 = sadd.s32 %s72, 1
    %p76 = scmp.eq.s32.totalorder %s17, 1
    %p77 = scmp.ne.s32.totalorder %s72, %s74
    %p78 = scmp.eq.s32.totalorder %s17, 0
    %p79 = por %p77, %p78
    %p80 = scmp.ne.s32.totalorder %s72, %s74
    %p81 = scmp.eq.s32.totalorder %s22, 1
    %p82 = por %p80, %p81
    %p83 = scmp.ne.s32.totalorder %s74, %s75
    %p84 = scmp.eq.s32.totalorder %s22, 0
    %p85 = por %p83, %p84
    %p86 = scmp.ne.s32.totalorder %s74, %s75
    %p87 = scmp.eq.s32.totalorder %s23, 1
    %p88 = por %p86, %p87
    %p90 = scmp.ne.s32.totalorder %s75, %s89
    %p91 = scmp.eq.s32.totalorder %s23, 0
    %p92 = por %p90, %p91
    %s94 = sadd.s32 %s93, 1
    %p97 = scmp.eq.s32.totalorder %s17, 1
    %p98 = scmp.ne.s32.totalorder %s93, %s95
    %p99 = scmp.eq.s32.totalorder %s17, 0
    %p100 = por %p98, %p99
    %p101 = scmp.ne.s32.totalorder %s93, %s95
    %p102 = scmp.eq.s32.totalorder %s22, 1
    %p103 = por %p101, %p102
    %p104 = scmp.ne.s32.totalorder %s95, %s96
    %p105 = scmp.eq.s32.totalorder %s22, 0
    %p106 = por %p104, %p105
    %p107 = scmp.ne.s32.totalorder %s95, %s96
    %p108 = scmp.eq.s32.totalorder %s23, 1
    %p109 = por %p107, %p108
    %p111 = scmp.ne.s32.totalorder %s96, %s110
    %p112 = scmp.eq.s32.totalorder %s23, 0
    %p113 = por %p111, %p112
    %s115 = sadd.s32 %s114, 1
    %p118 = scmp.eq.s32.totalorder %s17, 1
    %p119 = scmp.ne.s32.totalorder %s114, %s116
    %p120 = scmp.eq.s32.totalorder %s17, 0
    %p121 = por %p119, %p120
    %p122 = scmp.ne.s32.totalorder %s114, %s116
    %p123 = scmp.eq.s32.totalorder %s22, 1
    %p124 = por %p122, %p123
    %p125 = scmp.ne.s32.totalorder %s116, %s117
    %p126 = scmp.eq.s32.totalorder %s22, 0
    %p127 = por %p125, %p126
    %p128 = scmp.ne.s32.totalorder %s116, %s117
    %p129 = scmp.eq.s32.totalorder %s23, 1
    %p130 = por %p128, %p129
    %p132 = scmp.ne.s32.totalorder %s117, %s131
    %p133 = scmp.eq.s32.totalorder %s23, 0
    %p134 = por %p132, %p133
    %s136 = sadd.s32 %s135, 1
    %p139 = scmp.eq.s32.totalorder %s17, 1
    %p140 = scmp.ne.s32.totalorder %s135, %s137
    %p141 = scmp.eq.s32.totalorder %s17, 0
    %p142 = por %p140, %p141
    %p143 = scmp.ne.s32.totalorder %s135, %s137
    %p144 = scmp.eq.s32.totalorder %s22, 1
    %p145 = por %p143, %p144
    %p146 = scmp.ne.s32.totalorder %s137, %s138
    %p147 = scmp.eq.s32.totalorder %s22, 0
    %p148 = por %p146, %p147
    %p149 = scmp.ne.s32.totalorder %s137, %s138
    %p150 = scmp.eq.s32.totalorder %s23, 1
    %p151 = por %p149, %p150
    %p153 = scmp.ne.s32.totalorder %s138, %s152
    %p154 = scmp.eq.s32.totalorder %s23, 0
    %p155 = por %p153, %p154
    %s157 = sadd.s32 %s156, 1
    %p160 = scmp.eq.s32.totalorder %s17, 1
    %p161 = scmp.ne.s32.totalorder %s156, %s158
    %p162 = scmp.eq.s32.totalorder %s17, 0
    %p163 = por %p161, %p162
    %p164 = scmp.ne.s32.totalorder %s156, %s158
    %p165 = scmp.eq.s32.totalorder %s22, 1
    %p166 = por %p164, %p165
    %p167 = scmp.ne.s32.totalorder %s158, %s159
    %p168 = scmp.eq.s32.totalorder %s22, 0
    %p169 = por %p167, %p168
    %p170 = scmp.ne.s32.totalorder %s158, %s159
    %p171 = scmp.eq.s32.totalorder %s23, 1
    %p172 = por %p170, %p171
    %p174 = scmp.ne.s32.totalorder %s159, %s173
    %p175 = scmp.eq.s32.totalorder %s23, 0
    %p176 = por %p174, %p175
    %s178 = sadd.s32 %s177, 1
    %p181 = scmp.eq.s32.totalorder %s17, 1
    %p182 = scmp.ne.s32.totalorder %s177, %s179
    %p183 = scmp.eq.s32.totalorder %s17, 0
    %p184 = por %p182, %p183
    %p185 = scmp.ne.s32.totalorder %s177, %s179
    %p186 = scmp.eq.s32.totalorder %s22, 1
    %p187 = por %p185, %p186
    %p188 = scmp.ne.s32.totalorder %s179, %s180
    %p189 = scmp.eq.s32.totalorder %s22, 0
    %p190 = por %p188, %p189
    %p191 = scmp.ne.s32.totalorder %s179, %s180
    %p192 = scmp.eq.s32.totalorder %s23, 1
    %p193 = por %p191, %p192
    %p195 = scmp.ne.s32.totalorder %s180, %s194
    %p196 = scmp.eq.s32.totalorder %s23, 0
    %p197 = por %p195, %p196
    %s199 = sadd.s32 %s198, 1
    %p202 = scmp.eq.s32.totalorder %s17, 1
    %p203 = scmp.ne.s32.totalorder %s198, %s200
    %p204 = scmp.eq.s32.totalorder %s17, 0
    %p205 = por %p203, %p204
    %p206 = scmp.ne.s32.totalorder %s198, %s200
    %p207 = scmp.eq.s32.totalorder %s22, 1
    %p208 = por %p206, %p207
    %p209 = scmp.ne.s32.totalorder %s200, %s201
    %p210 = scmp.eq.s32.totalorder %s22, 0
    %p211 = por %p209, %p210
    %p212 = scmp.ne.s32.totalorder %s200, %s201
    %p213 = scmp.eq.s32.totalorder %s23, 1
    %p214 = por %p212, %p213
    %p216 = scmp.ne.s32.totalorder %s201, %s215
    %p217 = scmp.eq.s32.totalorder %s23, 0
    %p218 = por %p216, %p217
    %s220 = sadd.s32 %s219, 1
    %p223 = scmp.eq.s32.totalorder %s17, 1
    %p224 = scmp.ne.s32.totalorder %s219, %s221
    %p225 = scmp.eq.s32.totalorder %s17, 0
    %p226 = por %p224, %p225
    %p227 = scmp.ne.s32.totalorder %s219, %s221
    %p228 = scmp.eq.s32.totalorder %s22, 1
    %p229 = por %p227, %p228
    %p230 = scmp.ne.s32.totalorder %s221, %s222
    %p231 = scmp.eq.s32.totalorder %s22, 0
    %p232 = por %p230, %p231
    %p233 = scmp.ne.s32.totalorder %s221, %s222
    %p234 = scmp.eq.s32.totalorder %s23, 1
    %p235 = por %p233, %p234
    %p237 = scmp.ne.s32.totalorder %s222, %s236
    %p238 = scmp.eq.s32.totalorder %s23, 0
    %p239 = por %p237, %p238
    %s241 = sadd.s32 %s240, 1
    %p244 = scmp.eq.s32.totalorder %s17, 1
    %p245 = scmp.ne.s32.totalorder %s240, %s242
    %p246 = scmp.eq.s32.totalorder %s17, 0
    %p247 = por %p245, %p246
    %p248 = scmp.ne.s32.totalorder %s240, %s242
    %p249 = scmp.eq.s32.totalorder %s22, 1
    %p250 = por %p248, %p249
    %p251 = scmp.ne.s32.totalorder %s242, %s243
    %p252 = scmp.eq.s32.totalorder %s22, 0
    %p253 = por %p251, %p252
    %p254 = scmp.ne.s32.totalorder %s242, %s243
    %p255 = scmp.eq.s32.totalorder %s23, 1
    %p256 = por %p254, %p255
    %p258 = scmp.ne.s32.totalorder %s243, %s257
    %p259 = scmp.eq.s32.totalorder %s23, 0
    %p260 = por %p258, %p259
    %s261 = ssub.s32 %s17, %s24
    %p262 = scmp.eq.s32.totalorder %s261, 0
    %s264 = sadd.s32 %s263, 1
    %s265 = scalar_select %p262, %s263, %s264
    %p268 = pneg %p262
    %p269 = scmp.eq.s32.totalorder %s17, 1
    %p270 = por %p268, %p269
    %p271 = scmp.ne.s32.totalorder %s263, %s266
    %p272 = scmp.eq.s32.totalorder %s17, 0
    %p273 = por %p271, %p272
    %p274 = scmp.ne.s32.totalorder %s263, %s266
    %p275 = scmp.eq.s32.totalorder %s22, 1
    %p276 = por %p274, %p275
    %p277 = scmp.ne.s32.totalorder %s266, %s267
    %p278 = scmp.eq.s32.totalorder %s22, 0
    %p279 = por %p277, %p278
    %p280 = scmp.ne.s32.totalorder %s266, %s267
    %p281 = scmp.eq.s32.totalorder %s23, 1
    %p282 = por %p280, %p281
    %p284 = scmp.ne.s32.totalorder %s267, %s283
    %p285 = scmp.eq.s32.totalorder %s23, 0
    %p286 = por %p284, %p285
    %p287 = scmp.le.s32.totalorder 1, %s17
    %p288 = scmp.lt.s32.totalorder %s17, 3
    %p289 = pnand %p287, %p288
    %p290 = pneg %p289
    // Predicated region
    $region9: #{lenet5_forward.1} parent=5 // pred_check
      _
    $region10: #{lenet5_forward.1} parent=5 // pred_check_branch
      %292 = sbr.rel (%p289) target = $region12
    $region11: #{lenet5_forward.1} parent=5 // pred_region
      %s293 = ssub.s32 %s17, 1
      // Predicated region
      $region13: #{lenet5_forward.1} parent=11 // pred_check
        %p294 = pneg %p64
      $region14: #{lenet5_forward.1} parent=11 // pred_check_branch
        %296 = sbr.rel (%p294) target = $region16
      $region15: #{lenet5_forward.1} parent=11 // pred_region
        _
      $region16: #{lenet5_forward.1} parent=11 // pred_fallthru
        _
      // Predicated region
      $region17: #{lenet5_forward.1} parent=11 // pred_check
        %p297 = pneg %p85
      $region18: #{lenet5_forward.1} parent=11 // pred_check_branch
        %299 = sbr.rel (%p297) target = $region20
      $region19: #{lenet5_forward.1} parent=11 // pred_region
        _
      $region20: #{lenet5_forward.1} parent=11 // pred_fallthru
        _
      // Predicated region
      $region21: #{lenet5_forward.1} parent=11 // pred_check
        %p300 = pneg %p106
      $region22: #{lenet5_forward.1} parent=11 // pred_check_branch
        %302 = sbr.rel (%p300) target = $region24
      $region23: #{lenet5_forward.1} parent=11 // pred_region
        _
      $region24: #{lenet5_forward.1} parent=11 // pred_fallthru
        _
      // Predicated region
      $region25: #{lenet5_forward.1} parent=11 // pred_check
        %p303 = pneg %p127
      $region26: #{lenet5_forward.1} parent=11 // pred_check_branch
        %305 = sbr.rel (%p303) target = $region28
      $region27: #{lenet5_forward.1} parent=11 // pred_region
        _
      $region28: #{lenet5_forward.1} parent=11 // pred_fallthru
        _
      // Predicated region
      $region29: #{lenet5_forward.1} parent=11 // pred_check
        %p306 = pneg %p148
      $region30: #{lenet5_forward.1} parent=11 // pred_check_branch
        %308 = sbr.rel (%p306) target = $region32
      $region31: #{lenet5_forward.1} parent=11 // pred_region
        _
      $region32: #{lenet5_forward.1} parent=11 // pred_fallthru
        _
      // Predicated region
      $region33: #{lenet5_forward.1} parent=11 // pred_check
        %p309 = pneg %p169
      $region34: #{lenet5_forward.1} parent=11 // pred_check_branch
        %311 = sbr.rel (%p309) target = $region36
      $region35: #{lenet5_forward.1} parent=11 // pred_region
        _
      $region36: #{lenet5_forward.1} parent=11 // pred_fallthru
        _
      // Predicated region
      $region37: #{lenet5_forward.1} parent=11 // pred_check
        %p312 = pneg %p190
      $region38: #{lenet5_forward.1} parent=11 // pred_check_branch
        %314 = sbr.rel (%p312) target = $region40
      $region39: #{lenet5_forward.1} parent=11 // pred_region
        _
      $region40: #{lenet5_forward.1} parent=11 // pred_fallthru
        _
      // Predicated region
      $region41: #{lenet5_forward.1} parent=11 // pred_check
        %p315 = pneg %p211
      $region42: #{lenet5_forward.1} parent=11 // pred_check_branch
        %317 = sbr.rel (%p315) target = $region44
      $region43: #{lenet5_forward.1} parent=11 // pred_region
        _
      $region44: #{lenet5_forward.1} parent=11 // pred_fallthru
        _
      // Predicated region
      $region45: #{lenet5_forward.1} parent=11 // pred_check
        %p318 = pneg %p232
      $region46: #{lenet5_forward.1} parent=11 // pred_check_branch
        %320 = sbr.rel (%p318) target = $region48
      $region47: #{lenet5_forward.1} parent=11 // pred_region
        _
      $region48: #{lenet5_forward.1} parent=11 // pred_fallthru
        _
      // Predicated region
      $region49: #{lenet5_forward.1} parent=11 // pred_check
        %p321 = pneg %p253
      $region50: #{lenet5_forward.1} parent=11 // pred_check_branch
        %323 = sbr.rel (%p321) target = $region52
      $region51: #{lenet5_forward.1} parent=11 // pred_region
        _
      $region52: #{lenet5_forward.1} parent=11 // pred_fallthru
        _
    $region12: #{lenet5_forward.1} parent=5 // pred_fallthru
      _
    %p324 = scmp.lt.s32.totalorder %s17, 2
    // Predicated region
    $region53: #{lenet5_forward.1} parent=5 // pred_check
      %p325 = pneg %p324
    $region54: #{lenet5_forward.1} parent=5 // pred_check_branch
      %327 = sbr.rel (%p325) target = $region56
    $region55: #{lenet5_forward.1} parent=5 // pred_region
      // Predicated region
      $region57: #{lenet5_forward.1} parent=55 // pred_check
        %p328 = pneg %p37
      $region58: #{lenet5_forward.1} parent=55 // pred_check_branch
        %330 = sbr.rel (%p328) target = $region60
      $region59: #{lenet5_forward.1} parent=55 // pred_region
        %p331 = scmp.lt.s32.totalorder %s17, 1
        %s332 = scalar_select %p331, %s17, 1
        %s333 = smul.addr %s332, 9
        %s334 = scalar_lea.vmem %s0, %s333
      $region60: #{lenet5_forward.1} parent=55 // pred_fallthru
        _
    $region56: #{lenet5_forward.1} parent=5 // pred_fallthru
      _
    %p335 = scmp.le.s32.totalorder 1, %s17
    %p336 = scmp.lt.s32.totalorder %s17, 3
    %p337 = pnand %p335, %p336
    %p338 = pneg %p337
    // Predicated region
    $region61: #{lenet5_forward.1} parent=5 // pred_check
      _
    $region62: #{lenet5_forward.1} parent=5 // pred_check_branch
      %340 = sbr.rel (%p337) target = $region64
    $region63: #{lenet5_forward.1} parent=5 // pred_region
      %s341 = ssub.s32 %s17, 1
      %p342 = scmp.lt.s32.totalorder %s22, 1
      %s343 = scalar_select %p342, %s22, 1
      %s344 = smul.addr %s343, 9
      %s345 = scalar_lea.vmem %s0, %s344
      %p346 = pneg %p43
      %p347 = pneg %p40
      %p348 = pneg %p64
      %p349 = pneg %p61
      %p350 = pneg %p85
      %p351 = pneg %p82
      %p352 = pneg %p106
      %p353 = pneg %p103
      %p354 = pneg %p127
      %p355 = pneg %p124
      %p356 = pneg %p148
      %p357 = pneg %p145
      %p358 = pneg %p169
      %p359 = pneg %p166
      %p360 = pneg %p190
      %p361 = pneg %p187
      %p362 = pneg %p211
      %p363 = pneg %p208
      %p364 = pneg %p232
      %p365 = pneg %p229
      %p366 = pneg %p253
      %p367 = pneg %p250
      %p368 = pneg %p279
      %p369 = pneg %p276
      %p370 = scmp.lt.s32.totalorder %s22, 1
      %s371 = scalar_select %p370, %s22, 1
      %s372 = smul.addr %s371, 2
      %s373 = smul.addr %s372, 8
      %s374 = scalar_lea.vmem %s11, %s373
      %p375 = scmp.lt.s32.totalorder %s22, 1
      %s376 = scalar_select %p375, %s22, 1
      %s377 = smul.addr %s376, 9
      %s378 = scalar_lea.vmem %s0, %s377
      %p379 = scmp.lt.s32.totalorder %s22, 1
      %s380 = scalar_select %p379, %s22, 1
      %s381 = smul.addr %s380, 2
      %s382 = smul.addr %s381, 8
      %s383 = scalar_lea.vmem %s11, %s382
      %v384 = vld [vmem:[%s378] sm:$0xff]
      %v385 = vld [vmem:[%s378 + $0x8] sm:$0x1]
      %v386 = vlaneseq
      %vm387 = vcmp.ge.s32.totalorder %v386, 0
      %vm388 = vcmp.lt.s32.totalorder %v386, 896
      %vm389 = vmand %vm387, %vm388
      %390 = vst.msk [vmem:[#allocation2] ss:$8 sm:$0xf] %vm389, %v384
      %391 = vst.msk [vmem:[#allocation2] ss:$8 sm:$0x70] %vm389, %v384
      %393 = vrot.lane.b32.xlu0 %v384, 127
      %v394 = vpop.permute.xlu0 %393
      %v395 = vrot.slane %v394, 1
      %vm396 = vcmask 1039360
      %v397 = vsel %vm396, %v394, %v395
      %s399 = scalar_lea.vmem [#allocation2], 1
      %400 = vst.msk [vmem:[%s399] ss:$8 sm:$0xf] %vm389, %v397
      %401 = vst.msk [vmem:[%s399] ss:$8 sm:$0x70] %vm389, %v397
      %402 = vrot.lane.b32.xlu0 %v384, 126
      %v403 = vpop.permute.xlu0 %402
      %v404 = vrot.slane %v403, 1
      %vm405 = vcmask 1031168
      %v406 = vsel %vm405, %v403, %v404
      %s408 = scalar_lea.vmem [#allocation2], 2
      %409 = vst.msk [vmem:[%s408] ss:$8 sm:$0xf] %vm389, %v406
      %410 = vst.msk [vmem:[%s408] ss:$8 sm:$0x70] %vm389, %v406
      %411 = vrot.lane.b32.xlu0 %v384, 125
      %v412 = vpop.permute.xlu0 %411
      %v413 = vrot.slane %v412, 1
      %vm414 = vcmask 1022976
      %v415 = vsel %vm414, %v412, %v413
      %s417 = scalar_lea.vmem [#allocation2], 3
      %418 = vst.msk [vmem:[%s417] ss:$8 sm:$0xf] %vm389, %v415
      %419 = vst.msk [vmem:[%s417] ss:$8 sm:$0x70] %vm389, %v415
      %420 = vrot.lane.b32.xlu0 %v384, 124
      %v421 = vpop.permute.xlu0 %420
      %v422 = vrot.slane %v421, 1
      %vm423 = vcmask 1014784
      %v424 = vsel %vm423, %v421, %v422
      %s426 = scalar_lea.vmem [#allocation2], 4
      %427 = vst.msk [vmem:[%s426] ss:$8 sm:$0xf] %vm389, %v424
      %428 = vst.msk [vmem:[%s426] ss:$8 sm:$0x70] %vm389, %v424
      %429 = vrot.lane.b32.xlu0 %v384, 96
      %v430 = vpop.permute.xlu0 %429
      %v431 = vrot.slane %v430, 1
      %vm432 = vcmask 785408
      %v433 = vsel %vm432, %v430, %v431
      %s435 = scalar_lea.vmem [#allocation2], 5
      %436 = vst.msk [vmem:[%s435] ss:$8 sm:$0xf] %vm389, %v433
      %437 = vst.msk [vmem:[%s435] ss:$8 sm:$0x70] %vm389, %v433
      %438 = vrot.lane.b32.xlu0 %v384, 95
      %v439 = vpop.permute.xlu0 %438
      %v440 = vrot.slane %v439, 1
      %vm441 = vcmask 777216
      %v442 = vsel %vm441, %v439, %v440
      %s444 = scalar_lea.vmem [#allocation2], 6
      %445 = vst.msk [vmem:[%s444] ss:$8 sm:$0xf] %vm389, %v442
      %446 = vst.msk [vmem:[%s444] ss:$8 sm:$0x70] %vm389, %v442
      %447 = vrot.lane.b32.xlu0 %v384, 94
      %v448 = vpop.permute.xlu0 %447
      %v449 = vrot.slane %v448, 1
      %vm450 = vcmask 769024
      %v451 = vsel %vm450, %v448, %v449
      %s453 = scalar_lea.vmem [#allocation2], 7
      %454 = vst.msk [vmem:[%s453] ss:$8 sm:$0xf] %vm389, %v451
      %455 = vst.msk [vmem:[%s453] ss:$8 sm:$0x70] %vm389, %v451
      %456 = vrot.lane.b32.xlu0 %v384, 93
      %v457 = vpop.permute.xlu0 %456
      %v458 = vrot.slane %v457, 1
      %vm459 = vcmask 760832
      %v460 = vsel %vm459, %v457, %v458
      %s462 = scalar_lea.vmem [#allocation2], 56
      %463 = vst.msk [vmem:[%s462] ss:$8 sm:$0xf] %vm389, %v460
      %464 = vst.msk [vmem:[%s462] ss:$8 sm:$0x70] %vm389, %v460
      %465 = vrot.lane.b32.xlu0 %v384, 92
      %v466 = vpop.permute.xlu0 %465
      %v467 = vrot.slane %v466, 1
      %vm468 = vcmask 752640
      %v469 = vsel %vm468, %v466, %v467
      %s471 = scalar_lea.vmem [#allocation2], 57
      %472 = vst.msk [vmem:[%s471] ss:$8 sm:$0xf] %vm389, %v469
      %473 = vst.msk [vmem:[%s471] ss:$8 sm:$0x70] %vm389, %v469
      %474 = vrot.lane.b32.xlu0 %v384, 64
      %v475 = vpop.permute.xlu0 %474
      %v476 = vrot.slane %v475, 1
      %vm477 = vcmask 523264
      %v478 = vsel %vm477, %v475, %v476
      %s480 = scalar_lea.vmem [#allocation2], 58
      %481 = vst.msk [vmem:[%s480] ss:$8 sm:$0xf] %vm389, %v478
      %482 = vst.msk [vmem:[%s480] ss:$8 sm:$0x70] %vm389, %v478
      %483 = vrot.lane.b32.xlu0 %v384, 63
      %v484 = vpop.permute.xlu0 %483
      %v485 = vrot.slane %v484, 1
      %vm486 = vcmask 515072
      %v487 = vsel %vm486, %v484, %v485
      %s489 = scalar_lea.vmem [#allocation2], 59
      %490 = vst.msk [vmem:[%s489] ss:$8 sm:$0xf] %vm389, %v487
      %491 = vst.msk [vmem:[%s489] ss:$8 sm:$0x70] %vm389, %v487
      %492 = vrot.lane.b32.xlu0 %v384, 62
      %v493 = vpop.permute.xlu0 %492
      %v494 = vrot.slane %v493, 1
      %vm495 = vcmask 506880
      %v496 = vsel %vm495, %v493, %v494
      %s498 = scalar_lea.vmem [#allocation2], 60
      %499 = vst.msk [vmem:[%s498] ss:$8 sm:$0xf] %vm389, %v496
      %500 = vst.msk [vmem:[%s498] ss:$8 sm:$0x70] %vm389, %v496
      %501 = vrot.lane.b32.xlu0 %v384, 61
      %v502 = vpop.permute.xlu0 %501
      %v503 = vrot.slane %v502, 1
      %vm504 = vcmask 498688
      %v505 = vsel %vm504, %v502, %v503
      %s507 = scalar_lea.vmem [#allocation2], 61
      %508 = vst.msk [vmem:[%s507] ss:$8 sm:$0xf] %vm389, %v505
      %509 = vst.msk [vmem:[%s507] ss:$8 sm:$0x70] %vm389, %v505
      %510 = vrot.lane.b32.xlu0 %v384, 60
      %v511 = vpop.permute.xlu0 %510
      %v512 = vrot.slane %v511, 1
      %vm513 = vcmask 490496
      %v514 = vsel %vm513, %v511, %v512
      %s516 = scalar_lea.vmem [#allocation2], 62
      %517 = vst.msk [vmem:[%s516] ss:$8 sm:$0xf] %vm389, %v514
      %518 = vst.msk [vmem:[%s516] ss:$8 sm:$0x70] %vm389, %v514
      %519 = vrot.lane.b32.xlu0 %v384, 32
      %v520 = vpop.permute.xlu0 %519
      %v521 = vrot.slane %v520, 1
      %vm522 = vcmask 261120
      %v523 = vsel %vm522, %v520, %v521
      %s525 = scalar_lea.vmem [#allocation2], 63
      %526 = vst.msk [vmem:[%s525] ss:$8 sm:$0xf] %vm389, %v523
      %527 = vst.msk [vmem:[%s525] ss:$8 sm:$0x70] %vm389, %v523
      %528 = vrot.lane.b32.xlu0 %v384, 31
      %v529 = vpop.permute.xlu0 %528
      %v530 = vrot.slane %v529, 1
      %vm531 = vcmask 252928
      %v532 = vsel %vm531, %v529, %v530
      %s534 = scalar_lea.vmem [#allocation2], 112
      %535 = vst.msk [vmem:[%s534] ss:$8 sm:$0xf] %vm389, %v532
      %536 = vst.msk [vmem:[%s534] ss:$8 sm:$0x70] %vm389, %v532
      %537 = vrot.lane.b32.xlu0 %v384, 30
      %v538 = vpop.permute.xlu0 %537
      %v539 = vrot.slane %v538, 1
      %vm540 = vcmask 244736
      %v541 = vsel %vm540, %v538, %v539
      %s543 = scalar_lea.vmem [#allocation2], 113
      %544 = vst.msk [vmem:[%s543] ss:$8 sm:$0xf] %vm389, %v541
      %545 = vst.msk [vmem:[%s543] ss:$8 sm:$0x70] %vm389, %v541
      %546 = vrot.lane.b32.xlu0 %v384, 29
      %v547 = vpop.permute.xlu0 %546
      %v548 = vrot.slane %v547, 1
      %vm549 = vcmask 236544
      %v550 = vsel %vm549, %v547, %v548
      %s552 = scalar_lea.vmem [#allocation2], 114
      %553 = vst.msk [vmem:[%s552] ss:$8 sm:$0xf] %vm389, %v550
      %554 = vst.msk [vmem:[%s552] ss:$8 sm:$0x70] %vm389, %v550
      %555 = vrot.lane.b32.xlu0 %v384, 28
      %v556 = vpop.permute.xlu0 %555
      %v557 = vrot.slane %v556, 1
      %vm558 = vcmask 228352
      %v559 = vsel %vm558, %v556, %v557
      %s561 = scalar_lea.vmem [#allocation2], 115
      %562 = vst.msk [vmem:[%s561] ss:$8 sm:$0xf] %vm389, %v559
      %563 = vst.msk [vmem:[%s561] ss:$8 sm:$0x70] %vm389, %v559
      %v564 = vrot.slane %v384, 1
      %s566 = scalar_lea.vmem [#allocation2], 116
      %567 = vst.msk [vmem:[%s566] ss:$8 sm:$0xf] %vm389, %v564
      %568 = vst.msk [vmem:[%s566] ss:$8 sm:$0x70] %vm389, %v564
      %570 = vrot.lane.b32.xlu0 %v385, 127
      %v571 = vpop.permute.xlu0 %570
      %v572 = vrot.slane %v394, 2
      %v573 = vrot.slane %v571, 2
      %vm574 = vcmask 1045504
      %v575 = vsel %vm574, %v572, %v573
      %v576 = vsel %vm396, %v395, %v575
      %s578 = scalar_lea.vmem [#allocation2], 117
      %579 = vst.msk [vmem:[%s578] ss:$8 sm:$0xf] %vm389, %v576
      %580 = vst.msk [vmem:[%s578] ss:$8 sm:$0x70] %vm389, %v576
      %581 = vrot.lane.b32.xlu0 %v385, 126
      %v582 = vpop.permute.xlu0 %581
      %v583 = vrot.slane %v403, 2
      %v584 = vrot.slane %v582, 2
      %v585 = vsel %vm574, %v583, %v584
      %v586 = vsel %vm405, %v404, %v585
      %s588 = scalar_lea.vmem [#allocation2], 118
      %589 = vst.msk [vmem:[%s588] ss:$8 sm:$0xf] %vm389, %v586
      %590 = vst.msk [vmem:[%s588] ss:$8 sm:$0x70] %vm389, %v586
      %591 = vrot.lane.b32.xlu0 %v385, 125
      %v592 = vpop.permute.xlu0 %591
      %v593 = vrot.slane %v412, 2
      %v594 = vrot.slane %v592, 2
      %v595 = vsel %vm574, %v593, %v594
      %v596 = vsel %vm414, %v413, %v595
      %s598 = scalar_lea.vmem [#allocation2], 119
      %599 = vst.msk [vmem:[%s598] ss:$8 sm:$0xf] %vm389, %v596
      %600 = vst.msk [vmem:[%s598] ss:$8 sm:$0x70] %vm389, %v596
      %601 = vrot.lane.b32.xlu0 %v385, 124
      %v602 = vpop.permute.xlu0 %601
      %v603 = vrot.slane %v421, 2
      %v604 = vrot.slane %v602, 2
      %v605 = vsel %vm574, %v603, %v604
      %v606 = vsel %vm423, %v422, %v605
      %s608 = scalar_lea.vmem [#allocation2], 168
      %609 = vst.msk [vmem:[%s608] ss:$8 sm:$0xf] %vm389, %v606
      %610 = vst.msk [vmem:[%s608] ss:$8 sm:$0x70] %vm389, %v606
      %v611 = vld [vmem:[%s1] sm:$0x3f]
      %v612 = vld [vmem:[#allocation2] sm:$0xff]
      %v613 = vld [vmem:[#allocation2 + $0x8] sm:$0xff]
      %v614 = vld [vmem:[#allocation2 + $0x10] sm:$0xff]
      %v615 = vld [vmem:[#allocation2 + $0x18] sm:$0xff]
      %v616 = vld [vmem:[#allocation2 + $0x20] sm:$0xff]
      %v617 = vld [vmem:[#allocation2 + $0x28] sm:$0xff]
      %v618 = vld [vmem:[#allocation2 + $0x30] sm:$0xff]
      %v619 = vld [vmem:[#allocation2 + $0x38] sm:$0xff]
      %v620 = vld [vmem:[#allocation2 + $0x40] sm:$0xff]
      %v621 = vld [vmem:[#allocation2 + $0x48] sm:$0xff]
      %v622 = vld [vmem:[#allocation2 + $0x50] sm:$0xff]
      %v623 = vld [vmem:[#allocation2 + $0x58] sm:$0xff]
      %v624 = vld [vmem:[#allocation2 + $0x60] sm:$0xff]
      %v625 = vld [vmem:[#allocation2 + $0x68] sm:$0xff]
      %v626 = vld [vmem:[#allocation2 + $0x70] sm:$0xff]
      %v627 = vld [vmem:[#allocation2 + $0x78] sm:$0xff]
      %v628 = vld [vmem:[#allocation2 + $0x80] sm:$0xff]
      %v629 = vld [vmem:[#allocation2 + $0x88] sm:$0xff]
      %v630 = vld [vmem:[#allocation2 + $0x90] sm:$0xff]
      %v631 = vld [vmem:[#allocation2 + $0x98] sm:$0xff]
      %v632 = vld [vmem:[#allocation2 + $0xa0] sm:$0xff]
      %v633 = vld [vmem:[#allocation2 + $0xa8] sm:$0x1]
      %v634 = vld [vmem:[#allocation2 + $0xb0] sm:$0x1]
      %v635 = vld [vmem:[#allocation2 + $0xb8] sm:$0x1]
      %v636 = vld [vmem:[#allocation2 + $0xc0] sm:$0x1]
      %v637 = vld [vmem:[#allocation2 + $0xc8] sm:$0x1]
      %v638 = vld [vmem:[#allocation2 + $0xd0] sm:$0x1]
      %v639 = vld [vmem:[#allocation2 + $0xd8] sm:$0x1]
      %v640 = vld [vmem:[%s2] sm:$0x3f]
      %642 = vset.pattern.permute.xlu0 0
      %643 = vperm.xlu0 %642, %v640
      %v644 = vpop.permute.xlu0 %643
      %vm646 = vcmask 203776
      %v648 = vsel %vm646, %v611, 0
      %vm650 = vcmask 1040384
      %v652 = vsel %vm650, %v633, 0
      %v655 = vsel %vm650, %v634, 0
      %v658 = vsel %vm650, %v635, 0
      %v661 = vsel %vm650, %v636, 0
      %v664 = vsel %vm650, %v637, 0
      %v667 = vsel %vm650, %v638, 0
      %v670 = vsel %vm650, %v639, 0
      %672 = vmatprep.subr.mxu0 0.0
      %673 = vmatpush1.msra.mxu0 0.0
      %674 = vmatprep.subr.mxu0 0.0
      %675 = vmatpush1.msra.mxu0 0.0
      %676 = vmatprep.subr.mxu0 0.0
      %677 = vmatpush1.msra.mxu0 0.0
      %678 = vmatprep.subr.mxu0 0.0
      %679 = vmatpush1.msra.mxu0 0.0
      %680 = vmatprep.subr.mxu0 0.0
      %681 = vmatpush1.msra.mxu0 0.0
      %682 = vmatprep.subr.mxu0 0.0
      %683 = vmatpush1.msra.mxu0 0.0
      %684 = vmatprep.subr.mxu0 0.0
      %685 = vmatpush1.msra.mxu0 0.0
      %686 = vmatprep.subr.mxu0 0.0
      %687 = vmatpush1.msra.mxu0 0.0
      %688 = vmatprep.subr.mxu0 0.0
      %689 = vmatpush1.msra.mxu0 0.0
      %690 = vmatprep.subr.mxu0 0.0
      %691 = vmatpush1.msra.mxu0 0.0
      %692 = vmatprep.subr.mxu0 0.0
      %693 = vmatpush1.msra.mxu0 0.0
      %694 = vmatprep.subr.mxu0 0.0
      %695 = vmatpush1.msra.mxu0 0.0
      %696 = vmatprep.subr.mxu0 %v655
      %697 = vmatpush1.msra.mxu0 %v652
      %698 = vmatprep.subr.mxu0 %v627
      %699 = vmatpush1.msra.mxu0 %v626
      %700 = vmatprep.subr.mxu0 %v620
      %701 = vmatpush1.msra.mxu0 %v619
      %702 = vmatprep.subr.mxu0 %v613
      %703 = vmatpush1.msra.mxu0 %v612
      %704 = vmatprep.subr.mxu0 0.0
      %705 = vmatpush2.msra.mxu0 0.0
      %706 = vmatprep.subr.mxu0 0.0
      %707 = vmatpush2.msra.mxu0 0.0
      %708 = vmatprep.subr.mxu0 0.0
      %709 = vmatpush2.msra.mxu0 0.0
      %710 = vmatprep.subr.mxu0 0.0
      %711 = vmatpush2.msra.mxu0 0.0
      %712 = vmatprep.subr.mxu0 0.0
      %713 = vmatpush2.msra.mxu0 0.0
      %714 = vmatprep.subr.mxu0 0.0
      %715 = vmatpush2.msra.mxu0 0.0
      %716 = vmatprep.subr.mxu0 0.0
      %717 = vmatpush2.msra.mxu0 0.0
      %718 = vmatprep.subr.mxu0 0.0
      %719 = vmatpush2.msra.mxu0 0.0
      %720 = vmatprep.subr.mxu0 0.0
      %721 = vmatpush2.msra.mxu0 0.0
      %722 = vmatprep.subr.mxu0 0.0
      %723 = vmatpush2.msra.mxu0 0.0
      %724 = vmatprep.subr.mxu0 0.0
      %725 = vmatpush2.msra.mxu0 0.0
      %726 = vmatprep.subr.mxu0 0.0
      %727 = vmatpush2.msra.mxu0 0.0
      %728 = vmatprep.subr.mxu0 0.0
      %729 = vmatpush2.msra.mxu0 0.0
      %730 = vmatprep.subr.mxu0 0.0
      %731 = vmatpush2.msra.mxu0 0.0
      %732 = vmatprep.subr.mxu0 0.0
      %733 = vmatpush2.msra.mxu0 0.0
      %734 = vmatprep.subr.mxu0 0.0
      %735 = vmatpush2.msra.mxu0 0.0
      %736 = vmatprep.mubr.f32.mxu0 0.0
      %737 = vmatmul.mubr.f32.gmra.mxu0 %v648
      %v738 = vpop.f32.mrf.mxu0
      %v739 = vadd.f32 %v644, %v738
      %v740 = vpop.f32.mrf.mxu0
      %v741 = vadd.f32 %v644, %v740
      %742 = vdwg.mxu0
      %743 = vmatprep.subr.mxu0 0.0
      %744 = vmatpush1.msra.mxu0 0.0
      %745 = vmatprep.subr.mxu0 0.0
      %746 = vmatpush1.msra.mxu0 0.0
      %747 = vmatprep.subr.mxu0 0.0
      %748 = vmatpush1.msra.mxu0 0.0
      %749 = vmatprep.subr.mxu0 0.0
      %750 = vmatpush1.msra.mxu0 0.0
      %751 = vmatprep.subr.mxu0 0.0
      %752 = vmatpush1.msra.mxu0 0.0
      %753 = vmatprep.subr.mxu0 0.0
      %754 = vmatpush1.msra.mxu0 0.0
      %755 = vmatprep.subr.mxu0 0.0
      %756 = vmatpush1.msra.mxu0 0.0
      %757 = vmatprep.subr.mxu0 0.0
      %758 = vmatpush1.msra.mxu0 0.0
      %759 = vmatprep.subr.mxu0 0.0
      %760 = vmatpush1.msra.mxu0 0.0
      %761 = vmatprep.subr.mxu0 0.0
      %762 = vmatpush1.msra.mxu0 0.0
      %763 = vmatprep.subr.mxu0 0.0
      %764 = vmatpush1.msra.mxu0 0.0
      %765 = vmatprep.subr.mxu0 0.0
      %766 = vmatpush1.msra.mxu0 0.0
      %767 = vmatprep.subr.mxu0 %v661
      %768 = vmatpush1.msra.mxu0 %v658
      %769 = vmatprep.subr.mxu0 %v629
      %770 = vmatpush1.msra.mxu0 %v628
      %771 = vmatprep.subr.mxu0 %v622
      %772 = vmatpush1.msra.mxu0 %v621
      %773 = vmatprep.subr.mxu0 %v615
      %774 = vmatpush1.msra.mxu0 %v614
      %775 = vmatprep.subr.mxu0 0.0
      %776 = vmatpush2.msra.mxu0 0.0
      %777 = vmatprep.subr.mxu0 0.0
      %778 = vmatpush2.msra.mxu0 0.0
      %779 = vmatprep.subr.mxu0 0.0
      %780 = vmatpush2.msra.mxu0 0.0
      %781 = vmatprep.subr.mxu0 0.0
      %782 = vmatpush2.msra.mxu0 0.0
      %783 = vmatprep.subr.mxu0 0.0
      %784 = vmatpush2.msra.mxu0 0.0
      %785 = vmatprep.subr.mxu0 0.0
      %786 = vmatpush2.msra.mxu0 0.0
      %787 = vmatprep.subr.mxu0 0.0
      %788 = vmatpush2.msra.mxu0 0.0
      %789 = vmatprep.subr.mxu0 0.0
      %790 = vmatpush2.msra.mxu0 0.0
      %791 = vmatprep.subr.mxu0 0.0
      %792 = vmatpush2.msra.mxu0 0.0
      %793 = vmatprep.subr.mxu0 0.0
      %794 = vmatpush2.msra.mxu0 0.0
      %795 = vmatprep.subr.mxu0 0.0
      %796 = vmatpush2.msra.mxu0 0.0
      %797 = vmatprep.subr.mxu0 0.0
      %798 = vmatpush2.msra.mxu0 0.0
      %799 = vmatprep.subr.mxu0 0.0
      %800 = vmatpush2.msra.mxu0 0.0
      %801 = vmatprep.subr.mxu0 0.0
      %802 = vmatpush2.msra.mxu0 0.0
      %803 = vmatprep.subr.mxu0 0.0
      %804 = vmatpush2.msra.mxu0 0.0
      %805 = vmatprep.subr.mxu0 0.0
      %806 = vmatpush2.msra.mxu0 0.0
      %807 = vmatprep.mubr.f32.mxu0 0.0
      %808 = vmatmul.mubr.f32.gmra.mxu0 %v648
      %v809 = vpop.f32.mrf.mxu0
      %v810 = vadd.f32 %v644, %v809
      %v811 = vpop.f32.mrf.mxu0
      %v812 = vadd.f32 %v644, %v811
      %813 = vdwg.mxu0
      %814 = vmatprep.subr.mxu0 0.0
      %815 = vmatpush1.msra.mxu0 0.0
      %816 = vmatprep.subr.mxu0 0.0
      %817 = vmatpush1.msra.mxu0 0.0
      %818 = vmatprep.subr.mxu0 0.0
      %819 = vmatpush1.msra.mxu0 0.0
      %820 = vmatprep.subr.mxu0 0.0
      %821 = vmatpush1.msra.mxu0 0.0
      %822 = vmatprep.subr.mxu0 0.0
      %823 = vmatpush1.msra.mxu0 0.0
      %824 = vmatprep.subr.mxu0 0.0
      %825 = vmatpush1.msra.mxu0 0.0
      %826 = vmatprep.subr.mxu0 0.0
      %827 = vmatpush1.msra.mxu0 0.0
      %828 = vmatprep.subr.mxu0 0.0
      %829 = vmatpush1.msra.mxu0 0.0
      %830 = vmatprep.subr.mxu0 0.0
      %831 = vmatpush1.msra.mxu0 0.0
      %832 = vmatprep.subr.mxu0 0.0
      %833 = vmatpush1.msra.mxu0 0.0
      %834 = vmatprep.subr.mxu0 0.0
      %835 = vmatpush1.msra.mxu0 0.0
      %836 = vmatprep.subr.mxu0 0.0
      %837 = vmatpush1.msra.mxu0 0.0
      %838 = vmatprep.subr.mxu0 %v667
      %839 = vmatpush1.msra.mxu0 %v664
      %840 = vmatprep.subr.mxu0 %v631
      %841 = vmatpush1.msra.mxu0 %v630
      %842 = vmatprep.subr.mxu0 %v624
      %843 = vmatpush1.msra.mxu0 %v623
      %844 = vmatprep.subr.mxu0 %v617
      %845 = vmatpush1.msra.mxu0 %v616
      %846 = vmatprep.subr.mxu0 0.0
      %847 = vmatpush2.msra.mxu0 0.0
      %848 = vmatprep.subr.mxu0 0.0
      %849 = vmatpush2.msra.mxu0 0.0
      %850 = vmatprep.subr.mxu0 0.0
      %851 = vmatpush2.msra.mxu0 0.0
      %852 = vmatprep.subr.mxu0 0.0
      %853 = vmatpush2.msra.mxu0 0.0
      %854 = vmatprep.subr.mxu0 0.0
      %855 = vmatpush2.msra.mxu0 0.0
      %856 = vmatprep.subr.mxu0 0.0
      %857 = vmatpush2.msra.mxu0 0.0
      %858 = vmatprep.subr.mxu0 0.0
      %859 = vmatpush2.msra.mxu0 0.0
      %860 = vmatprep.subr.mxu0 0.0
      %861 = vmatpush2.msra.mxu0 0.0
      %862 = vmatprep.subr.mxu0 0.0
      %863 = vmatpush2.msra.mxu0 0.0
      %864 = vmatprep.subr.mxu0 0.0
      %865 = vmatpush2.msra.mxu0 0.0
      %866 = vmatprep.subr.mxu0 0.0
      %867 = vmatpush2.msra.mxu0 0.0
      %868 = vmatprep.subr.mxu0 0.0
      %869 = vmatpush2.msra.mxu0 0.0
      %870 = vmatprep.subr.mxu0 0.0
      %871 = vmatpush2.msra.mxu0 0.0
      %872 = vmatprep.subr.mxu0 0.0
      %873 = vmatpush2.msra.mxu0 0.0
      %874 = vmatprep.subr.mxu0 0.0
      %875 = vmatpush2.msra.mxu0 0.0
      %876 = vmatprep.subr.mxu0 0.0
      %877 = vmatpush2.msra.mxu0 0.0
      %878 = vmatprep.mubr.f32.mxu0 0.0
      %879 = vmatmul.mubr.f32.gmra.mxu0 %v648
      %v880 = vpop.f32.mrf.mxu0
      %v881 = vadd.f32 %v644, %v880
      %v882 = vpop.f32.mrf.mxu0
      %v883 = vadd.f32 %v644, %v882
      %884 = vdwg.mxu0
      %885 = vmatprep.subr.mxu0 0.0
      %886 = vmatpush1.msra.mxu0 0.0
      %887 = vmatprep.subr.mxu0 0.0
      %888 = vmatpush1.msra.mxu0 0.0
      %889 = vmatprep.subr.mxu0 0.0
      %890 = vmatpush1.msra.mxu0 0.0
      %891 = vmatprep.subr.mxu0 0.0
      %892 = vmatpush1.msra.mxu0 0.0
      %893 = vmatprep.subr.mxu0 0.0
      %894 = vmatpush1.msra.mxu0 0.0
      %895 = vmatprep.subr.mxu0 0.0
      %896 = vmatpush1.msra.mxu0 0.0
      %897 = vmatprep.subr.mxu0 0.0
      %898 = vmatpush1.msra.mxu0 0.0
      %899 = vmatprep.subr.mxu0 0.0
      %900 = vmatpush1.msra.mxu0 0.0
      %901 = vmatprep.subr.mxu0 0.0
      %902 = vmatpush1.msra.mxu0 0.0
      %903 = vmatprep.subr.mxu0 0.0
      %904 = vmatpush1.msra.mxu0 0.0
      %905 = vmatprep.subr.mxu0 0.0
      %906 = vmatpush1.msra.mxu0 0.0
      %907 = vmatprep.subr.mxu0 0.0
      %908 = vmatpush1.msra.mxu0 0.0
      %909 = vmatprep.subr.mxu0 0.0
      %910 = vmatpush1.msra.mxu0 %v670
      %911 = vmatprep.subr.mxu0 0.0
      %912 = vmatpush1.msra.mxu0 %v632
      %913 = vmatprep.subr.mxu0 0.0
      %914 = vmatpush1.msra.mxu0 %v625
      %915 = vmatprep.subr.mxu0 0.0
      %916 = vmatpush1.msra.mxu0 %v618
      %917 = vmatprep.subr.mxu0 0.0
      %918 = vmatpush2.msra.mxu0 0.0
      %919 = vmatprep.subr.mxu0 0.0
      %920 = vmatpush2.msra.mxu0 0.0
      %921 = vmatprep.subr.mxu0 0.0
      %922 = vmatpush2.msra.mxu0 0.0
      %923 = vmatprep.subr.mxu0 0.0
      %924 = vmatpush2.msra.mxu0 0.0
      %925 = vmatprep.subr.mxu0 0.0
      %926 = vmatpush2.msra.mxu0 0.0
      %927 = vmatprep.subr.mxu0 0.0
      %928 = vmatpush2.msra.mxu0 0.0
      %929 = vmatprep.subr.mxu0 0.0
      %930 = vmatpush2.msra.mxu0 0.0
      %931 = vmatprep.subr.mxu0 0.0
      %932 = vmatpush2.msra.mxu0 0.0
      %933 = vmatprep.subr.mxu0 0.0
      %934 = vmatpush2.msra.mxu0 0.0
      %935 = vmatprep.subr.mxu0 0.0
      %936 = vmatpush2.msra.mxu0 0.0
      %937 = vmatprep.subr.mxu0 0.0
      %938 = vmatpush2.msra.mxu0 0.0
      %939 = vmatprep.subr.mxu0 0.0
      %940 = vmatpush2.msra.mxu0 0.0
      %941 = vmatprep.subr.mxu0 0.0
      %942 = vmatpush2.msra.mxu0 0.0
      %943 = vmatprep.subr.mxu0 0.0
      %944 = vmatpush2.msra.mxu0 0.0
      %945 = vmatprep.subr.mxu0 0.0
      %946 = vmatpush2.msra.mxu0 0.0
      %947 = vmatprep.subr.mxu0 0.0
      %948 = vmatpush2.msra.mxu0 0.0
      %949 = vmatprep.mubr.f32.mxu0 0.0
      %950 = vmatmul.mubr.f32.gmra.mxu0 %v648
      %v951 = vpop.f32.mrf.mxu0
      %v952 = vadd.f32 %v644, %v951
      %v953 = vpop.f32.mrf.mxu0
      %954 = vdwg.mxu0
      %v955 = vmax.f32 %v739, 0.0
      %v956 = vmax.f32 %v741, 0.0
      %v957 = vmax.f32 %v810, 0.0
      %v958 = vmax.f32 %v812, 0.0
      %v959 = vmax.f32 %v881, 0.0
      %v960 = vmax.f32 %v883, 0.0
      %v961 = vmax.f32 %v952, 0.0
      %969 = vrot.lane.b32.xlu0 %v955, 96
      %v970 = vpop.permute.xlu0 %969
      %971 = vrot.lane.b32.xlu0 %v956, 96
      %v972 = vpop.permute.xlu0 %971
      %973 = vrot.lane.b32.xlu0 %v957, 96
      %v974 = vpop.permute.xlu0 %973
      %975 = vrot.lane.b32.xlu0 %v958, 96
      %v976 = vpop.permute.xlu0 %975
      %977 = vrot.lane.b32.xlu0 %v959, 96
      %v978 = vpop.permute.xlu0 %977
      %979 = vrot.lane.b32.xlu0 %v960, 96
      %v980 = vpop.permute.xlu0 %979
      %981 = vrot.lane.b32.xlu0 %v961, 96
      %v982 = vpop.permute.xlu0 %981
      %v983 = vsel %vm432, %v970, %v972
      %v984 = vsel %vm432, %v972, %v974
      %v985 = vsel %vm432, %v974, %v976
      %v986 = vsel %vm432, %v976, %v978
      %v987 = vsel %vm432, %v978, %v980
      %v988 = vsel %vm432, %v980, %v982
      %v996 = vmax.f32 %v955, %v983
      %v997 = vmax.f32 %v956, %v984
      %v998 = vmax.f32 %v957, %v985
      %v999 = vmax.f32 %v958, %v986
      %v1000 = vmax.f32 %v959, %v987
      %v1001 = vmax.f32 %v960, %v988
      %v1002 = vmax.f32 %v961, %v982
      %1010 = vrot.lane.b32.xlu0 %v996, 127
      %v1011 = vpop.permute.xlu0 %1010
      %1012 = vrot.lane.b32.xlu0 %v997, 127
      %v1013 = vpop.permute.xlu0 %1012
      %1014 = vrot.lane.b32.xlu0 %v998, 127
      %v1015 = vpop.permute.xlu0 %1014
      %1016 = vrot.lane.b32.xlu0 %v999, 127
      %v1017 = vpop.permute.xlu0 %1016
      %1018 = vrot.lane.b32.xlu0 %v1000, 127
      %v1019 = vpop.permute.xlu0 %1018
      %1020 = vrot.lane.b32.xlu0 %v1001, 127
      %v1021 = vpop.permute.xlu0 %1020
      %1022 = vrot.lane.b32.xlu0 %v1002, 127
      %v1023 = vpop.permute.xlu0 %1022
      %v1024 = vsel %vm396, %v1011, %v1013
      %v1025 = vsel %vm396, %v1013, %v1015
      %v1026 = vsel %vm396, %v1015, %v1017
      %v1027 = vsel %vm396, %v1017, %v1019
      %v1028 = vsel %vm396, %v1019, %v1021
      %v1029 = vsel %vm396, %v1021, %v1023
      %v1037 = vmax.f32 %v996, %v1024
      %v1038 = vmax.f32 %v997, %v1025
      %v1039 = vmax.f32 %v998, %v1026
      %v1040 = vmax.f32 %v999, %v1027
      %v1041 = vmax.f32 %v1000, %v1028
      %v1042 = vmax.f32 %v1001, %v1029
      %v1043 = vmax.f32 %v1002, %v1023
      %v1049 = vcombine.low %v1037, %v1038
      %v1050 = vcombine.low %v1039, %v1040
      %v1052 = vunpack.c.l.s4 1966171168
      %v1053 = vunpack.c.0.s8 %v1052
      %v1054 = vlaneseq
      %v1055 = vshrl.u32 %v1054, 7
      %v1056 = vsub.s32 %v1053, %v1055
      %v1057 = vrot.slane %v1049, %v1056
      %v1059 = vunpack.c.l.s4 1966171168
      %v1060 = vunpack.c.0.s8 %v1059
      %v1061 = vlaneseq
      %v1062 = vshrl.u32 %v1061, 7
      %v1063 = vsub.s32 %v1060, %v1062
      %v1064 = vrot.slane %v1050, %v1063
      %v1066 = vunpack.c.l.s4 1966171168
      %v1067 = vunpack.c.0.s8 %v1066
      %v1068 = vlaneseq
      %v1069 = vshrl.u32 %v1068, 7
      %v1070 = vsub.s32 %v1067, %v1069
      %v1071 = vrot.slane %v1041, %v1070
      %v1072 = vcombine.low %v1057, %v1064
      %v1074 = vunpack.c.l.s4 1966171168
      %v1075 = vunpack.c.0.s8 %v1074
      %v1076 = vlaneseq
      %v1077 = vshrl.u32 %v1076, 7
      %v1078 = vsub.s32 %v1075, %v1077
      %v1079 = vrot.slane %v1072, %v1078
      %v1081 = vunpack.c.l.s4 1966171168
      %v1082 = vunpack.c.0.s8 %v1081
      %v1083 = vlaneseq
      %v1084 = vshrl.u32 %v1083, 7
      %v1085 = vsub.s32 %v1082, %v1084
      %v1086 = vrot.slane %v1071, %v1085
      %v1087 = vcombine.low %v1079, %v1086
      %vm1089 = vcmp.lt.s32.totalorder %v386, 596
      %vm1090 = vmand %vm387, %vm1089
      %1091 = vst.msk [vmem:[#allocation3] ss:$8 sm:$0xf] %vm1090, %v1087
      %1092 = vst.msk [vmem:[#allocation3] ss:$8 sm:$0x10] %vm1090, %v1087
      %1093 = vrot.lane.b32.xlu0 %v1087, 126
      %v1094 = vpop.permute.xlu0 %1093
      %v1095 = vrot.slane %v1094, 1
      %v1096 = vsel %vm405, %v1094, %v1095
      %s1098 = scalar_lea.vmem [#allocation3], 1
      %1099 = vst.msk [vmem:[%s1098] ss:$8 sm:$0xf] %vm1090, %v1096
      %1100 = vst.msk [vmem:[%s1098] ss:$8 sm:$0x10] %vm1090, %v1096
      %1101 = vrot.lane.b32.xlu0 %v1087, 124
      %v1102 = vpop.permute.xlu0 %1101
      %v1103 = vrot.slane %v1102, 1
      %v1104 = vsel %vm423, %v1102, %v1103
      %s1106 = scalar_lea.vmem [#allocation3], 2
      %1107 = vst.msk [vmem:[%s1106] ss:$8 sm:$0xf] %vm1090, %v1104
      %1108 = vst.msk [vmem:[%s1106] ss:$8 sm:$0x10] %vm1090, %v1104
      %1109 = vrot.lane.b32.xlu0 %v1087, 122
      %v1110 = vpop.permute.xlu0 %1109
      %v1111 = vrot.slane %v1110, 1
      %vm1112 = vcmask 998400
      %v1113 = vsel %vm1112, %v1110, %v1111
      %s1115 = scalar_lea.vmem [#allocation3], 3
      %1116 = vst.msk [vmem:[%s1115] ss:$8 sm:$0xf] %vm1090, %v1113
      %1117 = vst.msk [vmem:[%s1115] ss:$8 sm:$0x10] %vm1090, %v1113
      %1118 = vrot.lane.b32.xlu0 %v1087, 120
      %v1119 = vpop.permute.xlu0 %1118
      %v1120 = vrot.slane %v1119, 1
      %vm1121 = vcmask 982016
      %v1122 = vsel %vm1121, %v1119, %v1120
      %s1124 = scalar_lea.vmem [#allocation3], 4
      %1125 = vst.msk [vmem:[%s1124] ss:$8 sm:$0xf] %vm1090, %v1122
      %1126 = vst.msk [vmem:[%s1124] ss:$8 sm:$0x10] %vm1090, %v1122
      %v1128 = vcombine.low %v1041, %v1042
      %v1130 = vunpack.c.l.s4 1966171168
      %v1131 = vunpack.c.0.s8 %v1130
      %v1132 = vlaneseq
      %v1133 = vshrl.u32 %v1132, 7
      %v1134 = vsub.s32 %v1131, %v1133
      %v1135 = vrot.slane %v1128, %v1134
      %v1137 = vunpack.c.l.s4 1966171168
      %v1138 = vunpack.c.0.s8 %v1137
      %v1139 = vlaneseq
      %v1140 = vshrl.u32 %v1139, 7
      %v1141 = vsub.s32 %v1138, %v1140
      %v1142 = vrot.slane %v1135, %v1141
      %v1143 = vcombine.low %v1079, %v1142
      %1144 = vrot.lane.b32.xlu0 %v1143, 64
      %v1145 = vpop.permute.xlu0 %1144
      %v1146 = vrot.slane %v1145, 1
      %v1147 = vsel %vm477, %v1145, %v1146
      %s1149 = scalar_lea.vmem [#allocation3], 5
      %1150 = vst.msk [vmem:[%s1149] ss:$8 sm:$0xf] %vm1090, %v1147
      %1151 = vst.msk [vmem:[%s1149] ss:$8 sm:$0x10] %vm1090, %v1147
      %1152 = vrot.lane.b32.xlu0 %v1143, 62
      %v1153 = vpop.permute.xlu0 %1152
      %v1154 = vrot.slane %v1153, 1
      %v1155 = vsel %vm495, %v1153, %v1154
      %s1157 = scalar_lea.vmem [#allocation3], 6
      %1158 = vst.msk [vmem:[%s1157] ss:$8 sm:$0xf] %vm1090, %v1155
      %1159 = vst.msk [vmem:[%s1157] ss:$8 sm:$0x10] %vm1090, %v1155
      %1160 = vrot.lane.b32.xlu0 %v1143, 60
      %v1161 = vpop.permute.xlu0 %1160
      %v1162 = vrot.slane %v1161, 1
      %v1163 = vsel %vm513, %v1161, %v1162
      %s1165 = scalar_lea.vmem [#allocation3], 7
      %1166 = vst.msk [vmem:[%s1165] ss:$8 sm:$0xf] %vm1090, %v1163
      %1167 = vst.msk [vmem:[%s1165] ss:$8 sm:$0x10] %vm1090, %v1163
      %1168 = vrot.lane.b32.xlu0 %v1143, 58
      %v1169 = vpop.permute.xlu0 %1168
      %v1170 = vrot.slane %v1169, 1
      %vm1171 = vcmask 474112
      %v1172 = vsel %vm1171, %v1169, %v1170
      %s1174 = scalar_lea.vmem [#allocation3], 40
      %1175 = vst.msk [vmem:[%s1174] ss:$8 sm:$0xf] %vm1090, %v1172
      %1176 = vst.msk [vmem:[%s1174] ss:$8 sm:$0x10] %vm1090, %v1172
      %1177 = vrot.lane.b32.xlu0 %v1143, 56
      %v1178 = vpop.permute.xlu0 %1177
      %v1179 = vrot.slane %v1178, 1
      %vm1180 = vcmask 457728
      %v1181 = vsel %vm1180, %v1178, %v1179
      %s1183 = scalar_lea.vmem [#allocation3], 41
      %1184 = vst.msk [vmem:[%s1183] ss:$8 sm:$0xf] %vm1090, %v1181
      %1185 = vst.msk [vmem:[%s1183] ss:$8 sm:$0x10] %vm1090, %v1181
      %v1186 = vcombine.low %v1038, %v1039
      %v1187 = vcombine.low %v1040, %v1041
      %v1189 = vunpack.c.l.s4 1966171168
      %v1190 = vunpack.c.0.s8 %v1189
      %v1191 = vlaneseq
      %v1192 = vshrl.u32 %v1191, 7
      %v1193 = vsub.s32 %v1190, %v1192
      %v1194 = vrot.slane %v1186, %v1193
      %v1196 = vunpack.c.l.s4 1966171168
      %v1197 = vunpack.c.0.s8 %v1196
      %v1198 = vlaneseq
      %v1199 = vshrl.u32 %v1198, 7
      %v1200 = vsub.s32 %v1197, %v1199
      %v1201 = vrot.slane %v1187, %v1200
      %v1203 = vunpack.c.l.s4 1966171168
      %v1204 = vunpack.c.0.s8 %v1203
      %v1205 = vlaneseq
      %v1206 = vshrl.u32 %v1205, 7
      %v1207 = vsub.s32 %v1204, %v1206
      %v1208 = vrot.slane %v1042, %v1207
      %v1209 = vcombine.low %v1194, %v1201
      %v1211 = vunpack.c.l.s4 1966171168
      %v1212 = vunpack.c.0.s8 %v1211
      %v1213 = vlaneseq
      %v1214 = vshrl.u32 %v1213, 7
      %v1215 = vsub.s32 %v1212, %v1214
      %v1216 = vrot.slane %v1209, %v1215
      %v1218 = vunpack.c.l.s4 1966171168
      %v1219 = vunpack.c.0.s8 %v1218
      %v1220 = vlaneseq
      %v1221 = vshrl.u32 %v1220, 7
      %v1222 = vsub.s32 %v1219, %v1221
      %v1223 = vrot.slane %v1208, %v1222
      %v1224 = vcombine.low %v1216, %v1223
      %s1226 = scalar_lea.vmem [#allocation3], 42
      %1227 = vst.msk [vmem:[%s1226] ss:$8 sm:$0xf] %vm1090, %v1224
      %1228 = vst.msk [vmem:[%s1226] ss:$8 sm:$0x10] %vm1090, %v1224
      %1229 = vrot.lane.b32.xlu0 %v1224, 126
      %v1230 = vpop.permute.xlu0 %1229
      %v1231 = vrot.slane %v1230, 1
      %v1232 = vsel %vm405, %v1230, %v1231
      %s1234 = scalar_lea.vmem [#allocation3], 43
      %1235 = vst.msk [vmem:[%s1234] ss:$8 sm:$0xf] %vm1090, %v1232
      %1236 = vst.msk [vmem:[%s1234] ss:$8 sm:$0x10] %vm1090, %v1232
      %1237 = vrot.lane.b32.xlu0 %v1224, 124
      %v1238 = vpop.permute.xlu0 %1237
      %v1239 = vrot.slane %v1238, 1
      %v1240 = vsel %vm423, %v1238, %v1239
      %s1242 = scalar_lea.vmem [#allocation3], 44
      %1243 = vst.msk [vmem:[%s1242] ss:$8 sm:$0xf] %vm1090, %v1240
      %1244 = vst.msk [vmem:[%s1242] ss:$8 sm:$0x10] %vm1090, %v1240
      %1245 = vrot.lane.b32.xlu0 %v1224, 122
      %v1246 = vpop.permute.xlu0 %1245
      %v1247 = vrot.slane %v1246, 1
      %v1248 = vsel %vm1112, %v1246, %v1247
      %s1250 = scalar_lea.vmem [#allocation3], 45
      %1251 = vst.msk [vmem:[%s1250] ss:$8 sm:$0xf] %vm1090, %v1248
      %1252 = vst.msk [vmem:[%s1250] ss:$8 sm:$0x10] %vm1090, %v1248
      %1253 = vrot.lane.b32.xlu0 %v1224, 120
      %v1254 = vpop.permute.xlu0 %1253
      %v1255 = vrot.slane %v1254, 1
      %v1256 = vsel %vm1121, %v1254, %v1255
      %s1258 = scalar_lea.vmem [#allocation3], 46
      %1259 = vst.msk [vmem:[%s1258] ss:$8 sm:$0xf] %vm1090, %v1256
      %1260 = vst.msk [vmem:[%s1258] ss:$8 sm:$0x10] %vm1090, %v1256
      %v1262 = vcombine.low %v1042, %v1043
      %v1264 = vunpack.c.l.s4 1966171168
      %v1265 = vunpack.c.0.s8 %v1264
      %v1266 = vlaneseq
      %v1267 = vshrl.u32 %v1266, 7
      %v1268 = vsub.s32 %v1265, %v1267
      %v1269 = vrot.slane %v1262, %v1268
      %v1271 = vunpack.c.l.s4 1966171168
      %v1272 = vunpack.c.0.s8 %v1271
      %v1273 = vlaneseq
      %v1274 = vshrl.u32 %v1273, 7
      %v1275 = vsub.s32 %v1272, %v1274
      %v1276 = vrot.slane %v1269, %v1275
      %v1277 = vcombine.low %v1216, %v1276
      %1278 = vrot.lane.b32.xlu0 %v1277, 64
      %v1279 = vpop.permute.xlu0 %1278
      %v1280 = vrot.slane %v1279, 1
      %v1281 = vsel %vm477, %v1279, %v1280
      %s1283 = scalar_lea.vmem [#allocation3], 47
      %1284 = vst.msk [vmem:[%s1283] ss:$8 sm:$0xf] %vm1090, %v1281
      %1285 = vst.msk [vmem:[%s1283] ss:$8 sm:$0x10] %vm1090, %v1281
      %1286 = vrot.lane.b32.xlu0 %v1277, 62
      %v1287 = vpop.permute.xlu0 %1286
      %v1288 = vrot.slane %v1287, 1
      %v1289 = vsel %vm495, %v1287, %v1288
      %s1291 = scalar_lea.vmem [#allocation3], 80
      %1292 = vst.msk [vmem:[%s1291] ss:$8 sm:$0xf] %vm1090, %v1289
      %1293 = vst.msk [vmem:[%s1291] ss:$8 sm:$0x10] %vm1090, %v1289
      %1294 = vrot.lane.b32.xlu0 %v1277, 60
      %v1295 = vpop.permute.xlu0 %1294
      %v1296 = vrot.slane %v1295, 1
      %v1297 = vsel %vm513, %v1295, %v1296
      %s1299 = scalar_lea.vmem [#allocation3], 81
      %1300 = vst.msk [vmem:[%s1299] ss:$8 sm:$0xf] %vm1090, %v1297
      %1301 = vst.msk [vmem:[%s1299] ss:$8 sm:$0x10] %vm1090, %v1297
      %1302 = vrot.lane.b32.xlu0 %v1277, 58
      %v1303 = vpop.permute.xlu0 %1302
      %v1304 = vrot.slane %v1303, 1
      %v1305 = vsel %vm1171, %v1303, %v1304
      %s1307 = scalar_lea.vmem [#allocation3], 82
      %1308 = vst.msk [vmem:[%s1307] ss:$8 sm:$0xf] %vm1090, %v1305
      %1309 = vst.msk [vmem:[%s1307] ss:$8 sm:$0x10] %vm1090, %v1305
      %1310 = vrot.lane.b32.xlu0 %v1277, 56
      %v1311 = vpop.permute.xlu0 %1310
      %v1312 = vrot.slane %v1311, 1
      %v1313 = vsel %vm1180, %v1311, %v1312
      %s1315 = scalar_lea.vmem [#allocation3], 83
      %1316 = vst.msk [vmem:[%s1315] ss:$8 sm:$0xf] %vm1090, %v1313
      %1317 = vst.msk [vmem:[%s1315] ss:$8 sm:$0x10] %vm1090, %v1313
      %v1319 = vunpack.c.l.s4 1966171168
      %v1320 = vunpack.c.0.s8 %v1319
      %v1321 = vlaneseq
      %v1322 = vshrl.u32 %v1321, 7
      %v1323 = vsub.s32 %v1320, %v1322
      %v1324 = vrot.slane %v1043, %v1323
      %v1325 = vcombine.low %v1064, %v1135
      %v1327 = vunpack.c.l.s4 1966171168
      %v1328 = vunpack.c.0.s8 %v1327
      %v1329 = vlaneseq
      %v1330 = vshrl.u32 %v1329, 7
      %v1331 = vsub.s32 %v1328, %v1330
      %v1332 = vrot.slane %v1325, %v1331
      %v1334 = vunpack.c.l.s4 1966171168
      %v1335 = vunpack.c.0.s8 %v1334
      %v1336 = vlaneseq
      %v1337 = vshrl.u32 %v1336, 7
      %v1338 = vsub.s32 %v1335, %v1337
      %v1339 = vrot.slane %v1324, %v1338
      %v1340 = vcombine.low %v1332, %v1339
      %s1342 = scalar_lea.vmem [#allocation3], 84
      %1343 = vst.msk [vmem:[%s1342] ss:$8 sm:$0xf] %vm1090, %v1340
      %1344 = vst.msk [vmem:[%s1342] ss:$8 sm:$0x10] %vm1090, %v1340
      %1345 = vrot.lane.b32.xlu0 %v1340, 126
      %v1346 = vpop.permute.xlu0 %1345
      %v1347 = vrot.slane %v1346, 1
      %v1348 = vsel %vm405, %v1346, %v1347
      %s1350 = scalar_lea.vmem [#allocation3], 85
      %1351 = vst.msk [vmem:[%s1350] ss:$8 sm:$0xf] %vm1090, %v1348
      %1352 = vst.msk [vmem:[%s1350] ss:$8 sm:$0x10] %vm1090, %v1348
      %1353 = vrot.lane.b32.xlu0 %v1340, 124
      %v1354 = vpop.permute.xlu0 %1353
      %v1355 = vrot.slane %v1354, 1
      %v1356 = vsel %vm423, %v1354, %v1355
      %s1358 = scalar_lea.vmem [#allocation3], 86
      %1359 = vst.msk [vmem:[%s1358] ss:$8 sm:$0xf] %vm1090, %v1356
      %1360 = vst.msk [vmem:[%s1358] ss:$8 sm:$0x10] %vm1090, %v1356
      %1361 = vrot.lane.b32.xlu0 %v1340, 122
      %v1362 = vpop.permute.xlu0 %1361
      %v1363 = vrot.slane %v1362, 1
      %v1364 = vsel %vm1112, %v1362, %v1363
      %s1366 = scalar_lea.vmem [#allocation3], 87
      %1367 = vst.msk [vmem:[%s1366] ss:$8 sm:$0xf] %vm1090, %v1364
      %1368 = vst.msk [vmem:[%s1366] ss:$8 sm:$0x10] %vm1090, %v1364
      %1369 = vrot.lane.b32.xlu0 %v1340, 120
      %v1370 = vpop.permute.xlu0 %1369
      %v1371 = vrot.slane %v1370, 1
      %v1372 = vsel %vm1121, %v1370, %v1371
      %s1374 = scalar_lea.vmem [#allocation3], 120
      %1375 = vst.msk [vmem:[%s1374] ss:$8 sm:$0xf] %vm1090, %v1372
      %1376 = vst.msk [vmem:[%s1374] ss:$8 sm:$0x10] %vm1090, %v1372
      %v1377 = vcombine.high %v1057, %v1064
      %v1378 = vcombine.high %v1071, %v1071
      %v1380 = vunpack.c.l.s4 1966171168
      %v1381 = vunpack.c.0.s8 %v1380
      %v1382 = vlaneseq
      %v1383 = vshrl.u32 %v1382, 7
      %v1384 = vsub.s32 %v1381, %v1383
      %v1385 = vrot.slane %v1377, %v1384
      %v1387 = vunpack.c.l.s4 1966171168
      %v1388 = vunpack.c.0.s8 %v1387
      %v1389 = vlaneseq
      %v1390 = vshrl.u32 %v1389, 7
      %v1391 = vsub.s32 %v1388, %v1390
      %v1392 = vrot.slane %v1378, %v1391
      %v1393 = vcombine.low %v1385, %v1392
      %s1395 = scalar_lea.vmem [#allocation3], 121
      %1396 = vst.msk [vmem:[%s1395] ss:$8 sm:$0xf] %vm1090, %v1393
      %1397 = vst.msk [vmem:[%s1395] ss:$8 sm:$0x10] %vm1090, %v1393
      %1398 = vrot.lane.b32.xlu0 %v1393, 126
      %v1399 = vpop.permute.xlu0 %1398
      %v1400 = vrot.slane %v1399, 1
      %v1401 = vsel %vm405, %v1399, %v1400
      %s1403 = scalar_lea.vmem [#allocation3], 122
      %1404 = vst.msk [vmem:[%s1403] ss:$8 sm:$0xf] %vm1090, %v1401
      %1405 = vst.msk [vmem:[%s1403] ss:$8 sm:$0x10] %vm1090, %v1401
      %1406 = vrot.lane.b32.xlu0 %v1393, 124
      %v1407 = vpop.permute.xlu0 %1406
      %v1408 = vrot.slane %v1407, 1
      %v1409 = vsel %vm423, %v1407, %v1408
      %s1411 = scalar_lea.vmem [#allocation3], 123
      %1412 = vst.msk [vmem:[%s1411] ss:$8 sm:$0xf] %vm1090, %v1409
      %1413 = vst.msk [vmem:[%s1411] ss:$8 sm:$0x10] %vm1090, %v1409
      %1414 = vrot.lane.b32.xlu0 %v1393, 122
      %v1415 = vpop.permute.xlu0 %1414
      %v1416 = vrot.slane %v1415, 1
      %v1417 = vsel %vm1112, %v1415, %v1416
      %s1419 = scalar_lea.vmem [#allocation3], 124
      %1420 = vst.msk [vmem:[%s1419] ss:$8 sm:$0xf] %vm1090, %v1417
      %1421 = vst.msk [vmem:[%s1419] ss:$8 sm:$0x10] %vm1090, %v1417
      %1422 = vrot.lane.b32.xlu0 %v1393, 120
      %v1423 = vpop.permute.xlu0 %1422
      %v1424 = vrot.slane %v1423, 1
      %v1425 = vsel %vm1121, %v1423, %v1424
      %s1427 = scalar_lea.vmem [#allocation3], 125
      %1428 = vst.msk [vmem:[%s1427] ss:$8 sm:$0xf] %vm1090, %v1425
      %1429 = vst.msk [vmem:[%s1427] ss:$8 sm:$0x10] %vm1090, %v1425
      %v1430 = vcombine.high %v1135, %v1135
      %v1432 = vunpack.c.l.s4 1966171168
      %v1433 = vunpack.c.0.s8 %v1432
      %v1434 = vlaneseq
      %v1435 = vshrl.u32 %v1434, 7
      %v1436 = vsub.s32 %v1433, %v1435
      %v1437 = vrot.slane %v1430, %v1436
      %v1438 = vcombine.low %v1385, %v1437
      %1439 = vrot.lane.b32.xlu0 %v1438, 64
      %v1440 = vpop.permute.xlu0 %1439
      %v1441 = vrot.slane %v1440, 1
      %v1442 = vsel %vm477, %v1440, %v1441
      %s1444 = scalar_lea.vmem [#allocation3], 126
      %1445 = vst.msk [vmem:[%s1444] ss:$8 sm:$0xf] %vm1090, %v1442
      %1446 = vst.msk [vmem:[%s1444] ss:$8 sm:$0x10] %vm1090, %v1442
      %1447 = vrot.lane.b32.xlu0 %v1438, 62
      %v1448 = vpop.permute.xlu0 %1447
      %v1449 = vrot.slane %v1448, 1
      %v1450 = vsel %vm495, %v1448, %v1449
      %s1452 = scalar_lea.vmem [#allocation3], 127
      %1453 = vst.msk [vmem:[%s1452] ss:$8 sm:$0xf] %vm1090, %v1450
      %1454 = vst.msk [vmem:[%s1452] ss:$8 sm:$0x10] %vm1090, %v1450
      %1455 = vrot.lane.b32.xlu0 %v1438, 60
      %v1456 = vpop.permute.xlu0 %1455
      %v1457 = vrot.slane %v1456, 1
      %v1458 = vsel %vm513, %v1456, %v1457
      %s1460 = scalar_lea.vmem [#allocation3], 160
      %1461 = vst.msk [vmem:[%s1460] ss:$8 sm:$0xf] %vm1090, %v1458
      %1462 = vst.msk [vmem:[%s1460] ss:$8 sm:$0x10] %vm1090, %v1458
      %1463 = vrot.lane.b32.xlu0 %v1438, 58
      %v1464 = vpop.permute.xlu0 %1463
      %v1465 = vrot.slane %v1464, 1
      %v1466 = vsel %vm1171, %v1464, %v1465
      %s1468 = scalar_lea.vmem [#allocation3], 161
      %1469 = vst.msk [vmem:[%s1468] ss:$8 sm:$0xf] %vm1090, %v1466
      %1470 = vst.msk [vmem:[%s1468] ss:$8 sm:$0x10] %vm1090, %v1466
      %1471 = vrot.lane.b32.xlu0 %v1438, 56
      %v1472 = vpop.permute.xlu0 %1471
      %v1473 = vrot.slane %v1472, 1
      %v1474 = vsel %vm1180, %v1472, %v1473
      %s1476 = scalar_lea.vmem [#allocation3], 162
      %1477 = vst.msk [vmem:[%s1476] ss:$8 sm:$0xf] %vm1090, %v1474
      %1478 = vst.msk [vmem:[%s1476] ss:$8 sm:$0x10] %vm1090, %v1474
      %v1479 = vcombine.high %v1194, %v1201
      %v1480 = vcombine.high %v1208, %v1208
      %v1482 = vunpack.c.l.s4 1966171168
      %v1483 = vunpack.c.0.s8 %v1482
      %v1484 = vlaneseq
      %v1485 = vshrl.u32 %v1484, 7
      %v1486 = vsub.s32 %v1483, %v1485
      %v1487 = vrot.slane %v1479, %v1486
      %v1489 = vunpack.c.l.s4 1966171168
      %v1490 = vunpack.c.0.s8 %v1489
      %v1491 = vlaneseq
      %v1492 = vshrl.u32 %v1491, 7
      %v1493 = vsub.s32 %v1490, %v1492
      %v1494 = vrot.slane %v1480, %v1493
      %v1495 = vcombine.low %v1487, %v1494
      %s1497 = scalar_lea.vmem [#allocation3], 163
      %1498 = vst.msk [vmem:[%s1497] ss:$8 sm:$0xf] %vm1090, %v1495
      %1499 = vst.msk [vmem:[%s1497] ss:$8 sm:$0x10] %vm1090, %v1495
      %1500 = vrot.lane.b32.xlu0 %v1495, 126
      %v1501 = vpop.permute.xlu0 %1500
      %v1502 = vrot.slane %v1501, 1
      %v1503 = vsel %vm405, %v1501, %v1502
      %s1505 = scalar_lea.vmem [#allocation3], 164
      %1506 = vst.msk [vmem:[%s1505] ss:$8 sm:$0xf] %vm1090, %v1503
      %1507 = vst.msk [vmem:[%s1505] ss:$8 sm:$0x10] %vm1090, %v1503
      %1508 = vrot.lane.b32.xlu0 %v1495, 124
      %v1509 = vpop.permute.xlu0 %1508
      %v1510 = vrot.slane %v1509, 1
      %v1511 = vsel %vm423, %v1509, %v1510
      %s1513 = scalar_lea.vmem [#allocation3], 165
      %1514 = vst.msk [vmem:[%s1513] ss:$8 sm:$0xf] %vm1090, %v1511
      %1515 = vst.msk [vmem:[%s1513] ss:$8 sm:$0x10] %vm1090, %v1511
      %1516 = vrot.lane.b32.xlu0 %v1495, 122
      %v1517 = vpop.permute.xlu0 %1516
      %v1518 = vrot.slane %v1517, 1
      %v1519 = vsel %vm1112, %v1517, %v1518
      %s1521 = scalar_lea.vmem [#allocation3], 166
      %1522 = vst.msk [vmem:[%s1521] ss:$8 sm:$0xf] %vm1090, %v1519
      %1523 = vst.msk [vmem:[%s1521] ss:$8 sm:$0x10] %vm1090, %v1519
      %1524 = vrot.lane.b32.xlu0 %v1495, 120
      %v1525 = vpop.permute.xlu0 %1524
      %v1526 = vrot.slane %v1525, 1
      %v1527 = vsel %vm1121, %v1525, %v1526
      %s1529 = scalar_lea.vmem [#allocation3], 167
      %1530 = vst.msk [vmem:[%s1529] ss:$8 sm:$0xf] %vm1090, %v1527
      %1531 = vst.msk [vmem:[%s1529] ss:$8 sm:$0x10] %vm1090, %v1527
      %v1532 = vcombine.high %v1269, %v1269
      %v1534 = vunpack.c.l.s4 1966171168
      %v1535 = vunpack.c.0.s8 %v1534
      %v1536 = vlaneseq
      %v1537 = vshrl.u32 %v1536, 7
      %v1538 = vsub.s32 %v1535, %v1537
      %v1539 = vrot.slane %v1532, %v1538
      %v1540 = vcombine.low %v1487, %v1539
      %1541 = vrot.lane.b32.xlu0 %v1540, 64
      %v1542 = vpop.permute.xlu0 %1541
      %v1543 = vrot.slane %v1542, 1
      %v1544 = vsel %vm477, %v1542, %v1543
      %s1546 = scalar_lea.vmem [#allocation3], 200
      %1547 = vst.msk [vmem:[%s1546] ss:$8 sm:$0xf] %vm1090, %v1544
      %1548 = vst.msk [vmem:[%s1546] ss:$8 sm:$0x10] %vm1090, %v1544
      %1549 = vrot.lane.b32.xlu0 %v1540, 62
      %v1550 = vpop.permute.xlu0 %1549
      %v1551 = vrot.slane %v1550, 1
      %v1552 = vsel %vm495, %v1550, %v1551
      %s1554 = scalar_lea.vmem [#allocation3], 201
      %1555 = vst.msk [vmem:[%s1554] ss:$8 sm:$0xf] %vm1090, %v1552
      %1556 = vst.msk [vmem:[%s1554] ss:$8 sm:$0x10] %vm1090, %v1552
      %1557 = vrot.lane.b32.xlu0 %v1540, 60
      %v1558 = vpop.permute.xlu0 %1557
      %v1559 = vrot.slane %v1558, 1
      %v1560 = vsel %vm513, %v1558, %v1559
      %s1562 = scalar_lea.vmem [#allocation3], 202
      %1563 = vst.msk [vmem:[%s1562] ss:$8 sm:$0xf] %vm1090, %v1560
      %1564 = vst.msk [vmem:[%s1562] ss:$8 sm:$0x10] %vm1090, %v1560
      %1565 = vrot.lane.b32.xlu0 %v1540, 58
      %v1566 = vpop.permute.xlu0 %1565
      %v1567 = vrot.slane %v1566, 1
      %v1568 = vsel %vm1171, %v1566, %v1567
      %s1570 = scalar_lea.vmem [#allocation3], 203
      %1571 = vst.msk [vmem:[%s1570] ss:$8 sm:$0xf] %vm1090, %v1568
      %1572 = vst.msk [vmem:[%s1570] ss:$8 sm:$0x10] %vm1090, %v1568
      %1573 = vrot.lane.b32.xlu0 %v1540, 56
      %v1574 = vpop.permute.xlu0 %1573
      %v1575 = vrot.slane %v1574, 1
      %v1576 = vsel %vm1180, %v1574, %v1575
      %s1578 = scalar_lea.vmem [#allocation3], 204
      %1579 = vst.msk [vmem:[%s1578] ss:$8 sm:$0xf] %vm1090, %v1576
      %1580 = vst.msk [vmem:[%s1578] ss:$8 sm:$0x10] %vm1090, %v1576
      %v1581 = vcombine.high %v1064, %v1135
      %v1582 = vcombine.high %v1324, %v1324
      %v1584 = vunpack.c.l.s4 1966171168
      %v1585 = vunpack.c.0.s8 %v1584
      %v1586 = vlaneseq
      %v1587 = vshrl.u32 %v1586, 7
      %v1588 = vsub.s32 %v1585, %v1587
      %v1589 = vrot.slane %v1581, %v1588
      %v1591 = vunpack.c.l.s4 1966171168
      %v1592 = vunpack.c.0.s8 %v1591
      %v1593 = vlaneseq
      %v1594 = vshrl.u32 %v1593, 7
      %v1595 = vsub.s32 %v1592, %v1594
      %v1596 = vrot.slane %v1582, %v1595
      %v1597 = vcombine.low %v1589, %v1596
      %s1599 = scalar_lea.vmem [#allocation3], 205
      %1600 = vst.msk [vmem:[%s1599] ss:$8 sm:$0xf] %vm1090, %v1597
      %1601 = vst.msk [vmem:[%s1599] ss:$8 sm:$0x10] %vm1090, %v1597
      %1602 = vrot.lane.b32.xlu0 %v1597, 126
      %v1603 = vpop.permute.xlu0 %1602
      %v1604 = vrot.slane %v1603, 1
      %v1605 = vsel %vm405, %v1603, %v1604
      %s1607 = scalar_lea.vmem [#allocation3], 206
      %1608 = vst.msk [vmem:[%s1607] ss:$8 sm:$0xf] %vm1090, %v1605
      %1609 = vst.msk [vmem:[%s1607] ss:$8 sm:$0x10] %vm1090, %v1605
      %1610 = vrot.lane.b32.xlu0 %v1597, 124
      %v1611 = vpop.permute.xlu0 %1610
      %v1612 = vrot.slane %v1611, 1
      %v1613 = vsel %vm423, %v1611, %v1612
      %s1615 = scalar_lea.vmem [#allocation3], 207
      %1616 = vst.msk [vmem:[%s1615] ss:$8 sm:$0xf] %vm1090, %v1613
      %1617 = vst.msk [vmem:[%s1615] ss:$8 sm:$0x10] %vm1090, %v1613
      %1618 = vrot.lane.b32.xlu0 %v1597, 122
      %v1619 = vpop.permute.xlu0 %1618
      %v1620 = vrot.slane %v1619, 1
      %v1621 = vsel %vm1112, %v1619, %v1620
      %s1623 = scalar_lea.vmem [#allocation3], 240
      %1624 = vst.msk [vmem:[%s1623] ss:$8 sm:$0xf] %vm1090, %v1621
      %1625 = vst.msk [vmem:[%s1623] ss:$8 sm:$0x10] %vm1090, %v1621
      %1626 = vrot.lane.b32.xlu0 %v1597, 120
      %v1627 = vpop.permute.xlu0 %1626
      %v1628 = vrot.slane %v1627, 1
      %v1629 = vsel %vm1121, %v1627, %v1628
      %s1631 = scalar_lea.vmem [#allocation3], 241
      %1632 = vst.msk [vmem:[%s1631] ss:$8 sm:$0xf] %vm1090, %v1629
      %1633 = vst.msk [vmem:[%s1631] ss:$8 sm:$0x10] %vm1090, %v1629
      %v1634 = vcombine.high %v1079, %v1086
      %s1636 = scalar_lea.vmem [#allocation3], 242
      %1637 = vst.msk [vmem:[%s1636] ss:$8 sm:$0xf] %vm1090, %v1634
      %1638 = vst.msk [vmem:[%s1636] ss:$8 sm:$0x10] %vm1090, %v1634
      %1639 = vrot.lane.b32.xlu0 %v1634, 126
      %v1640 = vpop.permute.xlu0 %1639
      %v1641 = vrot.slane %v1640, 1
      %v1642 = vsel %vm405, %v1640, %v1641
      %s1644 = scalar_lea.vmem [#allocation3], 243
      %1645 = vst.msk [vmem:[%s1644] ss:$8 sm:$0xf] %vm1090, %v1642
      %1646 = vst.msk [vmem:[%s1644] ss:$8 sm:$0x10] %vm1090, %v1642
      %1647 = vrot.lane.b32.xlu0 %v1634, 124
      %v1648 = vpop.permute.xlu0 %1647
      %v1649 = vrot.slane %v1648, 1
      %v1650 = vsel %vm423, %v1648, %v1649
      %s1652 = scalar_lea.vmem [#allocation3], 244
      %1653 = vst.msk [vmem:[%s1652] ss:$8 sm:$0xf] %vm1090, %v1650
      %1654 = vst.msk [vmem:[%s1652] ss:$8 sm:$0x10] %vm1090, %v1650
      %1655 = vrot.lane.b32.xlu0 %v1634, 122
      %v1656 = vpop.permute.xlu0 %1655
      %v1657 = vrot.slane %v1656, 1
      %v1658 = vsel %vm1112, %v1656, %v1657
      %s1660 = scalar_lea.vmem [#allocation3], 245
      %1661 = vst.msk [vmem:[%s1660] ss:$8 sm:$0xf] %vm1090, %v1658
      %1662 = vst.msk [vmem:[%s1660] ss:$8 sm:$0x10] %vm1090, %v1658
      %1663 = vrot.lane.b32.xlu0 %v1634, 120
      %v1664 = vpop.permute.xlu0 %1663
      %v1665 = vrot.slane %v1664, 1
      %v1666 = vsel %vm1121, %v1664, %v1665
      %s1668 = scalar_lea.vmem [#allocation3], 246
      %1669 = vst.msk [vmem:[%s1668] ss:$8 sm:$0xf] %vm1090, %v1666
      %1670 = vst.msk [vmem:[%s1668] ss:$8 sm:$0x10] %vm1090, %v1666
      %v1671 = vcombine.high %v1079, %v1142
      %1672 = vrot.lane.b32.xlu0 %v1671, 64
      %v1673 = vpop.permute.xlu0 %1672
      %v1674 = vrot.slane %v1673, 1
      %v1675 = vsel %vm477, %v1673, %v1674
      %s1677 = scalar_lea.vmem [#allocation3], 247
      %1678 = vst.msk [vmem:[%s1677] ss:$8 sm:$0xf] %vm1090, %v1675
      %1679 = vst.msk [vmem:[%s1677] ss:$8 sm:$0x10] %vm1090, %v1675
      %1680 = vrot.lane.b32.xlu0 %v1671, 62
      %v1681 = vpop.permute.xlu0 %1680
      %v1682 = vrot.slane %v1681, 1
      %v1683 = vsel %vm495, %v1681, %v1682
      %s1685 = scalar_lea.vmem [#allocation3], 280
      %1686 = vst.msk [vmem:[%s1685] ss:$8 sm:$0xf] %vm1090, %v1683
      %1687 = vst.msk [vmem:[%s1685] ss:$8 sm:$0x10] %vm1090, %v1683
      %1688 = vrot.lane.b32.xlu0 %v1671, 60
      %v1689 = vpop.permute.xlu0 %1688
      %v1690 = vrot.slane %v1689, 1
      %v1691 = vsel %vm513, %v1689, %v1690
      %s1693 = scalar_lea.vmem [#allocation3], 281
      %1694 = vst.msk [vmem:[%s1693] ss:$8 sm:$0xf] %vm1090, %v1691
      %1695 = vst.msk [vmem:[%s1693] ss:$8 sm:$0x10] %vm1090, %v1691
      %1696 = vrot.lane.b32.xlu0 %v1671, 58
      %v1697 = vpop.permute.xlu0 %1696
      %v1698 = vrot.slane %v1697, 1
      %v1699 = vsel %vm1171, %v1697, %v1698
      %s1701 = scalar_lea.vmem [#allocation3], 282
      %1702 = vst.msk [vmem:[%s1701] ss:$8 sm:$0xf] %vm1090, %v1699
      %1703 = vst.msk [vmem:[%s1701] ss:$8 sm:$0x10] %vm1090, %v1699
      %1704 = vrot.lane.b32.xlu0 %v1671, 56
      %v1705 = vpop.permute.xlu0 %1704
      %v1706 = vrot.slane %v1705, 1
      %v1707 = vsel %vm1180, %v1705, %v1706
      %s1709 = scalar_lea.vmem [#allocation3], 283
      %1710 = vst.msk [vmem:[%s1709] ss:$8 sm:$0xf] %vm1090, %v1707
      %1711 = vst.msk [vmem:[%s1709] ss:$8 sm:$0x10] %vm1090, %v1707
      %v1712 = vcombine.high %v1216, %v1223
      %s1714 = scalar_lea.vmem [#allocation3], 284
      %1715 = vst.msk [vmem:[%s1714] ss:$8 sm:$0xf] %vm1090, %v1712
      %1716 = vst.msk [vmem:[%s1714] ss:$8 sm:$0x10] %vm1090, %v1712
      %1717 = vrot.lane.b32.xlu0 %v1712, 126
      %v1718 = vpop.permute.xlu0 %1717
      %v1719 = vrot.slane %v1718, 1
      %v1720 = vsel %vm405, %v1718, %v1719
      %s1722 = scalar_lea.vmem [#allocation3], 285
      %1723 = vst.msk [vmem:[%s1722] ss:$8 sm:$0xf] %vm1090, %v1720
      %1724 = vst.msk [vmem:[%s1722] ss:$8 sm:$0x10] %vm1090, %v1720
      %1725 = vrot.lane.b32.xlu0 %v1712, 124
      %v1726 = vpop.permute.xlu0 %1725
      %v1727 = vrot.slane %v1726, 1
      %v1728 = vsel %vm423, %v1726, %v1727
      %s1730 = scalar_lea.vmem [#allocation3], 286
      %1731 = vst.msk [vmem:[%s1730] ss:$8 sm:$0xf] %vm1090, %v1728
      %1732 = vst.msk [vmem:[%s1730] ss:$8 sm:$0x10] %vm1090, %v1728
      %1733 = vrot.lane.b32.xlu0 %v1712, 122
      %v1734 = vpop.permute.xlu0 %1733
      %v1735 = vrot.slane %v1734, 1
      %v1736 = vsel %vm1112, %v1734, %v1735
      %s1738 = scalar_lea.vmem [#allocation3], 287
      %1739 = vst.msk [vmem:[%s1738] ss:$8 sm:$0xf] %vm1090, %v1736
      %1740 = vst.msk [vmem:[%s1738] ss:$8 sm:$0x10] %vm1090, %v1736
      %1741 = vrot.lane.b32.xlu0 %v1712, 120
      %v1742 = vpop.permute.xlu0 %1741
      %v1743 = vrot.slane %v1742, 1
      %v1744 = vsel %vm1121, %v1742, %v1743
      %s1746 = scalar_lea.vmem [#allocation3], 320
      %1747 = vst.msk [vmem:[%s1746] ss:$8 sm:$0xf] %vm1090, %v1744
      %1748 = vst.msk [vmem:[%s1746] ss:$8 sm:$0x10] %vm1090, %v1744
      %v1749 = vcombine.high %v1216, %v1276
      %1750 = vrot.lane.b32.xlu0 %v1749, 64
      %v1751 = vpop.permute.xlu0 %1750
      %v1752 = vrot.slane %v1751, 1
      %v1753 = vsel %vm477, %v1751, %v1752
      %s1755 = scalar_lea.vmem [#allocation3], 321
      %1756 = vst.msk [vmem:[%s1755] ss:$8 sm:$0xf] %vm1090, %v1753
      %1757 = vst.msk [vmem:[%s1755] ss:$8 sm:$0x10] %vm1090, %v1753
      %1758 = vrot.lane.b32.xlu0 %v1749, 62
      %v1759 = vpop.permute.xlu0 %1758
      %v1760 = vrot.slane %v1759, 1
      %v1761 = vsel %vm495, %v1759, %v1760
      %s1763 = scalar_lea.vmem [#allocation3], 322
      %1764 = vst.msk [vmem:[%s1763] ss:$8 sm:$0xf] %vm1090, %v1761
      %1765 = vst.msk [vmem:[%s1763] ss:$8 sm:$0x10] %vm1090, %v1761
      %1766 = vrot.lane.b32.xlu0 %v1749, 60
      %v1767 = vpop.permute.xlu0 %1766
      %v1768 = vrot.slane %v1767, 1
      %v1769 = vsel %vm513, %v1767, %v1768
      %s1771 = scalar_lea.vmem [#allocation3], 323
      %1772 = vst.msk [vmem:[%s1771] ss:$8 sm:$0xf] %vm1090, %v1769
      %1773 = vst.msk [vmem:[%s1771] ss:$8 sm:$0x10] %vm1090, %v1769
      %1774 = vrot.lane.b32.xlu0 %v1749, 58
      %v1775 = vpop.permute.xlu0 %1774
      %v1776 = vrot.slane %v1775, 1
      %v1777 = vsel %vm1171, %v1775, %v1776
      %s1779 = scalar_lea.vmem [#allocation3], 324
      %1780 = vst.msk [vmem:[%s1779] ss:$8 sm:$0xf] %vm1090, %v1777
      %1781 = vst.msk [vmem:[%s1779] ss:$8 sm:$0x10] %vm1090, %v1777
      %1782 = vrot.lane.b32.xlu0 %v1749, 56
      %v1783 = vpop.permute.xlu0 %1782
      %v1784 = vrot.slane %v1783, 1
      %v1785 = vsel %vm1180, %v1783, %v1784
      %s1787 = scalar_lea.vmem [#allocation3], 325
      %1788 = vst.msk [vmem:[%s1787] ss:$8 sm:$0xf] %vm1090, %v1785
      %1789 = vst.msk [vmem:[%s1787] ss:$8 sm:$0x10] %vm1090, %v1785
      %v1790 = vcombine.high %v1332, %v1339
      %s1792 = scalar_lea.vmem [#allocation3], 326
      %1793 = vst.msk [vmem:[%s1792] ss:$8 sm:$0xf] %vm1090, %v1790
      %1794 = vst.msk [vmem:[%s1792] ss:$8 sm:$0x10] %vm1090, %v1790
      %1795 = vrot.lane.b32.xlu0 %v1790, 126
      %v1796 = vpop.permute.xlu0 %1795
      %v1797 = vrot.slane %v1796, 1
      %v1798 = vsel %vm405, %v1796, %v1797
      %s1800 = scalar_lea.vmem [#allocation3], 327
      %1801 = vst.msk [vmem:[%s1800] ss:$8 sm:$0xf] %vm1090, %v1798
      %1802 = vst.msk [vmem:[%s1800] ss:$8 sm:$0x10] %vm1090, %v1798
      %1803 = vrot.lane.b32.xlu0 %v1790, 124
      %v1804 = vpop.permute.xlu0 %1803
      %v1805 = vrot.slane %v1804, 1
      %v1806 = vsel %vm423, %v1804, %v1805
      %s1808 = scalar_lea.vmem [#allocation3], 360
      %1809 = vst.msk [vmem:[%s1808] ss:$8 sm:$0xf] %vm1090, %v1806
      %1810 = vst.msk [vmem:[%s1808] ss:$8 sm:$0x10] %vm1090, %v1806
      %1811 = vrot.lane.b32.xlu0 %v1790, 122
      %v1812 = vpop.permute.xlu0 %1811
      %v1813 = vrot.slane %v1812, 1
      %v1814 = vsel %vm1112, %v1812, %v1813
      %s1816 = scalar_lea.vmem [#allocation3], 361
      %1817 = vst.msk [vmem:[%s1816] ss:$8 sm:$0xf] %vm1090, %v1814
      %1818 = vst.msk [vmem:[%s1816] ss:$8 sm:$0x10] %vm1090, %v1814
      %1819 = vrot.lane.b32.xlu0 %v1790, 120
      %v1820 = vpop.permute.xlu0 %1819
      %v1821 = vrot.slane %v1820, 1
      %v1822 = vsel %vm1121, %v1820, %v1821
      %s1824 = scalar_lea.vmem [#allocation3], 362
      %1825 = vst.msk [vmem:[%s1824] ss:$8 sm:$0xf] %vm1090, %v1822
      %1826 = vst.msk [vmem:[%s1824] ss:$8 sm:$0x10] %vm1090, %v1822
      %v1827 = vcombine.high %v1385, %v1392
      %s1829 = scalar_lea.vmem [#allocation3], 363
      %1830 = vst.msk [vmem:[%s1829] ss:$8 sm:$0xf] %vm1090, %v1827
      %1831 = vst.msk [vmem:[%s1829] ss:$8 sm:$0x10] %vm1090, %v1827
      %1832 = vrot.lane.b32.xlu0 %v1827, 126
      %v1833 = vpop.permute.xlu0 %1832
      %v1834 = vrot.slane %v1833, 1
      %v1835 = vsel %vm405, %v1833, %v1834
      %s1837 = scalar_lea.vmem [#allocation3], 364
      %1838 = vst.msk [vmem:[%s1837] ss:$8 sm:$0xf] %vm1090, %v1835
      %1839 = vst.msk [vmem:[%s1837] ss:$8 sm:$0x10] %vm1090, %v1835
      %1840 = vrot.lane.b32.xlu0 %v1827, 124
      %v1841 = vpop.permute.xlu0 %1840
      %v1842 = vrot.slane %v1841, 1
      %v1843 = vsel %vm423, %v1841, %v1842
      %s1845 = scalar_lea.vmem [#allocation3], 365
      %1846 = vst.msk [vmem:[%s1845] ss:$8 sm:$0xf] %vm1090, %v1843
      %1847 = vst.msk [vmem:[%s1845] ss:$8 sm:$0x10] %vm1090, %v1843
      %1848 = vrot.lane.b32.xlu0 %v1827, 122
      %v1849 = vpop.permute.xlu0 %1848
      %v1850 = vrot.slane %v1849, 1
      %v1851 = vsel %vm1112, %v1849, %v1850
      %s1853 = scalar_lea.vmem [#allocation3], 366
      %1854 = vst.msk [vmem:[%s1853] ss:$8 sm:$0xf] %vm1090, %v1851
      %1855 = vst.msk [vmem:[%s1853] ss:$8 sm:$0x10] %vm1090, %v1851
      %1856 = vrot.lane.b32.xlu0 %v1827, 120
      %v1857 = vpop.permute.xlu0 %1856
      %v1858 = vrot.slane %v1857, 1
      %v1859 = vsel %vm1121, %v1857, %v1858
      %s1861 = scalar_lea.vmem [#allocation3], 367
      %1862 = vst.msk [vmem:[%s1861] ss:$8 sm:$0xf] %vm1090, %v1859
      %1863 = vst.msk [vmem:[%s1861] ss:$8 sm:$0x10] %vm1090, %v1859
      %v1864 = vcombine.high %v1385, %v1437
      %1865 = vrot.lane.b32.xlu0 %v1864, 64
      %v1866 = vpop.permute.xlu0 %1865
      %v1867 = vrot.slane %v1866, 1
      %v1868 = vsel %vm477, %v1866, %v1867
      %s1870 = scalar_lea.vmem [#allocation3], 400
      %1871 = vst.msk [vmem:[%s1870] ss:$8 sm:$0xf] %vm1090, %v1868
      %1872 = vst.msk [vmem:[%s1870] ss:$8 sm:$0x10] %vm1090, %v1868
      %1873 = vrot.lane.b32.xlu0 %v1864, 62
      %v1874 = vpop.permute.xlu0 %1873
      %v1875 = vrot.slane %v1874, 1
      %v1876 = vsel %vm495, %v1874, %v1875
      %s1878 = scalar_lea.vmem [#allocation3], 401
      %1879 = vst.msk [vmem:[%s1878] ss:$8 sm:$0xf] %vm1090, %v1876
      %1880 = vst.msk [vmem:[%s1878] ss:$8 sm:$0x10] %vm1090, %v1876
      %1881 = vrot.lane.b32.xlu0 %v1864, 60
      %v1882 = vpop.permute.xlu0 %1881
      %v1883 = vrot.slane %v1882, 1
      %v1884 = vsel %vm513, %v1882, %v1883
      %s1886 = scalar_lea.vmem [#allocation3], 402
      %1887 = vst.msk [vmem:[%s1886] ss:$8 sm:$0xf] %vm1090, %v1884
      %1888 = vst.msk [vmem:[%s1886] ss:$8 sm:$0x10] %vm1090, %v1884
      %1889 = vrot.lane.b32.xlu0 %v1864, 58
      %v1890 = vpop.permute.xlu0 %1889
      %v1891 = vrot.slane %v1890, 1
      %v1892 = vsel %vm1171, %v1890, %v1891
      %s1894 = scalar_lea.vmem [#allocation3], 403
      %1895 = vst.msk [vmem:[%s1894] ss:$8 sm:$0xf] %vm1090, %v1892
      %1896 = vst.msk [vmem:[%s1894] ss:$8 sm:$0x10] %vm1090, %v1892
      %1897 = vrot.lane.b32.xlu0 %v1864, 56
      %v1898 = vpop.permute.xlu0 %1897
      %v1899 = vrot.slane %v1898, 1
      %v1900 = vsel %vm1180, %v1898, %v1899
      %s1902 = scalar_lea.vmem [#allocation3], 404
      %1903 = vst.msk [vmem:[%s1902] ss:$8 sm:$0xf] %vm1090, %v1900
      %1904 = vst.msk [vmem:[%s1902] ss:$8 sm:$0x10] %vm1090, %v1900
      %v1905 = vcombine.high %v1487, %v1494
      %s1907 = scalar_lea.vmem [#allocation3], 405
      %1908 = vst.msk [vmem:[%s1907] ss:$8 sm:$0xf] %vm1090, %v1905
      %1909 = vst.msk [vmem:[%s1907] ss:$8 sm:$0x10] %vm1090, %v1905
      %1910 = vrot.lane.b32.xlu0 %v1905, 126
      %v1911 = vpop.permute.xlu0 %1910
      %v1912 = vrot.slane %v1911, 1
      %v1913 = vsel %vm405, %v1911, %v1912
      %s1915 = scalar_lea.vmem [#allocation3], 406
      %1916 = vst.msk [vmem:[%s1915] ss:$8 sm:$0xf] %vm1090, %v1913
      %1917 = vst.msk [vmem:[%s1915] ss:$8 sm:$0x10] %vm1090, %v1913
      %1918 = vrot.lane.b32.xlu0 %v1905, 124
      %v1919 = vpop.permute.xlu0 %1918
      %v1920 = vrot.slane %v1919, 1
      %v1921 = vsel %vm423, %v1919, %v1920
      %s1923 = scalar_lea.vmem [#allocation3], 407
      %1924 = vst.msk [vmem:[%s1923] ss:$8 sm:$0xf] %vm1090, %v1921
      %1925 = vst.msk [vmem:[%s1923] ss:$8 sm:$0x10] %vm1090, %v1921
      %1926 = vrot.lane.b32.xlu0 %v1905, 122
      %v1927 = vpop.permute.xlu0 %1926
      %v1928 = vrot.slane %v1927, 1
      %v1929 = vsel %vm1112, %v1927, %v1928
      %s1931 = scalar_lea.vmem [#allocation3], 440
      %1932 = vst.msk [vmem:[%s1931] ss:$8 sm:$0xf] %vm1090, %v1929
      %1933 = vst.msk [vmem:[%s1931] ss:$8 sm:$0x10] %vm1090, %v1929
      %1934 = vrot.lane.b32.xlu0 %v1905, 120
      %v1935 = vpop.permute.xlu0 %1934
      %v1936 = vrot.slane %v1935, 1
      %v1937 = vsel %vm1121, %v1935, %v1936
      %s1939 = scalar_lea.vmem [#allocation3], 441
      %1940 = vst.msk [vmem:[%s1939] ss:$8 sm:$0xf] %vm1090, %v1937
      %1941 = vst.msk [vmem:[%s1939] ss:$8 sm:$0x10] %vm1090, %v1937
      %v1942 = vcombine.high %v1487, %v1539
      %1943 = vrot.lane.b32.xlu0 %v1942, 64
      %v1944 = vpop.permute.xlu0 %1943
      %v1945 = vrot.slane %v1944, 1
      %v1946 = vsel %vm477, %v1944, %v1945
      %s1948 = scalar_lea.vmem [#allocation3], 442
      %1949 = vst.msk [vmem:[%s1948] ss:$8 sm:$0xf] %vm1090, %v1946
      %1950 = vst.msk [vmem:[%s1948] ss:$8 sm:$0x10] %vm1090, %v1946
      %1951 = vrot.lane.b32.xlu0 %v1942, 62
      %v1952 = vpop.permute.xlu0 %1951
      %v1953 = vrot.slane %v1952, 1
      %v1954 = vsel %vm495, %v1952, %v1953
      %s1956 = scalar_lea.vmem [#allocation3], 443
      %1957 = vst.msk [vmem:[%s1956] ss:$8 sm:$0xf] %vm1090, %v1954
      %1958 = vst.msk [vmem:[%s1956] ss:$8 sm:$0x10] %vm1090, %v1954
      %1959 = vrot.lane.b32.xlu0 %v1942, 60
      %v1960 = vpop.permute.xlu0 %1959
      %v1961 = vrot.slane %v1960, 1
      %v1962 = vsel %vm513, %v1960, %v1961
      %s1964 = scalar_lea.vmem [#allocation3], 444
      %1965 = vst.msk [vmem:[%s1964] ss:$8 sm:$0xf] %vm1090, %v1962
      %1966 = vst.msk [vmem:[%s1964] ss:$8 sm:$0x10] %vm1090, %v1962
      %1967 = vrot.lane.b32.xlu0 %v1942, 58
      %v1968 = vpop.permute.xlu0 %1967
      %v1969 = vrot.slane %v1968, 1
      %v1970 = vsel %vm1171, %v1968, %v1969
      %s1972 = scalar_lea.vmem [#allocation3], 445
      %1973 = vst.msk [vmem:[%s1972] ss:$8 sm:$0xf] %vm1090, %v1970
      %1974 = vst.msk [vmem:[%s1972] ss:$8 sm:$0x10] %vm1090, %v1970
      %1975 = vrot.lane.b32.xlu0 %v1942, 56
      %v1976 = vpop.permute.xlu0 %1975
      %v1977 = vrot.slane %v1976, 1
      %v1978 = vsel %vm1180, %v1976, %v1977
      %s1980 = scalar_lea.vmem [#allocation3], 446
      %1981 = vst.msk [vmem:[%s1980] ss:$8 sm:$0xf] %vm1090, %v1978
      %1982 = vst.msk [vmem:[%s1980] ss:$8 sm:$0x10] %vm1090, %v1978
      %v1983 = vcombine.high %v1589, %v1596
      %s1985 = scalar_lea.vmem [#allocation3], 447
      %1986 = vst.msk [vmem:[%s1985] ss:$8 sm:$0xf] %vm1090, %v1983
      %1987 = vst.msk [vmem:[%s1985] ss:$8 sm:$0x10] %vm1090, %v1983
      %1988 = vrot.lane.b32.xlu0 %v1983, 126
      %v1989 = vpop.permute.xlu0 %1988
      %v1990 = vrot.slane %v1989, 1
      %v1991 = vsel %vm405, %v1989, %v1990
      %s1993 = scalar_lea.vmem [#allocation3], 480
      %1994 = vst.msk [vmem:[%s1993] ss:$8 sm:$0xf] %vm1090, %v1991
      %1995 = vst.msk [vmem:[%s1993] ss:$8 sm:$0x10] %vm1090, %v1991
      %1996 = vrot.lane.b32.xlu0 %v1983, 124
      %v1997 = vpop.permute.xlu0 %1996
      %v1998 = vrot.slane %v1997, 1
      %v1999 = vsel %vm423, %v1997, %v1998
      %s2001 = scalar_lea.vmem [#allocation3], 481
      %2002 = vst.msk [vmem:[%s2001] ss:$8 sm:$0xf] %vm1090, %v1999
      %2003 = vst.msk [vmem:[%s2001] ss:$8 sm:$0x10] %vm1090, %v1999
      %2004 = vrot.lane.b32.xlu0 %v1983, 122
      %v2005 = vpop.permute.xlu0 %2004
      %v2006 = vrot.slane %v2005, 1
      %v2007 = vsel %vm1112, %v2005, %v2006
      %s2009 = scalar_lea.vmem [#allocation3], 482
      %2010 = vst.msk [vmem:[%s2009] ss:$8 sm:$0xf] %vm1090, %v2007
      %2011 = vst.msk [vmem:[%s2009] ss:$8 sm:$0x10] %vm1090, %v2007
      %2012 = vrot.lane.b32.xlu0 %v1983, 120
      %v2013 = vpop.permute.xlu0 %2012
      %v2014 = vrot.slane %v2013, 1
      %v2015 = vsel %vm1121, %v2013, %v2014
      %s2017 = scalar_lea.vmem [#allocation3], 483
      %2018 = vst.msk [vmem:[%s2017] ss:$8 sm:$0xf] %vm1090, %v2015
      %2019 = vst.msk [vmem:[%s2017] ss:$8 sm:$0x10] %vm1090, %v2015
      %v2020 = vcombine.high %v1037, %v1038
      %v2021 = vcombine.high %v1039, %v1040
      %v2022 = vcombine.high %v1041, %v1041
      %v2024 = vunpack.c.l.s4 1966171168
      %v2025 = vunpack.c.0.s8 %v2024
      %v2026 = vlaneseq
      %v2027 = vshrl.u32 %v2026, 7
      %v2028 = vsub.s32 %v2025, %v2027
      %v2029 = vrot.slane %v2020, %v2028
      %v2031 = vunpack.c.l.s4 1966171168
      %v2032 = vunpack.c.0.s8 %v2031
      %v2033 = vlaneseq
      %v2034 = vshrl.u32 %v2033, 7
      %v2035 = vsub.s32 %v2032, %v2034
      %v2036 = vrot.slane %v2021, %v2035
      %v2038 = vunpack.c.l.s4 1966171168
      %v2039 = vunpack.c.0.s8 %v2038
      %v2040 = vlaneseq
      %v2041 = vshrl.u32 %v2040, 7
      %v2042 = vsub.s32 %v2039, %v2041
      %v2043 = vrot.slane %v2022, %v2042
      %v2044 = vcombine.low %v2029, %v2036
      %v2046 = vunpack.c.l.s4 1966171168
      %v2047 = vunpack.c.0.s8 %v2046
      %v2048 = vlaneseq
      %v2049 = vshrl.u32 %v2048, 7
      %v2050 = vsub.s32 %v2047, %v2049
      %v2051 = vrot.slane %v2044, %v2050
      %v2053 = vunpack.c.l.s4 1966171168
      %v2054 = vunpack.c.0.s8 %v2053
      %v2055 = vlaneseq
      %v2056 = vshrl.u32 %v2055, 7
      %v2057 = vsub.s32 %v2054, %v2056
      %v2058 = vrot.slane %v2043, %v2057
      %v2059 = vcombine.low %v2051, %v2058
      %s2061 = scalar_lea.vmem [#allocation3], 484
      %2062 = vst.msk [vmem:[%s2061] ss:$8 sm:$0xf] %vm1090, %v2059
      %2063 = vst.msk [vmem:[%s2061] ss:$8 sm:$0x10] %vm1090, %v2059
      %2064 = vrot.lane.b32.xlu0 %v2059, 126
      %v2065 = vpop.permute.xlu0 %2064
      %v2066 = vrot.slane %v2065, 1
      %v2067 = vsel %vm405, %v2065, %v2066
      %s2069 = scalar_lea.vmem [#allocation3], 485
      %2070 = vst.msk [vmem:[%s2069] ss:$8 sm:$0xf] %vm1090, %v2067
      %2071 = vst.msk [vmem:[%s2069] ss:$8 sm:$0x10] %vm1090, %v2067
      %2072 = vrot.lane.b32.xlu0 %v2059, 124
      %v2073 = vpop.permute.xlu0 %2072
      %v2074 = vrot.slane %v2073, 1
      %v2075 = vsel %vm423, %v2073, %v2074
      %s2077 = scalar_lea.vmem [#allocation3], 486
      %2078 = vst.msk [vmem:[%s2077] ss:$8 sm:$0xf] %vm1090, %v2075
      %2079 = vst.msk [vmem:[%s2077] ss:$8 sm:$0x10] %vm1090, %v2075
      %2080 = vrot.lane.b32.xlu0 %v2059, 122
      %v2081 = vpop.permute.xlu0 %2080
      %v2082 = vrot.slane %v2081, 1
      %v2083 = vsel %vm1112, %v2081, %v2082
      %s2085 = scalar_lea.vmem [#allocation3], 487
      %2086 = vst.msk [vmem:[%s2085] ss:$8 sm:$0xf] %vm1090, %v2083
      %2087 = vst.msk [vmem:[%s2085] ss:$8 sm:$0x10] %vm1090, %v2083
      %2088 = vrot.lane.b32.xlu0 %v2059, 120
      %v2089 = vpop.permute.xlu0 %2088
      %v2090 = vrot.slane %v2089, 1
      %v2091 = vsel %vm1121, %v2089, %v2090
      %s2093 = scalar_lea.vmem [#allocation3], 520
      %2094 = vst.msk [vmem:[%s2093] ss:$8 sm:$0xf] %vm1090, %v2091
      %2095 = vst.msk [vmem:[%s2093] ss:$8 sm:$0x10] %vm1090, %v2091
      %v2096 = vcombine.high %v1041, %v1042
      %v2098 = vunpack.c.l.s4 1966171168
      %v2099 = vunpack.c.0.s8 %v2098
      %v2100 = vlaneseq
      %v2101 = vshrl.u32 %v2100, 7
      %v2102 = vsub.s32 %v2099, %v2101
      %v2103 = vrot.slane %v2096, %v2102
      %v2105 = vunpack.c.l.s4 1966171168
      %v2106 = vunpack.c.0.s8 %v2105
      %v2107 = vlaneseq
      %v2108 = vshrl.u32 %v2107, 7
      %v2109 = vsub.s32 %v2106, %v2108
      %v2110 = vrot.slane %v2103, %v2109
      %v2111 = vcombine.low %v2051, %v2110
      %2112 = vrot.lane.b32.xlu0 %v2111, 64
      %v2113 = vpop.permute.xlu0 %2112
      %v2114 = vrot.slane %v2113, 1
      %v2115 = vsel %vm477, %v2113, %v2114
      %s2117 = scalar_lea.vmem [#allocation3], 521
      %2118 = vst.msk [vmem:[%s2117] ss:$8 sm:$0xf] %vm1090, %v2115
      %2119 = vst.msk [vmem:[%s2117] ss:$8 sm:$0x10] %vm1090, %v2115
      %2120 = vrot.lane.b32.xlu0 %v2111, 62
      %v2121 = vpop.permute.xlu0 %2120
      %v2122 = vrot.slane %v2121, 1
      %v2123 = vsel %vm495, %v2121, %v2122
      %s2125 = scalar_lea.vmem [#allocation3], 522
      %2126 = vst.msk [vmem:[%s2125] ss:$8 sm:$0xf] %vm1090, %v2123
      %2127 = vst.msk [vmem:[%s2125] ss:$8 sm:$0x10] %vm1090, %v2123
      %2128 = vrot.lane.b32.xlu0 %v2111, 60
      %v2129 = vpop.permute.xlu0 %2128
      %v2130 = vrot.slane %v2129, 1
      %v2131 = vsel %vm513, %v2129, %v2130
      %s2133 = scalar_lea.vmem [#allocation3], 523
      %2134 = vst.msk [vmem:[%s2133] ss:$8 sm:$0xf] %vm1090, %v2131
      %2135 = vst.msk [vmem:[%s2133] ss:$8 sm:$0x10] %vm1090, %v2131
      %2136 = vrot.lane.b32.xlu0 %v2111, 58
      %v2137 = vpop.permute.xlu0 %2136
      %v2138 = vrot.slane %v2137, 1
      %v2139 = vsel %vm1171, %v2137, %v2138
      %s2141 = scalar_lea.vmem [#allocation3], 524
      %2142 = vst.msk [vmem:[%s2141] ss:$8 sm:$0xf] %vm1090, %v2139
      %2143 = vst.msk [vmem:[%s2141] ss:$8 sm:$0x10] %vm1090, %v2139
      %2144 = vrot.lane.b32.xlu0 %v2111, 56
      %v2145 = vpop.permute.xlu0 %2144
      %v2146 = vrot.slane %v2145, 1
      %v2147 = vsel %vm1180, %v2145, %v2146
      %s2149 = scalar_lea.vmem [#allocation3], 525
      %2150 = vst.msk [vmem:[%s2149] ss:$8 sm:$0xf] %vm1090, %v2147
      %2151 = vst.msk [vmem:[%s2149] ss:$8 sm:$0x10] %vm1090, %v2147
      %v2152 = vcombine.high %v1038, %v1039
      %v2153 = vcombine.high %v1040, %v1041
      %v2154 = vcombine.high %v1042, %v1042
      %v2156 = vunpack.c.l.s4 1966171168
      %v2157 = vunpack.c.0.s8 %v2156
      %v2158 = vlaneseq
      %v2159 = vshrl.u32 %v2158, 7
      %v2160 = vsub.s32 %v2157, %v2159
      %v2161 = vrot.slane %v2152, %v2160
      %v2163 = vunpack.c.l.s4 1966171168
      %v2164 = vunpack.c.0.s8 %v2163
      %v2165 = vlaneseq
      %v2166 = vshrl.u32 %v2165, 7
      %v2167 = vsub.s32 %v2164, %v2166
      %v2168 = vrot.slane %v2153, %v2167
      %v2170 = vunpack.c.l.s4 1966171168
      %v2171 = vunpack.c.0.s8 %v2170
      %v2172 = vlaneseq
      %v2173 = vshrl.u32 %v2172, 7
      %v2174 = vsub.s32 %v2171, %v2173
      %v2175 = vrot.slane %v2154, %v2174
      %v2176 = vcombine.low %v2161, %v2168
      %v2178 = vunpack.c.l.s4 1966171168
      %v2179 = vunpack.c.0.s8 %v2178
      %v2180 = vlaneseq
      %v2181 = vshrl.u32 %v2180, 7
      %v2182 = vsub.s32 %v2179, %v2181
      %v2183 = vrot.slane %v2176, %v2182
      %v2185 = vunpack.c.l.s4 1966171168
      %v2186 = vunpack.c.0.s8 %v2185
      %v2187 = vlaneseq
      %v2188 = vshrl.u32 %v2187, 7
      %v2189 = vsub.s32 %v2186, %v2188
      %v2190 = vrot.slane %v2175, %v2189
      %v2191 = vcombine.low %v2183, %v2190
      %s2193 = scalar_lea.vmem [#allocation3], 526
      %2194 = vst.msk [vmem:[%s2193] ss:$8 sm:$0xf] %vm1090, %v2191
      %2195 = vst.msk [vmem:[%s2193] ss:$8 sm:$0x10] %vm1090, %v2191
      %2196 = vrot.lane.b32.xlu0 %v2191, 126
      %v2197 = vpop.permute.xlu0 %2196
      %v2198 = vrot.slane %v2197, 1
      %v2199 = vsel %vm405, %v2197, %v2198
      %s2201 = scalar_lea.vmem [#allocation3], 527
      %2202 = vst.msk [vmem:[%s2201] ss:$8 sm:$0xf] %vm1090, %v2199
      %2203 = vst.msk [vmem:[%s2201] ss:$8 sm:$0x10] %vm1090, %v2199
      %2204 = vrot.lane.b32.xlu0 %v2191, 124
      %v2205 = vpop.permute.xlu0 %2204
      %v2206 = vrot.slane %v2205, 1
      %v2207 = vsel %vm423, %v2205, %v2206
      %s2209 = scalar_lea.vmem [#allocation3], 560
      %2210 = vst.msk [vmem:[%s2209] ss:$8 sm:$0xf] %vm1090, %v2207
      %2211 = vst.msk [vmem:[%s2209] ss:$8 sm:$0x10] %vm1090, %v2207
      %2212 = vrot.lane.b32.xlu0 %v2191, 122
      %v2213 = vpop.permute.xlu0 %2212
      %v2214 = vrot.slane %v2213, 1
      %v2215 = vsel %vm1112, %v2213, %v2214
      %s2217 = scalar_lea.vmem [#allocation3], 561
      %2218 = vst.msk [vmem:[%s2217] ss:$8 sm:$0xf] %vm1090, %v2215
      %2219 = vst.msk [vmem:[%s2217] ss:$8 sm:$0x10] %vm1090, %v2215
      %2220 = vrot.lane.b32.xlu0 %v2191, 120
      %v2221 = vpop.permute.xlu0 %2220
      %v2222 = vrot.slane %v2221, 1
      %v2223 = vsel %vm1121, %v2221, %v2222
      %s2225 = scalar_lea.vmem [#allocation3], 562
      %2226 = vst.msk [vmem:[%s2225] ss:$8 sm:$0xf] %vm1090, %v2223
      %2227 = vst.msk [vmem:[%s2225] ss:$8 sm:$0x10] %vm1090, %v2223
      %v2228 = vcombine.high %v1042, %v1043
      %v2230 = vunpack.c.l.s4 1966171168
      %v2231 = vunpack.c.0.s8 %v2230
      %v2232 = vlaneseq
      %v2233 = vshrl.u32 %v2232, 7
      %v2234 = vsub.s32 %v2231, %v2233
      %v2235 = vrot.slane %v2228, %v2234
      %v2237 = vunpack.c.l.s4 1966171168
      %v2238 = vunpack.c.0.s8 %v2237
      %v2239 = vlaneseq
      %v2240 = vshrl.u32 %v2239, 7
      %v2241 = vsub.s32 %v2238, %v2240
      %v2242 = vrot.slane %v2235, %v2241
      %v2243 = vcombine.low %v2183, %v2242
      %2244 = vrot.lane.b32.xlu0 %v2243, 64
      %v2245 = vpop.permute.xlu0 %2244
      %v2246 = vrot.slane %v2245, 1
      %v2247 = vsel %vm477, %v2245, %v2246
      %s2249 = scalar_lea.vmem [#allocation3], 563
      %2250 = vst.msk [vmem:[%s2249] ss:$8 sm:$0xf] %vm1090, %v2247
      %2251 = vst.msk [vmem:[%s2249] ss:$8 sm:$0x10] %vm1090, %v2247
      %2252 = vrot.lane.b32.xlu0 %v2243, 62
      %v2253 = vpop.permute.xlu0 %2252
      %v2254 = vrot.slane %v2253, 1
      %v2255 = vsel %vm495, %v2253, %v2254
      %s2257 = scalar_lea.vmem [#allocation3], 564
      %2258 = vst.msk [vmem:[%s2257] ss:$8 sm:$0xf] %vm1090, %v2255
      %2259 = vst.msk [vmem:[%s2257] ss:$8 sm:$0x10] %vm1090, %v2255
      %2260 = vrot.lane.b32.xlu0 %v2243, 60
      %v2261 = vpop.permute.xlu0 %2260
      %v2262 = vrot.slane %v2261, 1
      %v2263 = vsel %vm513, %v2261, %v2262
      %s2265 = scalar_lea.vmem [#allocation3], 565
      %2266 = vst.msk [vmem:[%s2265] ss:$8 sm:$0xf] %vm1090, %v2263
      %2267 = vst.msk [vmem:[%s2265] ss:$8 sm:$0x10] %vm1090, %v2263
      %2268 = vrot.lane.b32.xlu0 %v2243, 58
      %v2269 = vpop.permute.xlu0 %2268
      %v2270 = vrot.slane %v2269, 1
      %v2271 = vsel %vm1171, %v2269, %v2270
      %s2273 = scalar_lea.vmem [#allocation3], 566
      %2274 = vst.msk [vmem:[%s2273] ss:$8 sm:$0xf] %vm1090, %v2271
      %2275 = vst.msk [vmem:[%s2273] ss:$8 sm:$0x10] %vm1090, %v2271
      %2276 = vrot.lane.b32.xlu0 %v2243, 56
      %v2277 = vpop.permute.xlu0 %2276
      %v2278 = vrot.slane %v2277, 1
      %v2279 = vsel %vm1180, %v2277, %v2278
      %s2281 = scalar_lea.vmem [#allocation3], 567
      %2282 = vst.msk [vmem:[%s2281] ss:$8 sm:$0xf] %vm1090, %v2279
      %2283 = vst.msk [vmem:[%s2281] ss:$8 sm:$0x10] %vm1090, %v2279
      %v2284 = vcombine.high %v1043, %v1043
      %v2286 = vunpack.c.l.s4 1966171168
      %v2287 = vunpack.c.0.s8 %v2286
      %v2288 = vlaneseq
      %v2289 = vshrl.u32 %v2288, 7
      %v2290 = vsub.s32 %v2287, %v2289
      %v2291 = vrot.slane %v2284, %v2290
      %v2292 = vcombine.low %v2036, %v2103
      %v2294 = vunpack.c.l.s4 1966171168
      %v2295 = vunpack.c.0.s8 %v2294
      %v2296 = vlaneseq
      %v2297 = vshrl.u32 %v2296, 7
      %v2298 = vsub.s32 %v2295, %v2297
      %v2299 = vrot.slane %v2292, %v2298
      %v2301 = vunpack.c.l.s4 1966171168
      %v2302 = vunpack.c.0.s8 %v2301
      %v2303 = vlaneseq
      %v2304 = vshrl.u32 %v2303, 7
      %v2305 = vsub.s32 %v2302, %v2304
      %v2306 = vrot.slane %v2291, %v2305
      %v2307 = vcombine.low %v2299, %v2306
      %s2309 = scalar_lea.vmem [#allocation3], 600
      %2310 = vst.msk [vmem:[%s2309] ss:$8 sm:$0xf] %vm1090, %v2307
      %2311 = vst.msk [vmem:[%s2309] ss:$8 sm:$0x10] %vm1090, %v2307
      %2312 = vrot.lane.b32.xlu0 %v2307, 126
      %v2313 = vpop.permute.xlu0 %2312
      %v2314 = vrot.slane %v2313, 1
      %v2315 = vsel %vm405, %v2313, %v2314
      %s2317 = scalar_lea.vmem [#allocation3], 601
      %2318 = vst.msk [vmem:[%s2317] ss:$8 sm:$0xf] %vm1090, %v2315
      %2319 = vst.msk [vmem:[%s2317] ss:$8 sm:$0x10] %vm1090, %v2315
      %2320 = vrot.lane.b32.xlu0 %v2307, 124
      %v2321 = vpop.permute.xlu0 %2320
      %v2322 = vrot.slane %v2321, 1
      %v2323 = vsel %vm423, %v2321, %v2322
      %s2325 = scalar_lea.vmem [#allocation3], 602
      %2326 = vst.msk [vmem:[%s2325] ss:$8 sm:$0xf] %vm1090, %v2323
      %2327 = vst.msk [vmem:[%s2325] ss:$8 sm:$0x10] %vm1090, %v2323
      %2328 = vrot.lane.b32.xlu0 %v2307, 122
      %v2329 = vpop.permute.xlu0 %2328
      %v2330 = vrot.slane %v2329, 1
      %v2331 = vsel %vm1112, %v2329, %v2330
      %s2333 = scalar_lea.vmem [#allocation3], 603
      %2334 = vst.msk [vmem:[%s2333] ss:$8 sm:$0xf] %vm1090, %v2331
      %2335 = vst.msk [vmem:[%s2333] ss:$8 sm:$0x10] %vm1090, %v2331
      %2336 = vrot.lane.b32.xlu0 %v2307, 120
      %v2337 = vpop.permute.xlu0 %2336
      %v2338 = vrot.slane %v2337, 1
      %v2339 = vsel %vm1121, %v2337, %v2338
      %s2341 = scalar_lea.vmem [#allocation3], 604
      %2342 = vst.msk [vmem:[%s2341] ss:$8 sm:$0xf] %vm1090, %v2339
      %2343 = vst.msk [vmem:[%s2341] ss:$8 sm:$0x10] %vm1090, %v2339
      %v2344 = vcombine.high %v2029, %v2036
      %v2345 = vcombine.high %v2043, %v2043
      %v2347 = vunpack.c.l.s4 1966171168
      %v2348 = vunpack.c.0.s8 %v2347
      %v2349 = vlaneseq
      %v2350 = vshrl.u32 %v2349, 7
      %v2351 = vsub.s32 %v2348, %v2350
      %v2352 = vrot.slane %v2344, %v2351
      %v2354 = vunpack.c.l.s4 1966171168
      %v2355 = vunpack.c.0.s8 %v2354
      %v2356 = vlaneseq
      %v2357 = vshrl.u32 %v2356, 7
      %v2358 = vsub.s32 %v2355, %v2357
      %v2359 = vrot.slane %v2345, %v2358
      %v2360 = vcombine.low %v2352, %v2359
      %s2362 = scalar_lea.vmem [#allocation3], 605
      %2363 = vst.msk [vmem:[%s2362] ss:$8 sm:$0xf] %vm1090, %v2360
      %2364 = vst.msk [vmem:[%s2362] ss:$8 sm:$0x10] %vm1090, %v2360
      %2365 = vrot.lane.b32.xlu0 %v2360, 126
      %v2366 = vpop.permute.xlu0 %2365
      %v2367 = vrot.slane %v2366, 1
      %v2368 = vsel %vm405, %v2366, %v2367
      %s2370 = scalar_lea.vmem [#allocation3], 606
      %2371 = vst.msk [vmem:[%s2370] ss:$8 sm:$0xf] %vm1090, %v2368
      %2372 = vst.msk [vmem:[%s2370] ss:$8 sm:$0x10] %vm1090, %v2368
      %2373 = vrot.lane.b32.xlu0 %v2360, 124
      %v2374 = vpop.permute.xlu0 %2373
      %v2375 = vrot.slane %v2374, 1
      %v2376 = vsel %vm423, %v2374, %v2375
      %s2378 = scalar_lea.vmem [#allocation3], 607
      %2379 = vst.msk [vmem:[%s2378] ss:$8 sm:$0xf] %vm1090, %v2376
      %2380 = vst.msk [vmem:[%s2378] ss:$8 sm:$0x10] %vm1090, %v2376
      %2381 = vrot.lane.b32.xlu0 %v2360, 122
      %v2382 = vpop.permute.xlu0 %2381
      %v2383 = vrot.slane %v2382, 1
      %v2384 = vsel %vm1112, %v2382, %v2383
      %s2386 = scalar_lea.vmem [#allocation3], 640
      %2387 = vst.msk [vmem:[%s2386] ss:$8 sm:$0xf] %vm1090, %v2384
      %2388 = vst.msk [vmem:[%s2386] ss:$8 sm:$0x10] %vm1090, %v2384
      %2389 = vrot.lane.b32.xlu0 %v2360, 120
      %v2390 = vpop.permute.xlu0 %2389
      %v2391 = vrot.slane %v2390, 1
      %v2392 = vsel %vm1121, %v2390, %v2391
      %s2394 = scalar_lea.vmem [#allocation3], 641
      %2395 = vst.msk [vmem:[%s2394] ss:$8 sm:$0xf] %vm1090, %v2392
      %2396 = vst.msk [vmem:[%s2394] ss:$8 sm:$0x10] %vm1090, %v2392
      %v2397 = vcombine.high %v2103, %v2103
      %v2399 = vunpack.c.l.s4 1966171168
      %v2400 = vunpack.c.0.s8 %v2399
      %v2401 = vlaneseq
      %v2402 = vshrl.u32 %v2401, 7
      %v2403 = vsub.s32 %v2400, %v2402
      %v2404 = vrot.slane %v2397, %v2403
      %v2405 = vcombine.low %v2352, %v2404
      %2406 = vrot.lane.b32.xlu0 %v2405, 64
      %v2407 = vpop.permute.xlu0 %2406
      %v2408 = vrot.slane %v2407, 1
      %v2409 = vsel %vm477, %v2407, %v2408
      %s2411 = scalar_lea.vmem [#allocation3], 642
      %2412 = vst.msk [vmem:[%s2411] ss:$8 sm:$0xf] %vm1090, %v2409
      %2413 = vst.msk [vmem:[%s2411] ss:$8 sm:$0x10] %vm1090, %v2409
      %2414 = vrot.lane.b32.xlu0 %v2405, 62
      %v2415 = vpop.permute.xlu0 %2414
      %v2416 = vrot.slane %v2415, 1
      %v2417 = vsel %vm495, %v2415, %v2416
      %s2419 = scalar_lea.vmem [#allocation3], 643
      %2420 = vst.msk [vmem:[%s2419] ss:$8 sm:$0xf] %vm1090, %v2417
      %2421 = vst.msk [vmem:[%s2419] ss:$8 sm:$0x10] %vm1090, %v2417
      %2422 = vrot.lane.b32.xlu0 %v2405, 60
      %v2423 = vpop.permute.xlu0 %2422
      %v2424 = vrot.slane %v2423, 1
      %v2425 = vsel %vm513, %v2423, %v2424
      %s2427 = scalar_lea.vmem [#allocation3], 644
      %2428 = vst.msk [vmem:[%s2427] ss:$8 sm:$0xf] %vm1090, %v2425
      %2429 = vst.msk [vmem:[%s2427] ss:$8 sm:$0x10] %vm1090, %v2425
      %2430 = vrot.lane.b32.xlu0 %v2405, 58
      %v2431 = vpop.permute.xlu0 %2430
      %v2432 = vrot.slane %v2431, 1
      %v2433 = vsel %vm1171, %v2431, %v2432
      %s2435 = scalar_lea.vmem [#allocation3], 645
      %2436 = vst.msk [vmem:[%s2435] ss:$8 sm:$0xf] %vm1090, %v2433
      %2437 = vst.msk [vmem:[%s2435] ss:$8 sm:$0x10] %vm1090, %v2433
      %2438 = vrot.lane.b32.xlu0 %v2405, 56
      %v2439 = vpop.permute.xlu0 %2438
      %v2440 = vrot.slane %v2439, 1
      %v2441 = vsel %vm1180, %v2439, %v2440
      %s2443 = scalar_lea.vmem [#allocation3], 646
      %2444 = vst.msk [vmem:[%s2443] ss:$8 sm:$0xf] %vm1090, %v2441
      %2445 = vst.msk [vmem:[%s2443] ss:$8 sm:$0x10] %vm1090, %v2441
      %v2446 = vcombine.high %v2161, %v2168
      %v2447 = vcombine.high %v2175, %v2175
      %v2449 = vunpack.c.l.s4 1966171168
      %v2450 = vunpack.c.0.s8 %v2449
      %v2451 = vlaneseq
      %v2452 = vshrl.u32 %v2451, 7
      %v2453 = vsub.s32 %v2450, %v2452
      %v2454 = vrot.slane %v2446, %v2453
      %v2456 = vunpack.c.l.s4 1966171168
      %v2457 = vunpack.c.0.s8 %v2456
      %v2458 = vlaneseq
      %v2459 = vshrl.u32 %v2458, 7
      %v2460 = vsub.s32 %v2457, %v2459
      %v2461 = vrot.slane %v2447, %v2460
      %v2462 = vcombine.low %v2454, %v2461
      %s2464 = scalar_lea.vmem [#allocation3], 647
      %2465 = vst.msk [vmem:[%s2464] ss:$8 sm:$0xf] %vm1090, %v2462
      %2466 = vst.msk [vmem:[%s2464] ss:$8 sm:$0x10] %vm1090, %v2462
      %2467 = vrot.lane.b32.xlu0 %v2462, 126
      %v2468 = vpop.permute.xlu0 %2467
      %v2469 = vrot.slane %v2468, 1
      %v2470 = vsel %vm405, %v2468, %v2469
      %s2472 = scalar_lea.vmem [#allocation3], 680
      %2473 = vst.msk [vmem:[%s2472] ss:$8 sm:$0xf] %vm1090, %v2470
      %2474 = vst.msk [vmem:[%s2472] ss:$8 sm:$0x10] %vm1090, %v2470
      %2475 = vrot.lane.b32.xlu0 %v2462, 124
      %v2476 = vpop.permute.xlu0 %2475
      %v2477 = vrot.slane %v2476, 1
      %v2478 = vsel %vm423, %v2476, %v2477
      %s2480 = scalar_lea.vmem [#allocation3], 681
      %2481 = vst.msk [vmem:[%s2480] ss:$8 sm:$0xf] %vm1090, %v2478
      %2482 = vst.msk [vmem:[%s2480] ss:$8 sm:$0x10] %vm1090, %v2478
      %2483 = vrot.lane.b32.xlu0 %v2462, 122
      %v2484 = vpop.permute.xlu0 %2483
      %v2485 = vrot.slane %v2484, 1
      %v2486 = vsel %vm1112, %v2484, %v2485
      %s2488 = scalar_lea.vmem [#allocation3], 682
      %2489 = vst.msk [vmem:[%s2488] ss:$8 sm:$0xf] %vm1090, %v2486
      %2490 = vst.msk [vmem:[%s2488] ss:$8 sm:$0x10] %vm1090, %v2486
      %2491 = vrot.lane.b32.xlu0 %v2462, 120
      %v2492 = vpop.permute.xlu0 %2491
      %v2493 = vrot.slane %v2492, 1
      %v2494 = vsel %vm1121, %v2492, %v2493
      %s2496 = scalar_lea.vmem [#allocation3], 683
      %2497 = vst.msk [vmem:[%s2496] ss:$8 sm:$0xf] %vm1090, %v2494
      %2498 = vst.msk [vmem:[%s2496] ss:$8 sm:$0x10] %vm1090, %v2494
      %v2499 = vcombine.high %v2235, %v2235
      %v2501 = vunpack.c.l.s4 1966171168
      %v2502 = vunpack.c.0.s8 %v2501
      %v2503 = vlaneseq
      %v2504 = vshrl.u32 %v2503, 7
      %v2505 = vsub.s32 %v2502, %v2504
      %v2506 = vrot.slane %v2499, %v2505
      %v2507 = vcombine.low %v2454, %v2506
      %2508 = vrot.lane.b32.xlu0 %v2507, 64
      %v2509 = vpop.permute.xlu0 %2508
      %v2510 = vrot.slane %v2509, 1
      %v2511 = vsel %vm477, %v2509, %v2510
      %s2513 = scalar_lea.vmem [#allocation3], 684
      %2514 = vst.msk [vmem:[%s2513] ss:$8 sm:$0xf] %vm1090, %v2511
      %2515 = vst.msk [vmem:[%s2513] ss:$8 sm:$0x10] %vm1090, %v2511
      %2516 = vrot.lane.b32.xlu0 %v2507, 62
      %v2517 = vpop.permute.xlu0 %2516
      %v2518 = vrot.slane %v2517, 1
      %v2519 = vsel %vm495, %v2517, %v2518
      %s2521 = scalar_lea.vmem [#allocation3], 685
      %2522 = vst.msk [vmem:[%s2521] ss:$8 sm:$0xf] %vm1090, %v2519
      %2523 = vst.msk [vmem:[%s2521] ss:$8 sm:$0x10] %vm1090, %v2519
      %2524 = vrot.lane.b32.xlu0 %v2507, 60
      %v2525 = vpop.permute.xlu0 %2524
      %v2526 = vrot.slane %v2525, 1
      %v2527 = vsel %vm513, %v2525, %v2526
      %s2529 = scalar_lea.vmem [#allocation3], 686
      %2530 = vst.msk [vmem:[%s2529] ss:$8 sm:$0xf] %vm1090, %v2527
      %2531 = vst.msk [vmem:[%s2529] ss:$8 sm:$0x10] %vm1090, %v2527
      %2532 = vrot.lane.b32.xlu0 %v2507, 58
      %v2533 = vpop.permute.xlu0 %2532
      %v2534 = vrot.slane %v2533, 1
      %v2535 = vsel %vm1171, %v2533, %v2534
      %s2537 = scalar_lea.vmem [#allocation3], 687
      %2538 = vst.msk [vmem:[%s2537] ss:$8 sm:$0xf] %vm1090, %v2535
      %2539 = vst.msk [vmem:[%s2537] ss:$8 sm:$0x10] %vm1090, %v2535
      %2540 = vrot.lane.b32.xlu0 %v2507, 56
      %v2541 = vpop.permute.xlu0 %2540
      %v2542 = vrot.slane %v2541, 1
      %v2543 = vsel %vm1180, %v2541, %v2542
      %s2545 = scalar_lea.vmem [#allocation3], 720
      %2546 = vst.msk [vmem:[%s2545] ss:$8 sm:$0xf] %vm1090, %v2543
      %2547 = vst.msk [vmem:[%s2545] ss:$8 sm:$0x10] %vm1090, %v2543
      %v2548 = vcombine.high %v2036, %v2103
      %v2549 = vcombine.high %v2291, %v2291
      %v2551 = vunpack.c.l.s4 1966171168
      %v2552 = vunpack.c.0.s8 %v2551
      %v2553 = vlaneseq
      %v2554 = vshrl.u32 %v2553, 7
      %v2555 = vsub.s32 %v2552, %v2554
      %v2556 = vrot.slane %v2548, %v2555
      %v2558 = vunpack.c.l.s4 1966171168
      %v2559 = vunpack.c.0.s8 %v2558
      %v2560 = vlaneseq
      %v2561 = vshrl.u32 %v2560, 7
      %v2562 = vsub.s32 %v2559, %v2561
      %v2563 = vrot.slane %v2549, %v2562
      %v2564 = vcombine.low %v2556, %v2563
      %s2566 = scalar_lea.vmem [#allocation3], 721
      %2567 = vst.msk [vmem:[%s2566] ss:$8 sm:$0xf] %vm1090, %v2564
      %2568 = vst.msk [vmem:[%s2566] ss:$8 sm:$0x10] %vm1090, %v2564
      %2569 = vrot.lane.b32.xlu0 %v2564, 126
      %v2570 = vpop.permute.xlu0 %2569
      %v2571 = vrot.slane %v2570, 1
      %v2572 = vsel %vm405, %v2570, %v2571
      %s2574 = scalar_lea.vmem [#allocation3], 722
      %2575 = vst.msk [vmem:[%s2574] ss:$8 sm:$0xf] %vm1090, %v2572
      %2576 = vst.msk [vmem:[%s2574] ss:$8 sm:$0x10] %vm1090, %v2572
      %2577 = vrot.lane.b32.xlu0 %v2564, 124
      %v2578 = vpop.permute.xlu0 %2577
      %v2579 = vrot.slane %v2578, 1
      %v2580 = vsel %vm423, %v2578, %v2579
      %s2582 = scalar_lea.vmem [#allocation3], 723
      %2583 = vst.msk [vmem:[%s2582] ss:$8 sm:$0xf] %vm1090, %v2580
      %2584 = vst.msk [vmem:[%s2582] ss:$8 sm:$0x10] %vm1090, %v2580
      %2585 = vrot.lane.b32.xlu0 %v2564, 122
      %v2586 = vpop.permute.xlu0 %2585
      %v2587 = vrot.slane %v2586, 1
      %v2588 = vsel %vm1112, %v2586, %v2587
      %s2590 = scalar_lea.vmem [#allocation3], 724
      %2591 = vst.msk [vmem:[%s2590] ss:$8 sm:$0xf] %vm1090, %v2588
      %2592 = vst.msk [vmem:[%s2590] ss:$8 sm:$0x10] %vm1090, %v2588
      %2593 = vrot.lane.b32.xlu0 %v2564, 120
      %v2594 = vpop.permute.xlu0 %2593
      %v2595 = vrot.slane %v2594, 1
      %v2596 = vsel %vm1121, %v2594, %v2595
      %s2598 = scalar_lea.vmem [#allocation3], 725
      %2599 = vst.msk [vmem:[%s2598] ss:$8 sm:$0xf] %vm1090, %v2596
      %2600 = vst.msk [vmem:[%s2598] ss:$8 sm:$0x10] %vm1090, %v2596
      %v2601 = vld [vmem:[%s3] sm:$0xff]
      %v2602 = vld [vmem:[%s3 + $0x8] sm:$0xff]
      %v2603 = vld [vmem:[%s3 + $0x10] sm:$0xff]
      %v2604 = vld [vmem:[%s3 + $0x18] sm:$0xff]
      %v2605 = vld [vmem:[#allocation3] sm:$0xff]
      %v2606 = vld [vmem:[#allocation3 + $0x8] sm:$0xff]
      %v2607 = vld [vmem:[#allocation3 + $0x10] sm:$0xff]
      %v2608 = vld [vmem:[#allocation3 + $0x18] sm:$0xff]
      %v2609 = vld [vmem:[#allocation3 + $0x20] sm:$0xff]
      %v2610 = vld [vmem:[#allocation3 + $0x28] sm:$0xff]
      %v2611 = vld [vmem:[#allocation3 + $0x30] sm:$0xff]
      %v2612 = vld [vmem:[#allocation3 + $0x38] sm:$0xff]
      %v2613 = vld [vmem:[#allocation3 + $0x40] sm:$0xff]
      %v2614 = vld [vmem:[#allocation3 + $0x48] sm:$0xff]
      %v2615 = vld [vmem:[#allocation3 + $0x50] sm:$0xff]
      %v2616 = vld [vmem:[#allocation3 + $0x58] sm:$0xff]
      %v2617 = vld [vmem:[#allocation3 + $0x60] sm:$0xff]
      %v2618 = vld [vmem:[#allocation3 + $0x68] sm:$0xff]
      %v2619 = vld [vmem:[#allocation3 + $0x70] sm:$0xff]
      %v2620 = vld [vmem:[#allocation3 + $0x78] sm:$0xff]
      %v2621 = vld [vmem:[#allocation3 + $0x80] sm:$0xff]
      %v2622 = vld [vmem:[#allocation3 + $0x88] sm:$0xff]
      %v2623 = vld [vmem:[#allocation3 + $0x90] sm:$0xff]
      %v2624 = vld [vmem:[#allocation3 + $0x98] sm:$0xff]
      %v2625 = vld [vmem:[#allocation3 + $0xa0] sm:$0xff]
      %v2626 = vld [vmem:[#allocation3 + $0xa8] sm:$0xff]
      %v2627 = vld [vmem:[#allocation3 + $0xb0] sm:$0xff]
      %v2628 = vld [vmem:[#allocation3 + $0xb8] sm:$0xff]
      %v2629 = vld [vmem:[#allocation3 + $0xc0] sm:$0xff]
      %v2630 = vld [vmem:[#allocation3 + $0xc8] sm:$0xff]
      %v2631 = vld [vmem:[#allocation3 + $0xd0] sm:$0xff]
      %v2632 = vld [vmem:[#allocation3 + $0xd8] sm:$0xff]
      %v2633 = vld [vmem:[#allocation3 + $0xe0] sm:$0xff]
      %v2634 = vld [vmem:[#allocation3 + $0xe8] sm:$0xff]
      %v2635 = vld [vmem:[#allocation3 + $0xf0] sm:$0xff]
      %v2636 = vld [vmem:[#allocation3 + $0xf8] sm:$0xff]
      %v2637 = vld [vmem:[#allocation3 + $0x100] sm:$0xff]
      %v2638 = vld [vmem:[#allocation3 + $0x108] sm:$0xff]
      %v2639 = vld [vmem:[#allocation3 + $0x110] sm:$0xff]
      %v2640 = vld [vmem:[#allocation3 + $0x118] sm:$0xff]
      %v2641 = vld [vmem:[#allocation3 + $0x120] sm:$0xff]
      %v2642 = vld [vmem:[#allocation3 + $0x128] sm:$0xff]
      %v2643 = vld [vmem:[#allocation3 + $0x130] sm:$0xff]
      %v2644 = vld [vmem:[#allocation3 + $0x138] sm:$0xff]
      %v2645 = vld [vmem:[#allocation3 + $0x140] sm:$0xff]
      %v2646 = vld [vmem:[#allocation3 + $0x148] sm:$0xff]
      %v2647 = vld [vmem:[#allocation3 + $0x150] sm:$0xff]
      %v2648 = vld [vmem:[#allocation3 + $0x158] sm:$0xff]
      %v2649 = vld [vmem:[#allocation3 + $0x160] sm:$0xff]
      %v2650 = vld [vmem:[#allocation3 + $0x168] sm:$0xff]
      %v2651 = vld [vmem:[#allocation3 + $0x170] sm:$0xff]
      %v2652 = vld [vmem:[#allocation3 + $0x178] sm:$0xff]
      %v2653 = vld [vmem:[#allocation3 + $0x180] sm:$0xff]
      %v2654 = vld [vmem:[#allocation3 + $0x188] sm:$0xff]
      %v2655 = vld [vmem:[#allocation3 + $0x190] sm:$0xff]
      %v2656 = vld [vmem:[#allocation3 + $0x198] sm:$0xff]
      %v2657 = vld [vmem:[#allocation3 + $0x1a0] sm:$0xff]
      %v2658 = vld [vmem:[#allocation3 + $0x1a8] sm:$0xff]
      %v2659 = vld [vmem:[#allocation3 + $0x1b0] sm:$0xff]
      %v2660 = vld [vmem:[#allocation3 + $0x1b8] sm:$0xff]
      %v2661 = vld [vmem:[#allocation3 + $0x1c0] sm:$0xff]
      %v2662 = vld [vmem:[#allocation3 + $0x1c8] sm:$0xff]
      %v2663 = vld [vmem:[#allocation3 + $0x1d0] sm:$0xff]
      %v2664 = vld [vmem:[#allocation3 + $0x1d8] sm:$0xff]
      %v2665 = vld [vmem:[#allocation3 + $0x1e0] sm:$0xff]
      %v2666 = vld [vmem:[#allocation3 + $0x1e8] sm:$0xff]
      %v2667 = vld [vmem:[#allocation3 + $0x1f0] sm:$0xff]
      %v2668 = vld [vmem:[#allocation3 + $0x1f8] sm:$0xff]
      %v2669 = vld [vmem:[#allocation3 + $0x200] sm:$0xff]
      %v2670 = vld [vmem:[#allocation3 + $0x208] sm:$0xff]
      %v2671 = vld [vmem:[#allocation3 + $0x210] sm:$0xff]
      %v2672 = vld [vmem:[#allocation3 + $0x218] sm:$0xff]
      %v2673 = vld [vmem:[#allocation3 + $0x220] sm:$0xff]
      %v2674 = vld [vmem:[#allocation3 + $0x228] sm:$0xff]
      %v2675 = vld [vmem:[#allocation3 + $0x230] sm:$0xff]
      %v2676 = vld [vmem:[#allocation3 + $0x238] sm:$0xff]
      %v2677 = vld [vmem:[#allocation3 + $0x240] sm:$0xff]
      %v2678 = vld [vmem:[#allocation3 + $0x248] sm:$0xff]
      %v2679 = vld [vmem:[#allocation3 + $0x250] sm:$0xff]
      %v2680 = vld [vmem:[#allocation3 + $0x258] sm:$0xff]
      %v2681 = vld [vmem:[#allocation3 + $0x260] sm:$0xff]
      %v2682 = vld [vmem:[#allocation3 + $0x268] sm:$0xff]
      %v2683 = vld [vmem:[#allocation3 + $0x270] sm:$0xff]
      %v2684 = vld [vmem:[#allocation3 + $0x278] sm:$0xff]
      %v2685 = vld [vmem:[#allocation3 + $0x280] sm:$0xff]
      %v2686 = vld [vmem:[#allocation3 + $0x288] sm:$0xff]
      %v2687 = vld [vmem:[#allocation3 + $0x290] sm:$0xff]
      %v2688 = vld [vmem:[#allocation3 + $0x298] sm:$0xff]
      %v2689 = vld [vmem:[#allocation3 + $0x2a0] sm:$0xff]
      %v2690 = vld [vmem:[#allocation3 + $0x2a8] sm:$0xff]
      %v2691 = vld [vmem:[#allocation3 + $0x2b0] sm:$0xff]
      %v2692 = vld [vmem:[#allocation3 + $0x2b8] sm:$0xff]
      %v2693 = vld [vmem:[#allocation3 + $0x2c0] sm:$0xff]
      %v2694 = vld [vmem:[#allocation3 + $0x2c8] sm:$0xff]
      %v2695 = vld [vmem:[#allocation3 + $0x2d0] sm:$0x3f]
      %v2696 = vld [vmem:[#allocation3 + $0x2d8] sm:$0x3f]
      %v2697 = vld [vmem:[#allocation3 + $0x2e0] sm:$0x3f]
      %v2698 = vld [vmem:[#allocation3 + $0x2e8] sm:$0x3f]
      %v2699 = vld [vmem:[#allocation3 + $0x2f0] sm:$0x3f]
      %v2700 = vld [vmem:[%s4] sm:$0xff]
      %v2701 = vld [vmem:[%s4 + $0x8] sm:$0xff]
      %2703 = vset.pattern.permute.xlu0 0
      %2704 = vperm.xlu0 %2703, %v2700
      %v2705 = vpop.permute.xlu0 %2704
      %2708 = vset.pattern.permute.xlu0 0
      %2709 = vperm.xlu0 %2708, %v2701
      %v2710 = vpop.permute.xlu0 %2709
      %vm2712 = vcmask 179200
      %v2714 = vsel %vm2712, %v2602, 0
      %v2717 = vsel %vm2712, %v2604, 0
      %v2720 = vsel %vm574, %v2695, 0
      %v2723 = vsel %vm574, %v2696, 0
      %v2726 = vsel %vm574, %v2697, 0
      %v2729 = vsel %vm574, %v2698, 0
      %v2732 = vsel %vm574, %v2699, 0
      %2734 = vmatprep.subr.mxu0 %v2681
      %2735 = vmatpush1.msra.mxu0 %v2680
      %2736 = vmatprep.subr.mxu0 %v2676
      %2737 = vmatpush1.msra.mxu0 %v2675
      %2738 = vmatprep.subr.mxu0 %v2671
      %2739 = vmatpush1.msra.mxu0 %v2670
      %2740 = vmatprep.subr.mxu0 %v2666
      %2741 = vmatpush1.msra.mxu0 %v2665
      %2742 = vmatprep.subr.mxu0 %v2661
      %2743 = vmatpush1.msra.mxu0 %v2660
      %2744 = vmatprep.subr.mxu0 %v2656
      %2745 = vmatpush1.msra.mxu0 %v2655
      %2746 = vmatprep.subr.mxu0 %v2651
      %2747 = vmatpush1.msra.mxu0 %v2650
      %2748 = vmatprep.subr.mxu0 %v2646
      %2749 = vmatpush1.msra.mxu0 %v2645
      %2750 = vmatprep.subr.mxu0 %v2641
      %2751 = vmatpush1.msra.mxu0 %v2640
      %2752 = vmatprep.subr.mxu0 %v2636
      %2753 = vmatpush1.msra.mxu0 %v2635
      %2754 = vmatprep.subr.mxu0 %v2631
      %2755 = vmatpush1.msra.mxu0 %v2630
      %2756 = vmatprep.subr.mxu0 %v2626
      %2757 = vmatpush1.msra.mxu0 %v2625
      %2758 = vmatprep.subr.mxu0 %v2621
      %2759 = vmatpush1.msra.mxu0 %v2620
      %2760 = vmatprep.subr.mxu0 %v2616
      %2761 = vmatpush1.msra.mxu0 %v2615
      %2762 = vmatprep.subr.mxu0 %v2611
      %2763 = vmatpush1.msra.mxu0 %v2610
      %2764 = vmatprep.subr.mxu0 %v2606
      %2765 = vmatpush1.msra.mxu0 %v2605
      %2766 = vmatprep.subr.mxu0 0.0
      %2767 = vmatpush2.msra.mxu0 0.0
      %2768 = vmatprep.subr.mxu0 0.0
      %2769 = vmatpush2.msra.mxu0 0.0
      %2770 = vmatprep.subr.mxu0 0.0
      %2771 = vmatpush2.msra.mxu0 0.0
      %2772 = vmatprep.subr.mxu0 0.0
      %2773 = vmatpush2.msra.mxu0 0.0
      %2774 = vmatprep.subr.mxu0 0.0
      %2775 = vmatpush2.msra.mxu0 0.0
      %2776 = vmatprep.subr.mxu0 0.0
      %2777 = vmatpush2.msra.mxu0 0.0
      %2778 = vmatprep.subr.mxu0 0.0
      %2779 = vmatpush2.msra.mxu0 0.0
      %2780 = vmatprep.subr.mxu0 0.0
      %2781 = vmatpush2.msra.mxu0 0.0
      %2782 = vmatprep.subr.mxu0 0.0
      %2783 = vmatpush2.msra.mxu0 0.0
      %2784 = vmatprep.subr.mxu0 0.0
      %2785 = vmatpush2.msra.mxu0 0.0
      %2786 = vmatprep.subr.mxu0 0.0
      %2787 = vmatpush2.msra.mxu0 0.0
      %2788 = vmatprep.subr.mxu0 0.0
      %2789 = vmatpush2.msra.mxu0 0.0
      %2790 = vmatprep.subr.mxu0 0.0
      %2791 = vmatpush2.msra.mxu0 0.0
      %2792 = vmatprep.subr.mxu0 %v2723
      %2793 = vmatpush2.msra.mxu0 %v2720
      %2794 = vmatprep.subr.mxu0 %v2691
      %2795 = vmatpush2.msra.mxu0 %v2690
      %2796 = vmatprep.subr.mxu0 %v2686
      %2797 = vmatpush2.msra.mxu0 %v2685
      %2798 = vmatprep.mubr.f32.mxu0 %v2714
      %2799 = vmatmul.mubr.f32.gmra.mxu0 %v2601
      %v2800 = vpop.f32.mrf.mxu0
      %v2801 = vadd.f32 %v2705, %v2800
      %v2802 = vpop.f32.mrf.mxu0
      %v2803 = vadd.f32 %v2705, %v2802
      %2804 = vmatprep.mubr.f32.mxu0 %v2717
      %2805 = vmatmul.mubr.f32.gmra.mxu0 %v2603
      %v2806 = vpop.f32.mrf.mxu0
      %v2807 = vadd.f32 %v2710, %v2806
      %v2808 = vpop.f32.mrf.mxu0
      %v2809 = vadd.f32 %v2710, %v2808
      %2810 = vdwg.mxu0
      %2811 = vmatprep.subr.mxu0 %v2683
      %2812 = vmatpush1.msra.mxu0 %v2682
      %2813 = vmatprep.subr.mxu0 %v2678
      %2814 = vmatpush1.msra.mxu0 %v2677
      %2815 = vmatprep.subr.mxu0 %v2673
      %2816 = vmatpush1.msra.mxu0 %v2672
      %2817 = vmatprep.subr.mxu0 %v2668
      %2818 = vmatpush1.msra.mxu0 %v2667
      %2819 = vmatprep.subr.mxu0 %v2663
      %2820 = vmatpush1.msra.mxu0 %v2662
      %2821 = vmatprep.subr.mxu0 %v2658
      %2822 = vmatpush1.msra.mxu0 %v2657
      %2823 = vmatprep.subr.mxu0 %v2653
      %2824 = vmatpush1.msra.mxu0 %v2652
      %2825 = vmatprep.subr.mxu0 %v2648
      %2826 = vmatpush1.msra.mxu0 %v2647
      %2827 = vmatprep.subr.mxu0 %v2643
      %2828 = vmatpush1.msra.mxu0 %v2642
      %2829 = vmatprep.subr.mxu0 %v2638
      %2830 = vmatpush1.msra.mxu0 %v2637
      %2831 = vmatprep.subr.mxu0 %v2633
      %2832 = vmatpush1.msra.mxu0 %v2632
      %2833 = vmatprep.subr.mxu0 %v2628
      %2834 = vmatpush1.msra.mxu0 %v2627
      %2835 = vmatprep.subr.mxu0 %v2623
      %2836 = vmatpush1.msra.mxu0 %v2622
      %2837 = vmatprep.subr.mxu0 %v2618
      %2838 = vmatpush1.msra.mxu0 %v2617
      %2839 = vmatprep.subr.mxu0 %v2613
      %2840 = vmatpush1.msra.mxu0 %v2612
      %2841 = vmatprep.subr.mxu0 %v2608
      %2842 = vmatpush1.msra.mxu0 %v2607
      %2843 = vmatprep.subr.mxu0 0.0
      %2844 = vmatpush2.msra.mxu0 0.0
      %2845 = vmatprep.subr.mxu0 0.0
      %2846 = vmatpush2.msra.mxu0 0.0
      %2847 = vmatprep.subr.mxu0 0.0
      %2848 = vmatpush2.msra.mxu0 0.0
      %2849 = vmatprep.subr.mxu0 0.0
      %2850 = vmatpush2.msra.mxu0 0.0
      %2851 = vmatprep.subr.mxu0 0.0
      %2852 = vmatpush2.msra.mxu0 0.0
      %2853 = vmatprep.subr.mxu0 0.0
      %2854 = vmatpush2.msra.mxu0 0.0
      %2855 = vmatprep.subr.mxu0 0.0
      %2856 = vmatpush2.msra.mxu0 0.0
      %2857 = vmatprep.subr.mxu0 0.0
      %2858 = vmatpush2.msra.mxu0 0.0
      %2859 = vmatprep.subr.mxu0 0.0
      %2860 = vmatpush2.msra.mxu0 0.0
      %2861 = vmatprep.subr.mxu0 0.0
      %2862 = vmatpush2.msra.mxu0 0.0
      %2863 = vmatprep.subr.mxu0 0.0
      %2864 = vmatpush2.msra.mxu0 0.0
      %2865 = vmatprep.subr.mxu0 0.0
      %2866 = vmatpush2.msra.mxu0 0.0
      %2867 = vmatprep.subr.mxu0 0.0
      %2868 = vmatpush2.msra.mxu0 0.0
      %2869 = vmatprep.subr.mxu0 %v2729
      %2870 = vmatpush2.msra.mxu0 %v2726
      %2871 = vmatprep.subr.mxu0 %v2693
      %2872 = vmatpush2.msra.mxu0 %v2692
      %2873 = vmatprep.subr.mxu0 %v2688
      %2874 = vmatpush2.msra.mxu0 %v2687
      %2875 = vmatprep.mubr.f32.mxu0 %v2714
      %2876 = vmatmul.mubr.f32.gmra.mxu0 %v2601
      %v2877 = vpop.f32.mrf.mxu0
      %v2878 = vadd.f32 %v2705, %v2877
      %v2879 = vpop.f32.mrf.mxu0
      %v2880 = vadd.f32 %v2705, %v2879
      %2881 = vmatprep.mubr.f32.mxu0 %v2717
      %2882 = vmatmul.mubr.f32.gmra.mxu0 %v2603
      %v2883 = vpop.f32.mrf.mxu0
      %v2884 = vadd.f32 %v2710, %v2883
      %v2885 = vpop.f32.mrf.mxu0
      %v2886 = vadd.f32 %v2710, %v2885
      %2887 = vdwg.mxu0
      %2888 = vmatprep.subr.mxu0 0.0
      %2889 = vmatpush1.msra.mxu0 %v2684
      %2890 = vmatprep.subr.mxu0 0.0
      %2891 = vmatpush1.msra.mxu0 %v2679
      %2892 = vmatprep.subr.mxu0 0.0
      %2893 = vmatpush1.msra.mxu0 %v2674
      %2894 = vmatprep.subr.mxu0 0.0
      %2895 = vmatpush1.msra.mxu0 %v2669
      %2896 = vmatprep.subr.mxu0 0.0
      %2897 = vmatpush1.msra.mxu0 %v2664
      %2898 = vmatprep.subr.mxu0 0.0
      %2899 = vmatpush1.msra.mxu0 %v2659
      %2900 = vmatprep.subr.mxu0 0.0
      %2901 = vmatpush1.msra.mxu0 %v2654
      %2902 = vmatprep.subr.mxu0 0.0
      %2903 = vmatpush1.msra.mxu0 %v2649
      %2904 = vmatprep.subr.mxu0 0.0
      %2905 = vmatpush1.msra.mxu0 %v2644
      %2906 = vmatprep.subr.mxu0 0.0
      %2907 = vmatpush1.msra.mxu0 %v2639
      %2908 = vmatprep.subr.mxu0 0.0
      %2909 = vmatpush1.msra.mxu0 %v2634
      %2910 = vmatprep.subr.mxu0 0.0
      %2911 = vmatpush1.msra.mxu0 %v2629
      %2912 = vmatprep.subr.mxu0 0.0
      %2913 = vmatpush1.msra.mxu0 %v2624
      %2914 = vmatprep.subr.mxu0 0.0
      %2915 = vmatpush1.msra.mxu0 %v2619
      %2916 = vmatprep.subr.mxu0 0.0
      %2917 = vmatpush1.msra.mxu0 %v2614
      %2918 = vmatprep.subr.mxu0 0.0
      %2919 = vmatpush1.msra.mxu0 %v2609
      %2920 = vmatprep.subr.mxu0 0.0
      %2921 = vmatpush2.msra.mxu0 0.0
      %2922 = vmatprep.subr.mxu0 0.0
      %2923 = vmatpush2.msra.mxu0 0.0
      %2924 = vmatprep.subr.mxu0 0.0
      %2925 = vmatpush2.msra.mxu0 0.0
      %2926 = vmatprep.subr.mxu0 0.0
      %2927 = vmatpush2.msra.mxu0 0.0
      %2928 = vmatprep.subr.mxu0 0.0
      %2929 = vmatpush2.msra.mxu0 0.0
      %2930 = vmatprep.subr.mxu0 0.0
      %2931 = vmatpush2.msra.mxu0 0.0
      %2932 = vmatprep.subr.mxu0 0.0
      %2933 = vmatpush2.msra.mxu0 0.0
      %2934 = vmatprep.subr.mxu0 0.0
      %2935 = vmatpush2.msra.mxu0 0.0
      %2936 = vmatprep.subr.mxu0 0.0
      %2937 = vmatpush2.msra.mxu0 0.0
      %2938 = vmatprep.subr.mxu0 0.0
      %2939 = vmatpush2.msra.mxu0 0.0
      %2940 = vmatprep.subr.mxu0 0.0
      %2941 = vmatpush2.msra.mxu0 0.0
      %2942 = vmatprep.subr.mxu0 0.0
      %2943 = vmatpush2.msra.mxu0 0.0
      %2944 = vmatprep.subr.mxu0 0.0
      %2945 = vmatpush2.msra.mxu0 0.0
      %2946 = vmatprep.subr.mxu0 0.0
      %2947 = vmatpush2.msra.mxu0 %v2732
      %2948 = vmatprep.subr.mxu0 0.0
      %2949 = vmatpush2.msra.mxu0 %v2694
      %2950 = vmatprep.subr.mxu0 0.0
      %2951 = vmatpush2.msra.mxu0 %v2689
      %2952 = vmatprep.mubr.f32.mxu0 %v2714
      %2953 = vmatmul.mubr.f32.gmra.mxu0 %v2601
      %v2954 = vpop.f32.mrf.mxu0
      %v2955 = vadd.f32 %v2705, %v2954
      %v2956 = vpop.f32.mrf.mxu0
      %2957 = vmatprep.mubr.f32.mxu0 %v2717
      %2958 = vmatmul.mubr.f32.gmra.mxu0 %v2603
      %v2959 = vpop.f32.mrf.mxu0
      %v2960 = vadd.f32 %v2710, %v2959
      %v2961 = vpop.f32.mrf.mxu0
      %2962 = vdwg.mxu0
      %v2963 = vmax.f32 %v2801, 0.0
      %v2964 = vmax.f32 %v2803, 0.0
      %v2965 = vmax.f32 %v2878, 0.0
      %v2966 = vmax.f32 %v2880, 0.0
      %v2967 = vmax.f32 %v2955, 0.0
      %v2968 = vmax.f32 %v2807, 0.0
      %v2969 = vmax.f32 %v2809, 0.0
      %v2970 = vmax.f32 %v2884, 0.0
      %v2971 = vmax.f32 %v2886, 0.0
      %v2972 = vmax.f32 %v2960, 0.0
      %2983 = vrot.lane.b32.xlu0 %v2963, 64
      %v2984 = vpop.permute.xlu0 %2983
      %2985 = vrot.lane.b32.xlu0 %v2964, 64
      %v2986 = vpop.permute.xlu0 %2985
      %2987 = vrot.lane.b32.xlu0 %v2965, 64
      %v2988 = vpop.permute.xlu0 %2987
      %2989 = vrot.lane.b32.xlu0 %v2966, 64
      %v2990 = vpop.permute.xlu0 %2989
      %2991 = vrot.lane.b32.xlu0 %v2967, 64
      %v2992 = vpop.permute.xlu0 %2991
      %2993 = vrot.lane.b32.xlu0 %v2968, 64
      %v2994 = vpop.permute.xlu0 %2993
      %2995 = vrot.lane.b32.xlu0 %v2969, 64
      %v2996 = vpop.permute.xlu0 %2995
      %2997 = vrot.lane.b32.xlu0 %v2970, 64
      %v2998 = vpop.permute.xlu0 %2997
      %2999 = vrot.lane.b32.xlu0 %v2971, 64
      %v3000 = vpop.permute.xlu0 %2999
      %3001 = vrot.lane.b32.xlu0 %v2972, 64
      %v3002 = vpop.permute.xlu0 %3001
      %v3003 = vsel %vm477, %v2984, %v2986
      %v3004 = vsel %vm477, %v2986, %v2988
      %v3005 = vsel %vm477, %v2988, %v2990
      %v3006 = vsel %vm477, %v2990, %v2992
      %v3007 = vsel %vm477, %v2994, %v2996
      %v3008 = vsel %vm477, %v2996, %v2998
      %v3009 = vsel %vm477, %v2998, %v3000
      %v3010 = vsel %vm477, %v3000, %v3002
      %v3021 = vmax.f32 %v2963, %v3003
      %v3022 = vmax.f32 %v2964, %v3004
      %v3023 = vmax.f32 %v2965, %v3005
      %v3024 = vmax.f32 %v2966, %v3006
      %v3025 = vmax.f32 %v2967, %v2992
      %v3026 = vmax.f32 %v2968, %v3007
      %v3027 = vmax.f32 %v2969, %v3008
      %v3028 = vmax.f32 %v2970, %v3009
      %v3029 = vmax.f32 %v2971, %v3010
      %v3030 = vmax.f32 %v2972, %v3002
      %3041 = vrot.lane.b32.xlu0 %v3021, 126
      %v3042 = vpop.permute.xlu0 %3041
      %3043 = vrot.lane.b32.xlu0 %v3022, 126
      %v3044 = vpop.permute.xlu0 %3043
      %3045 = vrot.lane.b32.xlu0 %v3023, 126
      %v3046 = vpop.permute.xlu0 %3045
      %3047 = vrot.lane.b32.xlu0 %v3024, 126
      %v3048 = vpop.permute.xlu0 %3047
      %3049 = vrot.lane.b32.xlu0 %v3025, 126
      %v3050 = vpop.permute.xlu0 %3049
      %3051 = vrot.lane.b32.xlu0 %v3026, 126
      %v3052 = vpop.permute.xlu0 %3051
      %3053 = vrot.lane.b32.xlu0 %v3027, 126
      %v3054 = vpop.permute.xlu0 %3053
      %3055 = vrot.lane.b32.xlu0 %v3028, 126
      %v3056 = vpop.permute.xlu0 %3055
      %3057 = vrot.lane.b32.xlu0 %v3029, 126
      %v3058 = vpop.permute.xlu0 %3057
      %3059 = vrot.lane.b32.xlu0 %v3030, 126
      %v3060 = vpop.permute.xlu0 %3059
      %v3061 = vsel %vm405, %v3042, %v3044
      %v3062 = vsel %vm405, %v3044, %v3046
      %v3063 = vsel %vm405, %v3046, %v3048
      %v3064 = vsel %vm405, %v3048, %v3050
      %v3065 = vsel %vm405, %v3052, %v3054
      %v3066 = vsel %vm405, %v3054, %v3056
      %v3067 = vsel %vm405, %v3056, %v3058
      %v3068 = vsel %vm405, %v3058, %v3060
      %v3079 = vmax.f32 %v3021, %v3061
      %v3080 = vmax.f32 %v3022, %v3062
      %v3081 = vmax.f32 %v3023, %v3063
      %v3082 = vmax.f32 %v3024, %v3064
      %v3083 = vmax.f32 %v3025, %v3050
      %v3084 = vmax.f32 %v3026, %v3065
      %v3085 = vmax.f32 %v3027, %v3066
      %v3086 = vmax.f32 %v3028, %v3067
      %v3087 = vmax.f32 %v3029, %v3068
      %v3088 = vmax.f32 %v3030, %v3060
      %vm3089 = vcmask 7168
      %3090 = vst.msk [vmem:[#allocation4] sm:$0xff] %vm3089, %v3079
      %3091 = vst.msk [vmem:[#allocation4 + $0x8] sm:$0xff] %vm3089, %v3084
      %3094 = vrot.lane.b32.xlu0 %v3079, 124
      %v3095 = vpop.permute.xlu0 %3094
      %3096 = vrot.lane.b32.xlu0 %v3084, 124
      %v3097 = vpop.permute.xlu0 %3096
      %3100 = vst.msk [vmem:[#allocation4 + $0x10] sm:$0xff] %vm3089, %v3095
      %3101 = vst.msk [vmem:[#allocation4 + $0x18] sm:$0xff] %vm3089, %v3097
      %3102 = vrot.lane.b32.xlu0 %v3079, 120
      %v3103 = vpop.permute.xlu0 %3102
      %3104 = vrot.lane.b32.xlu0 %v3084, 120
      %v3105 = vpop.permute.xlu0 %3104
      %3108 = vst.msk [vmem:[#allocation4 + $0x20] sm:$0xff] %vm3089, %v3103
      %3109 = vst.msk [vmem:[#allocation4 + $0x28] sm:$0xff] %vm3089, %v3105
      %3110 = vrot.lane.b32.xlu0 %v3079, 116
      %v3111 = vpop.permute.xlu0 %3110
      %3112 = vrot.lane.b32.xlu0 %v3084, 116
      %v3113 = vpop.permute.xlu0 %3112
      %3116 = vst.msk [vmem:[#allocation4 + $0x30] sm:$0xff] %vm3089, %v3111
      %3117 = vst.msk [vmem:[#allocation4 + $0x38] sm:$0xff] %vm3089, %v3113
      %3118 = vrot.lane.b32.xlu0 %v3079, 112
      %v3119 = vpop.permute.xlu0 %3118
      %3120 = vrot.lane.b32.xlu0 %v3084, 112
      %v3121 = vpop.permute.xlu0 %3120
      %3124 = vst.msk [vmem:[#allocation4 + $0x40] sm:$0xff] %vm3089, %v3119
      %3125 = vst.msk [vmem:[#allocation4 + $0x48] sm:$0xff] %vm3089, %v3121
      %3126 = vst.msk [vmem:[#allocation4 + $0x50] sm:$0xff] %vm3089, %v3080
      %3127 = vst.msk [vmem:[#allocation4 + $0x58] sm:$0xff] %vm3089, %v3085
      %3130 = vrot.lane.b32.xlu0 %v3080, 124
      %v3131 = vpop.permute.xlu0 %3130
      %3132 = vrot.lane.b32.xlu0 %v3085, 124
      %v3133 = vpop.permute.xlu0 %3132
      %3136 = vst.msk [vmem:[#allocation4 + $0x60] sm:$0xff] %vm3089, %v3131
      %3137 = vst.msk [vmem:[#allocation4 + $0x68] sm:$0xff] %vm3089, %v3133
      %3138 = vrot.lane.b32.xlu0 %v3080, 120
      %v3139 = vpop.permute.xlu0 %3138
      %3140 = vrot.lane.b32.xlu0 %v3085, 120
      %v3141 = vpop.permute.xlu0 %3140
      %3144 = vst.msk [vmem:[#allocation4 + $0x70] sm:$0xff] %vm3089, %v3139
      %3145 = vst.msk [vmem:[#allocation4 + $0x78] sm:$0xff] %vm3089, %v3141
      %3146 = vrot.lane.b32.xlu0 %v3080, 116
      %v3147 = vpop.permute.xlu0 %3146
      %3148 = vrot.lane.b32.xlu0 %v3085, 116
      %v3149 = vpop.permute.xlu0 %3148
      %3152 = vst.msk [vmem:[#allocation4 + $0x80] sm:$0xff] %vm3089, %v3147
      %3153 = vst.msk [vmem:[#allocation4 + $0x88] sm:$0xff] %vm3089, %v3149
      %3154 = vrot.lane.b32.xlu0 %v3080, 112
      %v3155 = vpop.permute.xlu0 %3154
      %3156 = vrot.lane.b32.xlu0 %v3085, 112
      %v3157 = vpop.permute.xlu0 %3156
      %3160 = vst.msk [vmem:[#allocation4 + $0x90] sm:$0xff] %vm3089, %v3155
      %3161 = vst.msk [vmem:[#allocation4 + $0x98] sm:$0xff] %vm3089, %v3157
      %3162 = vst.msk [vmem:[#allocation4 + $0xa0] sm:$0xff] %vm3089, %v3081
      %3163 = vst.msk [vmem:[#allocation4 + $0xa8] sm:$0xff] %vm3089, %v3086
      %3166 = vrot.lane.b32.xlu0 %v3081, 124
      %v3167 = vpop.permute.xlu0 %3166
      %3168 = vrot.lane.b32.xlu0 %v3086, 124
      %v3169 = vpop.permute.xlu0 %3168
      %3172 = vst.msk [vmem:[#allocation4 + $0xb0] sm:$0xff] %vm3089, %v3167
      %3173 = vst.msk [vmem:[#allocation4 + $0xb8] sm:$0xff] %vm3089, %v3169
      %3174 = vrot.lane.b32.xlu0 %v3081, 120
      %v3175 = vpop.permute.xlu0 %3174
      %3176 = vrot.lane.b32.xlu0 %v3086, 120
      %v3177 = vpop.permute.xlu0 %3176
      %3180 = vst.msk [vmem:[#allocation4 + $0xc0] sm:$0xff] %vm3089, %v3175
      %3181 = vst.msk [vmem:[#allocation4 + $0xc8] sm:$0xff] %vm3089, %v3177
      %3182 = vrot.lane.b32.xlu0 %v3081, 116
      %v3183 = vpop.permute.xlu0 %3182
      %3184 = vrot.lane.b32.xlu0 %v3086, 116
      %v3185 = vpop.permute.xlu0 %3184
      %3188 = vst.msk [vmem:[#allocation4 + $0xd0] sm:$0xff] %vm3089, %v3183
      %3189 = vst.msk [vmem:[#allocation4 + $0xd8] sm:$0xff] %vm3089, %v3185
      %3190 = vrot.lane.b32.xlu0 %v3081, 112
      %v3191 = vpop.permute.xlu0 %3190
      %3192 = vrot.lane.b32.xlu0 %v3086, 112
      %v3193 = vpop.permute.xlu0 %3192
      %3196 = vst.msk [vmem:[#allocation4 + $0xe0] sm:$0xff] %vm3089, %v3191
      %3197 = vst.msk [vmem:[#allocation4 + $0xe8] sm:$0xff] %vm3089, %v3193
      %3198 = vst.msk [vmem:[#allocation4 + $0xf0] sm:$0xff] %vm3089, %v3082
      %3199 = vst.msk [vmem:[#allocation4 + $0xf8] sm:$0xff] %vm3089, %v3087
      %3202 = vrot.lane.b32.xlu0 %v3082, 124
      %v3203 = vpop.permute.xlu0 %3202
      %3204 = vrot.lane.b32.xlu0 %v3087, 124
      %v3205 = vpop.permute.xlu0 %3204
      %3208 = vst.msk [vmem:[#allocation4 + $0x100] sm:$0xff] %vm3089, %v3203
      %3209 = vst.msk [vmem:[#allocation4 + $0x108] sm:$0xff] %vm3089, %v3205
      %3210 = vrot.lane.b32.xlu0 %v3082, 120
      %v3211 = vpop.permute.xlu0 %3210
      %3212 = vrot.lane.b32.xlu0 %v3087, 120
      %v3213 = vpop.permute.xlu0 %3212
      %3216 = vst.msk [vmem:[#allocation4 + $0x110] sm:$0xff] %vm3089, %v3211
      %3217 = vst.msk [vmem:[#allocation4 + $0x118] sm:$0xff] %vm3089, %v3213
      %3218 = vrot.lane.b32.xlu0 %v3082, 116
      %v3219 = vpop.permute.xlu0 %3218
      %3220 = vrot.lane.b32.xlu0 %v3087, 116
      %v3221 = vpop.permute.xlu0 %3220
      %3224 = vst.msk [vmem:[#allocation4 + $0x120] sm:$0xff] %vm3089, %v3219
      %3225 = vst.msk [vmem:[#allocation4 + $0x128] sm:$0xff] %vm3089, %v3221
      %3226 = vrot.lane.b32.xlu0 %v3082, 112
      %v3227 = vpop.permute.xlu0 %3226
      %3228 = vrot.lane.b32.xlu0 %v3087, 112
      %v3229 = vpop.permute.xlu0 %3228
      %3232 = vst.msk [vmem:[#allocation4 + $0x130] sm:$0xff] %vm3089, %v3227
      %3233 = vst.msk [vmem:[#allocation4 + $0x138] sm:$0xff] %vm3089, %v3229
      %3234 = vst.msk [vmem:[#allocation4 + $0x140] sm:$0xff] %vm3089, %v3083
      %3235 = vst.msk [vmem:[#allocation4 + $0x148] sm:$0xff] %vm3089, %v3088
      %3238 = vrot.lane.b32.xlu0 %v3083, 124
      %v3239 = vpop.permute.xlu0 %3238
      %3240 = vrot.lane.b32.xlu0 %v3088, 124
      %v3241 = vpop.permute.xlu0 %3240
      %3244 = vst.msk [vmem:[#allocation4 + $0x150] sm:$0xff] %vm3089, %v3239
      %3245 = vst.msk [vmem:[#allocation4 + $0x158] sm:$0xff] %vm3089, %v3241
      %3246 = vrot.lane.b32.xlu0 %v3083, 120
      %v3247 = vpop.permute.xlu0 %3246
      %3248 = vrot.lane.b32.xlu0 %v3088, 120
      %v3249 = vpop.permute.xlu0 %3248
      %3252 = vst.msk [vmem:[#allocation4 + $0x160] sm:$0xff] %vm3089, %v3247
      %3253 = vst.msk [vmem:[#allocation4 + $0x168] sm:$0xff] %vm3089, %v3249
      %3254 = vrot.lane.b32.xlu0 %v3083, 116
      %v3255 = vpop.permute.xlu0 %3254
      %3256 = vrot.lane.b32.xlu0 %v3088, 116
      %v3257 = vpop.permute.xlu0 %3256
      %3260 = vst.msk [vmem:[#allocation4 + $0x170] sm:$0xff] %vm3089, %v3255
      %3261 = vst.msk [vmem:[#allocation4 + $0x178] sm:$0xff] %vm3089, %v3257
      %3262 = vrot.lane.b32.xlu0 %v3083, 112
      %v3263 = vpop.permute.xlu0 %3262
      %3264 = vrot.lane.b32.xlu0 %v3088, 112
      %v3265 = vpop.permute.xlu0 %3264
      %3268 = vst.msk [vmem:[#allocation4 + $0x180] sm:$0xff] %vm3089, %v3263
      %3269 = vst.msk [vmem:[#allocation4 + $0x188] sm:$0xff] %vm3089, %v3265
      %v3270 = vld [vmem:[%s5] sm:$0xff]
      %v3271 = vld [vmem:[%s5 + $0x8] sm:$0xff]
      %v3272 = vld [vmem:[%s5 + $0x10] sm:$0xff]
      %v3273 = vld [vmem:[%s5 + $0x18] sm:$0xff]
      %v3274 = vld [vmem:[%s5 + $0x20] sm:$0xff]
      %v3275 = vld [vmem:[%s5 + $0x28] sm:$0xff]
      %v3276 = vld [vmem:[%s5 + $0x30] sm:$0xff]
      %v3277 = vld [vmem:[%s5 + $0x38] sm:$0xff]
      %v3278 = vld [vmem:[%s5 + $0x40] sm:$0xff]
      %v3279 = vld [vmem:[%s5 + $0x48] sm:$0xff]
      %v3280 = vld [vmem:[%s5 + $0x50] sm:$0xff]
      %v3281 = vld [vmem:[%s5 + $0x58] sm:$0xff]
      %v3282 = vld [vmem:[%s5 + $0x60] sm:$0xff]
      %v3283 = vld [vmem:[%s5 + $0x68] sm:$0xff]
      %v3284 = vld [vmem:[%s5 + $0x70] sm:$0xff]
      %v3285 = vld [vmem:[%s5 + $0x78] sm:$0xff]
      %v3286 = vld [vmem:[%s5 + $0x80] sm:$0xff]
      %v3287 = vld [vmem:[%s5 + $0x88] sm:$0xff]
      %v3288 = vld [vmem:[%s5 + $0x90] sm:$0xff]
      %v3289 = vld [vmem:[%s5 + $0x98] sm:$0xff]
      %v3290 = vld [vmem:[%s5 + $0xa0] sm:$0xff]
      %v3291 = vld [vmem:[%s5 + $0xa8] sm:$0xff]
      %v3292 = vld [vmem:[%s5 + $0xb0] sm:$0xff]
      %v3293 = vld [vmem:[%s5 + $0xb8] sm:$0xff]
      %v3294 = vld [vmem:[%s5 + $0xc0] sm:$0xff]
      %v3295 = vld [vmem:[%s5 + $0xc8] sm:$0xff]
      %v3296 = vld [vmem:[%s5 + $0xd0] sm:$0xff]
      %v3297 = vld [vmem:[%s5 + $0xd8] sm:$0xff]
      %v3298 = vld [vmem:[%s5 + $0xe0] sm:$0xff]
      %v3299 = vld [vmem:[%s5 + $0xe8] sm:$0xff]
      %v3300 = vld [vmem:[%s5 + $0xf0] sm:$0xff]
      %v3301 = vld [vmem:[%s5 + $0xf8] sm:$0xff]
      %v3302 = vld [vmem:[%s5 + $0x100] sm:$0xff]
      %v3303 = vld [vmem:[%s5 + $0x108] sm:$0xff]
      %v3304 = vld [vmem:[%s5 + $0x110] sm:$0xff]
      %v3305 = vld [vmem:[%s5 + $0x118] sm:$0xff]
      %v3306 = vld [vmem:[%s5 + $0x120] sm:$0xff]
      %v3307 = vld [vmem:[%s5 + $0x128] sm:$0xff]
      %v3308 = vld [vmem:[%s5 + $0x130] sm:$0xff]
      %v3309 = vld [vmem:[%s5 + $0x138] sm:$0xff]
      %v3310 = vld [vmem:[%s5 + $0x140] sm:$0xff]
      %v3311 = vld [vmem:[%s5 + $0x148] sm:$0xff]
      %v3312 = vld [vmem:[%s5 + $0x150] sm:$0xff]
      %v3313 = vld [vmem:[%s5 + $0x158] sm:$0xff]
      %v3314 = vld [vmem:[%s5 + $0x160] sm:$0xff]
      %v3315 = vld [vmem:[%s5 + $0x168] sm:$0xff]
      %v3316 = vld [vmem:[%s5 + $0x170] sm:$0xff]
      %v3317 = vld [vmem:[%s5 + $0x178] sm:$0xff]
      %v3318 = vld [vmem:[%s5 + $0x180] sm:$0xff]
      %v3319 = vld [vmem:[%s5 + $0x188] sm:$0xff]
      %v3320 = vld [vmem:[%s5 + $0x190] sm:$0xff]
      %v3321 = vld [vmem:[%s5 + $0x198] sm:$0xff]
      %v3322 = vld [vmem:[%s5 + $0x1a0] sm:$0xff]
      %v3323 = vld [vmem:[%s5 + $0x1a8] sm:$0xff]
      %v3324 = vld [vmem:[%s5 + $0x1b0] sm:$0xff]
      %v3325 = vld [vmem:[%s5 + $0x1b8] sm:$0xff]
      %v3326 = vld [vmem:[%s5 + $0x1c0] sm:$0xff]
      %v3327 = vld [vmem:[%s5 + $0x1c8] sm:$0xff]
      %v3328 = vld [vmem:[%s5 + $0x1d0] sm:$0xff]
      %v3329 = vld [vmem:[%s5 + $0x1d8] sm:$0xff]
      %v3330 = vld [vmem:[#allocation4] sm:$0xff]
      %v3331 = vld [vmem:[#allocation4 + $0x8] sm:$0xff]
      %v3332 = vld [vmem:[#allocation4 + $0x10] sm:$0xff]
      %v3333 = vld [vmem:[#allocation4 + $0x18] sm:$0xff]
      %v3334 = vld [vmem:[#allocation4 + $0x20] sm:$0xff]
      %v3335 = vld [vmem:[#allocation4 + $0x28] sm:$0xff]
      %v3336 = vld [vmem:[#allocation4 + $0x30] sm:$0xff]
      %v3337 = vld [vmem:[#allocation4 + $0x38] sm:$0xff]
      %v3338 = vld [vmem:[#allocation4 + $0x40] sm:$0xff]
      %v3339 = vld [vmem:[#allocation4 + $0x48] sm:$0xff]
      %v3340 = vld [vmem:[#allocation4 + $0x50] sm:$0xff]
      %v3341 = vld [vmem:[#allocation4 + $0x58] sm:$0xff]
      %v3342 = vld [vmem:[#allocation4 + $0x60] sm:$0xff]
      %v3343 = vld [vmem:[#allocation4 + $0x68] sm:$0xff]
      %v3344 = vld [vmem:[#allocation4 + $0x70] sm:$0xff]
      %v3345 = vld [vmem:[#allocation4 + $0x78] sm:$0xff]
      %v3346 = vld [vmem:[#allocation4 + $0x80] sm:$0xff]
      %v3347 = vld [vmem:[#allocation4 + $0x88] sm:$0xff]
      %v3348 = vld [vmem:[#allocation4 + $0x90] sm:$0xff]
      %v3349 = vld [vmem:[#allocation4 + $0x98] sm:$0xff]
      %v3350 = vld [vmem:[#allocation4 + $0xa0] sm:$0xff]
      %v3351 = vld [vmem:[#allocation4 + $0xa8] sm:$0xff]
      %v3352 = vld [vmem:[#allocation4 + $0xb0] sm:$0xff]
      %v3353 = vld [vmem:[#allocation4 + $0xb8] sm:$0xff]
      %v3354 = vld [vmem:[#allocation4 + $0xc0] sm:$0xff]
      %v3355 = vld [vmem:[#allocation4 + $0xc8] sm:$0xff]
      %v3356 = vld [vmem:[#allocation4 + $0xd0] sm:$0xff]
      %v3357 = vld [vmem:[#allocation4 + $0xd8] sm:$0xff]
      %v3358 = vld [vmem:[#allocation4 + $0xe0] sm:$0xff]
      %v3359 = vld [vmem:[#allocation4 + $0xe8] sm:$0xff]
      %v3360 = vld [vmem:[#allocation4 + $0xf0] sm:$0xff]
      %v3361 = vld [vmem:[#allocation4 + $0xf8] sm:$0xff]
      %v3362 = vld [vmem:[#allocation4 + $0x100] sm:$0xff]
      %v3363 = vld [vmem:[#allocation4 + $0x108] sm:$0xff]
      %v3364 = vld [vmem:[#allocation4 + $0x110] sm:$0xff]
      %v3365 = vld [vmem:[#allocation4 + $0x118] sm:$0xff]
      %v3366 = vld [vmem:[#allocation4 + $0x120] sm:$0xff]
      %v3367 = vld [vmem:[#allocation4 + $0x128] sm:$0xff]
      %v3368 = vld [vmem:[#allocation4 + $0x130] sm:$0xff]
      %v3369 = vld [vmem:[#allocation4 + $0x138] sm:$0xff]
      %v3370 = vld [vmem:[#allocation4 + $0x140] sm:$0xff]
      %v3371 = vld [vmem:[#allocation4 + $0x148] sm:$0xff]
      %v3372 = vld [vmem:[#allocation4 + $0x150] sm:$0xff]
      %v3373 = vld [vmem:[#allocation4 + $0x158] sm:$0xff]
      %v3374 = vld [vmem:[#allocation4 + $0x160] sm:$0xff]
      %v3375 = vld [vmem:[#allocation4 + $0x168] sm:$0xff]
      %v3376 = vld [vmem:[#allocation4 + $0x170] sm:$0xff]
      %v3377 = vld [vmem:[#allocation4 + $0x178] sm:$0xff]
      %v3378 = vld [vmem:[#allocation4 + $0x180] sm:$0xff]
      %v3379 = vld [vmem:[#allocation4 + $0x188] sm:$0xff]
      %v3380 = vld [vmem:[%s6] sm:$0xff]
      %v3381 = vld [vmem:[%s6 + $0x8] sm:$0xff]
      %v3382 = vld [vmem:[%s6 + $0x10] sm:$0xff]
      %v3383 = vld [vmem:[%s6 + $0x18] sm:$0xff]
      %v3384 = vld [vmem:[%s6 + $0x20] sm:$0xff]
      %v3385 = vld [vmem:[%s6 + $0x28] sm:$0xff]
      %v3386 = vld [vmem:[%s6 + $0x30] sm:$0xff]
      %v3387 = vld [vmem:[%s6 + $0x38] sm:$0xff]
      %v3388 = vld [vmem:[%s6 + $0x40] sm:$0xff]
      %v3389 = vld [vmem:[%s6 + $0x48] sm:$0xff]
      %v3390 = vld [vmem:[%s6 + $0x50] sm:$0xff]
      %v3391 = vld [vmem:[%s6 + $0x58] sm:$0xff]
      %v3392 = vld [vmem:[%s6 + $0x60] sm:$0xff]
      %v3393 = vld [vmem:[%s6 + $0x68] sm:$0xff]
      %v3394 = vld [vmem:[%s6 + $0x70] sm:$0xff]
      %vm3395 = vcmask 130048
      %v3397 = vsel %vm3395, %v3273, 0
      %v3400 = vsel %vm3395, %v3277, 0
      %v3403 = vsel %vm3395, %v3281, 0
      %v3406 = vsel %vm3395, %v3285, 0
      %v3409 = vsel %vm3395, %v3289, 0
      %v3412 = vsel %vm3395, %v3293, 0
      %v3415 = vsel %vm3395, %v3297, 0
      %v3418 = vsel %vm3395, %v3301, 0
      %v3421 = vsel %vm3395, %v3305, 0
      %v3424 = vsel %vm3395, %v3309, 0
      %v3427 = vsel %vm3395, %v3313, 0
      %v3430 = vsel %vm3395, %v3317, 0
      %v3433 = vsel %vm3395, %v3321, 0
      %v3436 = vsel %vm3395, %v3325, 0
      %v3439 = vsel %vm3395, %v3329, 0
      %3441 = vmatprep.subr.mxu0 0.0
      %3442 = vmatpush1.msra.mxu0 %v3345
      %3443 = vmatprep.subr.mxu0 0.0
      %3444 = vmatpush1.msra.mxu0 %v3344
      %3445 = vmatprep.subr.mxu0 0.0
      %3446 = vmatpush1.msra.mxu0 %v3343
      %3447 = vmatprep.subr.mxu0 0.0
      %3448 = vmatpush1.msra.mxu0 %v3342
      %3449 = vmatprep.subr.mxu0 0.0
      %3450 = vmatpush1.msra.mxu0 %v3341
      %3451 = vmatprep.subr.mxu0 0.0
      %3452 = vmatpush1.msra.mxu0 %v3340
      %3453 = vmatprep.subr.mxu0 0.0
      %3454 = vmatpush1.msra.mxu0 %v3339
      %3455 = vmatprep.subr.mxu0 0.0
      %3456 = vmatpush1.msra.mxu0 %v3338
      %3457 = vmatprep.subr.mxu0 0.0
      %3458 = vmatpush1.msra.mxu0 %v3337
      %3459 = vmatprep.subr.mxu0 0.0
      %3460 = vmatpush1.msra.mxu0 %v3336
      %3461 = vmatprep.subr.mxu0 0.0
      %3462 = vmatpush1.msra.mxu0 %v3335
      %3463 = vmatprep.subr.mxu0 0.0
      %3464 = vmatpush1.msra.mxu0 %v3334
      %3465 = vmatprep.subr.mxu0 0.0
      %3466 = vmatpush1.msra.mxu0 %v3333
      %3467 = vmatprep.subr.mxu0 0.0
      %3468 = vmatpush1.msra.mxu0 %v3332
      %3469 = vmatprep.subr.mxu0 0.0
      %3470 = vmatpush1.msra.mxu0 %v3331
      %3471 = vmatprep.subr.mxu0 0.0
      %3472 = vmatpush1.msra.mxu0 %v3330
      %3473 = vmatprep.subr.mxu0 0.0
      %3474 = vmatpush2.msra.mxu0 %v3361
      %3475 = vmatprep.subr.mxu0 0.0
      %3476 = vmatpush2.msra.mxu0 %v3360
      %3477 = vmatprep.subr.mxu0 0.0
      %3478 = vmatpush2.msra.mxu0 %v3359
      %3479 = vmatprep.subr.mxu0 0.0
      %3480 = vmatpush2.msra.mxu0 %v3358
      %3481 = vmatprep.subr.mxu0 0.0
      %3482 = vmatpush2.msra.mxu0 %v3357
      %3483 = vmatprep.subr.mxu0 0.0
      %3484 = vmatpush2.msra.mxu0 %v3356
      %3485 = vmatprep.subr.mxu0 0.0
      %3486 = vmatpush2.msra.mxu0 %v3355
      %3487 = vmatprep.subr.mxu0 0.0
      %3488 = vmatpush2.msra.mxu0 %v3354
      %3489 = vmatprep.subr.mxu0 0.0
      %3490 = vmatpush2.msra.mxu0 %v3353
      %3491 = vmatprep.subr.mxu0 0.0
      %3492 = vmatpush2.msra.mxu0 %v3352
      %3493 = vmatprep.subr.mxu0 0.0
      %3494 = vmatpush2.msra.mxu0 %v3351
      %3495 = vmatprep.subr.mxu0 0.0
      %3496 = vmatpush2.msra.mxu0 %v3350
      %3497 = vmatprep.subr.mxu0 0.0
      %3498 = vmatpush2.msra.mxu0 %v3349
      %3499 = vmatprep.subr.mxu0 0.0
      %3500 = vmatpush2.msra.mxu0 %v3348
      %3501 = vmatprep.subr.mxu0 0.0
      %3502 = vmatpush2.msra.mxu0 %v3347
      %3503 = vmatprep.subr.mxu0 0.0
      %3504 = vmatpush2.msra.mxu0 %v3346
      %3505 = vmatprep.mubr.f32.mxu0 %v3271
      %3506 = vmatmul.mubr.f32.gmra.mxu0 %v3270
      %v3507 = vpop.f32.mrf.mxu0
      %v3508 = vadd.f32 %v3380, %v3507
      %v3509 = vpop.f32.mrf.mxu0
      %3510 = vmatprep.mubr.f32.mxu0 %v3275
      %3511 = vmatmul.mubr.f32.gmra.mxu0 %v3274
      %v3512 = vpop.f32.mrf.mxu0
      %v3513 = vadd.f32 %v3381, %v3512
      %v3514 = vpop.f32.mrf.mxu0
      %3515 = vmatprep.mubr.f32.mxu0 %v3279
      %3516 = vmatmul.mubr.f32.gmra.mxu0 %v3278
      %v3517 = vpop.f32.mrf.mxu0
      %v3518 = vadd.f32 %v3382, %v3517
      %v3519 = vpop.f32.mrf.mxu0
      %3520 = vmatprep.mubr.f32.mxu0 %v3283
      %3521 = vmatmul.mubr.f32.gmra.mxu0 %v3282
      %v3522 = vpop.f32.mrf.mxu0
      %v3523 = vadd.f32 %v3383, %v3522
      %v3524 = vpop.f32.mrf.mxu0
      %3525 = vmatprep.mubr.f32.mxu0 %v3287
      %3526 = vmatmul.mubr.f32.gmra.mxu0 %v3286
      %v3527 = vpop.f32.mrf.mxu0
      %v3528 = vadd.f32 %v3384, %v3527
      %v3529 = vpop.f32.mrf.mxu0
      %3530 = vmatprep.mubr.f32.mxu0 %v3291
      %3531 = vmatmul.mubr.f32.gmra.mxu0 %v3290
      %v3532 = vpop.f32.mrf.mxu0
      %v3533 = vadd.f32 %v3385, %v3532
      %v3534 = vpop.f32.mrf.mxu0
      %3535 = vmatprep.mubr.f32.mxu0 %v3295
      %3536 = vmatmul.mubr.f32.gmra.mxu0 %v3294
      %v3537 = vpop.f32.mrf.mxu0
      %v3538 = vadd.f32 %v3386, %v3537
      %v3539 = vpop.f32.mrf.mxu0
      %3540 = vmatprep.mubr.f32.mxu0 %v3299
      %3541 = vmatmul.mubr.f32.gmra.mxu0 %v3298
      %v3542 = vpop.f32.mrf.mxu0
      %v3543 = vadd.f32 %v3387, %v3542
      %v3544 = vpop.f32.mrf.mxu0
      %3545 = vmatprep.mubr.f32.mxu0 %v3303
      %3546 = vmatmul.mubr.f32.gmra.mxu0 %v3302
      %v3547 = vpop.f32.mrf.mxu0
      %v3548 = vadd.f32 %v3388, %v3547
      %v3549 = vpop.f32.mrf.mxu0
      %3550 = vmatprep.mubr.f32.mxu0 %v3307
      %3551 = vmatmul.mubr.f32.gmra.mxu0 %v3306
      %v3552 = vpop.f32.mrf.mxu0
      %v3553 = vadd.f32 %v3389, %v3552
      %v3554 = vpop.f32.mrf.mxu0
      %3555 = vmatprep.mubr.f32.mxu0 %v3311
      %3556 = vmatmul.mubr.f32.gmra.mxu0 %v3310
      %v3557 = vpop.f32.mrf.mxu0
      %v3558 = vadd.f32 %v3390, %v3557
      %v3559 = vpop.f32.mrf.mxu0
      %3560 = vmatprep.mubr.f32.mxu0 %v3315
      %3561 = vmatmul.mubr.f32.gmra.mxu0 %v3314
      %v3562 = vpop.f32.mrf.mxu0
      %v3563 = vadd.f32 %v3391, %v3562
      %v3564 = vpop.f32.mrf.mxu0
      %3565 = vmatprep.mubr.f32.mxu0 %v3319
      %3566 = vmatmul.mubr.f32.gmra.mxu0 %v3318
      %v3567 = vpop.f32.mrf.mxu0
      %v3568 = vadd.f32 %v3392, %v3567
      %v3569 = vpop.f32.mrf.mxu0
      %3570 = vmatprep.mubr.f32.mxu0 %v3323
      %3571 = vmatmul.mubr.f32.gmra.mxu0 %v3322
      %v3572 = vpop.f32.mrf.mxu0
      %v3573 = vadd.f32 %v3393, %v3572
      %v3574 = vpop.f32.mrf.mxu0
      %3575 = vmatprep.mubr.f32.mxu0 %v3327
      %3576 = vmatmul.mubr.f32.gmra.mxu0 %v3326
      %v3577 = vpop.f32.mrf.mxu0
      %v3578 = vadd.f32 %v3394, %v3577
      %v3579 = vpop.f32.mrf.mxu0
      %3580 = vdwg.mxu0
      %3581 = vmatprep.subr.mxu0 0.0
      %3582 = vmatpush1.msra.mxu0 %v3377
      %3583 = vmatprep.subr.mxu0 0.0
      %3584 = vmatpush1.msra.mxu0 %v3376
      %3585 = vmatprep.subr.mxu0 0.0
      %3586 = vmatpush1.msra.mxu0 %v3375
      %3587 = vmatprep.subr.mxu0 0.0
      %3588 = vmatpush1.msra.mxu0 %v3374
      %3589 = vmatprep.subr.mxu0 0.0
      %3590 = vmatpush1.msra.mxu0 %v3373
      %3591 = vmatprep.subr.mxu0 0.0
      %3592 = vmatpush1.msra.mxu0 %v3372
      %3593 = vmatprep.subr.mxu0 0.0
      %3594 = vmatpush1.msra.mxu0 %v3371
      %3595 = vmatprep.subr.mxu0 0.0
      %3596 = vmatpush1.msra.mxu0 %v3370
      %3597 = vmatprep.subr.mxu0 0.0
      %3598 = vmatpush1.msra.mxu0 %v3369
      %3599 = vmatprep.subr.mxu0 0.0
      %3600 = vmatpush1.msra.mxu0 %v3368
      %3601 = vmatprep.subr.mxu0 0.0
      %3602 = vmatpush1.msra.mxu0 %v3367
      %3603 = vmatprep.subr.mxu0 0.0
      %3604 = vmatpush1.msra.mxu0 %v3366
      %3605 = vmatprep.subr.mxu0 0.0
      %3606 = vmatpush1.msra.mxu0 %v3365
      %3607 = vmatprep.subr.mxu0 0.0
      %3608 = vmatpush1.msra.mxu0 %v3364
      %3609 = vmatprep.subr.mxu0 0.0
      %3610 = vmatpush1.msra.mxu0 %v3363
      %3611 = vmatprep.subr.mxu0 0.0
      %3612 = vmatpush1.msra.mxu0 %v3362
      %3613 = vmatprep.subr.mxu0 0.0
      %3614 = vmatpush2.msra.mxu0 0.0
      %3615 = vmatprep.subr.mxu0 0.0
      %3616 = vmatpush2.msra.mxu0 0.0
      %3617 = vmatprep.subr.mxu0 0.0
      %3618 = vmatpush2.msra.mxu0 0.0
      %3619 = vmatprep.subr.mxu0 0.0
      %3620 = vmatpush2.msra.mxu0 0.0
      %3621 = vmatprep.subr.mxu0 0.0
      %3622 = vmatpush2.msra.mxu0 0.0
      %3623 = vmatprep.subr.mxu0 0.0
      %3624 = vmatpush2.msra.mxu0 0.0
      %3625 = vmatprep.subr.mxu0 0.0
      %3626 = vmatpush2.msra.mxu0 0.0
      %3627 = vmatprep.subr.mxu0 0.0
      %3628 = vmatpush2.msra.mxu0 0.0
      %3629 = vmatprep.subr.mxu0 0.0
      %3630 = vmatpush2.msra.mxu0 0.0
      %3631 = vmatprep.subr.mxu0 0.0
      %3632 = vmatpush2.msra.mxu0 0.0
      %3633 = vmatprep.subr.mxu0 0.0
      %3634 = vmatpush2.msra.mxu0 0.0
      %3635 = vmatprep.subr.mxu0 0.0
      %3636 = vmatpush2.msra.mxu0 0.0
      %3637 = vmatprep.subr.mxu0 0.0
      %3638 = vmatpush2.msra.mxu0 0.0
      %3639 = vmatprep.subr.mxu0 0.0
      %3640 = vmatpush2.msra.mxu0 0.0
      %3641 = vmatprep.subr.mxu0 0.0
      %3642 = vmatpush2.msra.mxu0 %v3379
      %3643 = vmatprep.subr.mxu0 0.0
      %3644 = vmatpush2.msra.mxu0 %v3378
      %3645 = vmatprep.mubr.f32.mxu0 %v3397
      %3646 = vmatmul.mubr.f32.gmra.mxu0 %v3272
      %v3647 = vpop.f32.mrf.mxu0
      %v3648 = vadd.f32 %v3508, %v3647
      %v3649 = vpop.f32.mrf.mxu0
      %3650 = vmatprep.mubr.f32.mxu0 %v3400
      %3651 = vmatmul.mubr.f32.gmra.mxu0 %v3276
      %v3652 = vpop.f32.mrf.mxu0
      %v3653 = vadd.f32 %v3513, %v3652
      %v3654 = vpop.f32.mrf.mxu0
      %3655 = vmatprep.mubr.f32.mxu0 %v3403
      %3656 = vmatmul.mubr.f32.gmra.mxu0 %v3280
      %v3657 = vpop.f32.mrf.mxu0
      %v3658 = vadd.f32 %v3518, %v3657
      %v3659 = vpop.f32.mrf.mxu0
      %3660 = vmatprep.mubr.f32.mxu0 %v3406
      %3661 = vmatmul.mubr.f32.gmra.mxu0 %v3284
      %v3662 = vpop.f32.mrf.mxu0
      %v3663 = vadd.f32 %v3523, %v3662
      %v3664 = vpop.f32.mrf.mxu0
      %3665 = vmatprep.mubr.f32.mxu0 %v3409
      %3666 = vmatmul.mubr.f32.gmra.mxu0 %v3288
      %v3667 = vpop.f32.mrf.mxu0
      %v3668 = vadd.f32 %v3528, %v3667
      %v3669 = vpop.f32.mrf.mxu0
      %3670 = vmatprep.mubr.f32.mxu0 %v3412
      %3671 = vmatmul.mubr.f32.gmra.mxu0 %v3292
      %v3672 = vpop.f32.mrf.mxu0
      %v3673 = vadd.f32 %v3533, %v3672
      %v3674 = vpop.f32.mrf.mxu0
      %3675 = vmatprep.mubr.f32.mxu0 %v3415
      %3676 = vmatmul.mubr.f32.gmra.mxu0 %v3296
      %v3677 = vpop.f32.mrf.mxu0
      %v3678 = vadd.f32 %v3538, %v3677
      %v3679 = vpop.f32.mrf.mxu0
      %3680 = vmatprep.mubr.f32.mxu0 %v3418
      %3681 = vmatmul.mubr.f32.gmra.mxu0 %v3300
      %v3682 = vpop.f32.mrf.mxu0
      %v3683 = vadd.f32 %v3543, %v3682
      %v3684 = vpop.f32.mrf.mxu0
      %3685 = vmatprep.mubr.f32.mxu0 %v3421
      %3686 = vmatmul.mubr.f32.gmra.mxu0 %v3304
      %v3687 = vpop.f32.mrf.mxu0
      %v3688 = vadd.f32 %v3548, %v3687
      %v3689 = vpop.f32.mrf.mxu0
      %3690 = vmatprep.mubr.f32.mxu0 %v3424
      %3691 = vmatmul.mubr.f32.gmra.mxu0 %v3308
      %v3692 = vpop.f32.mrf.mxu0
      %v3693 = vadd.f32 %v3553, %v3692
      %v3694 = vpop.f32.mrf.mxu0
      %3695 = vmatprep.mubr.f32.mxu0 %v3427
      %3696 = vmatmul.mubr.f32.gmra.mxu0 %v3312
      %v3697 = vpop.f32.mrf.mxu0
      %v3698 = vadd.f32 %v3558, %v3697
      %v3699 = vpop.f32.mrf.mxu0
      %3700 = vmatprep.mubr.f32.mxu0 %v3430
      %3701 = vmatmul.mubr.f32.gmra.mxu0 %v3316
      %v3702 = vpop.f32.mrf.mxu0
      %v3703 = vadd.f32 %v3563, %v3702
      %v3704 = vpop.f32.mrf.mxu0
      %3705 = vmatprep.mubr.f32.mxu0 %v3433
      %3706 = vmatmul.mubr.f32.gmra.mxu0 %v3320
      %v3707 = vpop.f32.mrf.mxu0
      %v3708 = vadd.f32 %v3568, %v3707
      %v3709 = vpop.f32.mrf.mxu0
      %3710 = vmatprep.mubr.f32.mxu0 %v3436
      %3711 = vmatmul.mubr.f32.gmra.mxu0 %v3324
      %v3712 = vpop.f32.mrf.mxu0
      %v3713 = vadd.f32 %v3573, %v3712
      %v3714 = vpop.f32.mrf.mxu0
      %3715 = vmatprep.mubr.f32.mxu0 %v3439
      %3716 = vmatmul.mubr.f32.gmra.mxu0 %v3328
      %v3717 = vpop.f32.mrf.mxu0
      %v3718 = vadd.f32 %v3578, %v3717
      %v3719 = vpop.f32.mrf.mxu0
      %3720 = vdwg.mxu0
      %v3721 = vmax.f32 %v3648, 0.0
      %v3722 = vmax.f32 %v3653, 0.0
      %v3723 = vmax.f32 %v3658, 0.0
      %v3724 = vmax.f32 %v3663, 0.0
      %v3725 = vmax.f32 %v3668, 0.0
      %v3726 = vmax.f32 %v3673, 0.0
      %v3727 = vmax.f32 %v3678, 0.0
      %v3728 = vmax.f32 %v3683, 0.0
      %v3729 = vmax.f32 %v3688, 0.0
      %v3730 = vmax.f32 %v3693, 0.0
      %v3731 = vmax.f32 %v3698, 0.0
      %v3732 = vmax.f32 %v3703, 0.0
      %v3733 = vmax.f32 %v3708, 0.0
      %v3734 = vmax.f32 %v3713, 0.0
      %v3735 = vmax.f32 %v3718, 0.0
      %v3736 = vld [vmem:[%s7] sm:$0xff]
      %v3737 = vld [vmem:[%s7 + $0x8] sm:$0xff]
      %v3738 = vld [vmem:[%s7 + $0x10] sm:$0xff]
      %v3739 = vld [vmem:[%s7 + $0x18] sm:$0xff]
      %v3740 = vld [vmem:[%s7 + $0x20] sm:$0xff]
      %v3741 = vld [vmem:[%s7 + $0x28] sm:$0xff]
      %v3742 = vld [vmem:[%s7 + $0x30] sm:$0xff]
      %v3743 = vld [vmem:[%s7 + $0x38] sm:$0xff]
      %v3744 = vld [vmem:[%s7 + $0x40] sm:$0xff]
      %v3745 = vld [vmem:[%s7 + $0x48] sm:$0xff]
      %v3746 = vld [vmem:[%s7 + $0x50] sm:$0xf]
      %v3747 = vld [vmem:[%s8] sm:$0xff]
      %v3748 = vld [vmem:[%s8 + $0x8] sm:$0xff]
      %v3749 = vld [vmem:[%s8 + $0x10] sm:$0xff]
      %v3750 = vld [vmem:[%s8 + $0x18] sm:$0xff]
      %v3751 = vld [vmem:[%s8 + $0x20] sm:$0xff]
      %v3752 = vld [vmem:[%s8 + $0x28] sm:$0xff]
      %v3753 = vld [vmem:[%s8 + $0x30] sm:$0xff]
      %v3754 = vld [vmem:[%s8 + $0x38] sm:$0xff]
      %v3755 = vld [vmem:[%s8 + $0x40] sm:$0xff]
      %v3756 = vld [vmem:[%s8 + $0x48] sm:$0xff]
      %v3757 = vld [vmem:[%s8 + $0x50] sm:$0xf]
      %v3759 = vsel %vm1121, %v3736, 0
      %v3762 = vsel %vm1121, %v3737, 0
      %v3765 = vsel %vm1121, %v3738, 0
      %v3768 = vsel %vm1121, %v3739, 0
      %v3771 = vsel %vm1121, %v3740, 0
      %v3774 = vsel %vm1121, %v3741, 0
      %v3777 = vsel %vm1121, %v3742, 0
      %v3780 = vsel %vm1121, %v3743, 0
      %v3783 = vsel %vm1121, %v3744, 0
      %v3786 = vsel %vm1121, %v3745, 0
      %v3789 = vsel %vm1121, %v3746, 0
      %3791 = vmatprep.subr.mxu0 0.0
      %3792 = vmatpush1.msra.mxu0 0.0
      %3793 = vmatprep.subr.mxu0 0.0
      %3794 = vmatpush1.msra.mxu0 %v3735
      %3795 = vmatprep.subr.mxu0 0.0
      %3796 = vmatpush1.msra.mxu0 %v3734
      %3797 = vmatprep.subr.mxu0 0.0
      %3798 = vmatpush1.msra.mxu0 %v3733
      %3799 = vmatprep.subr.mxu0 0.0
      %3800 = vmatpush1.msra.mxu0 %v3732
      %3801 = vmatprep.subr.mxu0 0.0
      %3802 = vmatpush1.msra.mxu0 %v3731
      %3803 = vmatprep.subr.mxu0 0.0
      %3804 = vmatpush1.msra.mxu0 %v3730
      %3805 = vmatprep.subr.mxu0 0.0
      %3806 = vmatpush1.msra.mxu0 %v3729
      %3807 = vmatprep.subr.mxu0 0.0
      %3808 = vmatpush1.msra.mxu0 %v3728
      %3809 = vmatprep.subr.mxu0 0.0
      %3810 = vmatpush1.msra.mxu0 %v3727
      %3811 = vmatprep.subr.mxu0 0.0
      %3812 = vmatpush1.msra.mxu0 %v3726
      %3813 = vmatprep.subr.mxu0 0.0
      %3814 = vmatpush1.msra.mxu0 %v3725
      %3815 = vmatprep.subr.mxu0 0.0
      %3816 = vmatpush1.msra.mxu0 %v3724
      %3817 = vmatprep.subr.mxu0 0.0
      %3818 = vmatpush1.msra.mxu0 %v3723
      %3819 = vmatprep.subr.mxu0 0.0
      %3820 = vmatpush1.msra.mxu0 %v3722
      %3821 = vmatprep.subr.mxu0 0.0
      %3822 = vmatpush1.msra.mxu0 %v3721
      %3823 = vmatprep.subr.mxu0 0.0
      %3824 = vmatpush2.msra.mxu0 0.0
      %3825 = vmatprep.subr.mxu0 0.0
      %3826 = vmatpush2.msra.mxu0 0.0
      %3827 = vmatprep.subr.mxu0 0.0
      %3828 = vmatpush2.msra.mxu0 0.0
      %3829 = vmatprep.subr.mxu0 0.0
      %3830 = vmatpush2.msra.mxu0 0.0
      %3831 = vmatprep.subr.mxu0 0.0
      %3832 = vmatpush2.msra.mxu0 0.0
      %3833 = vmatprep.subr.mxu0 0.0
      %3834 = vmatpush2.msra.mxu0 0.0
      %3835 = vmatprep.subr.mxu0 0.0
      %3836 = vmatpush2.msra.mxu0 0.0
      %3837 = vmatprep.subr.mxu0 0.0
      %3838 = vmatpush2.msra.mxu0 0.0
      %3839 = vmatprep.subr.mxu0 0.0
      %3840 = vmatpush2.msra.mxu0 0.0
      %3841 = vmatprep.subr.mxu0 0.0
      %3842 = vmatpush2.msra.mxu0 0.0
      %3843 = vmatprep.subr.mxu0 0.0
      %3844 = vmatpush2.msra.mxu0 0.0
      %3845 = vmatprep.subr.mxu0 0.0
      %3846 = vmatpush2.msra.mxu0 0.0
      %3847 = vmatprep.subr.mxu0 0.0
      %3848 = vmatpush2.msra.mxu0 0.0
      %3849 = vmatprep.subr.mxu0 0.0
      %3850 = vmatpush2.msra.mxu0 0.0
      %3851 = vmatprep.subr.mxu0 0.0
      %3852 = vmatpush2.msra.mxu0 0.0
      %3853 = vmatprep.subr.mxu0 0.0
      %3854 = vmatpush2.msra.mxu0 0.0
      %3855 = vmatprep.mubr.f32.mxu0 0.0
      %3856 = vmatmul.mubr.f32.gmra.mxu0 %v3759
      %v3857 = vpop.f32.mrf.mxu0
      %v3858 = vadd.f32 %v3747, %v3857
      %v3859 = vpop.f32.mrf.mxu0
      %3860 = vmatprep.mubr.f32.mxu0 0.0
      %3861 = vmatmul.mubr.f32.gmra.mxu0 %v3762
      %v3862 = vpop.f32.mrf.mxu0
      %v3863 = vadd.f32 %v3748, %v3862
      %v3864 = vpop.f32.mrf.mxu0
      %3865 = vmatprep.mubr.f32.mxu0 0.0
      %3866 = vmatmul.mubr.f32.gmra.mxu0 %v3765
      %v3867 = vpop.f32.mrf.mxu0
      %v3868 = vadd.f32 %v3749, %v3867
      %v3869 = vpop.f32.mrf.mxu0
      %3870 = vmatprep.mubr.f32.mxu0 0.0
      %3871 = vmatmul.mubr.f32.gmra.mxu0 %v3768
      %v3872 = vpop.f32.mrf.mxu0
      %v3873 = vadd.f32 %v3750, %v3872
      %v3874 = vpop.f32.mrf.mxu0
      %3875 = vmatprep.mubr.f32.mxu0 0.0
      %3876 = vmatmul.mubr.f32.gmra.mxu0 %v3771
      %v3877 = vpop.f32.mrf.mxu0
      %v3878 = vadd.f32 %v3751, %v3877
      %v3879 = vpop.f32.mrf.mxu0
      %3880 = vmatprep.mubr.f32.mxu0 0.0
      %3881 = vmatmul.mubr.f32.gmra.mxu0 %v3774
      %v3882 = vpop.f32.mrf.mxu0
      %v3883 = vadd.f32 %v3752, %v3882
      %v3884 = vpop.f32.mrf.mxu0
      %3885 = vmatprep.mubr.f32.mxu0 0.0
      %3886 = vmatmul.mubr.f32.gmra.mxu0 %v3777
      %v3887 = vpop.f32.mrf.mxu0
      %v3888 = vadd.f32 %v3753, %v3887
      %v3889 = vpop.f32.mrf.mxu0
      %3890 = vmatprep.mubr.f32.mxu0 0.0
      %3891 = vmatmul.mubr.f32.gmra.mxu0 %v3780
      %v3892 = vpop.f32.mrf.mxu0
      %v3893 = vadd.f32 %v3754, %v3892
      %v3894 = vpop.f32.mrf.mxu0
      %3895 = vmatprep.mubr.f32.mxu0 0.0
      %3896 = vmatmul.mubr.f32.gmra.mxu0 %v3783
      %v3897 = vpop.f32.mrf.mxu0
      %v3898 = vadd.f32 %v3755, %v3897
      %v3899 = vpop.f32.mrf.mxu0
      %3900 = vmatprep.mubr.f32.mxu0 0.0
      %3901 = vmatmul.mubr.f32.gmra.mxu0 %v3786
      %v3902 = vpop.f32.mrf.mxu0
      %v3903 = vadd.f32 %v3756, %v3902
      %v3904 = vpop.f32.mrf.mxu0
      %3905 = vmatprep.mubr.f32.mxu0 0.0
      %3906 = vmatmul.mubr.f32.gmra.mxu0 %v3789
      %v3907 = vpop.f32.mrf.mxu0
      %v3908 = vadd.f32 %v3757, %v3907
      %v3909 = vpop.f32.mrf.mxu0
      %3910 = vdwg.mxu0
      %v3911 = vmax.f32 %v3858, 0.0
      %v3912 = vmax.f32 %v3863, 0.0
      %v3913 = vmax.f32 %v3868, 0.0
      %v3914 = vmax.f32 %v3873, 0.0
      %v3915 = vmax.f32 %v3878, 0.0
      %v3916 = vmax.f32 %v3883, 0.0
      %v3917 = vmax.f32 %v3888, 0.0
      %v3918 = vmax.f32 %v3893, 0.0
      %v3919 = vmax.f32 %v3898, 0.0
      %v3920 = vmax.f32 %v3903, 0.0
      %v3921 = vmax.f32 %v3908, 0.0
      %v3922 = vld [vmem:[%s9] sm:$0xff]
      %v3923 = vld [vmem:[%s9 + $0x8] sm:$0x3]
      %v3924 = vld [vmem:[%s10] sm:$0xff]
      %v3925 = vld [vmem:[%s10 + $0x8] sm:$0x3]
      %vm3926 = vcmask 687104
      %v3928 = vsel %vm3926, %v3922, 0
      %v3931 = vsel %vm3926, %v3923, 0
      %vm3933 = vcmask 1043456
      %v3935 = vsel %vm3933, %v3921, 0
      %3937 = vmatprep.subr.mxu0 0.0
      %3938 = vmatpush1.msra.mxu0 0.0
      %3939 = vmatprep.subr.mxu0 0.0
      %3940 = vmatpush1.msra.mxu0 0.0
      %3941 = vmatprep.subr.mxu0 0.0
      %3942 = vmatpush1.msra.mxu0 0.0
      %3943 = vmatprep.subr.mxu0 0.0
      %3944 = vmatpush1.msra.mxu0 0.0
      %3945 = vmatprep.subr.mxu0 0.0
      %3946 = vmatpush1.msra.mxu0 0.0
      %3947 = vmatprep.subr.mxu0 0.0
      %3948 = vmatpush1.msra.mxu0 %v3935
      %3949 = vmatprep.subr.mxu0 0.0
      %3950 = vmatpush1.msra.mxu0 %v3920
      %3951 = vmatprep.subr.mxu0 0.0
      %3952 = vmatpush1.msra.mxu0 %v3919
      %3953 = vmatprep.subr.mxu0 0.0
      %3954 = vmatpush1.msra.mxu0 %v3918
      %3955 = vmatprep.subr.mxu0 0.0
      %3956 = vmatpush1.msra.mxu0 %v3917
      %3957 = vmatprep.subr.mxu0 0.0
      %3958 = vmatpush1.msra.mxu0 %v3916
      %3959 = vmatprep.subr.mxu0 0.0
      %3960 = vmatpush1.msra.mxu0 %v3915
      %3961 = vmatprep.subr.mxu0 0.0
      %3962 = vmatpush1.msra.mxu0 %v3914
      %3963 = vmatprep.subr.mxu0 0.0
      %3964 = vmatpush1.msra.mxu0 %v3913
      %3965 = vmatprep.subr.mxu0 0.0
      %3966 = vmatpush1.msra.mxu0 %v3912
      %3967 = vmatprep.subr.mxu0 0.0
      %3968 = vmatpush1.msra.mxu0 %v3911
      %3969 = vmatprep.subr.mxu0 0.0
      %3970 = vmatpush2.msra.mxu0 0.0
      %3971 = vmatprep.subr.mxu0 0.0
      %3972 = vmatpush2.msra.mxu0 0.0
      %3973 = vmatprep.subr.mxu0 0.0
      %3974 = vmatpush2.msra.mxu0 0.0
      %3975 = vmatprep.subr.mxu0 0.0
      %3976 = vmatpush2.msra.mxu0 0.0
      %3977 = vmatprep.subr.mxu0 0.0
      %3978 = vmatpush2.msra.mxu0 0.0
      %3979 = vmatprep.subr.mxu0 0.0
      %3980 = vmatpush2.msra.mxu0 0.0
      %3981 = vmatprep.subr.mxu0 0.0
      %3982 = vmatpush2.msra.mxu0 0.0
      %3983 = vmatprep.subr.mxu0 0.0
      %3984 = vmatpush2.msra.mxu0 0.0
      %3985 = vmatprep.subr.mxu0 0.0
      %3986 = vmatpush2.msra.mxu0 0.0
      %3987 = vmatprep.subr.mxu0 0.0
      %3988 = vmatpush2.msra.mxu0 0.0
      %3989 = vmatprep.subr.mxu0 0.0
      %3990 = vmatpush2.msra.mxu0 0.0
      %3991 = vmatprep.subr.mxu0 0.0
      %3992 = vmatpush2.msra.mxu0 0.0
      %3993 = vmatprep.subr.mxu0 0.0
      %3994 = vmatpush2.msra.mxu0 0.0
      %3995 = vmatprep.subr.mxu0 0.0
      %3996 = vmatpush2.msra.mxu0 0.0
      %3997 = vmatprep.subr.mxu0 0.0
      %3998 = vmatpush2.msra.mxu0 0.0
      %3999 = vmatprep.subr.mxu0 0.0
      %4000 = vmatpush2.msra.mxu0 0.0
      %4001 = vmatprep.mubr.f32.mxu0 0.0
      %4002 = vmatmul.mubr.f32.gmra.mxu0 %v3928
      %v4003 = vpop.f32.mrf.mxu0
      %v4004 = vadd.f32 %v3924, %v4003
      %v4005 = vpop.f32.mrf.mxu0
      %4006 = vmatprep.mubr.f32.mxu0 0.0
      %4007 = vmatmul.mubr.f32.gmra.mxu0 %v3931
      %v4008 = vpop.f32.mrf.mxu0
      %v4009 = vadd.f32 %v3925, %v4008
      %v4010 = vpop.f32.mrf.mxu0
      %4011 = vdwg.mxu0
      %4012 = vst.msk [vmem:[%s383] sm:$0xff] %vm3089, %v4004
      %vm4013 = vcmask 1024
      %4014 = vst.msk [vmem:[%s383 + $0x8] sm:$0x3] %vm4013, %v4009
      %p4015 = scmp.lt.s32.totalorder %s22, 1
      %s4016 = scalar_select %p4015, %s22, 1
      %s4017 = smul.addr %s4016, 2
      %s4018 = smul.addr %s4017, 8
      %s4019 = scalar_lea.vmem %s11, %s4018
      // Predicated region
      $region65: #{lenet5_forward.1} parent=63 // pred_check
        %p4020 = pneg %p276
      $region66: #{lenet5_forward.1} parent=63 // pred_check_branch
        %4022 = sbr.rel (%p4020) target = $region68
      $region67: #{lenet5_forward.1} parent=63 // pred_region
        _
      $region68: #{lenet5_forward.1} parent=63 // pred_fallthru
        _
    $region64: #{lenet5_forward.1} parent=5 // pred_fallthru
      _
    %p4023 = scmp.le.s32.totalorder 2, %s17
    // Predicated region
    $region69: #{lenet5_forward.1} parent=5 // pred_check
      %p4024 = pneg %p4023
    $region70: #{lenet5_forward.1} parent=5 // pred_check_branch
      %4026 = sbr.rel (%p4024) target = $region72
    $region71: #{lenet5_forward.1} parent=5 // pred_region
      %s4027 = ssub.s32 %s17, 2
      // Predicated region
      $region73: #{lenet5_forward.1} parent=71 // pred_check
        %p4028 = pneg %p282
      $region74: #{lenet5_forward.1} parent=71 // pred_check_branch
        %4030 = sbr.rel (%p4028) target = $region76
      $region75: #{lenet5_forward.1} parent=71 // pred_region
        %p4031 = scmp.lt.s32.totalorder %s23, 1
        %s4032 = scalar_select %p4031, %s23, 1
        %s4033 = smul.addr %s4032, 2
        %s4034 = smul.addr %s4033, 8
        %s4035 = scalar_lea.vmem %s11, %s4034
      $region76: #{lenet5_forward.1} parent=71 // pred_fallthru
        _
    $region72: #{lenet5_forward.1} parent=5 // pred_fallthru
      _
  $region6: #{lenet5_forward.1} parent=0 // loop_footer
    %s21 = sadd.s32 1, %s17
  $region7: #{lenet5_forward.1} parent=0 // loop_footer_branch
    %16 = sbr.rel target = $region3
  $region8: #{lenet5_forward.1} parent=0 // loop_exit
    _

</llo_original>
